<compile_context>
chip_gen: v7x
topology: tpu7x:2x2x1
jax: 0.10.0
libtpu: 0.0.40
codegen_flags: <defaults>
</compile_context>

<pallas_src>
import functools
import numpy as np
import jax
import jax.numpy as jnp
from jax import lax
from jax.experimental import pallas as pl
from jax.experimental.pallas import tpu as pltpu

NODE_TYPE_SIZE = 9
LATENT = 128
NUM_MP_STEPS = 15
OUT_DIM = 2
IN_DIM = 2 + NODE_TYPE_SIZE      # 11
EDGE_IN_DIM = 2 + 1              # 3
LN_EPS = 1e-5
LANE = 128


def _round_up(x, m):
    return (x + m - 1) // m * m


def _edge_tile_size(e_pad):
    for te in (1024, 512, 256):
        if e_pad % te == 0:
            return te
    return 128


# ---------------- the single fused Pallas kernel ----------------

def _fused_gnn_kernel(
        # graph features (constant across MP steps)
        node_x_ref, edge_x_ref,
        # incidence matrices left in HBM (single-buffered manual DMA at step 0)
        src_hbm, dst_hbm,
        # encoders
        ne_w1_ref, ne_w2_ref, ne_w3_ref, ne_b_ref,
        ee_w1_ref, ee_w2_ref, ee_w3_ref, ee_b_ref,
        # per-step edge block (leading [15] axis selected by the index_map)
        ew1e_ref, ew1sd_ref, ew2_ref, ew3_ref, eb_ref,
        # per-step node block
        nw1_ref, nw2_ref, nw3_ref, nb_ref,
        # decoder (out_norm.inverse folded into w3/b3)
        dw1_ref, dw2_ref, dw3_ref, db_ref,
        # output
        out_ref,
        # VMEM-resident state (persists across the MP-step grid axis)
        src_inc, dst_inc, node_lat, edge_lat, agg_sc, ns_sc, nd_sc, dma_sem,
        *, edge_tile, n_e_tiles):
    f32 = jnp.float32
    bf16 = jnp.bfloat16
    step = pl.program_id(0)

    def layer_norm(y, gamma, beta):
        mu = jnp.mean(y, axis=-1, keepdims=True)
        var = jnp.mean((y - mu) ** 2, axis=-1, keepdims=True)
        return (y - mu) * jax.lax.rsqrt(var + LN_EPS) * gamma + beta

    def mlp3(x_b, w1, w2, w3, b):
        h = jnp.maximum(jnp.dot(x_b, w1, preferred_element_type=f32) + b[0], 0.0)
        h = jnp.maximum(jnp.dot(h.astype(bf16), w2, preferred_element_type=f32) + b[1], 0.0)
        return jnp.dot(h.astype(bf16), w3, preferred_element_type=f32) + b[2]

    # ---- step 0: single-buffered incidence DMA, hidden behind the node encoder ----
    @pl.when(step == 0)
    def _init():
        cp_s = pltpu.make_async_copy(src_hbm, src_inc, dma_sem.at[0])
        cp_d = pltpu.make_async_copy(dst_hbm, dst_inc, dma_sem.at[1])
        cp_s.start()
        cp_d.start()
        nbv = ne_b_ref[...]                      # (5,128) f32: b1,b2,b3,gamma,beta
        y = mlp3(node_x_ref[...], ne_w1_ref[...], ne_w2_ref[...], ne_w3_ref[...], nbv)
        node_lat[...] = layer_norm(y, nbv[3], nbv[4])
        cp_s.wait()
        cp_d.wait()

    # ---- per-step setup: project node latents for the edge gathers once ----
    nl = node_lat[...]                           # [N,128] f32 (previous step's latents)
    nl_b = nl.astype(bf16)
    # single [N,128] x [128,256] matmul (fills a 256-wide MXU on v6e/v7x)
    nsd = jnp.dot(nl_b, ew1sd_ref[0], preferred_element_type=f32)
    ns_sc[...] = nsd[:, :LATENT].astype(bf16)
    nd_sc[...] = nsd[:, LATENT:].astype(bf16)
    agg_sc[...] = jnp.zeros_like(agg_sc)

    ebias = eb_ref[0]                            # (5,128) f32
    ee_bv = ee_b_ref[...]

    # ---- edge update, tiled over edge rows (bounds live [TE,128] temporaries) ----
    # TODO(synk): make the incidence block-sparse (scalar-prefetched nonzero node-tile
    # lists per edge tile) so the gathers/scatter skip zero blocks at production sizes.
    @pl.loop(0, n_e_tiles)
    def _edge_tile(ti):
        e0 = pl.multiple_of(ti * edge_tile, edge_tile)
        rows = pl.ds(e0, edge_tile)

        @pl.when(step == 0)                      # edge encoder, tile by tile
        def _encode():
            y = mlp3(edge_x_ref[rows, :], ee_w1_ref[...], ee_w2_ref[...],
                     ee_w3_ref[...], ee_bv)
            edge_lat[rows, :] = layer_norm(y, ee_bv[3], ee_bv[4])

        el = edge_lat[rows, :]                   # [TE,128] f32
        src_t = src_inc[rows, :]                 # [TE,N]   bf16 one-hot gather rows
        dst_t = dst_inc[rows, :]
        g = (jnp.dot(src_t, ns_sc[...], preferred_element_type=f32)
             + jnp.dot(dst_t, nd_sc[...], preferred_element_type=f32))
        h = jnp.dot(el.astype(bf16), ew1e_ref[0], preferred_element_type=f32) + g + ebias[0]
        h = jnp.maximum(h, 0.0)
        h = jnp.maximum(jnp.dot(h.astype(bf16), ew2_ref[0],
                                preferred_element_type=f32) + ebias[1], 0.0)
        y = jnp.dot(h.astype(bf16), ew3_ref[0], preferred_element_type=f32) + ebias[2]
        el_new = el + layer_norm(y, ebias[3], ebias[4])      # residual in f32
        edge_lat[rows, :] = el_new
        # scatter-sum (edge -> dst node): contract the edge dim of dst_t directly —
        # no transposed [N,E] incidence copy is ever stored or DMA'd.
        agg_sc[...] += lax.dot_general(
            dst_t, el_new.astype(bf16),
            dimension_numbers=(((0,), (0,)), ((), ())),
            preferred_element_type=f32)

    # ---- node update: single K=256 matmul on [node ‖ agg], residual ----
    nbias = nb_ref[0]                            # (5,128) f32
    x2 = jnp.concatenate([nl_b, agg_sc[...].astype(bf16)], axis=-1)   # [N,256] bf16
    y = mlp3(x2, nw1_ref[0], nw2_ref[0], nw3_ref[0], nbias)
    node_lat[...] = nl + layer_norm(y, nbias[3], nbias[4])

    # ---- last step: decoder (lane-dense 128-wide output, sliced in the wrapper) ----
    @pl.when(step == pl.num_programs(0) - 1)
    def _decode():
        out_ref[...] = mlp3(node_lat[...].astype(bf16),
                            dw1_ref[...], dw2_ref[...], dw3_ref[...], db_ref[...])


# ---------------- forward wrapper (one pallas_call) ----------------

def incompr_ns_forward(pp, node_x, edge_x, src_oh, dst_oh, *, n_nodes):
    n_pad = node_x.shape[0]
    e_pad = edge_x.shape[0]
    edge_tile = _edge_tile_size(e_pad)
    n_e_tiles = e_pad // edge_tile

    in_arrays = [
        node_x, edge_x, src_oh, dst_oh,
        pp['ne_w1'], pp['ne_w2'], pp['ne_w3'], pp['ne_b'],
        pp['ee_w1'], pp['ee_w2'], pp['ee_w3'], pp['ee_b'],
        pp['ew1e'], pp['ew1sd'], pp['ew2'], pp['ew3'], pp['eb'],
        pp['nw1'], pp['nw2'], pp['nw3'], pp['nb'],
        pp['dw1'], pp['dw2'], pp['dw3'], pp['db'],
    ]

    def const_spec(a):                   # same whole-array block every MP step
        ndim = a.ndim
        return pl.BlockSpec(tuple(a.shape), lambda s, _n=ndim: (0,) * _n)

    def step_spec(a):                    # select this MP step's weight slice
        ndim = a.ndim
        return pl.BlockSpec((1,) + tuple(a.shape[1:]),
                            lambda s, _n=ndim: (s,) + (0,) * (_n - 1))

    hbm_spec = pl.BlockSpec(memory_space=pl.ANY)   # stays in HBM; copied once, 1 buffer
    in_specs = ([const_spec(a) for a in in_arrays[:2]]
                + [hbm_spec, hbm_spec]
                + [const_spec(a) for a in in_arrays[4:12]]
                + [step_spec(a) for a in in_arrays[12:21]]
                + [const_spec(a) for a in in_arrays[21:]])

    # ---- VMEM budget derived from the actual resident footprint ----
    block_bytes = 0
    for idx, a in enumerate(in_arrays):
        if idx in (2, 3):                         # incidence stays in HBM
            continue
        nbytes = int(a.size) * np.dtype(a.dtype).itemsize
        if 12 <= idx <= 20:                       # per-step weight slices
            nbytes //= NUM_MP_STEPS
        block_bytes += 2 * nbytes                 # default double buffering
    scratch_bytes = (2 * e_pad * n_pad * 2                      # incidence (bf16, 1 copy)
                     + (2 * n_pad + e_pad) * LATENT * 4         # node_lat, agg, edge_lat
                     + 2 * n_pad * LATENT * 2)                  # ns/nd projections
    out_bytes = n_pad * LANE * 4
    temp_bytes = 8 * edge_tile * LATENT * 4 + 8 * n_pad * 2 * LATENT * 4
    footprint = block_bytes + scratch_bytes + out_bytes + temp_bytes
    try:
        vmem_cap = int(pltpu.get_tpu_info().vmem_capacity_bytes)
    except Exception:
        vmem_cap = 64 * 1024 * 1024               # v7x-safe fallback
    vmem_limit = min(max(int(1.25 * footprint), 32 * 1024 * 1024),
                     int(0.9 * vmem_cap))

    # advisory cost hint for XLA scheduling around the fused custom call
    N, E, L, T = n_pad, e_pad, LATENT, NUM_MP_STEPS
    per_step = (2 * N * L * (2 * L)               # src/dst node projections
                + 6 * E * N * L                   # two gathers + scatter
                + 6 * E * L * L                   # edge MLP
                + 2 * N * (2 * L) * L + 4 * N * L * L)   # node MLP
    flops = T * per_step + 6 * (N + E) * L * L + 6 * N * L * L
    bytes_accessed = int(sum(int(a.size) * np.dtype(a.dtype).itemsize for a in in_arrays)
                         + out_bytes)

    kernel = functools.partial(_fused_gnn_kernel,
                               edge_tile=edge_tile, n_e_tiles=n_e_tiles)
    out = pl.pallas_call(
        kernel,
        out_shape=jax.ShapeDtypeStruct((n_pad, LANE), jnp.float32),
        grid=(NUM_MP_STEPS,),
        in_specs=in_specs,
        out_specs=pl.BlockSpec((n_pad, LANE), lambda s: (0, 0)),
        scratch_shapes=[
            pltpu.VMEM((e_pad, n_pad), jnp.bfloat16),   # src incidence (single buffer)
            pltpu.VMEM((e_pad, n_pad), jnp.bfloat16),   # dst incidence (single buffer)
            pltpu.VMEM((n_pad, LATENT), jnp.float32),   # node latents
            pltpu.VMEM((e_pad, LATENT), jnp.float32),   # edge latents
            pltpu.VMEM((n_pad, LATENT), jnp.float32),   # per-step scatter aggregate
            pltpu.VMEM((n_pad, LATENT), jnp.bfloat16),  # projected src-node latents
            pltpu.VMEM((n_pad, LATENT), jnp.bfloat16),  # projected dst-node latents
            pltpu.SemaphoreType.DMA((2,)),
        ],
        compiler_params=pltpu.CompilerParams(
            dimension_semantics=("arbitrary",),
            vmem_limit_bytes=vmem_limit),
        cost_estimate=pl.CostEstimate(flops=int(flops),
                                      transcendentals=int(T * (N + E)),
                                      bytes_accessed=bytes_accessed),
    )(*in_arrays)
    # TODO(synk): on v7x, split the edge-tile loop and node rows across the two
    # TensorCores (core_parallel / pl.core_map) and combine partial aggregates.
    return out[:n_nodes, :OUT_DIM]


# ---------------- deterministic parameter init ----------------

def init_mlp(key, din, dout, layer_norm=True):
    ks = jax.random.split(key, 3)
    p = {
        'w1': jax.random.normal(ks[0], (din, LATENT), jnp.float32) / np.sqrt(din),
        'b1': jnp.zeros((LATENT,), jnp.float32),
        'w2': jax.random.normal(ks[1], (LATENT, LATENT), jnp.float32) / np.sqrt(LATENT),
        'b2': jnp.zeros((LATENT,), jnp.float32),
        'w3': jax.random.normal(ks[2], (LATENT, dout), jnp.float32) / np.sqrt(LATENT),
        'b3': jnp.zeros((dout,), jnp.float32),
    }
    if layer_norm:
        p['gamma'] = jnp.ones((dout,), jnp.float32)
        p['beta'] = jnp.zeros((dout,), jnp.float32)
    return p


def init_params(key):
    keys = jax.random.split(key, 3 + 2 * NUM_MP_STEPS)
    params = {
        'node_encoder': init_mlp(keys[0], IN_DIM, LATENT),
        'edge_encoder': init_mlp(keys[1], EDGE_IN_DIM, LATENT),
        'decoder': init_mlp(keys[2], LATENT, OUT_DIM, layer_norm=False),
        'edge_blocks': [init_mlp(keys[3 + 2 * i], 3 * LATENT, LATENT)
                        for i in range(NUM_MP_STEPS)],
        'node_blocks': [init_mlp(keys[4 + 2 * i], 2 * LATENT, LATENT)
                        for i in range(NUM_MP_STEPS)],
    }
    # InvertableNorm running-stat equivalents: deterministic (mean, std) pairs.
    params['node_norm'] = (0.05 * jnp.arange(IN_DIM, dtype=jnp.float32),
                           1.0 + 0.1 * jnp.arange(IN_DIM, dtype=jnp.float32))
    params['edge_norm'] = (0.02 * jnp.arange(EDGE_IN_DIM, dtype=jnp.float32),
                           1.0 + 0.1 * jnp.arange(EDGE_IN_DIM, dtype=jnp.float32))
    params['out_norm'] = (0.01 * jnp.arange(OUT_DIM, dtype=jnp.float32),
                          1.0 + 0.1 * jnp.arange(OUT_DIM, dtype=jnp.float32))
    return params


def prepare_params(params, unnorm=True):
    """Fold input/output normalizers into the first/last linear layers, split/pack the
    concat-input w1 matrices (256-wide MXU shapes), pad feature dims to 128 lanes, stack
    per-step weights along a leading [NUM_MP_STEPS] axis, cast MXU operands to bf16."""
    f32, bf16 = jnp.float32, jnp.bfloat16

    def fold_norm_into_w1(w1, b1, mean, std, k_pad):
        w = w1 / std[:, None]                       # (x-mean)/std @ w1 == x @ w - (mean/std)@w1
        b = b1 - (mean / std) @ w1
        wp = jnp.zeros((k_pad, w.shape[1]), f32).at[:w.shape[0], :].set(w)
        return wp, b

    ne, ee, dec = params['node_encoder'], params['edge_encoder'], params['decoder']
    ne_w1, ne_b1 = fold_norm_into_w1(ne['w1'], ne['b1'], *params['node_norm'], LANE)
    ee_w1, ee_b1 = fold_norm_into_w1(ee['w1'], ee['b1'], *params['edge_norm'], LANE)

    dw3, db3 = dec['w3'], dec['b3']
    if unnorm:                                       # out_norm.inverse: y*std + mean
        om, ostd = params['out_norm']
        dw3 = dw3 * ostd[None, :]
        db3 = db3 * ostd + om
    dw3p = jnp.zeros((LATENT, LANE), f32).at[:, :OUT_DIM].set(dw3)
    db3p = jnp.zeros((LANE,), f32).at[:OUT_DIM].set(db3)

    eblk, nblk, L = params['edge_blocks'], params['node_blocks'], LATENT
    return {
        'ne_w1': ne_w1.astype(bf16), 'ne_w2': ne['w2'].astype(bf16), 'ne_w3': ne['w3'].astype(bf16),
        'ne_b': jnp.stack([ne_b1, ne['b2'], ne['b3'], ne['gamma'], ne['beta']]).astype(f32),
        'ee_w1': ee_w1.astype(bf16), 'ee_w2': ee['w2'].astype(bf16), 'ee_w3': ee['w3'].astype(bf16),
        'ee_b': jnp.stack([ee_b1, ee['b2'], ee['b3'], ee['gamma'], ee['beta']]).astype(f32),
        'ew1e': jnp.stack([p['w1'][:L] for p in eblk]).astype(bf16),
        # src/dst halves of w1 packed side by side -> one [128,256] matmul per step
        'ew1sd': jnp.stack([jnp.concatenate([p['w1'][L:2 * L], p['w1'][2 * L:]], axis=-1)
                            for p in eblk]).astype(bf16),
        'ew2': jnp.stack([p['w2'] for p in eblk]).astype(bf16),
        'ew3': jnp.stack([p['w3'] for p in eblk]).astype(bf16),
        'eb': jnp.stack([jnp.stack([p['b1'], p['b2'], p['b3'], p['gamma'], p['beta']])
                         for p in eblk]).astype(f32),
        # node-block w1 kept stacked [256,128]: one K=256 matmul on [node ‖ agg]
        'nw1': jnp.stack([p['w1'] for p in nblk]).astype(bf16),
        'nw2': jnp.stack([p['w2'] for p in nblk]).astype(bf16),
        'nw3': jnp.stack([p['w3'] for p in nblk]).astype(bf16),
        'nb': jnp.stack([jnp.stack([p['b1'], p['b2'], p['b3'], p['gamma'], p['beta']])
                         for p in nblk]).astype(f32),
        'dw1': dec['w1'].astype(bf16), 'dw2': dec['w2'].astype(bf16), 'dw3': dw3p.astype(bf16),
        'db': jnp.stack([dec['b1'], dec['b2'], db3p]).astype(f32),
    }


# ---------------- graph preprocessing (host-side, done once) ----------------

def cells_to_edges(cells):
    """Triangles -> unique undirected edges, emitted in both directions (numpy)."""
    e = np.concatenate([cells[:, [0, 1]], cells[:, [1, 2]], cells[:, [2, 0]]], axis=0)
    e = np.sort(e, axis=1)
    e = np.unique(e, axis=0)
    srcs = np.concatenate([e[:, 0], e[:, 1]]).astype(np.int32)
    dsts = np.concatenate([e[:, 1], e[:, 0]]).astype(np.int32)
    return srcs, dsts


def prepare_graph(mesh_pos_np, cells_np, n_nodes):
    """Build bf16 gather incidence matrices and padded edge features once."""
    srcs, dsts = cells_to_edges(cells_np)
    n_edges = srcs.shape[0]
    n_pad = _round_up(n_nodes, LANE)
    e_pad = _round_up(n_edges, LANE)

    src_oh = np.zeros((e_pad, n_pad), np.float32)
    src_oh[np.arange(n_edges), srcs] = 1.0
    dst_oh = np.zeros((e_pad, n_pad), np.float32)
    dst_oh[np.arange(n_edges), dsts] = 1.0
    # NOTE: no transposed scatter matrix — the kernel contracts dst_oh's edge dim.

    rel = mesh_pos_np[srcs] - mesh_pos_np[dsts]
    ef = np.concatenate([rel, np.linalg.norm(rel, axis=-1, keepdims=True)], axis=-1)
    edge_x = np.zeros((e_pad, LANE), np.float32)
    edge_x[:n_edges, :EDGE_IN_DIM] = ef

    return (jnp.asarray(src_oh, jnp.bfloat16), jnp.asarray(dst_oh, jnp.bfloat16),
            jnp.asarray(edge_x, jnp.bfloat16), n_pad, e_pad)


def prepare_node_features(velocity, node_type, n_pad):
    n = velocity.shape[0]
    oh = jax.nn.one_hot(node_type[:, 0], NODE_TYPE_SIZE, dtype=jnp.float32)
    nf = jnp.concatenate([velocity, oh], axis=-1)                # [n, 11]
    node_x = jnp.zeros((n_pad, LANE), jnp.float32).at[:n, :IN_DIM].set(nf)
    return node_x.astype(jnp.bfloat16)


# ---------------- demo ----------------

if __name__ == "__main__":
    key = jax.random.PRNGKey(0)

    # small structured triangular mesh: 4x4 grid of nodes, 18 triangle cells
    nx, ny = 4, 4
    n_nodes = nx * ny
    mesh_pos_np = np.stack(
        np.meshgrid(np.arange(nx, dtype=np.float32),
                    np.arange(ny, dtype=np.float32), indexing='ij'),
        axis=-1).reshape(-1, 2) * 0.1
    tris = []
    for i in range(nx - 1):
        for j in range(ny - 1):
            a = i * ny + j
            b = (i + 1) * ny + j
            c = (i + 1) * ny + (j + 1)
            d = i * ny + (j + 1)
            tris.append([a, b, c])
            tris.append([a, c, d])
    cells = np.asarray(tris, dtype=np.int32)          # [18, 3] -> 66 directed edges

    k1, k2, k3 = jax.random.split(key, 3)
    velocity = jax.random.normal(k1, (n_nodes, 2), jnp.float32)              # [16, 2]
    node_type = jax.random.randint(k2, (n_nodes, 1), 0, 7, dtype=jnp.int32)  # [16, 1]

    params = init_params(k3)
    pp = prepare_params(params, unnorm=True)
    src_oh, dst_oh, edge_x, n_pad, e_pad = prepare_graph(mesh_pos_np, cells, n_nodes)
    node_x = prepare_node_features(velocity, node_type, n_pad)

    fwd = jax.jit(incompr_ns_forward, static_argnames=('n_nodes',))
    out = fwd(pp, node_x, edge_x, src_oh, dst_oh, n_nodes=n_nodes)
    out = jax.block_until_ready(out)

    assert out.shape == (n_nodes, OUT_DIM)
    assert bool(jnp.all(jnp.isfinite(out)))
    print("KERNEL_OK")
</pallas_src>

<mosaic_0001>
module attributes {stable_mosaic.version = 11 : i64} {
  func.func @_fused_gnn_kernel(%arg0: i32, %arg1: memref<128x128xbf16, #tpu.memory_space<vmem>>, %arg2: memref<128x128xbf16, #tpu.memory_space<vmem>>, %arg3: memref<128x128xbf16, #tpu.memory_space<any>>, %arg4: memref<128x128xbf16, #tpu.memory_space<any>>, %arg5: memref<128x128xbf16, #tpu.memory_space<vmem>>, %arg6: memref<128x128xbf16, #tpu.memory_space<vmem>>, %arg7: memref<128x128xbf16, #tpu.memory_space<vmem>>, %arg8: memref<5x128xf32, #tpu.memory_space<vmem>>, %arg9: memref<128x128xbf16, #tpu.memory_space<vmem>>, %arg10: memref<128x128xbf16, #tpu.memory_space<vmem>>, %arg11: memref<128x128xbf16, #tpu.memory_space<vmem>>, %arg12: memref<5x128xf32, #tpu.memory_space<vmem>>, %arg13: memref<1x128x128xbf16, #tpu.memory_space<vmem>>, %arg14: memref<1x128x256xbf16, #tpu.memory_space<vmem>>, %arg15: memref<1x128x128xbf16, #tpu.memory_space<vmem>>, %arg16: memref<1x128x128xbf16, #tpu.memory_space<vmem>>, %arg17: memref<1x5x128xf32, #tpu.memory_space<vmem>>, %arg18: memref<1x256x128xbf16, #tpu.memory_space<vmem>>, %arg19: memref<1x128x128xbf16, #tpu.memory_space<vmem>>, %arg20: memref<1x128x128xbf16, #tpu.memory_space<vmem>>, %arg21: memref<1x5x128xf32, #tpu.memory_space<vmem>>, %arg22: memref<128x128xbf16, #tpu.memory_space<vmem>>, %arg23: memref<128x128xbf16, #tpu.memory_space<vmem>>, %arg24: memref<128x128xbf16, #tpu.memory_space<vmem>>, %arg25: memref<3x128xf32, #tpu.memory_space<vmem>>, %arg26: memref<128x128xf32, #tpu.memory_space<vmem>>, %arg27: memref<128x128xbf16, #tpu.memory_space<vmem>>, %arg28: memref<128x128xbf16, #tpu.memory_space<vmem>>, %arg29: memref<128x128xf32, #tpu.memory_space<vmem>>, %arg30: memref<128x128xf32, #tpu.memory_space<vmem>>, %arg31: memref<128x128xf32, #tpu.memory_space<vmem>>, %arg32: memref<128x128xbf16, #tpu.memory_space<vmem>>, %arg33: memref<128x128xbf16, #tpu.memory_space<vmem>>, %arg34: memref<2x!tpu.dma_semaphore, #tpu.memory_space<semaphore_mem>>) attributes {dimension_semantics = [#tpu.dimension_semantics<arbitrary>], iteration_bounds = array<i64: 15>, scalar_prefetch = 0 : i64, scratch_operands = 8 : i64, tpu.core_type = #tpu.core_type<tc>, window_params = [{pipeline_mode = #tpu.pipeline_mode<synchronous>, transform_indices = @transform_0, window_bounds = array<i64: 128, 128>}, {pipeline_mode = #tpu.pipeline_mode<synchronous>, transform_indices = @transform_1, window_bounds = array<i64: 128, 128>}, {}, {}, {pipeline_mode = #tpu.pipeline_mode<synchronous>, transform_indices = @transform_4, window_bounds = array<i64: 128, 128>}, {pipeline_mode = #tpu.pipeline_mode<synchronous>, transform_indices = @transform_5, window_bounds = array<i64: 128, 128>}, {pipeline_mode = #tpu.pipeline_mode<synchronous>, transform_indices = @transform_6, window_bounds = array<i64: 128, 128>}, {pipeline_mode = #tpu.pipeline_mode<synchronous>, transform_indices = @transform_7, window_bounds = array<i64: 5, 128>}, {pipeline_mode = #tpu.pipeline_mode<synchronous>, transform_indices = @transform_8, window_bounds = array<i64: 128, 128>}, {pipeline_mode = #tpu.pipeline_mode<synchronous>, transform_indices = @transform_9, window_bounds = array<i64: 128, 128>}, {pipeline_mode = #tpu.pipeline_mode<synchronous>, transform_indices = @transform_10, window_bounds = array<i64: 128, 128>}, {pipeline_mode = #tpu.pipeline_mode<synchronous>, transform_indices = @transform_11, window_bounds = array<i64: 5, 128>}, {transform_indices = @transform_12, window_bounds = array<i64: 1, 128, 128>}, {transform_indices = @transform_13, window_bounds = array<i64: 1, 128, 256>}, {transform_indices = @transform_14, window_bounds = array<i64: 1, 128, 128>}, {transform_indices = @transform_15, window_bounds = array<i64: 1, 128, 128>}, {transform_indices = @transform_16, window_bounds = array<i64: 1, 5, 128>}, {transform_indices = @transform_17, window_bounds = array<i64: 1, 256, 128>}, {transform_indices = @transform_18, window_bounds = array<i64: 1, 128, 128>}, {transform_indices = @transform_19, window_bounds = array<i64: 1, 128, 128>}, {transform_indices = @transform_20, window_bounds = array<i64: 1, 5, 128>}, {pipeline_mode = #tpu.pipeline_mode<synchronous>, transform_indices = @transform_21, window_bounds = array<i64: 128, 128>}, {pipeline_mode = #tpu.pipeline_mode<synchronous>, transform_indices = @transform_22, window_bounds = array<i64: 128, 128>}, {pipeline_mode = #tpu.pipeline_mode<synchronous>, transform_indices = @transform_23, window_bounds = array<i64: 128, 128>}, {pipeline_mode = #tpu.pipeline_mode<synchronous>, transform_indices = @transform_24, window_bounds = array<i64: 3, 128>}, {pipeline_mode = #tpu.pipeline_mode<synchronous>, transform_indices = @transform_25, window_bounds = array<i64: 128, 128>}]} {
    %c0_i32 = arith.constant 0 : i32
    %0 = arith.cmpi eq, %arg0, %c0_i32 : i32
    %1 = arith.extui %0 : i1 to i32
    %c0_i32_0 = arith.constant 0 : i32
    %2 = arith.cmpi ne, %1, %c0_i32_0 : i32
    scf.if %2 {
      %c0_i32_83 = arith.constant 0 : i32
      %173 = tpu.memref_slice %arg34[%c0_i32_83] : memref<2x!tpu.dma_semaphore, #tpu.memory_space<semaphore_mem>> -> memref<1x!tpu.dma_semaphore, #tpu.memory_space<semaphore_mem>>
      %174 = tpu.memref_squeeze %173 : memref<1x!tpu.dma_semaphore, #tpu.memory_space<semaphore_mem>> -> memref<!tpu.dma_semaphore, #tpu.memory_space<semaphore_mem>>
      tpu.enqueue_dma source(%arg3 : memref<128x128xbf16, #tpu.memory_space<any>>) target(%arg27 : memref<128x128xbf16, #tpu.memory_space<vmem>>) target_semaphore(%174 : memref<!tpu.dma_semaphore, #tpu.memory_space<semaphore_mem>>)
      %c1_i32_84 = arith.constant 1 : i32
      %175 = tpu.memref_slice %arg34[%c1_i32_84] : memref<2x!tpu.dma_semaphore, #tpu.memory_space<semaphore_mem>> -> memref<1x!tpu.dma_semaphore, #tpu.memory_space<semaphore_mem>>
      %176 = tpu.memref_squeeze %175 : memref<1x!tpu.dma_semaphore, #tpu.memory_space<semaphore_mem>> -> memref<!tpu.dma_semaphore, #tpu.memory_space<semaphore_mem>>
      tpu.enqueue_dma source(%arg4 : memref<128x128xbf16, #tpu.memory_space<any>>) target(%arg28 : memref<128x128xbf16, #tpu.memory_space<vmem>>) target_semaphore(%176 : memref<!tpu.dma_semaphore, #tpu.memory_space<semaphore_mem>>)
      %c0_85 = arith.constant 0 : index
      %c0_86 = arith.constant 0 : index
      %177 = vector.load %arg8[%c0_85, %c0_86] : memref<5x128xf32, #tpu.memory_space<vmem>>, vector<5x128xf32>
      %c0_87 = arith.constant 0 : index
      %c0_88 = arith.constant 0 : index
      %178 = vector.load %arg1[%c0_87, %c0_88] : memref<128x128xbf16, #tpu.memory_space<vmem>>, vector<128x128xbf16>
      %c0_89 = arith.constant 0 : index
      %c0_90 = arith.constant 0 : index
      %179 = vector.load %arg5[%c0_89, %c0_90] : memref<128x128xbf16, #tpu.memory_space<vmem>>, vector<128x128xbf16>
      %c0_91 = arith.constant 0 : index
      %c0_92 = arith.constant 0 : index
      %180 = vector.load %arg6[%c0_91, %c0_92] : memref<128x128xbf16, #tpu.memory_space<vmem>>, vector<128x128xbf16>
      %c0_93 = arith.constant 0 : index
      %c0_94 = arith.constant 0 : index
      %181 = vector.load %arg7[%c0_93, %c0_94] : memref<128x128xbf16, #tpu.memory_space<vmem>>, vector<128x128xbf16>
      %cst_95 = arith.constant dense<0.000000e+00> : vector<128x128xf32>
      %182 = tpu.matmul %178, %179, %cst_95 {dimension_numbers = #tpu.dot_dimension_numbers<[1], [0], [0], [1], [0, 0, 1, 1], [], []>} : vector<128x128xbf16>, vector<128x128xbf16>, vector<128x128xf32> -> vector<128x128xf32>
      %183 = vector.extract_strided_slice %177 {offsets = [0, 0], sizes = [1, 128], strides = [1, 1]} : vector<5x128xf32> to vector<1x128xf32>
      %184 = vector.shape_cast %183 : vector<1x128xf32> to vector<128xf32>
      %185 = vector.shape_cast %184 : vector<128xf32> to vector<1x128xf32>
      %186 = vector.broadcast %185 : vector<1x128xf32> to vector<128x128xf32>
      %187 = arith.addf %182, %186 : vector<128x128xf32>
      %cst_96 = arith.constant 0.000000e+00 : f32
      %188 = vector.broadcast %cst_96 : f32 to vector<128x128xf32>
      %189 = arith.maximumf %187, %188 : vector<128x128xf32>
      %190 = arith.truncf %189 : vector<128x128xf32> to vector<128x128xbf16>
      %cst_97 = arith.constant dense<0.000000e+00> : vector<128x128xf32>
      %191 = tpu.matmul %190, %180, %cst_97 {dimension_numbers = #tpu.dot_dimension_numbers<[1], [0], [0], [1], [0, 0, 1, 1], [], []>} : vector<128x128xbf16>, vector<128x128xbf16>, vector<128x128xf32> -> vector<128x128xf32>
      %192 = vector.extract_strided_slice %177 {offsets = [1, 0], sizes = [1, 128], strides = [1, 1]} : vector<5x128xf32> to vector<1x128xf32>
      %193 = vector.shape_cast %192 : vector<1x128xf32> to vector<128xf32>
      %194 = vector.shape_cast %193 : vector<128xf32> to vector<1x128xf32>
      %195 = vector.broadcast %194 : vector<1x128xf32> to vector<128x128xf32>
      %196 = arith.addf %191, %195 : vector<128x128xf32>
      %cst_98 = arith.constant 0.000000e+00 : f32
      %197 = vector.broadcast %cst_98 : f32 to vector<128x128xf32>
      %198 = arith.maximumf %196, %197 : vector<128x128xf32>
      %199 = arith.truncf %198 : vector<128x128xf32> to vector<128x128xbf16>
      %cst_99 = arith.constant dense<0.000000e+00> : vector<128x128xf32>
      %200 = tpu.matmul %199, %181, %cst_99 {dimension_numbers = #tpu.dot_dimension_numbers<[1], [0], [0], [1], [0, 0, 1, 1], [], []>} : vector<128x128xbf16>, vector<128x128xbf16>, vector<128x128xf32> -> vector<128x128xf32>
      %201 = vector.extract_strided_slice %177 {offsets = [2, 0], sizes = [1, 128], strides = [1, 1]} : vector<5x128xf32> to vector<1x128xf32>
      %202 = vector.shape_cast %201 : vector<1x128xf32> to vector<128xf32>
      %203 = vector.shape_cast %202 : vector<128xf32> to vector<1x128xf32>
      %204 = vector.broadcast %203 : vector<1x128xf32> to vector<128x128xf32>
      %205 = arith.addf %200, %204 : vector<128x128xf32>
      %206 = vector.extract_strided_slice %177 {offsets = [3, 0], sizes = [1, 128], strides = [1, 1]} : vector<5x128xf32> to vector<1x128xf32>
      %207 = vector.shape_cast %206 : vector<1x128xf32> to vector<128xf32>
      %208 = vector.extract_strided_slice %177 {offsets = [4, 0], sizes = [1, 128], strides = [1, 1]} : vector<5x128xf32> to vector<1x128xf32>
      %209 = vector.shape_cast %208 : vector<1x128xf32> to vector<128xf32>
      %cst_100 = arith.constant dense<0.000000e+00> : vector<128xf32>
      %210 = vector.multi_reduction <add>, %205, %cst_100 [1] : vector<128x128xf32> to vector<128xf32>
      %211 = vector.shape_cast %210 : vector<128xf32> to vector<128x1xf32>
      %cst_101 = arith.constant 1.280000e+02 : f32
      %212 = vector.broadcast %cst_101 : f32 to vector<128x1xf32>
      %213 = arith.divf %211, %212 : vector<128x1xf32>
      %214 = vector.broadcast %213 : vector<128x1xf32> to vector<128x128xf32>
      %215 = arith.subf %205, %214 : vector<128x128xf32>
      %216 = arith.mulf %215, %215 : vector<128x128xf32>
      %cst_102 = arith.constant dense<0.000000e+00> : vector<128xf32>
      %217 = vector.multi_reduction <add>, %216, %cst_102 [1] : vector<128x128xf32> to vector<128xf32>
      %218 = vector.shape_cast %217 : vector<128xf32> to vector<128x1xf32>
      %cst_103 = arith.constant 1.280000e+02 : f32
      %219 = vector.broadcast %cst_103 : f32 to vector<128x1xf32>
      %220 = arith.divf %218, %219 : vector<128x1xf32>
      %221 = vector.broadcast %213 : vector<128x1xf32> to vector<128x128xf32>
      %222 = arith.subf %205, %221 : vector<128x128xf32>
      %cst_104 = arith.constant 9.99999974E-6 : f32
      %223 = vector.broadcast %cst_104 : f32 to vector<128x1xf32>
      %224 = arith.addf %220, %223 : vector<128x1xf32>
      %225 = math.rsqrt %224 : vector<128x1xf32>
      %226 = vector.broadcast %225 : vector<128x1xf32> to vector<128x128xf32>
      %227 = arith.mulf %222, %226 : vector<128x128xf32>
      %228 = vector.shape_cast %207 : vector<128xf32> to vector<1x128xf32>
      %229 = vector.broadcast %228 : vector<1x128xf32> to vector<128x128xf32>
      %230 = arith.mulf %227, %229 : vector<128x128xf32>
      %231 = vector.shape_cast %209 : vector<128xf32> to vector<1x128xf32>
      %232 = vector.broadcast %231 : vector<1x128xf32> to vector<128x128xf32>
      %233 = arith.addf %230, %232 : vector<128x128xf32>
      %c0_105 = arith.constant 0 : index
      %c0_106 = arith.constant 0 : index
      %234 = vector.load %arg29[%c0_105, %c0_106] : memref<128x128xf32, #tpu.memory_space<vmem>>, vector<128x128xf32>
      tpu.vector_store %arg29[%c0_105, %c0_106], %233 {strides = array<i32>} : memref<128x128xf32, #tpu.memory_space<vmem>>, vector<128x128xf32>,
      %c0_i32_107 = arith.constant 0 : i32
      %235 = tpu.memref_slice %arg34[%c0_i32_107] : memref<2x!tpu.dma_semaphore, #tpu.memory_space<semaphore_mem>> -> memref<1x!tpu.dma_semaphore, #tpu.memory_space<semaphore_mem>>
      %236 = tpu.memref_squeeze %235 : memref<1x!tpu.dma_semaphore, #tpu.memory_space<semaphore_mem>> -> memref<!tpu.dma_semaphore, #tpu.memory_space<semaphore_mem>>
      tpu.wait_dma2 semaphore(%236 : memref<!tpu.dma_semaphore, #tpu.memory_space<semaphore_mem>>) src(%arg3 : memref<128x128xbf16, #tpu.memory_space<any>>) dst(%arg27 : memref<128x128xbf16, #tpu.memory_space<vmem>>)
      %c1_i32_108 = arith.constant 1 : i32
      %237 = tpu.memref_slice %arg34[%c1_i32_108] : memref<2x!tpu.dma_semaphore, #tpu.memory_space<semaphore_mem>> -> memref<1x!tpu.dma_semaphore, #tpu.memory_space<semaphore_mem>>
      %238 = tpu.memref_squeeze %237 : memref<1x!tpu.dma_semaphore, #tpu.memory_space<semaphore_mem>> -> memref<!tpu.dma_semaphore, #tpu.memory_space<semaphore_mem>>
      tpu.wait_dma2 semaphore(%238 : memref<!tpu.dma_semaphore, #tpu.memory_space<semaphore_mem>>) src(%arg4 : memref<128x128xbf16, #tpu.memory_space<any>>) dst(%arg28 : memref<128x128xbf16, #tpu.memory_space<vmem>>)
    } else {
    }
    %c0 = arith.constant 0 : index
    %c0_1 = arith.constant 0 : index
    %3 = vector.load %arg29[%c0, %c0_1] : memref<128x128xf32, #tpu.memory_space<vmem>>, vector<128x128xf32>
    %4 = arith.truncf %3 : vector<128x128xf32> to vector<128x128xbf16>
    %c0_2 = arith.constant 0 : index
    %c0_3 = arith.constant 0 : index
    %c0_4 = arith.constant 0 : index
    %5 = vector.load %arg14[%c0_2, %c0_3, %c0_4] : memref<1x128x256xbf16, #tpu.memory_space<vmem>>, vector<1x128x256xbf16>
    %6 = vector.shape_cast %5 : vector<1x128x256xbf16> to vector<128x256xbf16>
    %cst = arith.constant dense<0.000000e+00> : vector<128x256xf32>
    %7 = tpu.matmul %4, %6, %cst {dimension_numbers = #tpu.dot_dimension_numbers<[1], [0], [0], [1], [0, 0, 1, 1], [], []>} : vector<128x128xbf16>, vector<128x256xbf16>, vector<128x256xf32> -> vector<128x256xf32>
    %8 = vector.extract_strided_slice %7 {offsets = [0, 0], sizes = [128, 128], strides = [1, 1]} : vector<128x256xf32> to vector<128x128xf32>
    %9 = arith.truncf %8 : vector<128x128xf32> to vector<128x128xbf16>
    %c0_5 = arith.constant 0 : index
    %c0_6 = arith.constant 0 : index
    %10 = vector.load %arg32[%c0_5, %c0_6] : memref<128x128xbf16, #tpu.memory_space<vmem>>, vector<128x128xbf16>
    tpu.vector_store %arg32[%c0_5, %c0_6], %9 {strides = array<i32>} : memref<128x128xbf16, #tpu.memory_space<vmem>>, vector<128x128xbf16>,
    %11 = vector.extract_strided_slice %7 {offsets = [0, 128], sizes = [128, 128], strides = [1, 1]} : vector<128x256xf32> to vector<128x128xf32>
    %12 = arith.truncf %11 : vector<128x128xf32> to vector<128x128xbf16>
    %c0_7 = arith.constant 0 : index
    %c0_8 = arith.constant 0 : index
    %13 = vector.load %arg33[%c0_7, %c0_8] : memref<128x128xbf16, #tpu.memory_space<vmem>>, vector<128x128xbf16>
    tpu.vector_store %arg33[%c0_7, %c0_8], %12 {strides = array<i32>} : memref<128x128xbf16, #tpu.memory_space<vmem>>, vector<128x128xbf16>,
    %cst_9 = arith.constant 0.000000e+00 : f32
    %14 = vector.broadcast %cst_9 : f32 to vector<128x128xf32>
    %c0_10 = arith.constant 0 : index
    %c0_11 = arith.constant 0 : index
    %15 = vector.load %arg31[%c0_10, %c0_11] : memref<128x128xf32, #tpu.memory_space<vmem>>, vector<128x128xf32>
    tpu.vector_store %arg31[%c0_10, %c0_11], %14 {strides = array<i32>} : memref<128x128xf32, #tpu.memory_space<vmem>>, vector<128x128xf32>,
    %c0_12 = arith.constant 0 : index
    %c0_13 = arith.constant 0 : index
    %c0_14 = arith.constant 0 : index
    %16 = vector.load %arg17[%c0_12, %c0_13, %c0_14] : memref<1x5x128xf32, #tpu.memory_space<vmem>>, vector<1x5x128xf32>
    %17 = vector.shape_cast %16 : vector<1x5x128xf32> to vector<5x128xf32>
    %c0_15 = arith.constant 0 : index
    %c0_16 = arith.constant 0 : index
    %18 = vector.load %arg12[%c0_15, %c0_16] : memref<5x128xf32, #tpu.memory_space<vmem>>, vector<5x128xf32>
    %c0_i32_17 = arith.constant 0 : i32
    %c1_i32 = arith.constant 1 : i32
    %19 = arith.muli %c0_i32_17, %c1_i32 : i32
    %c0_i32_18 = arith.constant 0 : i32
    %20 = arith.addi %c0_i32_18, %19 : i32
    %c128_i32 = arith.constant 128 : i32
    %21 = arith.muli %20, %c128_i32 : i32
    %22 = tpu.assume_multiple %21, 128 : i32
    %c0_i32_19 = arith.constant 0 : i32
    %23 = arith.cmpi eq, %arg0, %c0_i32_19 : i32
    %24 = arith.extui %23 : i1 to i32
    %c0_i32_20 = arith.constant 0 : i32
    %25 = arith.cmpi ne, %24, %c0_i32_20 : i32
    scf.if %25 {
      %173 = arith.index_cast %22 : i32 to index
      %c0_83 = arith.constant 0 : index
      %174 = vector.load %arg2[%173, %c0_83] : memref<128x128xbf16, #tpu.memory_space<vmem>>, vector<128x128xbf16>
      %c0_84 = arith.constant 0 : index
      %c0_85 = arith.constant 0 : index
      %175 = vector.load %arg9[%c0_84, %c0_85] : memref<128x128xbf16, #tpu.memory_space<vmem>>, vector<128x128xbf16>
      %c0_86 = arith.constant 0 : index
      %c0_87 = arith.constant 0 : index
      %176 = vector.load %arg10[%c0_86, %c0_87] : memref<128x128xbf16, #tpu.memory_space<vmem>>, vector<128x128xbf16>
      %c0_88 = arith.constant 0 : index
      %c0_89 = arith.constant 0 : index
      %177 = vector.load %arg11[%c0_88, %c0_89] : memref<128x128xbf16, #tpu.memory_space<vmem>>, vector<128x128xbf16>
      %cst_90 = arith.constant dense<0.000000e+00> : vector<128x128xf32>
      %178 = tpu.matmul %174, %175, %cst_90 {dimension_numbers = #tpu.dot_dimension_numbers<[1], [0], [0], [1], [0, 0, 1, 1], [], []>} : vector<128x128xbf16>, vector<128x128xbf16>, vector<128x128xf32> -> vector<128x128xf32>
      %179 = vector.extract_strided_slice %18 {offsets = [0, 0], sizes = [1, 128], strides = [1, 1]} : vector<5x128xf32> to vector<1x128xf32>
      %180 = vector.shape_cast %179 : vector<1x128xf32> to vector<128xf32>
      %181 = vector.shape_cast %180 : vector<128xf32> to vector<1x128xf32>
      %182 = vector.broadcast %181 : vector<1x128xf32> to vector<128x128xf32>
      %183 = arith.addf %178, %182 : vector<128x128xf32>
      %cst_91 = arith.constant 0.000000e+00 : f32
      %184 = vector.broadcast %cst_91 : f32 to vector<128x128xf32>
      %185 = arith.maximumf %183, %184 : vector<128x128xf32>
      %186 = arith.truncf %185 : vector<128x128xf32> to vector<128x128xbf16>
      %cst_92 = arith.constant dense<0.000000e+00> : vector<128x128xf32>
      %187 = tpu.matmul %186, %176, %cst_92 {dimension_numbers = #tpu.dot_dimension_numbers<[1], [0], [0], [1], [0, 0, 1, 1], [], []>} : vector<128x128xbf16>, vector<128x128xbf16>, vector<128x128xf32> -> vector<128x128xf32>
      %188 = vector.extract_strided_slice %18 {offsets = [1, 0], sizes = [1, 128], strides = [1, 1]} : vector<5x128xf32> to vector<1x128xf32>
      %189 = vector.shape_cast %188 : vector<1x128xf32> to vector<128xf32>
      %190 = vector.shape_cast %189 : vector<128xf32> to vector<1x128xf32>
      %191 = vector.broadcast %190 : vector<1x128xf32> to vector<128x128xf32>
      %192 = arith.addf %187, %191 : vector<128x128xf32>
      %cst_93 = arith.constant 0.000000e+00 : f32
      %193 = vector.broadcast %cst_93 : f32 to vector<128x128xf32>
      %194 = arith.maximumf %192, %193 : vector<128x128xf32>
      %195 = arith.truncf %194 : vector<128x128xf32> to vector<128x128xbf16>
      %cst_94 = arith.constant dense<0.000000e+00> : vector<128x128xf32>
      %196 = tpu.matmul %195, %177, %cst_94 {dimension_numbers = #tpu.dot_dimension_numbers<[1], [0], [0], [1], [0, 0, 1, 1], [], []>} : vector<128x128xbf16>, vector<128x128xbf16>, vector<128x128xf32> -> vector<128x128xf32>
      %197 = vector.extract_strided_slice %18 {offsets = [2, 0], sizes = [1, 128], strides = [1, 1]} : vector<5x128xf32> to vector<1x128xf32>
      %198 = vector.shape_cast %197 : vector<1x128xf32> to vector<128xf32>
      %199 = vector.shape_cast %198 : vector<128xf32> to vector<1x128xf32>
      %200 = vector.broadcast %199 : vector<1x128xf32> to vector<128x128xf32>
      %201 = arith.addf %196, %200 : vector<128x128xf32>
      %202 = vector.extract_strided_slice %18 {offsets = [3, 0], sizes = [1, 128], strides = [1, 1]} : vector<5x128xf32> to vector<1x128xf32>
      %203 = vector.shape_cast %202 : vector<1x128xf32> to vector<128xf32>
      %204 = vector.extract_strided_slice %18 {offsets = [4, 0], sizes = [1, 128], strides = [1, 1]} : vector<5x128xf32> to vector<1x128xf32>
      %205 = vector.shape_cast %204 : vector<1x128xf32> to vector<128xf32>
      %cst_95 = arith.constant dense<0.000000e+00> : vector<128xf32>
      %206 = vector.multi_reduction <add>, %201, %cst_95 [1] : vector<128x128xf32> to vector<128xf32>
      %207 = vector.shape_cast %206 : vector<128xf32> to vector<128x1xf32>
      %cst_96 = arith.constant 1.280000e+02 : f32
      %208 = vector.broadcast %cst_96 : f32 to vector<128x1xf32>
      %209 = arith.divf %207, %208 : vector<128x1xf32>
      %210 = vector.broadcast %209 : vector<128x1xf32> to vector<128x128xf32>
      %211 = arith.subf %201, %210 : vector<128x128xf32>
      %212 = arith.mulf %211, %211 : vector<128x128xf32>
      %cst_97 = arith.constant dense<0.000000e+00> : vector<128xf32>
      %213 = vector.multi_reduction <add>, %212, %cst_97 [1] : vector<128x128xf32> to vector<128xf32>
      %214 = vector.shape_cast %213 : vector<128xf32> to vector<128x1xf32>
      %cst_98 = arith.constant 1.280000e+02 : f32
      %215 = vector.broadcast %cst_98 : f32 to vector<128x1xf32>
      %216 = arith.divf %214, %215 : vector<128x1xf32>
      %217 = vector.broadcast %209 : vector<128x1xf32> to vector<128x128xf32>
      %218 = arith.subf %201, %217 : vector<128x128xf32>
      %cst_99 = arith.constant 9.99999974E-6 : f32
      %219 = vector.broadcast %cst_99 : f32 to vector<128x1xf32>
      %220 = arith.addf %216, %219 : vector<128x1xf32>
      %221 = math.rsqrt %220 : vector<128x1xf32>
      %222 = vector.broadcast %221 : vector<128x1xf32> to vector<128x128xf32>
      %223 = arith.mulf %218, %222 : vector<128x128xf32>
      %224 = vector.shape_cast %203 : vector<128xf32> to vector<1x128xf32>
      %225 = vector.broadcast %224 : vector<1x128xf32> to vector<128x128xf32>
      %226 = arith.mulf %223, %225 : vector<128x128xf32>
      %227 = vector.shape_cast %205 : vector<128xf32> to vector<1x128xf32>
      %228 = vector.broadcast %227 : vector<1x128xf32> to vector<128x128xf32>
      %229 = arith.addf %226, %228 : vector<128x128xf32>
      %230 = arith.index_cast %22 : i32 to index
      %c0_100 = arith.constant 0 : index
      %231 = vector.load %arg30[%230, %c0_100] : memref<128x128xf32, #tpu.memory_space<vmem>>, vector<128x128xf32>
      tpu.vector_store %arg30[%230, %c0_100], %229 {strides = array<i32>} : memref<128x128xf32, #tpu.memory_space<vmem>>, vector<128x128xf32>,
    } else {
    }
    %26 = arith.index_cast %22 : i32 to index
    %c0_21 = arith.constant 0 : index
    %27 = vector.load %arg30[%26, %c0_21] : memref<128x128xf32, #tpu.memory_space<vmem>>, vector<128x128xf32>
    %28 = arith.index_cast %22 : i32 to index
    %c0_22 = arith.constant 0 : index
    %29 = vector.load %arg27[%28, %c0_22] : memref<128x128xbf16, #tpu.memory_space<vmem>>, vector<128x128xbf16>
    %30 = arith.index_cast %22 : i32 to index
    %c0_23 = arith.constant 0 : index
    %31 = vector.load %arg28[%30, %c0_23] : memref<128x128xbf16, #tpu.memory_space<vmem>>, vector<128x128xbf16>
    %c0_24 = arith.constant 0 : index
    %c0_25 = arith.constant 0 : index
    %32 = vector.load %arg32[%c0_24, %c0_25] : memref<128x128xbf16, #tpu.memory_space<vmem>>, vector<128x128xbf16>
    %cst_26 = arith.constant dense<0.000000e+00> : vector<128x128xf32>
    %33 = tpu.matmul %29, %32, %cst_26 {dimension_numbers = #tpu.dot_dimension_numbers<[1], [0], [0], [1], [0, 0, 1, 1], [], []>} : vector<128x128xbf16>, vector<128x128xbf16>, vector<128x128xf32> -> vector<128x128xf32>
    %c0_27 = arith.constant 0 : index
    %c0_28 = arith.constant 0 : index
    %34 = vector.load %arg33[%c0_27, %c0_28] : memref<128x128xbf16, #tpu.memory_space<vmem>>, vector<128x128xbf16>
    %cst_29 = arith.constant dense<0.000000e+00> : vector<128x128xf32>
    %35 = tpu.matmul %31, %34, %cst_29 {dimension_numbers = #tpu.dot_dimension_numbers<[1], [0], [0], [1], [0, 0, 1, 1], [], []>} : vector<128x128xbf16>, vector<128x128xbf16>, vector<128x128xf32> -> vector<128x128xf32>
    %36 = arith.addf %33, %35 : vector<128x128xf32>
    %37 = arith.truncf %27 : vector<128x128xf32> to vector<128x128xbf16>
    %c0_30 = arith.constant 0 : index
    %c0_31 = arith.constant 0 : index
    %c0_32 = arith.constant 0 : index
    %38 = vector.load %arg13[%c0_30, %c0_31, %c0_32] : memref<1x128x128xbf16, #tpu.memory_space<vmem>>, vector<1x128x128xbf16>
    %39 = vector.shape_cast %38 : vector<1x128x128xbf16> to vector<128x128xbf16>
    %cst_33 = arith.constant dense<0.000000e+00> : vector<128x128xf32>
    %40 = tpu.matmul %37, %39, %cst_33 {dimension_numbers = #tpu.dot_dimension_numbers<[1], [0], [0], [1], [0, 0, 1, 1], [], []>} : vector<128x128xbf16>, vector<128x128xbf16>, vector<128x128xf32> -> vector<128x128xf32>
    %41 = arith.addf %40, %36 : vector<128x128xf32>
    %42 = vector.extract_strided_slice %17 {offsets = [0, 0], sizes = [1, 128], strides = [1, 1]} : vector<5x128xf32> to vector<1x128xf32>
    %43 = vector.shape_cast %42 : vector<1x128xf32> to vector<128xf32>
    %44 = vector.shape_cast %43 : vector<128xf32> to vector<1x128xf32>
    %45 = vector.broadcast %44 : vector<1x128xf32> to vector<128x128xf32>
    %46 = arith.addf %41, %45 : vector<128x128xf32>
    %cst_34 = arith.constant 0.000000e+00 : f32
    %47 = vector.broadcast %cst_34 : f32 to vector<128x128xf32>
    %48 = arith.maximumf %46, %47 : vector<128x128xf32>
    %49 = arith.truncf %48 : vector<128x128xf32> to vector<128x128xbf16>
    %c0_35 = arith.constant 0 : index
    %c0_36 = arith.constant 0 : index
    %c0_37 = arith.constant 0 : index
    %50 = vector.load %arg15[%c0_35, %c0_36, %c0_37] : memref<1x128x128xbf16, #tpu.memory_space<vmem>>, vector<1x128x128xbf16>
    %51 = vector.shape_cast %50 : vector<1x128x128xbf16> to vector<128x128xbf16>
    %cst_38 = arith.constant dense<0.000000e+00> : vector<128x128xf32>
    %52 = tpu.matmul %49, %51, %cst_38 {dimension_numbers = #tpu.dot_dimension_numbers<[1], [0], [0], [1], [0, 0, 1, 1], [], []>} : vector<128x128xbf16>, vector<128x128xbf16>, vector<128x128xf32> -> vector<128x128xf32>
    %53 = vector.extract_strided_slice %17 {offsets = [1, 0], sizes = [1, 128], strides = [1, 1]} : vector<5x128xf32> to vector<1x128xf32>
    %54 = vector.shape_cast %53 : vector<1x128xf32> to vector<128xf32>
    %55 = vector.shape_cast %54 : vector<128xf32> to vector<1x128xf32>
    %56 = vector.broadcast %55 : vector<1x128xf32> to vector<128x128xf32>
    %57 = arith.addf %52, %56 : vector<128x128xf32>
    %cst_39 = arith.constant 0.000000e+00 : f32
    %58 = vector.broadcast %cst_39 : f32 to vector<128x128xf32>
    %59 = arith.maximumf %57, %58 : vector<128x128xf32>
    %60 = arith.truncf %59 : vector<128x128xf32> to vector<128x128xbf16>
    %c0_40 = arith.constant 0 : index
    %c0_41 = arith.constant 0 : index
    %c0_42 = arith.constant 0 : index
    %61 = vector.load %arg16[%c0_40, %c0_41, %c0_42] : memref<1x128x128xbf16, #tpu.memory_space<vmem>>, vector<1x128x128xbf16>
    %62 = vector.shape_cast %61 : vector<1x128x128xbf16> to vector<128x128xbf16>
    %cst_43 = arith.constant dense<0.000000e+00> : vector<128x128xf32>
    %63 = tpu.matmul %60, %62, %cst_43 {dimension_numbers = #tpu.dot_dimension_numbers<[1], [0], [0], [1], [0, 0, 1, 1], [], []>} : vector<128x128xbf16>, vector<128x128xbf16>, vector<128x128xf32> -> vector<128x128xf32>
    %64 = vector.extract_strided_slice %17 {offsets = [2, 0], sizes = [1, 128], strides = [1, 1]} : vector<5x128xf32> to vector<1x128xf32>
    %65 = vector.shape_cast %64 : vector<1x128xf32> to vector<128xf32>
    %66 = vector.shape_cast %65 : vector<128xf32> to vector<1x128xf32>
    %67 = vector.broadcast %66 : vector<1x128xf32> to vector<128x128xf32>
    %68 = arith.addf %63, %67 : vector<128x128xf32>
    %69 = vector.extract_strided_slice %17 {offsets = [3, 0], sizes = [1, 128], strides = [1, 1]} : vector<5x128xf32> to vector<1x128xf32>
    %70 = vector.shape_cast %69 : vector<1x128xf32> to vector<128xf32>
    %71 = vector.extract_strided_slice %17 {offsets = [4, 0], sizes = [1, 128], strides = [1, 1]} : vector<5x128xf32> to vector<1x128xf32>
    %72 = vector.shape_cast %71 : vector<1x128xf32> to vector<128xf32>
    %cst_44 = arith.constant dense<0.000000e+00> : vector<128xf32>
    %73 = vector.multi_reduction <add>, %68, %cst_44 [1] : vector<128x128xf32> to vector<128xf32>
    %74 = vector.shape_cast %73 : vector<128xf32> to vector<128x1xf32>
    %cst_45 = arith.constant 1.280000e+02 : f32
    %75 = vector.broadcast %cst_45 : f32 to vector<128x1xf32>
    %76 = arith.divf %74, %75 : vector<128x1xf32>
    %77 = vector.broadcast %76 : vector<128x1xf32> to vector<128x128xf32>
    %78 = arith.subf %68, %77 : vector<128x128xf32>
    %79 = arith.mulf %78, %78 : vector<128x128xf32>
    %cst_46 = arith.constant dense<0.000000e+00> : vector<128xf32>
    %80 = vector.multi_reduction <add>, %79, %cst_46 [1] : vector<128x128xf32> to vector<128xf32>
    %81 = vector.shape_cast %80 : vector<128xf32> to vector<128x1xf32>
    %cst_47 = arith.constant 1.280000e+02 : f32
    %82 = vector.broadcast %cst_47 : f32 to vector<128x1xf32>
    %83 = arith.divf %81, %82 : vector<128x1xf32>
    %84 = vector.broadcast %76 : vector<128x1xf32> to vector<128x128xf32>
    %85 = arith.subf %68, %84 : vector<128x128xf32>
    %cst_48 = arith.constant 9.99999974E-6 : f32
    %86 = vector.broadcast %cst_48 : f32 to vector<128x1xf32>
    %87 = arith.addf %83, %86 : vector<128x1xf32>
    %88 = math.rsqrt %87 : vector<128x1xf32>
    %89 = vector.broadcast %88 : vector<128x1xf32> to vector<128x128xf32>
    %90 = arith.mulf %85, %89 : vector<128x128xf32>
    %91 = vector.shape_cast %70 : vector<128xf32> to vector<1x128xf32>
    %92 = vector.broadcast %91 : vector<1x128xf32> to vector<128x128xf32>
    %93 = arith.mulf %90, %92 : vector<128x128xf32>
    %94 = vector.shape_cast %72 : vector<128xf32> to vector<1x128xf32>
    %95 = vector.broadcast %94 : vector<1x128xf32> to vector<128x128xf32>
    %96 = arith.addf %93, %95 : vector<128x128xf32>
    %97 = arith.addf %27, %96 : vector<128x128xf32>
    %98 = arith.index_cast %22 : i32 to index
    %c0_49 = arith.constant 0 : index
    %99 = vector.load %arg30[%98, %c0_49] : memref<128x128xf32, #tpu.memory_space<vmem>>, vector<128x128xf32>
    tpu.vector_store %arg30[%98, %c0_49], %97 {strides = array<i32>} : memref<128x128xf32, #tpu.memory_space<vmem>>, vector<128x128xf32>,
    %c0_50 = arith.constant 0 : index
    %c0_51 = arith.constant 0 : index
    %100 = vector.load %arg31[%c0_50, %c0_51] : memref<128x128xf32, #tpu.memory_space<vmem>>, vector<128x128xf32>
    %101 = arith.truncf %97 : vector<128x128xf32> to vector<128x128xbf16>
    %cst_52 = arith.constant dense<0.000000e+00> : vector<128x128xf32>
    %102 = tpu.matmul %31, %101, %cst_52 {dimension_numbers = #tpu.dot_dimension_numbers<[0], [0], [1], [1], [0, 1, 1, 1], [], []>} : vector<128x128xbf16>, vector<128x128xbf16>, vector<128x128xf32> -> vector<128x128xf32>
    %103 = arith.addf %100, %102 : vector<128x128xf32>
    %c0_53 = arith.constant 0 : index
    %c0_54 = arith.constant 0 : index
    %104 = vector.load %arg31[%c0_53, %c0_54] : memref<128x128xf32, #tpu.memory_space<vmem>>, vector<128x128xf32>
    tpu.vector_store %arg31[%c0_53, %c0_54], %103 {strides = array<i32>} : memref<128x128xf32, #tpu.memory_space<vmem>>, vector<128x128xf32>,
    %c1_i32_55 = arith.constant 1 : i32
    %c0_56 = arith.constant 0 : index
    %c0_57 = arith.constant 0 : index
    %c0_58 = arith.constant 0 : index
    %105 = vector.load %arg21[%c0_56, %c0_57, %c0_58] : memref<1x5x128xf32, #tpu.memory_space<vmem>>, vector<1x5x128xf32>
    %106 = vector.shape_cast %105 : vector<1x5x128xf32> to vector<5x128xf32>
    %c0_59 = arith.constant 0 : index
    %c0_60 = arith.constant 0 : index
    %107 = vector.load %arg31[%c0_59, %c0_60] : memref<128x128xf32, #tpu.memory_space<vmem>>, vector<128x128xf32>
    %108 = arith.truncf %107 : vector<128x128xf32> to vector<128x128xbf16>
    %109 = tpu.concatenate %4, %108 in 1 : vector<128x128xbf16>, vector<128x128xbf16> -> vector<128x256xbf16>
    %c0_61 = arith.constant 0 : index
    %c0_62 = arith.constant 0 : index
    %c0_63 = arith.constant 0 : index
    %110 = vector.load %arg18[%c0_61, %c0_62, %c0_63] : memref<1x256x128xbf16, #tpu.memory_space<vmem>>, vector<1x256x128xbf16>
    %111 = vector.shape_cast %110 : vector<1x256x128xbf16> to vector<256x128xbf16>
    %c0_64 = arith.constant 0 : index
    %c0_65 = arith.constant 0 : index
    %c0_66 = arith.constant 0 : index
    %112 = vector.load %arg19[%c0_64, %c0_65, %c0_66] : memref<1x128x128xbf16, #tpu.memory_space<vmem>>, vector<1x128x128xbf16>
    %113 = vector.shape_cast %112 : vector<1x128x128xbf16> to vector<128x128xbf16>
    %c0_67 = arith.constant 0 : index
    %c0_68 = arith.constant 0 : index
    %c0_69 = arith.constant 0 : index
    %114 = vector.load %arg20[%c0_67, %c0_68, %c0_69] : memref<1x128x128xbf16, #tpu.memory_space<vmem>>, vector<1x128x128xbf16>
    %115 = vector.shape_cast %114 : vector<1x128x128xbf16> to vector<128x128xbf16>
    %cst_70 = arith.constant dense<0.000000e+00> : vector<128x128xf32>
    %116 = tpu.matmul %109, %111, %cst_70 {dimension_numbers = #tpu.dot_dimension_numbers<[1], [0], [0], [1], [0, 0, 1, 1], [], []>} : vector<128x256xbf16>, vector<256x128xbf16>, vector<128x128xf32> -> vector<128x128xf32>
    %117 = vector.extract_strided_slice %106 {offsets = [0, 0], sizes = [1, 128], strides = [1, 1]} : vector<5x128xf32> to vector<1x128xf32>
    %118 = vector.shape_cast %117 : vector<1x128xf32> to vector<128xf32>
    %119 = vector.shape_cast %118 : vector<128xf32> to vector<1x128xf32>
    %120 = vector.broadcast %119 : vector<1x128xf32> to vector<128x128xf32>
    %121 = arith.addf %116, %120 : vector<128x128xf32>
    %cst_71 = arith.constant 0.000000e+00 : f32
    %122 = vector.broadcast %cst_71 : f32 to vector<128x128xf32>
    %123 = arith.maximumf %121, %122 : vector<128x128xf32>
    %124 = arith.truncf %123 : vector<128x128xf32> to vector<128x128xbf16>
    %cst_72 = arith.constant dense<0.000000e+00> : vector<128x128xf32>
    %125 = tpu.matmul %124, %113, %cst_72 {dimension_numbers = #tpu.dot_dimension_numbers<[1], [0], [0], [1], [0, 0, 1, 1], [], []>} : vector<128x128xbf16>, vector<128x128xbf16>, vector<128x128xf32> -> vector<128x128xf32>
    %126 = vector.extract_strided_slice %106 {offsets = [1, 0], sizes = [1, 128], strides = [1, 1]} : vector<5x128xf32> to vector<1x128xf32>
    %127 = vector.shape_cast %126 : vector<1x128xf32> to vector<128xf32>
    %128 = vector.shape_cast %127 : vector<128xf32> to vector<1x128xf32>
    %129 = vector.broadcast %128 : vector<1x128xf32> to vector<128x128xf32>
    %130 = arith.addf %125, %129 : vector<128x128xf32>
    %cst_73 = arith.constant 0.000000e+00 : f32
    %131 = vector.broadcast %cst_73 : f32 to vector<128x128xf32>
    %132 = arith.maximumf %130, %131 : vector<128x128xf32>
    %133 = arith.truncf %132 : vector<128x128xf32> to vector<128x128xbf16>
    %cst_74 = arith.constant dense<0.000000e+00> : vector<128x128xf32>
    %134 = tpu.matmul %133, %115, %cst_74 {dimension_numbers = #tpu.dot_dimension_numbers<[1], [0], [0], [1], [0, 0, 1, 1], [], []>} : vector<128x128xbf16>, vector<128x128xbf16>, vector<128x128xf32> -> vector<128x128xf32>
    %135 = vector.extract_strided_slice %106 {offsets = [2, 0], sizes = [1, 128], strides = [1, 1]} : vector<5x128xf32> to vector<1x128xf32>
    %136 = vector.shape_cast %135 : vector<1x128xf32> to vector<128xf32>
    %137 = vector.shape_cast %136 : vector<128xf32> to vector<1x128xf32>
    %138 = vector.broadcast %137 : vector<1x128xf32> to vector<128x128xf32>
    %139 = arith.addf %134, %138 : vector<128x128xf32>
    %140 = vector.extract_strided_slice %106 {offsets = [3, 0], sizes = [1, 128], strides = [1, 1]} : vector<5x128xf32> to vector<1x128xf32>
    %141 = vector.shape_cast %140 : vector<1x128xf32> to vector<128xf32>
    %142 = vector.extract_strided_slice %106 {offsets = [4, 0], sizes = [1, 128], strides = [1, 1]} : vector<5x128xf32> to vector<1x128xf32>
    %143 = vector.shape_cast %142 : vector<1x128xf32> to vector<128xf32>
    %cst_75 = arith.constant dense<0.000000e+00> : vector<128xf32>
    %144 = vector.multi_reduction <add>, %139, %cst_75 [1] : vector<128x128xf32> to vector<128xf32>
    %145 = vector.shape_cast %144 : vector<128xf32> to vector<128x1xf32>
    %cst_76 = arith.constant 1.280000e+02 : f32
    %146 = vector.broadcast %cst_76 : f32 to vector<128x1xf32>
    %147 = arith.divf %145, %146 : vector<128x1xf32>
    %148 = vector.broadcast %147 : vector<128x1xf32> to vector<128x128xf32>
    %149 = arith.subf %139, %148 : vector<128x128xf32>
    %150 = arith.mulf %149, %149 : vector<128x128xf32>
    %cst_77 = arith.constant dense<0.000000e+00> : vector<128xf32>
    %151 = vector.multi_reduction <add>, %150, %cst_77 [1] : vector<128x128xf32> to vector<128xf32>
    %152 = vector.shape_cast %151 : vector<128xf32> to vector<128x1xf32>
    %cst_78 = arith.constant 1.280000e+02 : f32
    %153 = vector.broadcast %cst_78 : f32 to vector<128x1xf32>
    %154 = arith.divf %152, %153 : vector<128x1xf32>
    %155 = vector.broadcast %147 : vector<128x1xf32> to vector<128x128xf32>
    %156 = arith.subf %139, %155 : vector<128x128xf32>
    %cst_79 = arith.constant 9.99999974E-6 : f32
    %157 = vector.broadcast %cst_79 : f32 to vector<128x1xf32>
    %158 = arith.addf %154, %157 : vector<128x1xf32>
    %159 = math.rsqrt %158 : vector<128x1xf32>
    %160 = vector.broadcast %159 : vector<128x1xf32> to vector<128x128xf32>
    %161 = arith.mulf %156, %160 : vector<128x128xf32>
    %162 = vector.shape_cast %141 : vector<128xf32> to vector<1x128xf32>
    %163 = vector.broadcast %162 : vector<1x128xf32> to vector<128x128xf32>
    %164 = arith.mulf %161, %163 : vector<128x128xf32>
    %165 = vector.shape_cast %143 : vector<128xf32> to vector<1x128xf32>
    %166 = vector.broadcast %165 : vector<1x128xf32> to vector<128x128xf32>
    %167 = arith.addf %164, %166 : vector<128x128xf32>
    %168 = arith.addf %3, %167 : vector<128x128xf32>
    %c0_80 = arith.constant 0 : index
    %c0_81 = arith.constant 0 : index
    %169 = vector.load %arg29[%c0_80, %c0_81] : memref<128x128xf32, #tpu.memory_space<vmem>>, vector<128x128xf32>
    tpu.vector_store %arg29[%c0_80, %c0_81], %168 {strides = array<i32>} : memref<128x128xf32, #tpu.memory_space<vmem>>, vector<128x128xf32>,
    %c14_i32 = arith.constant 14 : i32
    %170 = arith.cmpi eq, %arg0, %c14_i32 : i32
    %171 = arith.extui %170 : i1 to i32
    %c0_i32_82 = arith.constant 0 : i32
    %172 = arith.cmpi ne, %171, %c0_i32_82 : i32
    scf.if %172 {
      %c0_83 = arith.constant 0 : index
      %c0_84 = arith.constant 0 : index
      %173 = vector.load %arg29[%c0_83, %c0_84] : memref<128x128xf32, #tpu.memory_space<vmem>>, vector<128x128xf32>
      %174 = arith.truncf %173 : vector<128x128xf32> to vector<128x128xbf16>
      %c0_85 = arith.constant 0 : index
      %c0_86 = arith.constant 0 : index
      %175 = vector.load %arg22[%c0_85, %c0_86] : memref<128x128xbf16, #tpu.memory_space<vmem>>, vector<128x128xbf16>
      %c0_87 = arith.constant 0 : index
      %c0_88 = arith.constant 0 : index
      %176 = vector.load %arg23[%c0_87, %c0_88] : memref<128x128xbf16, #tpu.memory_space<vmem>>, vector<128x128xbf16>
      %c0_89 = arith.constant 0 : index
      %c0_90 = arith.constant 0 : index
      %177 = vector.load %arg24[%c0_89, %c0_90] : memref<128x128xbf16, #tpu.memory_space<vmem>>, vector<128x128xbf16>
      %c0_91 = arith.constant 0 : index
      %c0_92 = arith.constant 0 : index
      %178 = vector.load %arg25[%c0_91, %c0_92] : memref<3x128xf32, #tpu.memory_space<vmem>>, vector<3x128xf32>
      %cst_93 = arith.constant dense<0.000000e+00> : vector<128x128xf32>
      %179 = tpu.matmul %174, %175, %cst_93 {dimension_numbers = #tpu.dot_dimension_numbers<[1], [0], [0], [1], [0, 0, 1, 1], [], []>} : vector<128x128xbf16>, vector<128x128xbf16>, vector<128x128xf32> -> vector<128x128xf32>
      %180 = vector.extract_strided_slice %178 {offsets = [0, 0], sizes = [1, 128], strides = [1, 1]} : vector<3x128xf32> to vector<1x128xf32>
      %181 = vector.shape_cast %180 : vector<1x128xf32> to vector<128xf32>
      %182 = vector.shape_cast %181 : vector<128xf32> to vector<1x128xf32>
      %183 = vector.broadcast %182 : vector<1x128xf32> to vector<128x128xf32>
      %184 = arith.addf %179, %183 : vector<128x128xf32>
      %cst_94 = arith.constant 0.000000e+00 : f32
      %185 = vector.broadcast %cst_94 : f32 to vector<128x128xf32>
      %186 = arith.maximumf %184, %185 : vector<128x128xf32>
      %187 = arith.truncf %186 : vector<128x128xf32> to vector<128x128xbf16>
      %cst_95 = arith.constant dense<0.000000e+00> : vector<128x128xf32>
      %188 = tpu.matmul %187, %176, %cst_95 {dimension_numbers = #tpu.dot_dimension_numbers<[1], [0], [0], [1], [0, 0, 1, 1], [], []>} : vector<128x128xbf16>, vector<128x128xbf16>, vector<128x128xf32> -> vector<128x128xf32>
      %189 = vector.extract_strided_slice %178 {offsets = [1, 0], sizes = [1, 128], strides = [1, 1]} : vector<3x128xf32> to vector<1x128xf32>
      %190 = vector.shape_cast %189 : vector<1x128xf32> to vector<128xf32>
      %191 = vector.shape_cast %190 : vector<128xf32> to vector<1x128xf32>
      %192 = vector.broadcast %191 : vector<1x128xf32> to vector<128x128xf32>
      %193 = arith.addf %188, %192 : vector<128x128xf32>
      %cst_96 = arith.constant 0.000000e+00 : f32
      %194 = vector.broadcast %cst_96 : f32 to vector<128x128xf32>
      %195 = arith.maximumf %193, %194 : vector<128x128xf32>
      %196 = arith.truncf %195 : vector<128x128xf32> to vector<128x128xbf16>
      %cst_97 = arith.constant dense<0.000000e+00> : vector<128x128xf32>
      %197 = tpu.matmul %196, %177, %cst_97 {dimension_numbers = #tpu.dot_dimension_numbers<[1], [0], [0], [1], [0, 0, 1, 1], [], []>} : vector<128x128xbf16>, vector<128x128xbf16>, vector<128x128xf32> -> vector<128x128xf32>
      %198 = vector.extract_strided_slice %178 {offsets = [2, 0], sizes = [1, 128], strides = [1, 1]} : vector<3x128xf32> to vector<1x128xf32>
      %199 = vector.shape_cast %198 : vector<1x128xf32> to vector<128xf32>
      %200 = vector.shape_cast %199 : vector<128xf32> to vector<1x128xf32>
      %201 = vector.broadcast %200 : vector<1x128xf32> to vector<128x128xf32>
      %202 = arith.addf %197, %201 : vector<128x128xf32>
      %c0_98 = arith.constant 0 : index
      %c0_99 = arith.constant 0 : index
      %203 = vector.load %arg26[%c0_98, %c0_99] : memref<128x128xf32, #tpu.memory_space<vmem>>, vector<128x128xf32>
      tpu.vector_store %arg26[%c0_98, %c0_99], %202 {strides = array<i32>} : memref<128x128xf32, #tpu.memory_space<vmem>>, vector<128x128xf32>,
    } else {
    }
    return
  }
  func.func @transform_0(%arg0: i32) -> (i32, i32) {
    %c0_i32 = arith.constant 0 : i32
    %c0_i32_0 = arith.constant 0 : i32
    %c0_i32_1 = arith.constant 0 : i32
    return %c0_i32, %c0_i32_0 : i32, i32
  }
  func.func @transform_1(%arg0: i32) -> (i32, i32) {
    %c0_i32 = arith.constant 0 : i32
    %c0_i32_0 = arith.constant 0 : i32
    %c0_i32_1 = arith.constant 0 : i32
    return %c0_i32, %c0_i32_0 : i32, i32
  }
  func.func @transform_4(%arg0: i32) -> (i32, i32) {
    %c0_i32 = arith.constant 0 : i32
    %c0_i32_0 = arith.constant 0 : i32
    %c0_i32_1 = arith.constant 0 : i32
    return %c0_i32, %c0_i32_0 : i32, i32
  }
  func.func @transform_5(%arg0: i32) -> (i32, i32) {
    %c0_i32 = arith.constant 0 : i32
    %c0_i32_0 = arith.constant 0 : i32
    %c0_i32_1 = arith.constant 0 : i32
    return %c0_i32, %c0_i32_0 : i32, i32
  }
  func.func @transform_6(%arg0: i32) -> (i32, i32) {
    %c0_i32 = arith.constant 0 : i32
    %c0_i32_0 = arith.constant 0 : i32
    %c0_i32_1 = arith.constant 0 : i32
    return %c0_i32, %c0_i32_0 : i32, i32
  }
  func.func @transform_7(%arg0: i32) -> (i32, i32) {
    %c0_i32 = arith.constant 0 : i32
    %c0_i32_0 = arith.constant 0 : i32
    %c0_i32_1 = arith.constant 0 : i32
    return %c0_i32, %c0_i32_0 : i32, i32
  }
  func.func @transform_8(%arg0: i32) -> (i32, i32) {
    %c0_i32 = arith.constant 0 : i32
    %c0_i32_0 = arith.constant 0 : i32
    %c0_i32_1 = arith.constant 0 : i32
    return %c0_i32, %c0_i32_0 : i32, i32
  }
  func.func @transform_9(%arg0: i32) -> (i32, i32) {
    %c0_i32 = arith.constant 0 : i32
    %c0_i32_0 = arith.constant 0 : i32
    %c0_i32_1 = arith.constant 0 : i32
    return %c0_i32, %c0_i32_0 : i32, i32
  }
  func.func @transform_10(%arg0: i32) -> (i32, i32) {
    %c0_i32 = arith.constant 0 : i32
    %c0_i32_0 = arith.constant 0 : i32
    %c0_i32_1 = arith.constant 0 : i32
    return %c0_i32, %c0_i32_0 : i32, i32
  }
  func.func @transform_11(%arg0: i32) -> (i32, i32) {
    %c0_i32 = arith.constant 0 : i32
    %c0_i32_0 = arith.constant 0 : i32
    %c0_i32_1 = arith.constant 0 : i32
    return %c0_i32, %c0_i32_0 : i32, i32
  }
  func.func @transform_12(%arg0: i32) -> (i32, i32, i32) {
    %c0_i32 = arith.constant 0 : i32
    %c0_i32_0 = arith.constant 0 : i32
    %c0_i32_1 = arith.constant 0 : i32
    return %arg0, %c0_i32, %c0_i32_0 : i32, i32, i32
  }
  func.func @transform_13(%arg0: i32) -> (i32, i32, i32) {
    %c0_i32 = arith.constant 0 : i32
    %c0_i32_0 = arith.constant 0 : i32
    %c0_i32_1 = arith.constant 0 : i32
    return %arg0, %c0_i32, %c0_i32_0 : i32, i32, i32
  }
  func.func @transform_14(%arg0: i32) -> (i32, i32, i32) {
    %c0_i32 = arith.constant 0 : i32
    %c0_i32_0 = arith.constant 0 : i32
    %c0_i32_1 = arith.constant 0 : i32
    return %arg0, %c0_i32, %c0_i32_0 : i32, i32, i32
  }
  func.func @transform_15(%arg0: i32) -> (i32, i32, i32) {
    %c0_i32 = arith.constant 0 : i32
    %c0_i32_0 = arith.constant 0 : i32
    %c0_i32_1 = arith.constant 0 : i32
    return %arg0, %c0_i32, %c0_i32_0 : i32, i32, i32
  }
  func.func @transform_16(%arg0: i32) -> (i32, i32, i32) {
    %c0_i32 = arith.constant 0 : i32
    %c0_i32_0 = arith.constant 0 : i32
    %c0_i32_1 = arith.constant 0 : i32
    return %arg0, %c0_i32, %c0_i32_0 : i32, i32, i32
  }
  func.func @transform_17(%arg0: i32) -> (i32, i32, i32) {
    %c0_i32 = arith.constant 0 : i32
    %c0_i32_0 = arith.constant 0 : i32
    %c0_i32_1 = arith.constant 0 : i32
    return %arg0, %c0_i32, %c0_i32_0 : i32, i32, i32
  }
  func.func @transform_18(%arg0: i32) -> (i32, i32, i32) {
    %c0_i32 = arith.constant 0 : i32
    %c0_i32_0 = arith.constant 0 : i32
    %c0_i32_1 = arith.constant 0 : i32
    return %arg0, %c0_i32, %c0_i32_0 : i32, i32, i32
  }
  func.func @transform_19(%arg0: i32) -> (i32, i32, i32) {
    %c0_i32 = arith.constant 0 : i32
    %c0_i32_0 = arith.constant 0 : i32
    %c0_i32_1 = arith.constant 0 : i32
    return %arg0, %c0_i32, %c0_i32_0 : i32, i32, i32
  }
  func.func @transform_20(%arg0: i32) -> (i32, i32, i32) {
    %c0_i32 = arith.constant 0 : i32
    %c0_i32_0 = arith.constant 0 : i32
    %c0_i32_1 = arith.constant 0 : i32
    return %arg0, %c0_i32, %c0_i32_0 : i32, i32, i32
  }
  func.func @transform_21(%arg0: i32) -> (i32, i32) {
    %c0_i32 = arith.constant 0 : i32
    %c0_i32_0 = arith.constant 0 : i32
    %c0_i32_1 = arith.constant 0 : i32
    return %c0_i32, %c0_i32_0 : i32, i32
  }
  func.func @transform_22(%arg0: i32) -> (i32, i32) {
    %c0_i32 = arith.constant 0 : i32
    %c0_i32_0 = arith.constant 0 : i32
    %c0_i32_1 = arith.constant 0 : i32
    return %c0_i32, %c0_i32_0 : i32, i32
  }
  func.func @transform_23(%arg0: i32) -> (i32, i32) {
    %c0_i32 = arith.constant 0 : i32
    %c0_i32_0 = arith.constant 0 : i32
    %c0_i32_1 = arith.constant 0 : i32
    return %c0_i32, %c0_i32_0 : i32, i32
  }
  func.func @transform_24(%arg0: i32) -> (i32, i32) {
    %c0_i32 = arith.constant 0 : i32
    %c0_i32_0 = arith.constant 0 : i32
    %c0_i32_1 = arith.constant 0 : i32
    return %c0_i32, %c0_i32_0 : i32, i32
  }
  func.func @transform_25(%arg0: i32) -> (i32, i32) {
    %c0_i32 = arith.constant 0 : i32
    %c0_i32_0 = arith.constant 0 : i32
    %c0_i32_1 = arith.constant 0 : i32
    return %c0_i32, %c0_i32_0 : i32, i32
  }
}

</mosaic_0001>

<llo_original>
// kernel: incompr_ns_forward.1
$region0: #{incompr_ns_forward.1}
  #allocation0 [shape = 'u32[]', space=smem, size = 0x4, offset = 0x4, fixed_abs, tag = 'smem constant byte address 0x4 - core index']
  #allocation1 [shape = 'u32[144,128]{1,0:T(1,128)}', space=vmem, size = 0x12000, scoped, tag = 'internal scratch']
  #allocation2 [shape = 'bf16[128,128]{1,0:T(16,128)(2,1)}', space=vmem, size = 0x8000, scoped, tag = 'scratch operand']
  #allocation3 [shape = 'bf16[128,128]{1,0:T(16,128)(2,1)}', space=vmem, size = 0x8000, scoped, tag = 'scratch operand']
  #allocation4 [shape = 'f32[128,128]{1,0:T(8,128)}', space=vmem, size = 0x10000, scoped, tag = 'scratch operand']
  #allocation5 [shape = 'f32[128,128]{1,0:T(8,128)}', space=vmem, size = 0x10000, scoped, tag = 'scratch operand']
  #allocation6 [shape = 'f32[128,128]{1,0:T(8,128)}', space=vmem, size = 0x10000, scoped, tag = 'scratch operand']
  #allocation7 [shape = 'bf16[128,128]{1,0:T(16,128)(2,1)}', space=vmem, size = 0x8000, scoped, tag = 'scratch operand']
  #allocation8 [shape = 'bf16[128,128]{1,0:T(16,128)(2,1)}', space=vmem, size = 0x8000, scoped, tag = 'scratch operand']
  #allocation9 [shape = 's32[2]{0}', space=sflag, size = 0x8, scoped, tag = 'scratch operand']
  #allocation32 [shape = 's32[]', space=sflag, size = 0x4, offset = 0, fixed_abs, tag = 'sflag constant byte address 0x0 - dummy sync flag']
  #allocation33 [shape = 's32[]', space=sflag, size = 0x4, offset = 0, fixed_abs, tag = 'sflag constant byte address 0x0 - dummy sync flag']
  %s0 = inlined_call_operand.vmem [shape: bf16[128,128], index: 0, kind: input, shape index: {}]
  %s1 = inlined_call_operand.vmem [shape: bf16[128,128], index: 1, kind: input, shape index: {}]
  %s2 = inlined_call_operand.vmem [shape: bf16[128,128], index: 2, kind: input, shape index: {}]
  %s3 = inlined_call_operand.vmem [shape: bf16[128,128], index: 3, kind: input, shape index: {}]
  %s4 = inlined_call_operand.vmem [shape: bf16[128,128], index: 4, kind: input, shape index: {}]
  %s5 = inlined_call_operand.hbm [shape: bf16[128,128], index: 5, kind: input, shape index: {}]
  %s6 = inlined_call_operand.hbm [shape: bf16[128,128], index: 6, kind: input, shape index: {}]
  %s7 = inlined_call_operand.vmem [shape: f32[5,128], index: 7, kind: input, shape index: {}]
  %s8 = inlined_call_operand.hbm [shape: bf16[128,128], index: 8, kind: input, shape index: {}]
  %s9 = inlined_call_operand.hbm [shape: bf16[128,128], index: 9, kind: input, shape index: {}]
  %s10 = inlined_call_operand.hbm [shape: bf16[128,128], index: 10, kind: input, shape index: {}]
  %s11 = inlined_call_operand.hbm [shape: f32[5,128], index: 11, kind: input, shape index: {}]
  %s12 = inlined_call_operand.hbm [shape: bf16[15,128,128], index: 12, kind: input, shape index: {}]
  %s13 = inlined_call_operand.hbm [shape: bf16[15,128,256], index: 13, kind: input, shape index: {}]
  %s14 = inlined_call_operand.hbm [shape: bf16[15,128,128], index: 14, kind: input, shape index: {}]
  %s15 = inlined_call_operand.hbm [shape: bf16[15,128,128], index: 15, kind: input, shape index: {}]
  %s16 = inlined_call_operand.vmem [shape: f32[15,5,128], index: 16, kind: input, shape index: {}]
  %s17 = inlined_call_operand.hbm [shape: bf16[15,256,128], index: 17, kind: input, shape index: {}]
  %s18 = inlined_call_operand.hbm [shape: bf16[15,128,128], index: 18, kind: input, shape index: {}]
  %s19 = inlined_call_operand.hbm [shape: bf16[15,128,128], index: 19, kind: input, shape index: {}]
  %s20 = inlined_call_operand.vmem [shape: f32[15,5,128], index: 20, kind: input, shape index: {}]
  %s21 = inlined_call_operand.hbm [shape: bf16[128,128], index: 21, kind: input, shape index: {}]
  %s22 = inlined_call_operand.hbm [shape: bf16[128,128], index: 22, kind: input, shape index: {}]
  %s23 = inlined_call_operand.hbm [shape: bf16[128,128], index: 23, kind: input, shape index: {}]
  %s24 = inlined_call_operand.hbm [shape: f32[3,128], index: 24, kind: input, shape index: {}]
  %s25 = inlined_call_operand.vmem [shape: f32[128,128], index: 25, kind: output, shape index: {}]
  %s26 = sld [smem:[#allocation0]]
  $region273: #{incompr_ns_forward.1} parent=0
    _
  %s28 = ssub.s32 1, %s26
  %s29 = scalar_select 0, %s28, %s26
  $region1: #{incompr_ns_forward.1} parent=0
    #allocation10 [shape = 'u8[32768]{0}', space=vmem, size = 0x8000, scoped, tag = 'input window, operand 5, single buffered']
    #allocation11 [shape = 's32[2]{0}', space=sflag, size = 0x8, scoped, tag = 'scoped memory for incompr_ns_forward.1']
    #allocation12 [shape = 'u8[32768]{0}', space=vmem, size = 0x8000, scoped, tag = 'input window, operand 6, single buffered']
    #allocation13 [shape = 's32[1]{0}', space=sflag, size = 0x4, scoped, tag = 'scoped memory for incompr_ns_forward.1']
    #allocation14 [shape = 'u8[32768]{0}', space=vmem, size = 0x8000, scoped, tag = 'input window, operand 8, single buffered']
    #allocation15 [shape = 'u8[32768]{0}', space=vmem, size = 0x8000, scoped, tag = 'input window, operand 9, single buffered']
    #allocation16 [shape = 's32[1]{0}', space=sflag, size = 0x4, scoped, tag = 'scoped memory for incompr_ns_forward.1']
    #allocation17 [shape = 'u8[32768]{0}', space=vmem, size = 0x8000, scoped, tag = 'input window, operand 10, single buffered']
    #allocation18 [shape = 'u8[4096]{0}', space=vmem, size = 0x1000, scoped, tag = 'input window, operand 11, single buffered']
    #allocation19 [shape = 's32[1]{0}', space=sflag, size = 0x4, scoped, tag = 'scoped memory for incompr_ns_forward.1']
    #allocation20 [shape = 'u8[65536]{0}', space=vmem, size = 0x10000, scoped, tag = 'input window, operand 12']
    #allocation21 [shape = 'u8[131072]{0}', space=vmem, size = 0x20000, scoped, tag = 'input window, operand 13']
    #allocation22 [shape = 'u8[65536]{0}', space=vmem, size = 0x10000, scoped, tag = 'input window, operand 14']
    #allocation23 [shape = 'u8[65536]{0}', space=vmem, size = 0x10000, scoped, tag = 'input window, operand 15']
    #allocation24 [shape = 'u8[131072]{0}', space=vmem, size = 0x20000, scoped, tag = 'input window, operand 17']
    #allocation25 [shape = 'u8[65536]{0}', space=vmem, size = 0x10000, scoped, tag = 'input window, operand 18']
    #allocation26 [shape = 'u8[65536]{0}', space=vmem, size = 0x10000, scoped, tag = 'input window, operand 19']
    #allocation27 [shape = 'u8[32768]{0}', space=vmem, size = 0x8000, scoped, tag = 'input window, operand 21, single buffered']
    #allocation28 [shape = 'u8[32768]{0}', space=vmem, size = 0x8000, scoped, tag = 'input window, operand 22, single buffered']
    #allocation29 [shape = 'u8[32768]{0}', space=vmem, size = 0x8000, scoped, tag = 'input window, operand 23, single buffered']
    #allocation30 [shape = 'u8[2048]{0}', space=vmem, size = 0x800, scoped, tag = 'input window, operand 24, single buffered']
    #allocation31 [shape = 's32[1]{0}', space=sflag, size = 0x4, scoped, tag = 'scoped memory for incompr_ns_forward.1']
    %30 = vsyncpa [#allocation11], 0
    %31 = vsyncpa [#allocation13], 0
    %32 = vsyncpa [#allocation16], 0
    %33 = vsyncpa [#allocation19], 0
    %34 = vsyncpa [#allocation31], 0
    loop: start=0, step=1, limit=17
    $region2: #{incompr_ns_forward.1} parent=1 // loop_pre_header
      _
    $region3: #{incompr_ns_forward.1} parent=1 // loop_header
      %s36 = sphi 0, %s40
      %p37 = scmp.ge.s32.totalorder %s36, 17
      %s44 = sphi 0, %s44
      %s46 = sphi 0, %s44
      %s47 = sphi 0, %s46
      %s61 = sphi 0, %s47
      %s65 = sphi 0, %s65
      %s67 = sphi 0, %s65
      %s68 = sphi 0, %s67
      %s82 = sphi 0, %s68
      %s86 = sphi 0, %s86
      %s88 = sphi 0, %s86
      %s89 = sphi 0, %s88
      %s103 = sphi 0, %s89
      %s107 = sphi 0, %s107
      %s109 = sphi 0, %s107
      %s110 = sphi 0, %s109
      %s124 = sphi 0, %s110
      %s128 = sphi 0, %s128
      %s130 = sphi 0, %s128
      %s131 = sphi 0, %s130
      %s145 = sphi 0, %s131
      %s149 = sphi 0, %s149
      %s151 = sphi 0, %s149
      %s152 = sphi 0, %s151
      %s166 = sphi 0, %s152
      %s170 = sphi 0, %s170
      %s172 = sphi 0, %s170
      %s173 = sphi 0, %s172
      %s187 = sphi 0, %s173
      %s191 = sphi 0, %s191
      %s193 = sphi 0, %s191
      %s194 = sphi 0, %s193
      %s208 = sphi 0, %s194
      %s212 = sphi 0, %s212
      %s214 = sphi 0, %s212
      %s215 = sphi 0, %s214
      %s229 = sphi 0, %s215
      %s233 = sphi 0, %s233
      %s235 = sphi 0, %s233
      %s236 = sphi 0, %s235
      %s250 = sphi 0, %s236
      %s256 = sphi 0, %s258
      %s259 = sphi 0, %s256
      %s260 = sphi 0, %s259
      %s276 = sphi 0, %s260
      %s282 = sphi 0, %s284
      %s285 = sphi 0, %s282
      %s286 = sphi 0, %s285
      %s302 = sphi 0, %s286
      %s308 = sphi 0, %s310
      %s311 = sphi 0, %s308
      %s312 = sphi 0, %s311
      %s328 = sphi 0, %s312
      %s334 = sphi 0, %s336
      %s337 = sphi 0, %s334
      %s338 = sphi 0, %s337
      %s354 = sphi 0, %s338
      %s360 = sphi 0, %s362
      %s363 = sphi 0, %s360
      %s364 = sphi 0, %s363
      %s380 = sphi 0, %s364
      %s386 = sphi 0, %s388
      %s389 = sphi 0, %s386
      %s390 = sphi 0, %s389
      %s406 = sphi 0, %s390
      %s412 = sphi 0, %s414
      %s415 = sphi 0, %s412
      %s416 = sphi 0, %s415
      %s432 = sphi 0, %s416
      %s438 = sphi 0, %s440
      %s441 = sphi 0, %s438
      %s442 = sphi 0, %s441
      %s458 = sphi 0, %s442
      %s464 = sphi 0, %s466
      %s467 = sphi 0, %s464
      %s468 = sphi 0, %s467
      %s484 = sphi 0, %s468
      %s488 = sphi 0, %s488
      %s490 = sphi 0, %s488
      %s491 = sphi 0, %s490
      %s505 = sphi 0, %s491
      %s509 = sphi 0, %s509
      %s511 = sphi 0, %s509
      %s512 = sphi 0, %s511
      %s526 = sphi 0, %s512
      %s530 = sphi 0, %s530
      %s532 = sphi 0, %s530
      %s533 = sphi 0, %s532
      %s547 = sphi 0, %s533
      %s551 = sphi 0, %s551
      %s553 = sphi 0, %s551
      %s554 = sphi 0, %s553
      %s568 = sphi 0, %s554
      %s572 = sphi 0, %s572
      %s574 = sphi 0, %s572
      %s575 = sphi 0, %s574
      %s589 = sphi 0, %s575
    $region4: #{incompr_ns_forward.1} parent=1 // loop_header_branch
      %39 = sbr.rel (%p37) target = $region8
    $region5: #{incompr_ns_forward.1} parent=1 // loop_body
      %s41 = ssub.s32 %s36, 1
      %s42 = ssub.s32 %s36, 2
      %s43 = sadd.s32 %s36, 1
      %s45 = sadd.s32 %s44, 1
      %p48 = scmp.eq.s32.totalorder %s36, 14
      %p49 = scmp.ne.s32.totalorder %s44, %s46
      %p50 = scmp.eq.s32.totalorder %s36, 0
      %p51 = por %p49, %p50
      %p52 = scmp.ne.s32.totalorder %s44, %s46
      %p53 = scmp.eq.s32.totalorder %s41, 14
      %p54 = por %p52, %p53
      %p55 = scmp.ne.s32.totalorder %s46, %s47
      %p56 = scmp.eq.s32.totalorder %s41, 0
      %p57 = por %p55, %p56
      %p58 = scmp.ne.s32.totalorder %s46, %s47
      %p59 = scmp.eq.s32.totalorder %s42, 14
      %p60 = por %p58, %p59
      %p62 = scmp.ne.s32.totalorder %s47, %s61
      %p63 = scmp.eq.s32.totalorder %s42, 0
      %p64 = por %p62, %p63
      %s66 = sadd.s32 %s65, 1
      %p69 = scmp.eq.s32.totalorder %s36, 14
      %p70 = scmp.ne.s32.totalorder %s65, %s67
      %p71 = scmp.eq.s32.totalorder %s36, 0
      %p72 = por %p70, %p71
      %p73 = scmp.ne.s32.totalorder %s65, %s67
      %p74 = scmp.eq.s32.totalorder %s41, 14
      %p75 = por %p73, %p74
      %p76 = scmp.ne.s32.totalorder %s67, %s68
      %p77 = scmp.eq.s32.totalorder %s41, 0
      %p78 = por %p76, %p77
      %p79 = scmp.ne.s32.totalorder %s67, %s68
      %p80 = scmp.eq.s32.totalorder %s42, 14
      %p81 = por %p79, %p80
      %p83 = scmp.ne.s32.totalorder %s68, %s82
      %p84 = scmp.eq.s32.totalorder %s42, 0
      %p85 = por %p83, %p84
      %s87 = sadd.s32 %s86, 1
      %p90 = scmp.eq.s32.totalorder %s36, 14
      %p91 = scmp.ne.s32.totalorder %s86, %s88
      %p92 = scmp.eq.s32.totalorder %s36, 0
      %p93 = por %p91, %p92
      %p94 = scmp.ne.s32.totalorder %s86, %s88
      %p95 = scmp.eq.s32.totalorder %s41, 14
      %p96 = por %p94, %p95
      %p97 = scmp.ne.s32.totalorder %s88, %s89
      %p98 = scmp.eq.s32.totalorder %s41, 0
      %p99 = por %p97, %p98
      %p100 = scmp.ne.s32.totalorder %s88, %s89
      %p101 = scmp.eq.s32.totalorder %s42, 14
      %p102 = por %p100, %p101
      %p104 = scmp.ne.s32.totalorder %s89, %s103
      %p105 = scmp.eq.s32.totalorder %s42, 0
      %p106 = por %p104, %p105
      %s108 = sadd.s32 %s107, 1
      %p111 = scmp.eq.s32.totalorder %s36, 14
      %p112 = scmp.ne.s32.totalorder %s107, %s109
      %p113 = scmp.eq.s32.totalorder %s36, 0
      %p114 = por %p112, %p113
      %p115 = scmp.ne.s32.totalorder %s107, %s109
      %p116 = scmp.eq.s32.totalorder %s41, 14
      %p117 = por %p115, %p116
      %p118 = scmp.ne.s32.totalorder %s109, %s110
      %p119 = scmp.eq.s32.totalorder %s41, 0
      %p120 = por %p118, %p119
      %p121 = scmp.ne.s32.totalorder %s109, %s110
      %p122 = scmp.eq.s32.totalorder %s42, 14
      %p123 = por %p121, %p122
      %p125 = scmp.ne.s32.totalorder %s110, %s124
      %p126 = scmp.eq.s32.totalorder %s42, 0
      %p127 = por %p125, %p126
      %s129 = sadd.s32 %s128, 1
      %p132 = scmp.eq.s32.totalorder %s36, 14
      %p133 = scmp.ne.s32.totalorder %s128, %s130
      %p134 = scmp.eq.s32.totalorder %s36, 0
      %p135 = por %p133, %p134
      %p136 = scmp.ne.s32.totalorder %s128, %s130
      %p137 = scmp.eq.s32.totalorder %s41, 14
      %p138 = por %p136, %p137
      %p139 = scmp.ne.s32.totalorder %s130, %s131
      %p140 = scmp.eq.s32.totalorder %s41, 0
      %p141 = por %p139, %p140
      %p142 = scmp.ne.s32.totalorder %s130, %s131
      %p143 = scmp.eq.s32.totalorder %s42, 14
      %p144 = por %p142, %p143
      %p146 = scmp.ne.s32.totalorder %s131, %s145
      %p147 = scmp.eq.s32.totalorder %s42, 0
      %p148 = por %p146, %p147
      %s150 = sadd.s32 %s149, 1
      %p153 = scmp.eq.s32.totalorder %s36, 14
      %p154 = scmp.ne.s32.totalorder %s149, %s151
      %p155 = scmp.eq.s32.totalorder %s36, 0
      %p156 = por %p154, %p155
      %p157 = scmp.ne.s32.totalorder %s149, %s151
      %p158 = scmp.eq.s32.totalorder %s41, 14
      %p159 = por %p157, %p158
      %p160 = scmp.ne.s32.totalorder %s151, %s152
      %p161 = scmp.eq.s32.totalorder %s41, 0
      %p162 = por %p160, %p161
      %p163 = scmp.ne.s32.totalorder %s151, %s152
      %p164 = scmp.eq.s32.totalorder %s42, 14
      %p165 = por %p163, %p164
      %p167 = scmp.ne.s32.totalorder %s152, %s166
      %p168 = scmp.eq.s32.totalorder %s42, 0
      %p169 = por %p167, %p168
      %s171 = sadd.s32 %s170, 1
      %p174 = scmp.eq.s32.totalorder %s36, 14
      %p175 = scmp.ne.s32.totalorder %s170, %s172
      %p176 = scmp.eq.s32.totalorder %s36, 0
      %p177 = por %p175, %p176
      %p178 = scmp.ne.s32.totalorder %s170, %s172
      %p179 = scmp.eq.s32.totalorder %s41, 14
      %p180 = por %p178, %p179
      %p181 = scmp.ne.s32.totalorder %s172, %s173
      %p182 = scmp.eq.s32.totalorder %s41, 0
      %p183 = por %p181, %p182
      %p184 = scmp.ne.s32.totalorder %s172, %s173
      %p185 = scmp.eq.s32.totalorder %s42, 14
      %p186 = por %p184, %p185
      %p188 = scmp.ne.s32.totalorder %s173, %s187
      %p189 = scmp.eq.s32.totalorder %s42, 0
      %p190 = por %p188, %p189
      %s192 = sadd.s32 %s191, 1
      %p195 = scmp.eq.s32.totalorder %s36, 14
      %p196 = scmp.ne.s32.totalorder %s191, %s193
      %p197 = scmp.eq.s32.totalorder %s36, 0
      %p198 = por %p196, %p197
      %p199 = scmp.ne.s32.totalorder %s191, %s193
      %p200 = scmp.eq.s32.totalorder %s41, 14
      %p201 = por %p199, %p200
      %p202 = scmp.ne.s32.totalorder %s193, %s194
      %p203 = scmp.eq.s32.totalorder %s41, 0
      %p204 = por %p202, %p203
      %p205 = scmp.ne.s32.totalorder %s193, %s194
      %p206 = scmp.eq.s32.totalorder %s42, 14
      %p207 = por %p205, %p206
      %p209 = scmp.ne.s32.totalorder %s194, %s208
      %p210 = scmp.eq.s32.totalorder %s42, 0
      %p211 = por %p209, %p210
      %s213 = sadd.s32 %s212, 1
      %p216 = scmp.eq.s32.totalorder %s36, 14
      %p217 = scmp.ne.s32.totalorder %s212, %s214
      %p218 = scmp.eq.s32.totalorder %s36, 0
      %p219 = por %p217, %p218
      %p220 = scmp.ne.s32.totalorder %s212, %s214
      %p221 = scmp.eq.s32.totalorder %s41, 14
      %p222 = por %p220, %p221
      %p223 = scmp.ne.s32.totalorder %s214, %s215
      %p224 = scmp.eq.s32.totalorder %s41, 0
      %p225 = por %p223, %p224
      %p226 = scmp.ne.s32.totalorder %s214, %s215
      %p227 = scmp.eq.s32.totalorder %s42, 14
      %p228 = por %p226, %p227
      %p230 = scmp.ne.s32.totalorder %s215, %s229
      %p231 = scmp.eq.s32.totalorder %s42, 0
      %p232 = por %p230, %p231
      %s234 = sadd.s32 %s233, 1
      %p237 = scmp.eq.s32.totalorder %s36, 14
      %p238 = scmp.ne.s32.totalorder %s233, %s235
      %p239 = scmp.eq.s32.totalorder %s36, 0
      %p240 = por %p238, %p239
      %p241 = scmp.ne.s32.totalorder %s233, %s235
      %p242 = scmp.eq.s32.totalorder %s41, 14
      %p243 = por %p241, %p242
      %p244 = scmp.ne.s32.totalorder %s235, %s236
      %p245 = scmp.eq.s32.totalorder %s41, 0
      %p246 = por %p244, %p245
      %p247 = scmp.ne.s32.totalorder %s235, %s236
      %p248 = scmp.eq.s32.totalorder %s42, 14
      %p249 = por %p247, %p248
      %p251 = scmp.ne.s32.totalorder %s236, %s250
      %p252 = scmp.eq.s32.totalorder %s42, 0
      %p253 = por %p251, %p252
      %s254 = ssub.s32 %s36, %s43
      %p255 = scmp.eq.s32.totalorder %s254, 0
      %s257 = sadd.s32 %s256, 1
      %s258 = scalar_select %p255, %s256, %s257
      %p261 = pneg %p255
      %p262 = scmp.eq.s32.totalorder %s36, 14
      %p263 = por %p261, %p262
      %p264 = scmp.ne.s32.totalorder %s256, %s259
      %p265 = scmp.eq.s32.totalorder %s36, 0
      %p266 = por %p264, %p265
      %p267 = scmp.ne.s32.totalorder %s256, %s259
      %p268 = scmp.eq.s32.totalorder %s41, 14
      %p269 = por %p267, %p268
      %p270 = scmp.ne.s32.totalorder %s259, %s260
      %p271 = scmp.eq.s32.totalorder %s41, 0
      %p272 = por %p270, %p271
      %p273 = scmp.ne.s32.totalorder %s259, %s260
      %p274 = scmp.eq.s32.totalorder %s42, 14
      %p275 = por %p273, %p274
      %p277 = scmp.ne.s32.totalorder %s260, %s276
      %p278 = scmp.eq.s32.totalorder %s42, 0
      %p279 = por %p277, %p278
      %s280 = ssub.s32 %s36, %s43
      %p281 = scmp.eq.s32.totalorder %s280, 0
      %s283 = sadd.s32 %s282, 1
      %s284 = scalar_select %p281, %s282, %s283
      %p287 = pneg %p281
      %p288 = scmp.eq.s32.totalorder %s36, 14
      %p289 = por %p287, %p288
      %p290 = scmp.ne.s32.totalorder %s282, %s285
      %p291 = scmp.eq.s32.totalorder %s36, 0
      %p292 = por %p290, %p291
      %p293 = scmp.ne.s32.totalorder %s282, %s285
      %p294 = scmp.eq.s32.totalorder %s41, 14
      %p295 = por %p293, %p294
      %p296 = scmp.ne.s32.totalorder %s285, %s286
      %p297 = scmp.eq.s32.totalorder %s41, 0
      %p298 = por %p296, %p297
      %p299 = scmp.ne.s32.totalorder %s285, %s286
      %p300 = scmp.eq.s32.totalorder %s42, 14
      %p301 = por %p299, %p300
      %p303 = scmp.ne.s32.totalorder %s286, %s302
      %p304 = scmp.eq.s32.totalorder %s42, 0
      %p305 = por %p303, %p304
      %s306 = ssub.s32 %s36, %s43
      %p307 = scmp.eq.s32.totalorder %s306, 0
      %s309 = sadd.s32 %s308, 1
      %s310 = scalar_select %p307, %s308, %s309
      %p313 = pneg %p307
      %p314 = scmp.eq.s32.totalorder %s36, 14
      %p315 = por %p313, %p314
      %p316 = scmp.ne.s32.totalorder %s308, %s311
      %p317 = scmp.eq.s32.totalorder %s36, 0
      %p318 = por %p316, %p317
      %p319 = scmp.ne.s32.totalorder %s308, %s311
      %p320 = scmp.eq.s32.totalorder %s41, 14
      %p321 = por %p319, %p320
      %p322 = scmp.ne.s32.totalorder %s311, %s312
      %p323 = scmp.eq.s32.totalorder %s41, 0
      %p324 = por %p322, %p323
      %p325 = scmp.ne.s32.totalorder %s311, %s312
      %p326 = scmp.eq.s32.totalorder %s42, 14
      %p327 = por %p325, %p326
      %p329 = scmp.ne.s32.totalorder %s312, %s328
      %p330 = scmp.eq.s32.totalorder %s42, 0
      %p331 = por %p329, %p330
      %s332 = ssub.s32 %s36, %s43
      %p333 = scmp.eq.s32.totalorder %s332, 0
      %s335 = sadd.s32 %s334, 1
      %s336 = scalar_select %p333, %s334, %s335
      %p339 = pneg %p333
      %p340 = scmp.eq.s32.totalorder %s36, 14
      %p341 = por %p339, %p340
      %p342 = scmp.ne.s32.totalorder %s334, %s337
      %p343 = scmp.eq.s32.totalorder %s36, 0
      %p344 = por %p342, %p343
      %p345 = scmp.ne.s32.totalorder %s334, %s337
      %p346 = scmp.eq.s32.totalorder %s41, 14
      %p347 = por %p345, %p346
      %p348 = scmp.ne.s32.totalorder %s337, %s338
      %p349 = scmp.eq.s32.totalorder %s41, 0
      %p350 = por %p348, %p349
      %p351 = scmp.ne.s32.totalorder %s337, %s338
      %p352 = scmp.eq.s32.totalorder %s42, 14
      %p353 = por %p351, %p352
      %p355 = scmp.ne.s32.totalorder %s338, %s354
      %p356 = scmp.eq.s32.totalorder %s42, 0
      %p357 = por %p355, %p356
      %s358 = ssub.s32 %s36, %s43
      %p359 = scmp.eq.s32.totalorder %s358, 0
      %s361 = sadd.s32 %s360, 1
      %s362 = scalar_select %p359, %s360, %s361
      %p365 = pneg %p359
      %p366 = scmp.eq.s32.totalorder %s36, 14
      %p367 = por %p365, %p366
      %p368 = scmp.ne.s32.totalorder %s360, %s363
      %p369 = scmp.eq.s32.totalorder %s36, 0
      %p370 = por %p368, %p369
      %p371 = scmp.ne.s32.totalorder %s360, %s363
      %p372 = scmp.eq.s32.totalorder %s41, 14
      %p373 = por %p371, %p372
      %p374 = scmp.ne.s32.totalorder %s363, %s364
      %p375 = scmp.eq.s32.totalorder %s41, 0
      %p376 = por %p374, %p375
      %p377 = scmp.ne.s32.totalorder %s363, %s364
      %p378 = scmp.eq.s32.totalorder %s42, 14
      %p379 = por %p377, %p378
      %p381 = scmp.ne.s32.totalorder %s364, %s380
      %p382 = scmp.eq.s32.totalorder %s42, 0
      %p383 = por %p381, %p382
      %s384 = ssub.s32 %s36, %s43
      %p385 = scmp.eq.s32.totalorder %s384, 0
      %s387 = sadd.s32 %s386, 1
      %s388 = scalar_select %p385, %s386, %s387
      %p391 = pneg %p385
      %p392 = scmp.eq.s32.totalorder %s36, 14
      %p393 = por %p391, %p392
      %p394 = scmp.ne.s32.totalorder %s386, %s389
      %p395 = scmp.eq.s32.totalorder %s36, 0
      %p396 = por %p394, %p395
      %p397 = scmp.ne.s32.totalorder %s386, %s389
      %p398 = scmp.eq.s32.totalorder %s41, 14
      %p399 = por %p397, %p398
      %p400 = scmp.ne.s32.totalorder %s389, %s390
      %p401 = scmp.eq.s32.totalorder %s41, 0
      %p402 = por %p400, %p401
      %p403 = scmp.ne.s32.totalorder %s389, %s390
      %p404 = scmp.eq.s32.totalorder %s42, 14
      %p405 = por %p403, %p404
      %p407 = scmp.ne.s32.totalorder %s390, %s406
      %p408 = scmp.eq.s32.totalorder %s42, 0
      %p409 = por %p407, %p408
      %s410 = ssub.s32 %s36, %s43
      %p411 = scmp.eq.s32.totalorder %s410, 0
      %s413 = sadd.s32 %s412, 1
      %s414 = scalar_select %p411, %s412, %s413
      %p417 = pneg %p411
      %p418 = scmp.eq.s32.totalorder %s36, 14
      %p419 = por %p417, %p418
      %p420 = scmp.ne.s32.totalorder %s412, %s415
      %p421 = scmp.eq.s32.totalorder %s36, 0
      %p422 = por %p420, %p421
      %p423 = scmp.ne.s32.totalorder %s412, %s415
      %p424 = scmp.eq.s32.totalorder %s41, 14
      %p425 = por %p423, %p424
      %p426 = scmp.ne.s32.totalorder %s415, %s416
      %p427 = scmp.eq.s32.totalorder %s41, 0
      %p428 = por %p426, %p427
      %p429 = scmp.ne.s32.totalorder %s415, %s416
      %p430 = scmp.eq.s32.totalorder %s42, 14
      %p431 = por %p429, %p430
      %p433 = scmp.ne.s32.totalorder %s416, %s432
      %p434 = scmp.eq.s32.totalorder %s42, 0
      %p435 = por %p433, %p434
      %s436 = ssub.s32 %s36, %s43
      %p437 = scmp.eq.s32.totalorder %s436, 0
      %s439 = sadd.s32 %s438, 1
      %s440 = scalar_select %p437, %s438, %s439
      %p443 = pneg %p437
      %p444 = scmp.eq.s32.totalorder %s36, 14
      %p445 = por %p443, %p444
      %p446 = scmp.ne.s32.totalorder %s438, %s441
      %p447 = scmp.eq.s32.totalorder %s36, 0
      %p448 = por %p446, %p447
      %p449 = scmp.ne.s32.totalorder %s438, %s441
      %p450 = scmp.eq.s32.totalorder %s41, 14
      %p451 = por %p449, %p450
      %p452 = scmp.ne.s32.totalorder %s441, %s442
      %p453 = scmp.eq.s32.totalorder %s41, 0
      %p454 = por %p452, %p453
      %p455 = scmp.ne.s32.totalorder %s441, %s442
      %p456 = scmp.eq.s32.totalorder %s42, 14
      %p457 = por %p455, %p456
      %p459 = scmp.ne.s32.totalorder %s442, %s458
      %p460 = scmp.eq.s32.totalorder %s42, 0
      %p461 = por %p459, %p460
      %s462 = ssub.s32 %s36, %s43
      %p463 = scmp.eq.s32.totalorder %s462, 0
      %s465 = sadd.s32 %s464, 1
      %s466 = scalar_select %p463, %s464, %s465
      %p469 = pneg %p463
      %p470 = scmp.eq.s32.totalorder %s36, 14
      %p471 = por %p469, %p470
      %p472 = scmp.ne.s32.totalorder %s464, %s467
      %p473 = scmp.eq.s32.totalorder %s36, 0
      %p474 = por %p472, %p473
      %p475 = scmp.ne.s32.totalorder %s464, %s467
      %p476 = scmp.eq.s32.totalorder %s41, 14
      %p477 = por %p475, %p476
      %p478 = scmp.ne.s32.totalorder %s467, %s468
      %p479 = scmp.eq.s32.totalorder %s41, 0
      %p480 = por %p478, %p479
      %p481 = scmp.ne.s32.totalorder %s467, %s468
      %p482 = scmp.eq.s32.totalorder %s42, 14
      %p483 = por %p481, %p482
      %p485 = scmp.ne.s32.totalorder %s468, %s484
      %p486 = scmp.eq.s32.totalorder %s42, 0
      %p487 = por %p485, %p486
      %s489 = sadd.s32 %s488, 1
      %p492 = scmp.eq.s32.totalorder %s36, 14
      %p493 = scmp.ne.s32.totalorder %s488, %s490
      %p494 = scmp.eq.s32.totalorder %s36, 0
      %p495 = por %p493, %p494
      %p496 = scmp.ne.s32.totalorder %s488, %s490
      %p497 = scmp.eq.s32.totalorder %s41, 14
      %p498 = por %p496, %p497
      %p499 = scmp.ne.s32.totalorder %s490, %s491
      %p500 = scmp.eq.s32.totalorder %s41, 0
      %p501 = por %p499, %p500
      %p502 = scmp.ne.s32.totalorder %s490, %s491
      %p503 = scmp.eq.s32.totalorder %s42, 14
      %p504 = por %p502, %p503
      %p506 = scmp.ne.s32.totalorder %s491, %s505
      %p507 = scmp.eq.s32.totalorder %s42, 0
      %p508 = por %p506, %p507
      %s510 = sadd.s32 %s509, 1
      %p513 = scmp.eq.s32.totalorder %s36, 14
      %p514 = scmp.ne.s32.totalorder %s509, %s511
      %p515 = scmp.eq.s32.totalorder %s36, 0
      %p516 = por %p514, %p515
      %p517 = scmp.ne.s32.totalorder %s509, %s511
      %p518 = scmp.eq.s32.totalorder %s41, 14
      %p519 = por %p517, %p518
      %p520 = scmp.ne.s32.totalorder %s511, %s512
      %p521 = scmp.eq.s32.totalorder %s41, 0
      %p522 = por %p520, %p521
      %p523 = scmp.ne.s32.totalorder %s511, %s512
      %p524 = scmp.eq.s32.totalorder %s42, 14
      %p525 = por %p523, %p524
      %p527 = scmp.ne.s32.totalorder %s512, %s526
      %p528 = scmp.eq.s32.totalorder %s42, 0
      %p529 = por %p527, %p528
      %s531 = sadd.s32 %s530, 1
      %p534 = scmp.eq.s32.totalorder %s36, 14
      %p535 = scmp.ne.s32.totalorder %s530, %s532
      %p536 = scmp.eq.s32.totalorder %s36, 0
      %p537 = por %p535, %p536
      %p538 = scmp.ne.s32.totalorder %s530, %s532
      %p539 = scmp.eq.s32.totalorder %s41, 14
      %p540 = por %p538, %p539
      %p541 = scmp.ne.s32.totalorder %s532, %s533
      %p542 = scmp.eq.s32.totalorder %s41, 0
      %p543 = por %p541, %p542
      %p544 = scmp.ne.s32.totalorder %s532, %s533
      %p545 = scmp.eq.s32.totalorder %s42, 14
      %p546 = por %p544, %p545
      %p548 = scmp.ne.s32.totalorder %s533, %s547
      %p549 = scmp.eq.s32.totalorder %s42, 0
      %p550 = por %p548, %p549
      %s552 = sadd.s32 %s551, 1
      %p555 = scmp.eq.s32.totalorder %s36, 14
      %p556 = scmp.ne.s32.totalorder %s551, %s553
      %p557 = scmp.eq.s32.totalorder %s36, 0
      %p558 = por %p556, %p557
      %p559 = scmp.ne.s32.totalorder %s551, %s553
      %p560 = scmp.eq.s32.totalorder %s41, 14
      %p561 = por %p559, %p560
      %p562 = scmp.ne.s32.totalorder %s553, %s554
      %p563 = scmp.eq.s32.totalorder %s41, 0
      %p564 = por %p562, %p563
      %p565 = scmp.ne.s32.totalorder %s553, %s554
      %p566 = scmp.eq.s32.totalorder %s42, 14
      %p567 = por %p565, %p566
      %p569 = scmp.ne.s32.totalorder %s554, %s568
      %p570 = scmp.eq.s32.totalorder %s42, 0
      %p571 = por %p569, %p570
      %s573 = sadd.s32 %s572, 1
      %p576 = scmp.eq.s32.totalorder %s36, 14
      %p577 = scmp.ne.s32.totalorder %s572, %s574
      %p578 = scmp.eq.s32.totalorder %s36, 0
      %p579 = por %p577, %p578
      %p580 = scmp.ne.s32.totalorder %s572, %s574
      %p581 = scmp.eq.s32.totalorder %s41, 14
      %p582 = por %p580, %p581
      %p583 = scmp.ne.s32.totalorder %s574, %s575
      %p584 = scmp.eq.s32.totalorder %s41, 0
      %p585 = por %p583, %p584
      %p586 = scmp.ne.s32.totalorder %s574, %s575
      %p587 = scmp.eq.s32.totalorder %s42, 14
      %p588 = por %p586, %p587
      %p590 = scmp.ne.s32.totalorder %s575, %s589
      %p591 = scmp.eq.s32.totalorder %s42, 0
      %p592 = por %p590, %p591
      %p593 = scmp.le.s32.totalorder 1, %s36
      %p594 = scmp.lt.s32.totalorder %s36, 16
      %p595 = pnand %p593, %p594
      %p596 = pneg %p595
      // Predicated region
      $region9: #{incompr_ns_forward.1} parent=5 // pred_check
        _
      $region10: #{incompr_ns_forward.1} parent=5 // pred_check_branch
        %598 = sbr.rel (%p595) target = $region12
      $region11: #{incompr_ns_forward.1} parent=5 // pred_region
        %s599 = ssub.s32 %s36, 1
        // Predicated region
        $region13: #{incompr_ns_forward.1} parent=11 // pred_check
          %p600 = pneg %p57
        $region14: #{incompr_ns_forward.1} parent=11 // pred_check_branch
          %602 = sbr.rel (%p600) target = $region16
        $region15: #{incompr_ns_forward.1} parent=11 // pred_region
          _
        $region16: #{incompr_ns_forward.1} parent=11 // pred_fallthru
          _
        // Predicated region
        $region17: #{incompr_ns_forward.1} parent=11 // pred_check
          %p603 = pneg %p78
        $region18: #{incompr_ns_forward.1} parent=11 // pred_check_branch
          %605 = sbr.rel (%p603) target = $region20
        $region19: #{incompr_ns_forward.1} parent=11 // pred_region
          _
        $region20: #{incompr_ns_forward.1} parent=11 // pred_fallthru
          _
        // Predicated region
        $region21: #{incompr_ns_forward.1} parent=11 // pred_check
          %p606 = pneg %p99
        $region22: #{incompr_ns_forward.1} parent=11 // pred_check_branch
          %608 = sbr.rel (%p606) target = $region24
        $region23: #{incompr_ns_forward.1} parent=11 // pred_region
          _
        $region24: #{incompr_ns_forward.1} parent=11 // pred_fallthru
          _
        // Predicated region
        $region25: #{incompr_ns_forward.1} parent=11 // pred_check
          %p609 = pneg %p120
        $region26: #{incompr_ns_forward.1} parent=11 // pred_check_branch
          %611 = sbr.rel (%p609) target = $region28
        $region27: #{incompr_ns_forward.1} parent=11 // pred_region
          %s613 = ssub.s32 1024, 1024
          %614 = vsyncadd [#allocation11], %s613
          %s615 = sshll.u32 [#allocation10], 4
          %s616 = int_to_ptr.vmem [resolvable:$true] %s615
          %621 = dma.hbm_to_vmem [thread:$0]  %s5, 1024, %s616, [#allocation11], 64, 64, 4
        $region28: #{incompr_ns_forward.1} parent=11 // pred_fallthru
          _
        // Predicated region
        $region29: #{incompr_ns_forward.1} parent=11 // pred_check
          %p622 = pneg %p141
        $region30: #{incompr_ns_forward.1} parent=11 // pred_check_branch
          %624 = sbr.rel (%p622) target = $region32
        $region31: #{incompr_ns_forward.1} parent=11 // pred_region
          %s626 = ssub.s32 1024, 1024
          %627 = vsyncadd [#allocation13], %s626
          %s628 = sshll.u32 [#allocation12], 4
          %s629 = int_to_ptr.vmem [resolvable:$true] %s628
          %634 = dma.hbm_to_vmem [thread:$0]  %s6, 1024, %s629, [#allocation13], 64, 64, 4
        $region32: #{incompr_ns_forward.1} parent=11 // pred_fallthru
          _
        // Predicated region
        $region33: #{incompr_ns_forward.1} parent=11 // pred_check
          %p635 = pneg %p162
        $region34: #{incompr_ns_forward.1} parent=11 // pred_check_branch
          %637 = sbr.rel (%p635) target = $region36
        $region35: #{incompr_ns_forward.1} parent=11 // pred_region
          _
        $region36: #{incompr_ns_forward.1} parent=11 // pred_fallthru
          _
        // Predicated region
        $region37: #{incompr_ns_forward.1} parent=11 // pred_check
          %p638 = pneg %p183
        $region38: #{incompr_ns_forward.1} parent=11 // pred_check_branch
          %640 = sbr.rel (%p638) target = $region40
        $region39: #{incompr_ns_forward.1} parent=11 // pred_region
          %s642 = ssub.s32 1024, 1024
          %643 = vsyncadd [#allocation13], %s642
          %s644 = sshll.u32 [#allocation14], 4
          %s645 = int_to_ptr.vmem [resolvable:$true] %s644
          %650 = dma.hbm_to_vmem [thread:$0]  %s8, 1024, %s645, [#allocation13], 64, 64, 4
        $region40: #{incompr_ns_forward.1} parent=11 // pred_fallthru
          _
        // Predicated region
        $region41: #{incompr_ns_forward.1} parent=11 // pred_check
          %p651 = pneg %p204
        $region42: #{incompr_ns_forward.1} parent=11 // pred_check_branch
          %653 = sbr.rel (%p651) target = $region44
        $region43: #{incompr_ns_forward.1} parent=11 // pred_region
          %s655 = ssub.s32 1024, 1024
          %656 = vsyncadd [#allocation16], %s655
          %s657 = sshll.u32 [#allocation15], 4
          %s658 = int_to_ptr.vmem [resolvable:$true] %s657
          %663 = dma.hbm_to_vmem [thread:$0]  %s9, 1024, %s658, [#allocation16], 64, 64, 4
        $region44: #{incompr_ns_forward.1} parent=11 // pred_fallthru
          _
        // Predicated region
        $region45: #{incompr_ns_forward.1} parent=11 // pred_check
          %p664 = pneg %p225
        $region46: #{incompr_ns_forward.1} parent=11 // pred_check_branch
          %666 = sbr.rel (%p664) target = $region48
        $region47: #{incompr_ns_forward.1} parent=11 // pred_region
          %s668 = ssub.s32 1024, 1024
          %669 = vsyncadd [#allocation16], %s668
          %s670 = sshll.u32 [#allocation17], 4
          %s671 = int_to_ptr.vmem [resolvable:$true] %s670
          %676 = dma.hbm_to_vmem [thread:$0]  %s10, 1024, %s671, [#allocation16], 64, 64, 4
        $region48: #{incompr_ns_forward.1} parent=11 // pred_fallthru
          _
        // Predicated region
        $region49: #{incompr_ns_forward.1} parent=11 // pred_check
          %p677 = pneg %p246
        $region50: #{incompr_ns_forward.1} parent=11 // pred_check_branch
          %679 = sbr.rel (%p677) target = $region52
        $region51: #{incompr_ns_forward.1} parent=11 // pred_region
          %s681 = ssub.s32 128, 128
          %682 = vsyncadd [#allocation19], %s681
          %s684 = sshll.u32 [#allocation18], 4
          %s685 = int_to_ptr.vmem [resolvable:$true] %s684
          %687 = dma.hbm_to_vmem [thread:$0]  %s11, 128, %s685, [#allocation19]
        $region52: #{incompr_ns_forward.1} parent=11 // pred_fallthru
          _
        // Predicated region
        $region53: #{incompr_ns_forward.1} parent=11 // pred_check
          %p688 = pneg %p501
        $region54: #{incompr_ns_forward.1} parent=11 // pred_check_branch
          %690 = sbr.rel (%p688) target = $region56
        $region55: #{incompr_ns_forward.1} parent=11 // pred_region
          %s692 = ssub.s32 1024, 1024
          %693 = vsyncadd [#allocation13], %s692
          %s694 = sshll.u32 [#allocation27], 4
          %s695 = int_to_ptr.vmem [resolvable:$true] %s694
          %700 = dma.hbm_to_vmem [thread:$0]  %s21, 1024, %s695, [#allocation13], 64, 64, 4
        $region56: #{incompr_ns_forward.1} parent=11 // pred_fallthru
          _
        // Predicated region
        $region57: #{incompr_ns_forward.1} parent=11 // pred_check
          %p701 = pneg %p522
        $region58: #{incompr_ns_forward.1} parent=11 // pred_check_branch
          %703 = sbr.rel (%p701) target = $region60
        $region59: #{incompr_ns_forward.1} parent=11 // pred_region
          %s705 = ssub.s32 1024, 1024
          %706 = vsyncadd [#allocation16], %s705
          %s707 = sshll.u32 [#allocation28], 4
          %s708 = int_to_ptr.vmem [resolvable:$true] %s707
          %713 = dma.hbm_to_vmem [thread:$0]  %s22, 1024, %s708, [#allocation16], 64, 64, 4
        $region60: #{incompr_ns_forward.1} parent=11 // pred_fallthru
          _
        // Predicated region
        $region61: #{incompr_ns_forward.1} parent=11 // pred_check
          %p714 = pneg %p543
        $region62: #{incompr_ns_forward.1} parent=11 // pred_check_branch
          %716 = sbr.rel (%p714) target = $region64
        $region63: #{incompr_ns_forward.1} parent=11 // pred_region
          %s718 = ssub.s32 1024, 1024
          %719 = vsyncadd [#allocation19], %s718
          %s720 = sshll.u32 [#allocation29], 4
          %s721 = int_to_ptr.vmem [resolvable:$true] %s720
          %726 = dma.hbm_to_vmem [thread:$0]  %s23, 1024, %s721, [#allocation19], 64, 64, 4
        $region64: #{incompr_ns_forward.1} parent=11 // pred_fallthru
          _
        // Predicated region
        $region65: #{incompr_ns_forward.1} parent=11 // pred_check
          %p727 = pneg %p564
        $region66: #{incompr_ns_forward.1} parent=11 // pred_check_branch
          %729 = sbr.rel (%p727) target = $region68
        $region67: #{incompr_ns_forward.1} parent=11 // pred_region
          %s731 = ssub.s32 64, 64
          %732 = vsyncadd [#allocation31], %s731
          %s734 = sshll.u32 [#allocation30], 4
          %s735 = int_to_ptr.vmem [resolvable:$true] %s734
          %737 = dma.hbm_to_vmem [thread:$0]  %s24, 64, %s735, [#allocation31]
        $region68: #{incompr_ns_forward.1} parent=11 // pred_fallthru
          _
      $region12: #{incompr_ns_forward.1} parent=5 // pred_fallthru
        _
      %p738 = scmp.lt.s32.totalorder %s36, 15
      // Predicated region
      $region69: #{incompr_ns_forward.1} parent=5 // pred_check
        %p739 = pneg %p738
      $region70: #{incompr_ns_forward.1} parent=5 // pred_check_branch
        %741 = sbr.rel (%p739) target = $region72
      $region71: #{incompr_ns_forward.1} parent=5 // pred_region
        // Predicated region
        $region73: #{incompr_ns_forward.1} parent=71 // pred_check
          %p742 = pneg %p266
        $region74: #{incompr_ns_forward.1} parent=71 // pred_check_branch
          %744 = sbr.rel (%p742) target = $region76
        $region75: #{incompr_ns_forward.1} parent=71 // pred_region
          %s745 = sand.u32 %s36, 1
          %s746 = scalar_lea.sflag [#allocation11], %s745
          %s747 = sand.u32 %s256, 1
          %s748 = smul.addr %s747, 64
          %s749 = scalar_lea.vmem [#allocation20], %s748
          %s751 = ssub.s32 1024, 1024
          %752 = vsyncadd %s746, %s751
          %s753 = smul.addr %s36, 16
          %s754 = smul.addr %s753, 64
          %s755 = scalar_lea.hbm %s12, %s754
          %s756 = sshll.u32 %s749, 4
          %s757 = int_to_ptr.vmem [resolvable:$true] %s756
          %762 = dma.hbm_to_vmem [thread:$0]  %s755, 1024, %s757, %s746, 64, 64, 4
        $region76: #{incompr_ns_forward.1} parent=71 // pred_fallthru
          _
        // Predicated region
        $region77: #{incompr_ns_forward.1} parent=71 // pred_check
          %p763 = pneg %p292
        $region78: #{incompr_ns_forward.1} parent=71 // pred_check_branch
          %765 = sbr.rel (%p763) target = $region80
        $region79: #{incompr_ns_forward.1} parent=71 // pred_region
          %s766 = sand.u32 %s36, 1
          %s767 = scalar_lea.sflag [#allocation11], %s766
          %s768 = sand.u32 %s282, 1
          %s769 = smul.addr %s768, 128
          %s770 = scalar_lea.vmem [#allocation21], %s769
          %s772 = ssub.s32 2048, 2048
          %773 = vsyncadd %s767, %s772
          %s774 = smul.addr %s36, 32
          %s775 = smul.addr %s774, 64
          %s776 = scalar_lea.hbm %s13, %s775
          %s777 = sshll.u32 %s770, 4
          %s778 = int_to_ptr.vmem [resolvable:$true] %s777
          %783 = dma.hbm_to_vmem [thread:$0]  %s776, 2048, %s778, %s767, 128, 128, 8
        $region80: #{incompr_ns_forward.1} parent=71 // pred_fallthru
          _
        // Predicated region
        $region81: #{incompr_ns_forward.1} parent=71 // pred_check
          %p784 = pneg %p318
        $region82: #{incompr_ns_forward.1} parent=71 // pred_check_branch
          %786 = sbr.rel (%p784) target = $region84
        $region83: #{incompr_ns_forward.1} parent=71 // pred_region
          %s787 = sand.u32 %s36, 1
          %s788 = scalar_lea.sflag [#allocation11], %s787
          %s789 = sand.u32 %s308, 1
          %s790 = smul.addr %s789, 64
          %s791 = scalar_lea.vmem [#allocation22], %s790
          %s793 = ssub.s32 1024, 1024
          %794 = vsyncadd %s788, %s793
          %s795 = smul.addr %s36, 16
          %s796 = smul.addr %s795, 64
          %s797 = scalar_lea.hbm %s14, %s796
          %s798 = sshll.u32 %s791, 4
          %s799 = int_to_ptr.vmem [resolvable:$true] %s798
          %804 = dma.hbm_to_vmem [thread:$0]  %s797, 1024, %s799, %s788, 64, 64, 4
        $region84: #{incompr_ns_forward.1} parent=71 // pred_fallthru
          _
        // Predicated region
        $region85: #{incompr_ns_forward.1} parent=71 // pred_check
          %p805 = pneg %p344
        $region86: #{incompr_ns_forward.1} parent=71 // pred_check_branch
          %807 = sbr.rel (%p805) target = $region88
        $region87: #{incompr_ns_forward.1} parent=71 // pred_region
          %s808 = sand.u32 %s36, 1
          %s809 = scalar_lea.sflag [#allocation11], %s808
          %s810 = sand.u32 %s334, 1
          %s811 = smul.addr %s810, 64
          %s812 = scalar_lea.vmem [#allocation23], %s811
          %s814 = ssub.s32 1024, 1024
          %815 = vsyncadd %s809, %s814
          %s816 = smul.addr %s36, 16
          %s817 = smul.addr %s816, 64
          %s818 = scalar_lea.hbm %s15, %s817
          %s819 = sshll.u32 %s812, 4
          %s820 = int_to_ptr.vmem [resolvable:$true] %s819
          %825 = dma.hbm_to_vmem [thread:$0]  %s818, 1024, %s820, %s809, 64, 64, 4
        $region88: #{incompr_ns_forward.1} parent=71 // pred_fallthru
          _
        // Predicated region
        $region89: #{incompr_ns_forward.1} parent=71 // pred_check
          %p826 = pneg %p370
        $region90: #{incompr_ns_forward.1} parent=71 // pred_check_branch
          %828 = sbr.rel (%p826) target = $region92
        $region91: #{incompr_ns_forward.1} parent=71 // pred_region
          %p829 = scmp.lt.s32.totalorder %s36, 14
          %s830 = scalar_select %p829, %s36, 14
          %s831 = smul.addr %s830, 8
          %s832 = scalar_lea.vmem %s16, %s831
        $region92: #{incompr_ns_forward.1} parent=71 // pred_fallthru
          _
        // Predicated region
        $region93: #{incompr_ns_forward.1} parent=71 // pred_check
          %p833 = pneg %p396
        $region94: #{incompr_ns_forward.1} parent=71 // pred_check_branch
          %835 = sbr.rel (%p833) target = $region96
        $region95: #{incompr_ns_forward.1} parent=71 // pred_region
          %s836 = sand.u32 %s36, 1
          %s837 = scalar_lea.sflag [#allocation11], %s836
          %s838 = sand.u32 %s386, 1
          %s839 = smul.addr %s838, 128
          %s840 = scalar_lea.vmem [#allocation24], %s839
          %s842 = ssub.s32 2048, 2048
          %843 = vsyncadd %s837, %s842
          %s844 = smul.addr %s36, 32
          %s845 = smul.addr %s844, 64
          %s846 = scalar_lea.hbm %s17, %s845
          %s847 = sshll.u32 %s840, 4
          %s848 = int_to_ptr.vmem [resolvable:$true] %s847
          %853 = dma.hbm_to_vmem [thread:$0]  %s846, 2048, %s848, %s837, 64, 64, 4
        $region96: #{incompr_ns_forward.1} parent=71 // pred_fallthru
          _
        // Predicated region
        $region97: #{incompr_ns_forward.1} parent=71 // pred_check
          %p854 = pneg %p422
        $region98: #{incompr_ns_forward.1} parent=71 // pred_check_branch
          %856 = sbr.rel (%p854) target = $region100
        $region99: #{incompr_ns_forward.1} parent=71 // pred_region
          %s857 = sand.u32 %s36, 1
          %s858 = scalar_lea.sflag [#allocation11], %s857
          %s859 = sand.u32 %s412, 1
          %s860 = smul.addr %s859, 64
          %s861 = scalar_lea.vmem [#allocation25], %s860
          %s863 = ssub.s32 1024, 1024
          %864 = vsyncadd %s858, %s863
          %s865 = smul.addr %s36, 16
          %s866 = smul.addr %s865, 64
          %s867 = scalar_lea.hbm %s18, %s866
          %s868 = sshll.u32 %s861, 4
          %s869 = int_to_ptr.vmem [resolvable:$true] %s868
          %874 = dma.hbm_to_vmem [thread:$0]  %s867, 1024, %s869, %s858, 64, 64, 4
        $region100: #{incompr_ns_forward.1} parent=71 // pred_fallthru
          _
        // Predicated region
        $region101: #{incompr_ns_forward.1} parent=71 // pred_check
          %p875 = pneg %p448
        $region102: #{incompr_ns_forward.1} parent=71 // pred_check_branch
          %877 = sbr.rel (%p875) target = $region104
        $region103: #{incompr_ns_forward.1} parent=71 // pred_region
          %s878 = sand.u32 %s36, 1
          %s879 = scalar_lea.sflag [#allocation11], %s878
          %s880 = sand.u32 %s438, 1
          %s881 = smul.addr %s880, 64
          %s882 = scalar_lea.vmem [#allocation26], %s881
          %s884 = ssub.s32 1024, 1024
          %885 = vsyncadd %s879, %s884
          %s886 = smul.addr %s36, 16
          %s887 = smul.addr %s886, 64
          %s888 = scalar_lea.hbm %s19, %s887
          %s889 = sshll.u32 %s882, 4
          %s890 = int_to_ptr.vmem [resolvable:$true] %s889
          %895 = dma.hbm_to_vmem [thread:$0]  %s888, 1024, %s890, %s879, 64, 64, 4
        $region104: #{incompr_ns_forward.1} parent=71 // pred_fallthru
          _
        // Predicated region
        $region105: #{incompr_ns_forward.1} parent=71 // pred_check
          %p896 = pneg %p474
        $region106: #{incompr_ns_forward.1} parent=71 // pred_check_branch
          %898 = sbr.rel (%p896) target = $region108
        $region107: #{incompr_ns_forward.1} parent=71 // pred_region
          %p899 = scmp.lt.s32.totalorder %s36, 14
          %s900 = scalar_select %p899, %s36, 14
          %s901 = smul.addr %s900, 8
          %s902 = scalar_lea.vmem %s20, %s901
        $region108: #{incompr_ns_forward.1} parent=71 // pred_fallthru
          _
      $region72: #{incompr_ns_forward.1} parent=5 // pred_fallthru
        _
      %p903 = scmp.le.s32.totalorder 1, %s36
      %p904 = scmp.lt.s32.totalorder %s36, 16
      %p905 = pnand %p903, %p904
      %p906 = pneg %p905
      // Predicated region
      $region109: #{incompr_ns_forward.1} parent=5 // pred_check
        _
      $region110: #{incompr_ns_forward.1} parent=5 // pred_check_branch
        %908 = sbr.rel (%p905) target = $region112
      $region111: #{incompr_ns_forward.1} parent=5 // pred_region
        %s909 = ssub.s32 %s36, 1
        // Predicated region
        $region113: #{incompr_ns_forward.1} parent=111 // pred_check
          %p910 = pneg %p120
        $region114: #{incompr_ns_forward.1} parent=111 // pred_check_branch
          %912 = sbr.rel (%p910) target = $region116
        $region115: #{incompr_ns_forward.1} parent=111 // pred_region
          %913 = dma.done [#allocation11], 1024
        $region116: #{incompr_ns_forward.1} parent=111 // pred_fallthru
          _
        // Predicated region
        $region117: #{incompr_ns_forward.1} parent=111 // pred_check
          %p914 = pneg %p141
        $region118: #{incompr_ns_forward.1} parent=111 // pred_check_branch
          %916 = sbr.rel (%p914) target = $region120
        $region119: #{incompr_ns_forward.1} parent=111 // pred_region
          %917 = dma.done [#allocation13], 1024
        $region120: #{incompr_ns_forward.1} parent=111 // pred_fallthru
          _
        // Predicated region
        $region121: #{incompr_ns_forward.1} parent=111 // pred_check
          %p918 = pneg %p183
        $region122: #{incompr_ns_forward.1} parent=111 // pred_check_branch
          %920 = sbr.rel (%p918) target = $region124
        $region123: #{incompr_ns_forward.1} parent=111 // pred_region
          %921 = dma.done [#allocation13], 1024
        $region124: #{incompr_ns_forward.1} parent=111 // pred_fallthru
          _
        // Predicated region
        $region125: #{incompr_ns_forward.1} parent=111 // pred_check
          %p922 = pneg %p204
        $region126: #{incompr_ns_forward.1} parent=111 // pred_check_branch
          %924 = sbr.rel (%p922) target = $region128
        $region127: #{incompr_ns_forward.1} parent=111 // pred_region
          %925 = dma.done [#allocation16], 1024
        $region128: #{incompr_ns_forward.1} parent=111 // pred_fallthru
          _
        // Predicated region
        $region129: #{incompr_ns_forward.1} parent=111 // pred_check
          %p926 = pneg %p225
        $region130: #{incompr_ns_forward.1} parent=111 // pred_check_branch
          %928 = sbr.rel (%p926) target = $region132
        $region131: #{incompr_ns_forward.1} parent=111 // pred_region
          %929 = dma.done [#allocation16], 1024
        $region132: #{incompr_ns_forward.1} parent=111 // pred_fallthru
          _
        // Predicated region
        $region133: #{incompr_ns_forward.1} parent=111 // pred_check
          %p930 = pneg %p246
        $region134: #{incompr_ns_forward.1} parent=111 // pred_check_branch
          %932 = sbr.rel (%p930) target = $region136
        $region135: #{incompr_ns_forward.1} parent=111 // pred_region
          %933 = dma.done [#allocation19], 128
        $region136: #{incompr_ns_forward.1} parent=111 // pred_fallthru
          _
        %s934 = sand.u32 %s41, 1
        %s935 = scalar_lea.sflag [#allocation11], %s934
        %s936 = sand.u32 %s259, 1
        %s937 = smul.addr %s936, 64
        %s938 = scalar_lea.vmem [#allocation20], %s937
        // Predicated region
        $region137: #{incompr_ns_forward.1} parent=111 // pred_check
          %p939 = pneg %p272
        $region138: #{incompr_ns_forward.1} parent=111 // pred_check_branch
          %941 = sbr.rel (%p939) target = $region140
        $region139: #{incompr_ns_forward.1} parent=111 // pred_region
          %942 = dma.done %s935, 1024
        $region140: #{incompr_ns_forward.1} parent=111 // pred_fallthru
          _
        %s943 = sand.u32 %s41, 1
        %s944 = scalar_lea.sflag [#allocation11], %s943
        %s945 = sand.u32 %s285, 1
        %s946 = smul.addr %s945, 128
        %s947 = scalar_lea.vmem [#allocation21], %s946
        // Predicated region
        $region141: #{incompr_ns_forward.1} parent=111 // pred_check
          %p948 = pneg %p298
        $region142: #{incompr_ns_forward.1} parent=111 // pred_check_branch
          %950 = sbr.rel (%p948) target = $region144
        $region143: #{incompr_ns_forward.1} parent=111 // pred_region
          %951 = dma.done %s944, 2048
        $region144: #{incompr_ns_forward.1} parent=111 // pred_fallthru
          _
        %s952 = sand.u32 %s41, 1
        %s953 = scalar_lea.sflag [#allocation11], %s952
        %s954 = sand.u32 %s311, 1
        %s955 = smul.addr %s954, 64
        %s956 = scalar_lea.vmem [#allocation22], %s955
        // Predicated region
        $region145: #{incompr_ns_forward.1} parent=111 // pred_check
          %p957 = pneg %p324
        $region146: #{incompr_ns_forward.1} parent=111 // pred_check_branch
          %959 = sbr.rel (%p957) target = $region148
        $region147: #{incompr_ns_forward.1} parent=111 // pred_region
          %960 = dma.done %s953, 1024
        $region148: #{incompr_ns_forward.1} parent=111 // pred_fallthru
          _
        %s961 = sand.u32 %s41, 1
        %s962 = scalar_lea.sflag [#allocation11], %s961
        %s963 = sand.u32 %s337, 1
        %s964 = smul.addr %s963, 64
        %s965 = scalar_lea.vmem [#allocation23], %s964
        // Predicated region
        $region149: #{incompr_ns_forward.1} parent=111 // pred_check
          %p966 = pneg %p350
        $region150: #{incompr_ns_forward.1} parent=111 // pred_check_branch
          %968 = sbr.rel (%p966) target = $region152
        $region151: #{incompr_ns_forward.1} parent=111 // pred_region
          %969 = dma.done %s962, 1024
        $region152: #{incompr_ns_forward.1} parent=111 // pred_fallthru
          _
        %s970 = sand.u32 %s41, 1
        %s971 = scalar_lea.sflag [#allocation11], %s970
        %s972 = sand.u32 %s389, 1
        %s973 = smul.addr %s972, 128
        %s974 = scalar_lea.vmem [#allocation24], %s973
        // Predicated region
        $region153: #{incompr_ns_forward.1} parent=111 // pred_check
          %p975 = pneg %p402
        $region154: #{incompr_ns_forward.1} parent=111 // pred_check_branch
          %977 = sbr.rel (%p975) target = $region156
        $region155: #{incompr_ns_forward.1} parent=111 // pred_region
          %978 = dma.done %s971, 2048
        $region156: #{incompr_ns_forward.1} parent=111 // pred_fallthru
          _
        %s979 = sand.u32 %s41, 1
        %s980 = scalar_lea.sflag [#allocation11], %s979
        %s981 = sand.u32 %s415, 1
        %s982 = smul.addr %s981, 64
        %s983 = scalar_lea.vmem [#allocation25], %s982
        // Predicated region
        $region157: #{incompr_ns_forward.1} parent=111 // pred_check
          %p984 = pneg %p428
        $region158: #{incompr_ns_forward.1} parent=111 // pred_check_branch
          %986 = sbr.rel (%p984) target = $region160
        $region159: #{incompr_ns_forward.1} parent=111 // pred_region
          %987 = dma.done %s980, 1024
        $region160: #{incompr_ns_forward.1} parent=111 // pred_fallthru
          _
        %s988 = sand.u32 %s41, 1
        %s989 = scalar_lea.sflag [#allocation11], %s988
        %s990 = sand.u32 %s441, 1
        %s991 = smul.addr %s990, 64
        %s992 = scalar_lea.vmem [#allocation26], %s991
        // Predicated region
        $region161: #{incompr_ns_forward.1} parent=111 // pred_check
          %p993 = pneg %p454
        $region162: #{incompr_ns_forward.1} parent=111 // pred_check_branch
          %995 = sbr.rel (%p993) target = $region164
        $region163: #{incompr_ns_forward.1} parent=111 // pred_region
          %996 = dma.done %s989, 1024
        $region164: #{incompr_ns_forward.1} parent=111 // pred_fallthru
          _
        // Predicated region
        $region165: #{incompr_ns_forward.1} parent=111 // pred_check
          %p997 = pneg %p501
        $region166: #{incompr_ns_forward.1} parent=111 // pred_check_branch
          %999 = sbr.rel (%p997) target = $region168
        $region167: #{incompr_ns_forward.1} parent=111 // pred_region
          %1000 = dma.done [#allocation13], 1024
        $region168: #{incompr_ns_forward.1} parent=111 // pred_fallthru
          _
        // Predicated region
        $region169: #{incompr_ns_forward.1} parent=111 // pred_check
          %p1001 = pneg %p522
        $region170: #{incompr_ns_forward.1} parent=111 // pred_check_branch
          %1003 = sbr.rel (%p1001) target = $region172
        $region171: #{incompr_ns_forward.1} parent=111 // pred_region
          %1004 = dma.done [#allocation16], 1024
        $region172: #{incompr_ns_forward.1} parent=111 // pred_fallthru
          _
        // Predicated region
        $region173: #{incompr_ns_forward.1} parent=111 // pred_check
          %p1005 = pneg %p543
        $region174: #{incompr_ns_forward.1} parent=111 // pred_check_branch
          %1007 = sbr.rel (%p1005) target = $region176
        $region175: #{incompr_ns_forward.1} parent=111 // pred_region
          %1008 = dma.done [#allocation19], 1024
        $region176: #{incompr_ns_forward.1} parent=111 // pred_fallthru
          _
        // Predicated region
        $region177: #{incompr_ns_forward.1} parent=111 // pred_check
          %p1009 = pneg %p564
        $region178: #{incompr_ns_forward.1} parent=111 // pred_check_branch
          %1011 = sbr.rel (%p1009) target = $region180
        $region179: #{incompr_ns_forward.1} parent=111 // pred_region
          %1012 = dma.done [#allocation31], 64
        $region180: #{incompr_ns_forward.1} parent=111 // pred_fallthru
          _
        %p1013 = pneg %p57
        %p1014 = pneg %p54
        %p1015 = pneg %p78
        %p1016 = pneg %p75
        %p1017 = pneg %p99
        %p1018 = pneg %p96
        %p1019 = pneg %p120
        %p1020 = pneg %p117
        %p1021 = pneg %p141
        %p1022 = pneg %p138
        %p1023 = pneg %p162
        %p1024 = pneg %p159
        %p1025 = pneg %p183
        %p1026 = pneg %p180
        %p1027 = pneg %p204
        %p1028 = pneg %p201
        %p1029 = pneg %p225
        %p1030 = pneg %p222
        %p1031 = pneg %p246
        %p1032 = pneg %p243
        %s1033 = sand.u32 %s41, 1
        %s1034 = scalar_lea.sflag [#allocation11], %s1033
        %s1035 = sand.u32 %s259, 1
        %s1036 = smul.addr %s1035, 64
        %s1037 = scalar_lea.vmem [#allocation20], %s1036
        %p1038 = pneg %p272
        %p1039 = pneg %p269
        %s1040 = sand.u32 %s41, 1
        %s1041 = scalar_lea.sflag [#allocation11], %s1040
        %s1042 = sand.u32 %s285, 1
        %s1043 = smul.addr %s1042, 128
        %s1044 = scalar_lea.vmem [#allocation21], %s1043
        %p1045 = pneg %p298
        %p1046 = pneg %p295
        %s1047 = sand.u32 %s41, 1
        %s1048 = scalar_lea.sflag [#allocation11], %s1047
        %s1049 = sand.u32 %s311, 1
        %s1050 = smul.addr %s1049, 64
        %s1051 = scalar_lea.vmem [#allocation22], %s1050
        %p1052 = pneg %p324
        %p1053 = pneg %p321
        %s1054 = sand.u32 %s41, 1
        %s1055 = scalar_lea.sflag [#allocation11], %s1054
        %s1056 = sand.u32 %s337, 1
        %s1057 = smul.addr %s1056, 64
        %s1058 = scalar_lea.vmem [#allocation23], %s1057
        %p1059 = pneg %p350
        %p1060 = pneg %p347
        %p1061 = scmp.lt.s32.totalorder %s41, 14
        %s1062 = scalar_select %p1061, %s41, 14
        %s1063 = smul.addr %s1062, 8
        %s1064 = scalar_lea.vmem %s16, %s1063
        %p1065 = pneg %p376
        %p1066 = pneg %p373
        %s1067 = sand.u32 %s41, 1
        %s1068 = scalar_lea.sflag [#allocation11], %s1067
        %s1069 = sand.u32 %s389, 1
        %s1070 = smul.addr %s1069, 128
        %s1071 = scalar_lea.vmem [#allocation24], %s1070
        %p1072 = pneg %p402
        %p1073 = pneg %p399
        %s1074 = sand.u32 %s41, 1
        %s1075 = scalar_lea.sflag [#allocation11], %s1074
        %s1076 = sand.u32 %s415, 1
        %s1077 = smul.addr %s1076, 64
        %s1078 = scalar_lea.vmem [#allocation25], %s1077
        %p1079 = pneg %p428
        %p1080 = pneg %p425
        %s1081 = sand.u32 %s41, 1
        %s1082 = scalar_lea.sflag [#allocation11], %s1081
        %s1083 = sand.u32 %s441, 1
        %s1084 = smul.addr %s1083, 64
        %s1085 = scalar_lea.vmem [#allocation26], %s1084
        %p1086 = pneg %p454
        %p1087 = pneg %p451
        %p1088 = scmp.lt.s32.totalorder %s41, 14
        %s1089 = scalar_select %p1088, %s41, 14
        %s1090 = smul.addr %s1089, 8
        %s1091 = scalar_lea.vmem %s20, %s1090
        %p1092 = pneg %p480
        %p1093 = pneg %p477
        %p1094 = pneg %p501
        %p1095 = pneg %p498
        %p1096 = pneg %p522
        %p1097 = pneg %p519
        %p1098 = pneg %p543
        %p1099 = pneg %p540
        %p1100 = pneg %p564
        %p1101 = pneg %p561
        %p1102 = pneg %p585
        %p1103 = pneg %p582
        %p1104 = scmp.lt.s32.totalorder %s41, 14
        %s1105 = scalar_select %p1104, %s41, 14
        %s1106 = smul.addr %s1105, 8
        %s1107 = scalar_lea.vmem %s16, %s1106
        %p1108 = scmp.lt.s32.totalorder %s41, 14
        %s1109 = scalar_select %p1108, %s41, 14
        %s1110 = smul.addr %s1109, 8
        %s1111 = scalar_lea.vmem %s20, %s1110
        %p1113 = scmp.eq.s32.totalorder %s41, 0
        // Predicated region
        $region181: #{incompr_ns_forward.1} parent=111 // pred_check
          %p1114 = pneg %p1113
        $region182: #{incompr_ns_forward.1} parent=111 // pred_check_branch
          %1116 = sbr.rel (%p1114) target = $region184
        $region183: #{incompr_ns_forward.1} parent=111 // pred_region
          %p1118 = scmp.lt.u32.totalorder 64, 8
          %p1119 = pneg %p1118
          // Predicated region
          $region185: #{incompr_ns_forward.1} parent=183 // pred_check
            _
          $region186: #{incompr_ns_forward.1} parent=183 // pred_check_branch
            %1121 = sbr.rel (%p1118) target = $region188
          $region187: #{incompr_ns_forward.1} parent=183 // pred_region
            %s1136 = sand.u32 64, 7
            %p1137 = scmp.eq.s32.totalorder %s1136, 0
            // Predicated region
            $region200: #{incompr_ns_forward.1} parent=187 // pred_check
              %p1138 = pneg %p1137
            $region201: #{incompr_ns_forward.1} parent=187 // pred_check_branch
              %1140 = sbr.rel (%p1138) target = $region203
            $region202: #{incompr_ns_forward.1} parent=187 // pred_region
              loop: start=0, step=1, limit=1
              $region204: #{incompr_ns_forward.1} parent=202 // loop_pre_header
                _
              $region205: #{incompr_ns_forward.1} parent=202 // loop_header
                %s1142 = sphi 0, %s1146
                %p1143 = scmp.ge.s32.totalorder %s1142, 1
                %s1147 = sphi %s2, %s2
                %s1148 = sphi [#allocation2], [#allocation2]
              $region206: #{incompr_ns_forward.1} parent=202 // loop_header_branch
                %1145 = sbr.rel (%p1143) target = $region210
              $region207: #{incompr_ns_forward.1} parent=202 // loop_body
                %v1149 = vld [vmem:[%s1147] sm:$0xff]
                %1150 = vst [vmem:[%s1148] sm:$0xff] %v1149
                %v1151 = vld [vmem:[%s1147 + $0x8] sm:$0xff]
                %1152 = vst [vmem:[%s1148 + $0x8] sm:$0xff] %v1151
                %v1153 = vld [vmem:[%s1147 + $0x10] sm:$0xff]
                %1154 = vst [vmem:[%s1148 + $0x10] sm:$0xff] %v1153
                %v1155 = vld [vmem:[%s1147 + $0x18] sm:$0xff]
                %1156 = vst [vmem:[%s1148 + $0x18] sm:$0xff] %v1155
                %v1157 = vld [vmem:[%s1147 + $0x20] sm:$0xff]
                %1158 = vst [vmem:[%s1148 + $0x20] sm:$0xff] %v1157
                %v1159 = vld [vmem:[%s1147 + $0x28] sm:$0xff]
                %1160 = vst [vmem:[%s1148 + $0x28] sm:$0xff] %v1159
                %v1161 = vld [vmem:[%s1147 + $0x30] sm:$0xff]
                %1162 = vst [vmem:[%s1148 + $0x30] sm:$0xff] %v1161
                %v1163 = vld [vmem:[%s1147 + $0x38] sm:$0xff]
                %1164 = vst [vmem:[%s1148 + $0x38] sm:$0xff] %v1163
              $region208: #{incompr_ns_forward.1} parent=202 // loop_footer
                %s1146 = sadd.s32 1, %s1142
              $region209: #{incompr_ns_forward.1} parent=202 // loop_footer_branch
                %1141 = sbr.rel target = $region205
              $region210: #{incompr_ns_forward.1} parent=202 // loop_exit
                _
            $region203: #{incompr_ns_forward.1} parent=187 // pred_fallthru
              _
            %p1165 = pneg %p1137
            // Predicated region
            $region211: #{incompr_ns_forward.1} parent=187 // pred_check
              _
            $region212: #{incompr_ns_forward.1} parent=187 // pred_check_branch
              %1167 = sbr.rel (%p1137) target = $region214
            $region213: #{incompr_ns_forward.1} parent=187 // pred_region
              %s1168 = sand.u32 64, 7
            $region214: #{incompr_ns_forward.1} parent=187 // pred_fallthru
              _
          $region188: #{incompr_ns_forward.1} parent=183 // pred_fallthru
            _
          // Predicated region
          $region189: #{incompr_ns_forward.1} parent=183 // pred_check
            %p1122 = pneg %p1118
          $region190: #{incompr_ns_forward.1} parent=183 // pred_check_branch
            %1124 = sbr.rel (%p1122) target = $region192
          $region191: #{incompr_ns_forward.1} parent=183 // pred_region
            %s1125 = sshllo.u32 0, 64
            loop: start=0, step=1, limit=1
            $region193: #{incompr_ns_forward.1} parent=191 // loop_pre_header
              _
            $region194: #{incompr_ns_forward.1} parent=191 // loop_header
              %s1127 = sphi 0, %s1131
              %p1128 = scmp.ge.s32.totalorder %s1127, 1
              %s1132 = sphi %s2, %s2
              %s1133 = sphi [#allocation2], [#allocation2]
            $region195: #{incompr_ns_forward.1} parent=191 // loop_header_branch
              %1130 = sbr.rel (%p1128) target = $region199
            $region196: #{incompr_ns_forward.1} parent=191 // loop_body
              %v1134 = vld [vmem:[%s1132] sm:%s1125]
              %1135 = vst [vmem:[%s1133] sm:%s1125] %v1134
            $region197: #{incompr_ns_forward.1} parent=191 // loop_footer
              %s1131 = sadd.s32 1, %s1127
            $region198: #{incompr_ns_forward.1} parent=191 // loop_footer_branch
              %1126 = sbr.rel target = $region194
            $region199: #{incompr_ns_forward.1} parent=191 // loop_exit
              _
          $region192: #{incompr_ns_forward.1} parent=183 // pred_fallthru
            _
          // Predicated region
          $region215: #{incompr_ns_forward.1} parent=183 // pred_check
            _
          $region216: #{incompr_ns_forward.1} parent=183 // pred_check_branch
            %1171 = sbr.rel (0) target = $region218
          $region217: #{incompr_ns_forward.1} parent=183 // pred_region
            %1172 = vsyncadd [#allocation9], 1024
          $region218: #{incompr_ns_forward.1} parent=183 // pred_fallthru
            _
          %s1173 = scalar_lea.sflag [#allocation9], 1
          %p1175 = scmp.lt.u32.totalorder 64, 8
          %p1176 = pneg %p1175
          // Predicated region
          $region219: #{incompr_ns_forward.1} parent=183 // pred_check
            _
          $region220: #{incompr_ns_forward.1} parent=183 // pred_check_branch
            %1178 = sbr.rel (%p1175) target = $region222
          $region221: #{incompr_ns_forward.1} parent=183 // pred_region
            %s1193 = sand.u32 64, 7
            %p1194 = scmp.eq.s32.totalorder %s1193, 0
            // Predicated region
            $region234: #{incompr_ns_forward.1} parent=221 // pred_check
              %p1195 = pneg %p1194
            $region235: #{incompr_ns_forward.1} parent=221 // pred_check_branch
              %1197 = sbr.rel (%p1195) target = $region237
            $region236: #{incompr_ns_forward.1} parent=221 // pred_region
              loop: start=0, step=1, limit=1
              $region238: #{incompr_ns_forward.1} parent=236 // loop_pre_header
                _
              $region239: #{incompr_ns_forward.1} parent=236 // loop_header
                %s1199 = sphi 0, %s1203
                %p1200 = scmp.ge.s32.totalorder %s1199, 1
                %s1204 = sphi %s3, %s3
                %s1205 = sphi [#allocation3], [#allocation3]
              $region240: #{incompr_ns_forward.1} parent=236 // loop_header_branch
                %1202 = sbr.rel (%p1200) target = $region244
              $region241: #{incompr_ns_forward.1} parent=236 // loop_body
                %v1206 = vld [vmem:[%s1204] sm:$0xff]
                %1207 = vst [vmem:[%s1205] sm:$0xff] %v1206
                %v1208 = vld [vmem:[%s1204 + $0x8] sm:$0xff]
                %1209 = vst [vmem:[%s1205 + $0x8] sm:$0xff] %v1208
                %v1210 = vld [vmem:[%s1204 + $0x10] sm:$0xff]
                %1211 = vst [vmem:[%s1205 + $0x10] sm:$0xff] %v1210
                %v1212 = vld [vmem:[%s1204 + $0x18] sm:$0xff]
                %1213 = vst [vmem:[%s1205 + $0x18] sm:$0xff] %v1212
                %v1214 = vld [vmem:[%s1204 + $0x20] sm:$0xff]
                %1215 = vst [vmem:[%s1205 + $0x20] sm:$0xff] %v1214
                %v1216 = vld [vmem:[%s1204 + $0x28] sm:$0xff]
                %1217 = vst [vmem:[%s1205 + $0x28] sm:$0xff] %v1216
                %v1218 = vld [vmem:[%s1204 + $0x30] sm:$0xff]
                %1219 = vst [vmem:[%s1205 + $0x30] sm:$0xff] %v1218
                %v1220 = vld [vmem:[%s1204 + $0x38] sm:$0xff]
                %1221 = vst [vmem:[%s1205 + $0x38] sm:$0xff] %v1220
              $region242: #{incompr_ns_forward.1} parent=236 // loop_footer
                %s1203 = sadd.s32 1, %s1199
              $region243: #{incompr_ns_forward.1} parent=236 // loop_footer_branch
                %1198 = sbr.rel target = $region239
              $region244: #{incompr_ns_forward.1} parent=236 // loop_exit
                _
            $region237: #{incompr_ns_forward.1} parent=221 // pred_fallthru
              _
            %p1222 = pneg %p1194
            // Predicated region
            $region245: #{incompr_ns_forward.1} parent=221 // pred_check
              _
            $region246: #{incompr_ns_forward.1} parent=221 // pred_check_branch
              %1224 = sbr.rel (%p1194) target = $region248
            $region247: #{incompr_ns_forward.1} parent=221 // pred_region
              %s1225 = sand.u32 64, 7
            $region248: #{incompr_ns_forward.1} parent=221 // pred_fallthru
              _
          $region222: #{incompr_ns_forward.1} parent=183 // pred_fallthru
            _
          // Predicated region
          $region223: #{incompr_ns_forward.1} parent=183 // pred_check
            %p1179 = pneg %p1175
          $region224: #{incompr_ns_forward.1} parent=183 // pred_check_branch
            %1181 = sbr.rel (%p1179) target = $region226
          $region225: #{incompr_ns_forward.1} parent=183 // pred_region
            %s1182 = sshllo.u32 0, 64
            loop: start=0, step=1, limit=1
            $region227: #{incompr_ns_forward.1} parent=225 // loop_pre_header
              _
            $region228: #{incompr_ns_forward.1} parent=225 // loop_header
              %s1184 = sphi 0, %s1188
              %p1185 = scmp.ge.s32.totalorder %s1184, 1
              %s1189 = sphi %s3, %s3
              %s1190 = sphi [#allocation3], [#allocation3]
            $region229: #{incompr_ns_forward.1} parent=225 // loop_header_branch
              %1187 = sbr.rel (%p1185) target = $region233
            $region230: #{incompr_ns_forward.1} parent=225 // loop_body
              %v1191 = vld [vmem:[%s1189] sm:%s1182]
              %1192 = vst [vmem:[%s1190] sm:%s1182] %v1191
            $region231: #{incompr_ns_forward.1} parent=225 // loop_footer
              %s1188 = sadd.s32 1, %s1184
            $region232: #{incompr_ns_forward.1} parent=225 // loop_footer_branch
              %1183 = sbr.rel target = $region228
            $region233: #{incompr_ns_forward.1} parent=225 // loop_exit
              _
          $region226: #{incompr_ns_forward.1} parent=183 // pred_fallthru
            _
          // Predicated region
          $region249: #{incompr_ns_forward.1} parent=183 // pred_check
            _
          $region250: #{incompr_ns_forward.1} parent=183 // pred_check_branch
            %1228 = sbr.rel (0) target = $region252
          $region251: #{incompr_ns_forward.1} parent=183 // pred_region
            %1229 = vsyncadd %s1173, 1024
          $region252: #{incompr_ns_forward.1} parent=183 // pred_fallthru
            _
          %v1230 = vld [vmem:[%s7] sm:$0x1f]
          %v1231 = vld [vmem:[%s0] sm:$0xf]
          %v1232 = vld [vmem:[%s0 + $0x4] sm:$0xf]
          %v1233 = vld [vmem:[%s0 + $0x8] sm:$0xf]
          %v1234 = vld [vmem:[%s0 + $0xc] sm:$0xf]
          %v1235 = vld [vmem:[%s0 + $0x10] sm:$0xf]
          %v1236 = vld [vmem:[%s0 + $0x14] sm:$0xf]
          %v1237 = vld [vmem:[%s0 + $0x18] sm:$0xf]
          %v1238 = vld [vmem:[%s0 + $0x1c] sm:$0xf]
          %v1239 = vld [vmem:[%s0 + $0x20] sm:$0xf]
          %v1240 = vld [vmem:[%s0 + $0x24] sm:$0xf]
          %v1241 = vld [vmem:[%s0 + $0x28] sm:$0xf]
          %v1242 = vld [vmem:[%s0 + $0x2c] sm:$0xf]
          %v1243 = vld [vmem:[%s0 + $0x30] sm:$0xf]
          %v1244 = vld [vmem:[%s0 + $0x34] sm:$0xf]
          %v1245 = vld [vmem:[%s0 + $0x38] sm:$0xf]
          %v1246 = vld [vmem:[%s0 + $0x3c] sm:$0xf]
          %v1247 = vld [vmem:[%s4] sm:$0xf]
          %v1248 = vld [vmem:[%s4 + $0x4] sm:$0xf]
          %v1249 = vld [vmem:[%s4 + $0x8] sm:$0xf]
          %v1250 = vld [vmem:[%s4 + $0xc] sm:$0xf]
          %v1251 = vld [vmem:[%s4 + $0x10] sm:$0xf]
          %v1252 = vld [vmem:[%s4 + $0x14] sm:$0xf]
          %v1253 = vld [vmem:[%s4 + $0x18] sm:$0xf]
          %v1254 = vld [vmem:[%s4 + $0x1c] sm:$0xf]
          %v1255 = vld [vmem:[%s4 + $0x20] sm:$0xf]
          %v1256 = vld [vmem:[%s4 + $0x24] sm:$0xf]
          %v1257 = vld [vmem:[%s4 + $0x28] sm:$0xf]
          %v1258 = vld [vmem:[%s4 + $0x2c] sm:$0xf]
          %v1259 = vld [vmem:[%s4 + $0x30] sm:$0xf]
          %v1260 = vld [vmem:[%s4 + $0x34] sm:$0xf]
          %v1261 = vld [vmem:[%s4 + $0x38] sm:$0xf]
          %v1262 = vld [vmem:[%s4 + $0x3c] sm:$0xf]
          %v1263 = vld [vmem:[#allocation10] sm:$0xf]
          %v1264 = vld [vmem:[#allocation10 + $0x4] sm:$0xf]
          %v1265 = vld [vmem:[#allocation10 + $0x8] sm:$0xf]
          %v1266 = vld [vmem:[#allocation10 + $0xc] sm:$0xf]
          %v1267 = vld [vmem:[#allocation10 + $0x10] sm:$0xf]
          %v1268 = vld [vmem:[#allocation10 + $0x14] sm:$0xf]
          %v1269 = vld [vmem:[#allocation10 + $0x18] sm:$0xf]
          %v1270 = vld [vmem:[#allocation10 + $0x1c] sm:$0xf]
          %v1271 = vld [vmem:[#allocation10 + $0x20] sm:$0xf]
          %v1272 = vld [vmem:[#allocation10 + $0x24] sm:$0xf]
          %v1273 = vld [vmem:[#allocation10 + $0x28] sm:$0xf]
          %v1274 = vld [vmem:[#allocation10 + $0x2c] sm:$0xf]
          %v1275 = vld [vmem:[#allocation10 + $0x30] sm:$0xf]
          %v1276 = vld [vmem:[#allocation10 + $0x34] sm:$0xf]
          %v1277 = vld [vmem:[#allocation10 + $0x38] sm:$0xf]
          %v1278 = vld [vmem:[#allocation10 + $0x3c] sm:$0xf]
          %v1279 = vld [vmem:[#allocation12] sm:$0xf]
          %v1280 = vld [vmem:[#allocation12 + $0x4] sm:$0xf]
          %v1281 = vld [vmem:[#allocation12 + $0x8] sm:$0xf]
          %v1282 = vld [vmem:[#allocation12 + $0xc] sm:$0xf]
          %v1283 = vld [vmem:[#allocation12 + $0x10] sm:$0xf]
          %v1284 = vld [vmem:[#allocation12 + $0x14] sm:$0xf]
          %v1285 = vld [vmem:[#allocation12 + $0x18] sm:$0xf]
          %v1286 = vld [vmem:[#allocation12 + $0x1c] sm:$0xf]
          %v1287 = vld [vmem:[#allocation12 + $0x20] sm:$0xf]
          %v1288 = vld [vmem:[#allocation12 + $0x24] sm:$0xf]
          %v1289 = vld [vmem:[#allocation12 + $0x28] sm:$0xf]
          %v1290 = vld [vmem:[#allocation12 + $0x2c] sm:$0xf]
          %v1291 = vld [vmem:[#allocation12 + $0x30] sm:$0xf]
          %v1292 = vld [vmem:[#allocation12 + $0x34] sm:$0xf]
          %v1293 = vld [vmem:[#allocation12 + $0x38] sm:$0xf]
          %v1294 = vld [vmem:[#allocation12 + $0x3c] sm:$0xf]
          %v1295 = vlaneseq
          %v1296 = vshrl.u32 %v1295, 7
          %v1297 = vsub.s32 0, %v1296
          %v1298 = vrot.slane %v1230, %v1297
          %v1315 = vunpack.c.l.b16 %v1231
          %v1316 = vunpack.c.l.b16 %v1232
          %v1317 = vunpack.c.l.b16 %v1233
          %v1318 = vunpack.c.l.b16 %v1234
          %v1319 = vunpack.c.l.b16 %v1235
          %v1320 = vunpack.c.l.b16 %v1236
          %v1321 = vunpack.c.l.b16 %v1237
          %v1322 = vunpack.c.l.b16 %v1238
          %v1323 = vunpack.c.l.b16 %v1239
          %v1324 = vunpack.c.l.b16 %v1240
          %v1325 = vunpack.c.l.b16 %v1241
          %v1326 = vunpack.c.l.b16 %v1242
          %v1327 = vunpack.c.l.b16 %v1243
          %v1328 = vunpack.c.l.b16 %v1244
          %v1329 = vunpack.c.l.b16 %v1245
          %v1330 = vunpack.c.l.b16 %v1246
          %v1331 = vpack.c.b16 %v1316, %v1315
          %v1332 = vpack.c.b16 %v1318, %v1317
          %v1333 = vpack.c.b16 %v1320, %v1319
          %v1334 = vpack.c.b16 %v1322, %v1321
          %v1335 = vpack.c.b16 %v1324, %v1323
          %v1336 = vpack.c.b16 %v1326, %v1325
          %v1337 = vpack.c.b16 %v1328, %v1327
          %v1338 = vpack.c.b16 %v1330, %v1329
          %v1363 = vunpack.c.l.b16 %v1247
          %v1364 = vunpack.c.l.b16 %v1248
          %v1365 = vunpack.c.l.b16 %v1249
          %v1366 = vunpack.c.l.b16 %v1250
          %v1367 = vunpack.c.l.b16 %v1251
          %v1368 = vunpack.c.l.b16 %v1252
          %v1369 = vunpack.c.l.b16 %v1253
          %v1370 = vunpack.c.l.b16 %v1254
          %v1371 = vunpack.c.l.b16 %v1255
          %v1372 = vunpack.c.l.b16 %v1256
          %v1373 = vunpack.c.l.b16 %v1257
          %v1374 = vunpack.c.l.b16 %v1258
          %v1375 = vunpack.c.l.b16 %v1259
          %v1376 = vunpack.c.l.b16 %v1260
          %v1377 = vunpack.c.l.b16 %v1261
          %v1378 = vunpack.c.l.b16 %v1262
          %v1379 = vpack.c.b16 %v1364, %v1363
          %v1380 = vpack.c.b16 %v1366, %v1365
          %v1381 = vpack.c.b16 %v1368, %v1367
          %v1382 = vpack.c.b16 %v1370, %v1369
          %v1383 = vpack.c.b16 %v1372, %v1371
          %v1384 = vpack.c.b16 %v1374, %v1373
          %v1385 = vpack.c.b16 %v1376, %v1375
          %v1386 = vpack.c.b16 %v1378, %v1377
          %1395 = vmatprep.subr.bf16.mxu0 0
          %1396 = vmatpush1.bf16.msra.mxu0 %v1379
          %1397 = vmatprep.subr.bf16.mxu0 0
          %1398 = vmatpush1.bf16.msra.mxu0 %v1380
          %1399 = vmatprep.subr.bf16.mxu0 0
          %1400 = vmatpush1.bf16.msra.mxu0 %v1381
          %1401 = vmatprep.subr.bf16.mxu0 0
          %1402 = vmatpush1.bf16.msra.mxu0 %v1382
          %1403 = vmatprep.subr.bf16.mxu0 0
          %1404 = vmatpush1.bf16.msra.mxu0 %v1383
          %1405 = vmatprep.subr.bf16.mxu0 0
          %1406 = vmatpush1.bf16.msra.mxu0 %v1384
          %1407 = vmatprep.subr.bf16.mxu0 0
          %1408 = vmatpush1.bf16.msra.mxu0 %v1385
          %1409 = vmatprep.subr.bf16.mxu0 0
          %1410 = vmatpush1.bf16.msra.mxu0 %v1386
          %1411 = vmatprep.subr.bf16.mxu0 0
          %1412 = vmatpush1.bf16.msra.mxu0 0
          %1413 = vmatprep.subr.bf16.mxu0 0
          %1414 = vmatpush1.bf16.msra.mxu0 0
          %1415 = vmatprep.subr.bf16.mxu0 0
          %1416 = vmatpush1.bf16.msra.mxu0 0
          %1417 = vmatprep.subr.bf16.mxu0 0
          %1418 = vmatpush1.bf16.msra.mxu0 0
          %1419 = vmatprep.subr.bf16.mxu0 0
          %1420 = vmatpush1.bf16.msra.mxu0 0
          %1421 = vmatprep.subr.bf16.mxu0 0
          %1422 = vmatpush1.bf16.msra.mxu0 0
          %1423 = vmatprep.subr.bf16.mxu0 0
          %1424 = vmatpush1.bf16.msra.mxu0 0
          %1425 = vmatprep.subr.bf16.mxu0 0
          %1426 = vmatpush1.bf16.msra.mxu0 0
          %1427 = vmatprep.mubr.bf16.mxu0 0
          %1428 = vmatmul.mubr.bf16.gmra.mrb[0].mxu0 %v1331
          %v1429 = vpop.f32.mrb[0].mxu0
          %v1430 = vadd.f32 %v1298, %v1429
          %v1431 = vpop.f32.mrb[0].mxu0
          %v1432 = vpop.f32.mrb[0].mxu0
          %v1433 = vadd.f32 %v1298, %v1432
          %v1434 = vpop.f32.mrb[0].mxu0
          %1435 = vmatprep.mubr.bf16.mxu0 0
          %1436 = vmatmul.mubr.bf16.gmra.mrb[0].mxu0 %v1332
          %v1437 = vpop.f32.mrb[0].mxu0
          %v1438 = vadd.f32 %v1298, %v1437
          %v1439 = vpop.f32.mrb[0].mxu0
          %v1440 = vpop.f32.mrb[0].mxu0
          %v1441 = vadd.f32 %v1298, %v1440
          %v1442 = vpop.f32.mrb[0].mxu0
          %1443 = vmatprep.mubr.bf16.mxu0 0
          %1444 = vmatmul.mubr.bf16.gmra.mrb[0].mxu0 %v1333
          %v1445 = vpop.f32.mrb[0].mxu0
          %v1446 = vadd.f32 %v1298, %v1445
          %v1447 = vpop.f32.mrb[0].mxu0
          %v1448 = vpop.f32.mrb[0].mxu0
          %v1449 = vadd.f32 %v1298, %v1448
          %v1450 = vpop.f32.mrb[0].mxu0
          %1451 = vmatprep.mubr.bf16.mxu0 0
          %1452 = vmatmul.mubr.bf16.gmra.mrb[0].mxu0 %v1334
          %v1453 = vpop.f32.mrb[0].mxu0
          %v1454 = vadd.f32 %v1298, %v1453
          %v1455 = vpop.f32.mrb[0].mxu0
          %v1456 = vpop.f32.mrb[0].mxu0
          %v1457 = vadd.f32 %v1298, %v1456
          %v1458 = vpop.f32.mrb[0].mxu0
          %1459 = vmatprep.mubr.bf16.mxu0 0
          %1460 = vmatmul.mubr.bf16.gmra.mrb[0].mxu0 %v1335
          %v1461 = vpop.f32.mrb[0].mxu0
          %v1462 = vadd.f32 %v1298, %v1461
          %v1463 = vpop.f32.mrb[0].mxu0
          %v1464 = vpop.f32.mrb[0].mxu0
          %v1465 = vadd.f32 %v1298, %v1464
          %v1466 = vpop.f32.mrb[0].mxu0
          %1467 = vmatprep.mubr.bf16.mxu0 0
          %1468 = vmatmul.mubr.bf16.gmra.mrb[0].mxu0 %v1336
          %v1469 = vpop.f32.mrb[0].mxu0
          %v1470 = vadd.f32 %v1298, %v1469
          %v1471 = vpop.f32.mrb[0].mxu0
          %v1472 = vpop.f32.mrb[0].mxu0
          %v1473 = vadd.f32 %v1298, %v1472
          %v1474 = vpop.f32.mrb[0].mxu0
          %1475 = vmatprep.mubr.bf16.mxu0 0
          %1476 = vmatmul.mubr.bf16.gmra.mrb[0].mxu0 %v1337
          %v1477 = vpop.f32.mrb[0].mxu0
          %v1478 = vadd.f32 %v1298, %v1477
          %v1479 = vpop.f32.mrb[0].mxu0
          %v1480 = vpop.f32.mrb[0].mxu0
          %v1481 = vadd.f32 %v1298, %v1480
          %v1482 = vpop.f32.mrb[0].mxu0
          %1483 = vmatprep.mubr.bf16.mxu0 0
          %1484 = vmatmul.mubr.bf16.gmra.mrb[0].mxu0 %v1338
          %v1485 = vpop.f32.mrb[0].mxu0
          %v1486 = vadd.f32 %v1298, %v1485
          %v1487 = vpop.f32.mrb[0].mxu0
          %v1488 = vpop.f32.mrb[0].mxu0
          %v1489 = vadd.f32 %v1298, %v1488
          %v1490 = vpop.f32.mrb[0].mxu0
          %1491 = vdwg.mxu0
          %v1492 = vmax.f32 %v1430, 0.0
          %v1493 = vmax.f32 %v1433, 0.0
          %v1494 = vmax.f32 %v1438, 0.0
          %v1495 = vmax.f32 %v1441, 0.0
          %v1496 = vmax.f32 %v1446, 0.0
          %v1497 = vmax.f32 %v1449, 0.0
          %v1498 = vmax.f32 %v1454, 0.0
          %v1499 = vmax.f32 %v1457, 0.0
          %v1500 = vmax.f32 %v1462, 0.0
          %v1501 = vmax.f32 %v1465, 0.0
          %v1502 = vmax.f32 %v1470, 0.0
          %v1503 = vmax.f32 %v1473, 0.0
          %v1504 = vmax.f32 %v1478, 0.0
          %v1505 = vmax.f32 %v1481, 0.0
          %v1506 = vmax.f32 %v1486, 0.0
          %v1507 = vmax.f32 %v1489, 0.0
          %v1508 = vpack.c.bf16 %v1493, %v1492
          %v1509 = vpack.c.bf16 %v1495, %v1494
          %v1510 = vpack.c.bf16 %v1497, %v1496
          %v1511 = vpack.c.bf16 %v1499, %v1498
          %v1512 = vpack.c.bf16 %v1501, %v1500
          %v1513 = vpack.c.bf16 %v1503, %v1502
          %v1514 = vpack.c.bf16 %v1505, %v1504
          %v1515 = vpack.c.bf16 %v1507, %v1506
          %v1516 = vlaneseq
          %v1517 = vshrl.u32 %v1516, 7
          %v1518 = vsub.s32 1, %v1517
          %v1519 = vrot.slane %v1230, %v1518
          %v1536 = vunpack.c.l.b16 %v1263
          %v1537 = vunpack.c.l.b16 %v1264
          %v1538 = vunpack.c.l.b16 %v1265
          %v1539 = vunpack.c.l.b16 %v1266
          %v1540 = vunpack.c.l.b16 %v1267
          %v1541 = vunpack.c.l.b16 %v1268
          %v1542 = vunpack.c.l.b16 %v1269
          %v1543 = vunpack.c.l.b16 %v1270
          %v1544 = vunpack.c.l.b16 %v1271
          %v1545 = vunpack.c.l.b16 %v1272
          %v1546 = vunpack.c.l.b16 %v1273
          %v1547 = vunpack.c.l.b16 %v1274
          %v1548 = vunpack.c.l.b16 %v1275
          %v1549 = vunpack.c.l.b16 %v1276
          %v1550 = vunpack.c.l.b16 %v1277
          %v1551 = vunpack.c.l.b16 %v1278
          %v1552 = vpack.c.b16 %v1537, %v1536
          %v1553 = vpack.c.b16 %v1539, %v1538
          %v1554 = vpack.c.b16 %v1541, %v1540
          %v1555 = vpack.c.b16 %v1543, %v1542
          %v1556 = vpack.c.b16 %v1545, %v1544
          %v1557 = vpack.c.b16 %v1547, %v1546
          %v1558 = vpack.c.b16 %v1549, %v1548
          %v1559 = vpack.c.b16 %v1551, %v1550
          %1568 = vmatprep.subr.bf16.mxu0 0
          %1569 = vmatpush1.bf16.msra.mxu0 %v1552
          %1570 = vmatprep.subr.bf16.mxu0 0
          %1571 = vmatpush1.bf16.msra.mxu0 %v1553
          %1572 = vmatprep.subr.bf16.mxu0 0
          %1573 = vmatpush1.bf16.msra.mxu0 %v1554
          %1574 = vmatprep.subr.bf16.mxu0 0
          %1575 = vmatpush1.bf16.msra.mxu0 %v1555
          %1576 = vmatprep.subr.bf16.mxu0 0
          %1577 = vmatpush1.bf16.msra.mxu0 %v1556
          %1578 = vmatprep.subr.bf16.mxu0 0
          %1579 = vmatpush1.bf16.msra.mxu0 %v1557
          %1580 = vmatprep.subr.bf16.mxu0 0
          %1581 = vmatpush1.bf16.msra.mxu0 %v1558
          %1582 = vmatprep.subr.bf16.mxu0 0
          %1583 = vmatpush1.bf16.msra.mxu0 %v1559
          %1584 = vmatprep.subr.bf16.mxu0 0
          %1585 = vmatpush1.bf16.msra.mxu0 0
          %1586 = vmatprep.subr.bf16.mxu0 0
          %1587 = vmatpush1.bf16.msra.mxu0 0
          %1588 = vmatprep.subr.bf16.mxu0 0
          %1589 = vmatpush1.bf16.msra.mxu0 0
          %1590 = vmatprep.subr.bf16.mxu0 0
          %1591 = vmatpush1.bf16.msra.mxu0 0
          %1592 = vmatprep.subr.bf16.mxu0 0
          %1593 = vmatpush1.bf16.msra.mxu0 0
          %1594 = vmatprep.subr.bf16.mxu0 0
          %1595 = vmatpush1.bf16.msra.mxu0 0
          %1596 = vmatprep.subr.bf16.mxu0 0
          %1597 = vmatpush1.bf16.msra.mxu0 0
          %1598 = vmatprep.subr.bf16.mxu0 0
          %1599 = vmatpush1.bf16.msra.mxu0 0
          %1600 = vmatprep.mubr.bf16.mxu0 0
          %1601 = vmatmul.mubr.bf16.gmra.mrb[0].mxu0 %v1508
          %v1602 = vpop.f32.mrb[0].mxu0
          %v1603 = vadd.f32 %v1519, %v1602
          %v1604 = vpop.f32.mrb[0].mxu0
          %v1605 = vpop.f32.mrb[0].mxu0
          %v1606 = vadd.f32 %v1519, %v1605
          %v1607 = vpop.f32.mrb[0].mxu0
          %1608 = vmatprep.mubr.bf16.mxu0 0
          %1609 = vmatmul.mubr.bf16.gmra.mrb[0].mxu0 %v1509
          %v1610 = vpop.f32.mrb[0].mxu0
          %v1611 = vadd.f32 %v1519, %v1610
          %v1612 = vpop.f32.mrb[0].mxu0
          %v1613 = vpop.f32.mrb[0].mxu0
          %v1614 = vadd.f32 %v1519, %v1613
          %v1615 = vpop.f32.mrb[0].mxu0
          %1616 = vmatprep.mubr.bf16.mxu0 0
          %1617 = vmatmul.mubr.bf16.gmra.mrb[0].mxu0 %v1510
          %v1618 = vpop.f32.mrb[0].mxu0
          %v1619 = vadd.f32 %v1519, %v1618
          %v1620 = vpop.f32.mrb[0].mxu0
          %v1621 = vpop.f32.mrb[0].mxu0
          %v1622 = vadd.f32 %v1519, %v1621
          %v1623 = vpop.f32.mrb[0].mxu0
          %1624 = vmatprep.mubr.bf16.mxu0 0
          %1625 = vmatmul.mubr.bf16.gmra.mrb[0].mxu0 %v1511
          %v1626 = vpop.f32.mrb[0].mxu0
          %v1627 = vadd.f32 %v1519, %v1626
          %v1628 = vpop.f32.mrb[0].mxu0
          %v1629 = vpop.f32.mrb[0].mxu0
          %v1630 = vadd.f32 %v1519, %v1629
          %v1631 = vpop.f32.mrb[0].mxu0
          %1632 = vmatprep.mubr.bf16.mxu0 0
          %1633 = vmatmul.mubr.bf16.gmra.mrb[0].mxu0 %v1512
          %v1634 = vpop.f32.mrb[0].mxu0
          %v1635 = vadd.f32 %v1519, %v1634
          %v1636 = vpop.f32.mrb[0].mxu0
          %v1637 = vpop.f32.mrb[0].mxu0
          %v1638 = vadd.f32 %v1519, %v1637
          %v1639 = vpop.f32.mrb[0].mxu0
          %1640 = vmatprep.mubr.bf16.mxu0 0
          %1641 = vmatmul.mubr.bf16.gmra.mrb[0].mxu0 %v1513
          %v1642 = vpop.f32.mrb[0].mxu0
          %v1643 = vadd.f32 %v1519, %v1642
          %v1644 = vpop.f32.mrb[0].mxu0
          %v1645 = vpop.f32.mrb[0].mxu0
          %v1646 = vadd.f32 %v1519, %v1645
          %v1647 = vpop.f32.mrb[0].mxu0
          %1648 = vmatprep.mubr.bf16.mxu0 0
          %1649 = vmatmul.mubr.bf16.gmra.mrb[0].mxu0 %v1514
          %v1650 = vpop.f32.mrb[0].mxu0
          %v1651 = vadd.f32 %v1519, %v1650
          %v1652 = vpop.f32.mrb[0].mxu0
          %v1653 = vpop.f32.mrb[0].mxu0
          %v1654 = vadd.f32 %v1519, %v1653
          %v1655 = vpop.f32.mrb[0].mxu0
          %1656 = vmatprep.mubr.bf16.mxu0 0
          %1657 = vmatmul.mubr.bf16.gmra.mrb[0].mxu0 %v1515
          %v1658 = vpop.f32.mrb[0].mxu0
          %v1659 = vadd.f32 %v1519, %v1658
          %v1660 = vpop.f32.mrb[0].mxu0
          %v1661 = vpop.f32.mrb[0].mxu0
          %v1662 = vadd.f32 %v1519, %v1661
          %v1663 = vpop.f32.mrb[0].mxu0
          %1664 = vdwg.mxu0
          %v1665 = vmax.f32 %v1603, 0.0
          %v1666 = vmax.f32 %v1606, 0.0
          %v1667 = vmax.f32 %v1611, 0.0
          %v1668 = vmax.f32 %v1614, 0.0
          %v1669 = vmax.f32 %v1619, 0.0
          %v1670 = vmax.f32 %v1622, 0.0
          %v1671 = vmax.f32 %v1627, 0.0
          %v1672 = vmax.f32 %v1630, 0.0
          %v1673 = vmax.f32 %v1635, 0.0
          %v1674 = vmax.f32 %v1638, 0.0
          %v1675 = vmax.f32 %v1643, 0.0
          %v1676 = vmax.f32 %v1646, 0.0
          %v1677 = vmax.f32 %v1651, 0.0
          %v1678 = vmax.f32 %v1654, 0.0
          %v1679 = vmax.f32 %v1659, 0.0
          %v1680 = vmax.f32 %v1662, 0.0
          %v1681 = vpack.c.bf16 %v1666, %v1665
          %v1682 = vpack.c.bf16 %v1668, %v1667
          %v1683 = vpack.c.bf16 %v1670, %v1669
          %v1684 = vpack.c.bf16 %v1672, %v1671
          %v1685 = vpack.c.bf16 %v1674, %v1673
          %v1686 = vpack.c.bf16 %v1676, %v1675
          %v1687 = vpack.c.bf16 %v1678, %v1677
          %v1688 = vpack.c.bf16 %v1680, %v1679
          %v1689 = vlaneseq
          %v1690 = vshrl.u32 %v1689, 7
          %v1691 = vsub.s32 2, %v1690
          %v1692 = vrot.slane %v1230, %v1691
          %v1709 = vunpack.c.l.b16 %v1279
          %v1710 = vunpack.c.l.b16 %v1280
          %v1711 = vunpack.c.l.b16 %v1281
          %v1712 = vunpack.c.l.b16 %v1282
          %v1713 = vunpack.c.l.b16 %v1283
          %v1714 = vunpack.c.l.b16 %v1284
          %v1715 = vunpack.c.l.b16 %v1285
          %v1716 = vunpack.c.l.b16 %v1286
          %v1717 = vunpack.c.l.b16 %v1287
          %v1718 = vunpack.c.l.b16 %v1288
          %v1719 = vunpack.c.l.b16 %v1289
          %v1720 = vunpack.c.l.b16 %v1290
          %v1721 = vunpack.c.l.b16 %v1291
          %v1722 = vunpack.c.l.b16 %v1292
          %v1723 = vunpack.c.l.b16 %v1293
          %v1724 = vunpack.c.l.b16 %v1294
          %v1725 = vpack.c.b16 %v1710, %v1709
          %v1726 = vpack.c.b16 %v1712, %v1711
          %v1727 = vpack.c.b16 %v1714, %v1713
          %v1728 = vpack.c.b16 %v1716, %v1715
          %v1729 = vpack.c.b16 %v1718, %v1717
          %v1730 = vpack.c.b16 %v1720, %v1719
          %v1731 = vpack.c.b16 %v1722, %v1721
          %v1732 = vpack.c.b16 %v1724, %v1723
          %1741 = vmatprep.subr.bf16.mxu0 0
          %1742 = vmatpush1.bf16.msra.mxu0 %v1725
          %1743 = vmatprep.subr.bf16.mxu0 0
          %1744 = vmatpush1.bf16.msra.mxu0 %v1726
          %1745 = vmatprep.subr.bf16.mxu0 0
          %1746 = vmatpush1.bf16.msra.mxu0 %v1727
          %1747 = vmatprep.subr.bf16.mxu0 0
          %1748 = vmatpush1.bf16.msra.mxu0 %v1728
          %1749 = vmatprep.subr.bf16.mxu0 0
          %1750 = vmatpush1.bf16.msra.mxu0 %v1729
          %1751 = vmatprep.subr.bf16.mxu0 0
          %1752 = vmatpush1.bf16.msra.mxu0 %v1730
          %1753 = vmatprep.subr.bf16.mxu0 0
          %1754 = vmatpush1.bf16.msra.mxu0 %v1731
          %1755 = vmatprep.subr.bf16.mxu0 0
          %1756 = vmatpush1.bf16.msra.mxu0 %v1732
          %1757 = vmatprep.subr.bf16.mxu0 0
          %1758 = vmatpush1.bf16.msra.mxu0 0
          %1759 = vmatprep.subr.bf16.mxu0 0
          %1760 = vmatpush1.bf16.msra.mxu0 0
          %1761 = vmatprep.subr.bf16.mxu0 0
          %1762 = vmatpush1.bf16.msra.mxu0 0
          %1763 = vmatprep.subr.bf16.mxu0 0
          %1764 = vmatpush1.bf16.msra.mxu0 0
          %1765 = vmatprep.subr.bf16.mxu0 0
          %1766 = vmatpush1.bf16.msra.mxu0 0
          %1767 = vmatprep.subr.bf16.mxu0 0
          %1768 = vmatpush1.bf16.msra.mxu0 0
          %1769 = vmatprep.subr.bf16.mxu0 0
          %1770 = vmatpush1.bf16.msra.mxu0 0
          %1771 = vmatprep.subr.bf16.mxu0 0
          %1772 = vmatpush1.bf16.msra.mxu0 0
          %1773 = vmatprep.mubr.bf16.mxu0 0
          %1774 = vmatmul.mubr.bf16.gmra.mrb[0].mxu0 %v1681
          %v1775 = vpop.f32.mrb[0].mxu0
          %v1776 = vadd.f32 %v1692, %v1775
          %v1777 = vpop.f32.mrb[0].mxu0
          %v1778 = vpop.f32.mrb[0].mxu0
          %v1779 = vadd.f32 %v1692, %v1778
          %v1780 = vpop.f32.mrb[0].mxu0
          %1781 = vmatprep.mubr.bf16.mxu0 0
          %1782 = vmatmul.mubr.bf16.gmra.mrb[0].mxu0 %v1682
          %v1783 = vpop.f32.mrb[0].mxu0
          %v1784 = vadd.f32 %v1692, %v1783
          %v1785 = vpop.f32.mrb[0].mxu0
          %v1786 = vpop.f32.mrb[0].mxu0
          %v1787 = vadd.f32 %v1692, %v1786
          %v1788 = vpop.f32.mrb[0].mxu0
          %1789 = vmatprep.mubr.bf16.mxu0 0
          %1790 = vmatmul.mubr.bf16.gmra.mrb[0].mxu0 %v1683
          %v1791 = vpop.f32.mrb[0].mxu0
          %v1792 = vadd.f32 %v1692, %v1791
          %v1793 = vpop.f32.mrb[0].mxu0
          %v1794 = vpop.f32.mrb[0].mxu0
          %v1795 = vadd.f32 %v1692, %v1794
          %v1796 = vpop.f32.mrb[0].mxu0
          %1797 = vmatprep.mubr.bf16.mxu0 0
          %1798 = vmatmul.mubr.bf16.gmra.mrb[0].mxu0 %v1684
          %v1799 = vpop.f32.mrb[0].mxu0
          %v1800 = vadd.f32 %v1692, %v1799
          %v1801 = vpop.f32.mrb[0].mxu0
          %v1802 = vpop.f32.mrb[0].mxu0
          %v1803 = vadd.f32 %v1692, %v1802
          %v1804 = vpop.f32.mrb[0].mxu0
          %1805 = vmatprep.mubr.bf16.mxu0 0
          %1806 = vmatmul.mubr.bf16.gmra.mrb[0].mxu0 %v1685
          %v1807 = vpop.f32.mrb[0].mxu0
          %v1808 = vadd.f32 %v1692, %v1807
          %v1809 = vpop.f32.mrb[0].mxu0
          %v1810 = vpop.f32.mrb[0].mxu0
          %v1811 = vadd.f32 %v1692, %v1810
          %v1812 = vpop.f32.mrb[0].mxu0
          %1813 = vmatprep.mubr.bf16.mxu0 0
          %1814 = vmatmul.mubr.bf16.gmra.mrb[0].mxu0 %v1686
          %v1815 = vpop.f32.mrb[0].mxu0
          %v1816 = vadd.f32 %v1692, %v1815
          %v1817 = vpop.f32.mrb[0].mxu0
          %v1818 = vpop.f32.mrb[0].mxu0
          %v1819 = vadd.f32 %v1692, %v1818
          %v1820 = vpop.f32.mrb[0].mxu0
          %1821 = vmatprep.mubr.bf16.mxu0 0
          %1822 = vmatmul.mubr.bf16.gmra.mrb[0].mxu0 %v1687
          %v1823 = vpop.f32.mrb[0].mxu0
          %v1824 = vadd.f32 %v1692, %v1823
          %v1825 = vpop.f32.mrb[0].mxu0
          %v1826 = vpop.f32.mrb[0].mxu0
          %v1827 = vadd.f32 %v1692, %v1826
          %v1828 = vpop.f32.mrb[0].mxu0
          %1829 = vmatprep.mubr.bf16.mxu0 0
          %1830 = vmatmul.mubr.bf16.gmra.mrb[0].mxu0 %v1688
          %v1831 = vpop.f32.mrb[0].mxu0
          %v1832 = vadd.f32 %v1692, %v1831
          %v1833 = vpop.f32.mrb[0].mxu0
          %v1834 = vpop.f32.mrb[0].mxu0
          %v1835 = vadd.f32 %v1692, %v1834
          %v1836 = vpop.f32.mrb[0].mxu0
          %1837 = vdwg.mxu0
          %1838 = vadd.xlane.f32.xlu0 %v1776
          %v1839 = vpop.xlane.xlu0 %1838
          %1840 = vadd.xlane.f32.xlu0 %v1779
          %v1841 = vpop.xlane.xlu0 %1840
          %1842 = vadd.xlane.f32.xlu0 %v1784
          %v1843 = vpop.xlane.xlu0 %1842
          %1844 = vadd.xlane.f32.xlu0 %v1787
          %v1845 = vpop.xlane.xlu0 %1844
          %1846 = vadd.xlane.f32.xlu0 %v1792
          %v1847 = vpop.xlane.xlu0 %1846
          %1848 = vadd.xlane.f32.xlu0 %v1795
          %v1849 = vpop.xlane.xlu0 %1848
          %1850 = vadd.xlane.f32.xlu0 %v1800
          %v1851 = vpop.xlane.xlu0 %1850
          %1852 = vadd.xlane.f32.xlu0 %v1803
          %v1853 = vpop.xlane.xlu0 %1852
          %1854 = vadd.xlane.f32.xlu0 %v1808
          %v1855 = vpop.xlane.xlu0 %1854
          %1856 = vadd.xlane.f32.xlu0 %v1811
          %v1857 = vpop.xlane.xlu0 %1856
          %1858 = vadd.xlane.f32.xlu0 %v1816
          %v1859 = vpop.xlane.xlu0 %1858
          %1860 = vadd.xlane.f32.xlu0 %v1819
          %v1861 = vpop.xlane.xlu0 %1860
          %1862 = vadd.xlane.f32.xlu0 %v1824
          %v1863 = vpop.xlane.xlu0 %1862
          %1864 = vadd.xlane.f32.xlu0 %v1827
          %v1865 = vpop.xlane.xlu0 %1864
          %1866 = vadd.xlane.f32.xlu0 %v1832
          %v1867 = vpop.xlane.xlu0 %1866
          %1868 = vadd.xlane.f32.xlu0 %v1835
          %v1869 = vpop.xlane.xlu0 %1868
          %v1870 = vrcp.pop 128.0
          %v1871 = vmul.f32 %v1839, %v1870
          %v1872 = vmul.f32 %v1841, %v1870
          %v1873 = vmul.f32 %v1843, %v1870
          %v1874 = vmul.f32 %v1845, %v1870
          %v1875 = vmul.f32 %v1847, %v1870
          %v1876 = vmul.f32 %v1849, %v1870
          %v1877 = vmul.f32 %v1851, %v1870
          %v1878 = vmul.f32 %v1853, %v1870
          %v1879 = vmul.f32 %v1855, %v1870
          %v1880 = vmul.f32 %v1857, %v1870
          %v1881 = vmul.f32 %v1859, %v1870
          %v1882 = vmul.f32 %v1861, %v1870
          %v1883 = vmul.f32 %v1863, %v1870
          %v1884 = vmul.f32 %v1865, %v1870
          %v1885 = vmul.f32 %v1867, %v1870
          %v1886 = vmul.f32 %v1869, %v1870
          %v1887 = vsub.f32 %v1776, %v1871
          %v1888 = vsub.f32 %v1779, %v1872
          %v1889 = vsub.f32 %v1784, %v1873
          %v1890 = vsub.f32 %v1787, %v1874
          %v1891 = vsub.f32 %v1792, %v1875
          %v1892 = vsub.f32 %v1795, %v1876
          %v1893 = vsub.f32 %v1800, %v1877
          %v1894 = vsub.f32 %v1803, %v1878
          %v1895 = vsub.f32 %v1808, %v1879
          %v1896 = vsub.f32 %v1811, %v1880
          %v1897 = vsub.f32 %v1816, %v1881
          %v1898 = vsub.f32 %v1819, %v1882
          %v1899 = vsub.f32 %v1824, %v1883
          %v1900 = vsub.f32 %v1827, %v1884
          %v1901 = vsub.f32 %v1832, %v1885
          %v1902 = vsub.f32 %v1835, %v1886
          %v1903 = vmul.f32 %v1887, %v1887
          %v1904 = vmul.f32 %v1888, %v1888
          %v1905 = vmul.f32 %v1889, %v1889
          %v1906 = vmul.f32 %v1890, %v1890
          %v1907 = vmul.f32 %v1891, %v1891
          %v1908 = vmul.f32 %v1892, %v1892
          %v1909 = vmul.f32 %v1893, %v1893
          %v1910 = vmul.f32 %v1894, %v1894
          %v1911 = vmul.f32 %v1895, %v1895
          %v1912 = vmul.f32 %v1896, %v1896
          %v1913 = vmul.f32 %v1897, %v1897
          %v1914 = vmul.f32 %v1898, %v1898
          %v1915 = vmul.f32 %v1899, %v1899
          %v1916 = vmul.f32 %v1900, %v1900
          %v1917 = vmul.f32 %v1901, %v1901
          %v1918 = vmul.f32 %v1902, %v1902
          %1919 = vadd.xlane.f32.xlu0 %v1903
          %v1920 = vpop.xlane.xlu0 %1919
          %1921 = vadd.xlane.f32.xlu0 %v1904
          %v1922 = vpop.xlane.xlu0 %1921
          %1923 = vadd.xlane.f32.xlu0 %v1905
          %v1924 = vpop.xlane.xlu0 %1923
          %1925 = vadd.xlane.f32.xlu0 %v1906
          %v1926 = vpop.xlane.xlu0 %1925
          %1927 = vadd.xlane.f32.xlu0 %v1907
          %v1928 = vpop.xlane.xlu0 %1927
          %1929 = vadd.xlane.f32.xlu0 %v1908
          %v1930 = vpop.xlane.xlu0 %1929
          %1931 = vadd.xlane.f32.xlu0 %v1909
          %v1932 = vpop.xlane.xlu0 %1931
          %1933 = vadd.xlane.f32.xlu0 %v1910
          %v1934 = vpop.xlane.xlu0 %1933
          %1935 = vadd.xlane.f32.xlu0 %v1911
          %v1936 = vpop.xlane.xlu0 %1935
          %1937 = vadd.xlane.f32.xlu0 %v1912
          %v1938 = vpop.xlane.xlu0 %1937
          %1939 = vadd.xlane.f32.xlu0 %v1913
          %v1940 = vpop.xlane.xlu0 %1939
          %1941 = vadd.xlane.f32.xlu0 %v1914
          %v1942 = vpop.xlane.xlu0 %1941
          %1943 = vadd.xlane.f32.xlu0 %v1915
          %v1944 = vpop.xlane.xlu0 %1943
          %1945 = vadd.xlane.f32.xlu0 %v1916
          %v1946 = vpop.xlane.xlu0 %1945
          %1947 = vadd.xlane.f32.xlu0 %v1917
          %v1948 = vpop.xlane.xlu0 %1947
          %1949 = vadd.xlane.f32.xlu0 %v1918
          %v1950 = vpop.xlane.xlu0 %1949
          %v1951 = vmul.f32 %v1920, %v1870
          %v1952 = vmul.f32 %v1922, %v1870
          %v1953 = vmul.f32 %v1924, %v1870
          %v1954 = vmul.f32 %v1926, %v1870
          %v1955 = vmul.f32 %v1928, %v1870
          %v1956 = vmul.f32 %v1930, %v1870
          %v1957 = vmul.f32 %v1932, %v1870
          %v1958 = vmul.f32 %v1934, %v1870
          %v1959 = vmul.f32 %v1936, %v1870
          %v1960 = vmul.f32 %v1938, %v1870
          %v1961 = vmul.f32 %v1940, %v1870
          %v1962 = vmul.f32 %v1942, %v1870
          %v1963 = vmul.f32 %v1944, %v1870
          %v1964 = vmul.f32 %v1946, %v1870
          %v1965 = vmul.f32 %v1948, %v1870
          %v1966 = vmul.f32 %v1950, %v1870
          %v1967 = vadd.f32 %v1951, 1e-05
          %v1968 = vadd.f32 %v1952, 1e-05
          %v1969 = vadd.f32 %v1953, 1e-05
          %v1970 = vadd.f32 %v1954, 1e-05
          %v1971 = vadd.f32 %v1955, 1e-05
          %v1972 = vadd.f32 %v1956, 1e-05
          %v1973 = vadd.f32 %v1957, 1e-05
          %v1974 = vadd.f32 %v1958, 1e-05
          %v1975 = vadd.f32 %v1959, 1e-05
          %v1976 = vadd.f32 %v1960, 1e-05
          %v1977 = vadd.f32 %v1961, 1e-05
          %v1978 = vadd.f32 %v1962, 1e-05
          %v1979 = vadd.f32 %v1963, 1e-05
          %v1980 = vadd.f32 %v1964, 1e-05
          %v1981 = vadd.f32 %v1965, 1e-05
          %v1982 = vadd.f32 %v1966, 1e-05
          %v1983 = vrsqrt.pop %v1967
          %v1984 = vrsqrt.pop %v1968
          %v1985 = vrsqrt.pop %v1969
          %v1986 = vrsqrt.pop %v1970
          %v1987 = vrsqrt.pop %v1971
          %v1988 = vrsqrt.pop %v1972
          %v1989 = vrsqrt.pop %v1973
          %v1990 = vrsqrt.pop %v1974
          %v1991 = vrsqrt.pop %v1975
          %v1992 = vrsqrt.pop %v1976
          %v1993 = vrsqrt.pop %v1977
          %v1994 = vrsqrt.pop %v1978
          %v1995 = vrsqrt.pop %v1979
          %v1996 = vrsqrt.pop %v1980
          %v1997 = vrsqrt.pop %v1981
          %v1998 = vrsqrt.pop %v1982
          %v1999 = vmul.f32 %v1887, %v1983
          %v2000 = vmul.f32 %v1888, %v1984
          %v2001 = vmul.f32 %v1889, %v1985
          %v2002 = vmul.f32 %v1890, %v1986
          %v2003 = vmul.f32 %v1891, %v1987
          %v2004 = vmul.f32 %v1892, %v1988
          %v2005 = vmul.f32 %v1893, %v1989
          %v2006 = vmul.f32 %v1894, %v1990
          %v2007 = vmul.f32 %v1895, %v1991
          %v2008 = vmul.f32 %v1896, %v1992
          %v2009 = vmul.f32 %v1897, %v1993
          %v2010 = vmul.f32 %v1898, %v1994
          %v2011 = vmul.f32 %v1899, %v1995
          %v2012 = vmul.f32 %v1900, %v1996
          %v2013 = vmul.f32 %v1901, %v1997
          %v2014 = vmul.f32 %v1902, %v1998
          %v2015 = vlaneseq
          %v2016 = vshrl.u32 %v2015, 7
          %v2017 = vsub.s32 3, %v2016
          %v2018 = vrot.slane %v1230, %v2017
          %v2019 = vmul.f32 %v1999, %v2018
          %v2020 = vmul.f32 %v2000, %v2018
          %v2021 = vmul.f32 %v2001, %v2018
          %v2022 = vmul.f32 %v2002, %v2018
          %v2023 = vmul.f32 %v2003, %v2018
          %v2024 = vmul.f32 %v2004, %v2018
          %v2025 = vmul.f32 %v2005, %v2018
          %v2026 = vmul.f32 %v2006, %v2018
          %v2027 = vmul.f32 %v2007, %v2018
          %v2028 = vmul.f32 %v2008, %v2018
          %v2029 = vmul.f32 %v2009, %v2018
          %v2030 = vmul.f32 %v2010, %v2018
          %v2031 = vmul.f32 %v2011, %v2018
          %v2032 = vmul.f32 %v2012, %v2018
          %v2033 = vmul.f32 %v2013, %v2018
          %v2034 = vmul.f32 %v2014, %v2018
          %v2035 = vlaneseq
          %v2036 = vshrl.u32 %v2035, 7
          %v2037 = vsub.s32 4, %v2036
          %v2038 = vrot.slane %v1230, %v2037
          %v2039 = vadd.f32 %v2019, %v2038
          %v2040 = vadd.f32 %v2020, %v2038
          %v2041 = vadd.f32 %v2021, %v2038
          %v2042 = vadd.f32 %v2022, %v2038
          %v2043 = vadd.f32 %v2023, %v2038
          %v2044 = vadd.f32 %v2024, %v2038
          %v2045 = vadd.f32 %v2025, %v2038
          %v2046 = vadd.f32 %v2026, %v2038
          %v2047 = vadd.f32 %v2027, %v2038
          %v2048 = vadd.f32 %v2028, %v2038
          %v2049 = vadd.f32 %v2029, %v2038
          %v2050 = vadd.f32 %v2030, %v2038
          %v2051 = vadd.f32 %v2031, %v2038
          %v2052 = vadd.f32 %v2032, %v2038
          %v2053 = vadd.f32 %v2033, %v2038
          %v2054 = vadd.f32 %v2034, %v2038
          %2055 = vst [vmem:[#allocation4] sm:$0xff] %v2039
          %2056 = vst [vmem:[#allocation4 + $0x8] sm:$0xff] %v2040
          %2057 = vst [vmem:[#allocation4 + $0x10] sm:$0xff] %v2041
          %2058 = vst [vmem:[#allocation4 + $0x18] sm:$0xff] %v2042
          %2059 = vst [vmem:[#allocation4 + $0x20] sm:$0xff] %v2043
          %2060 = vst [vmem:[#allocation4 + $0x28] sm:$0xff] %v2044
          %2061 = vst [vmem:[#allocation4 + $0x30] sm:$0xff] %v2045
          %2062 = vst [vmem:[#allocation4 + $0x38] sm:$0xff] %v2046
          %2063 = vst [vmem:[#allocation4 + $0x40] sm:$0xff] %v2047
          %2064 = vst [vmem:[#allocation4 + $0x48] sm:$0xff] %v2048
          %2065 = vst [vmem:[#allocation4 + $0x50] sm:$0xff] %v2049
          %2066 = vst [vmem:[#allocation4 + $0x58] sm:$0xff] %v2050
          %2067 = vst [vmem:[#allocation4 + $0x60] sm:$0xff] %v2051
          %2068 = vst [vmem:[#allocation4 + $0x68] sm:$0xff] %v2052
          %2069 = vst [vmem:[#allocation4 + $0x70] sm:$0xff] %v2053
          %2070 = vst [vmem:[#allocation4 + $0x78] sm:$0xff] %v2054
          %s2071 = smul.u32 4, 16
          %s2072 = smul.u32 %s2071, 1
          %s2073 = sshll.u32 %s2072, 4
          %2074 = dma.done [#allocation9], %s2073
          %s2075 = sshll.u32 %s2072, 4
          %2076 = dma.done %s1173, %s2075
        $region184: #{incompr_ns_forward.1} parent=111 // pred_fallthru
          _
        %v2077 = vld [vmem:[#allocation4] sm:$0xff]
        %v2078 = vld [vmem:[#allocation4 + $0x8] sm:$0xff]
        %v2079 = vld [vmem:[#allocation4 + $0x10] sm:$0xff]
        %v2080 = vld [vmem:[#allocation4 + $0x18] sm:$0xff]
        %v2081 = vld [vmem:[#allocation4 + $0x20] sm:$0xff]
        %v2082 = vld [vmem:[#allocation4 + $0x28] sm:$0xff]
        %v2083 = vld [vmem:[#allocation4 + $0x30] sm:$0xff]
        %v2084 = vld [vmem:[#allocation4 + $0x38] sm:$0xff]
        %v2085 = vld [vmem:[#allocation4 + $0x40] sm:$0xff]
        %v2086 = vld [vmem:[#allocation4 + $0x48] sm:$0xff]
        %v2087 = vld [vmem:[#allocation4 + $0x50] sm:$0xff]
        %v2088 = vld [vmem:[#allocation4 + $0x58] sm:$0xff]
        %v2089 = vld [vmem:[#allocation4 + $0x60] sm:$0xff]
        %v2090 = vld [vmem:[#allocation4 + $0x68] sm:$0xff]
        %v2091 = vld [vmem:[#allocation4 + $0x70] sm:$0xff]
        %v2092 = vld [vmem:[#allocation4 + $0x78] sm:$0xff]
        %v2093 = vpack.c.bf16 %v2078, %v2077
        %v2094 = vpack.c.bf16 %v2080, %v2079
        %v2095 = vpack.c.bf16 %v2082, %v2081
        %v2096 = vpack.c.bf16 %v2084, %v2083
        %v2097 = vpack.c.bf16 %v2086, %v2085
        %v2098 = vpack.c.bf16 %v2088, %v2087
        %v2099 = vpack.c.bf16 %v2090, %v2089
        %v2100 = vpack.c.bf16 %v2092, %v2091
        %v2101 = vld [vmem:[%s947] sm:$0xff]
        %v2102 = vld [vmem:[%s947 + $0x8] sm:$0xff]
        %v2103 = vld [vmem:[%s947 + $0x10] sm:$0xff]
        %v2104 = vld [vmem:[%s947 + $0x18] sm:$0xff]
        %v2105 = vld [vmem:[%s947 + $0x20] sm:$0xff]
        %v2106 = vld [vmem:[%s947 + $0x28] sm:$0xff]
        %v2107 = vld [vmem:[%s947 + $0x30] sm:$0xff]
        %v2108 = vld [vmem:[%s947 + $0x38] sm:$0xff]
        %v2109 = vld [vmem:[%s947 + $0x40] sm:$0xff]
        %v2110 = vld [vmem:[%s947 + $0x48] sm:$0xff]
        %v2111 = vld [vmem:[%s947 + $0x50] sm:$0xff]
        %v2112 = vld [vmem:[%s947 + $0x58] sm:$0xff]
        %v2113 = vld [vmem:[%s947 + $0x60] sm:$0xff]
        %v2114 = vld [vmem:[%s947 + $0x68] sm:$0xff]
        %v2115 = vld [vmem:[%s947 + $0x70] sm:$0xff]
        %v2116 = vld [vmem:[%s947 + $0x78] sm:$0xff]
        %v2133 = vunpack.c.l.b16 %v2101
        %v2134 = vunpack.c.h.b16 %v2101
        %v2135 = vunpack.c.l.b16 %v2102
        %v2136 = vunpack.c.h.b16 %v2102
        %v2137 = vunpack.c.l.b16 %v2103
        %v2138 = vunpack.c.h.b16 %v2103
        %v2139 = vunpack.c.l.b16 %v2104
        %v2140 = vunpack.c.h.b16 %v2104
        %v2141 = vunpack.c.l.b16 %v2105
        %v2142 = vunpack.c.h.b16 %v2105
        %v2143 = vunpack.c.l.b16 %v2106
        %v2144 = vunpack.c.h.b16 %v2106
        %v2145 = vunpack.c.l.b16 %v2107
        %v2146 = vunpack.c.h.b16 %v2107
        %v2147 = vunpack.c.l.b16 %v2108
        %v2148 = vunpack.c.h.b16 %v2108
        %v2149 = vunpack.c.l.b16 %v2109
        %v2150 = vunpack.c.h.b16 %v2109
        %v2151 = vunpack.c.l.b16 %v2110
        %v2152 = vunpack.c.h.b16 %v2110
        %v2153 = vunpack.c.l.b16 %v2111
        %v2154 = vunpack.c.h.b16 %v2111
        %v2155 = vunpack.c.l.b16 %v2112
        %v2156 = vunpack.c.h.b16 %v2112
        %v2157 = vunpack.c.l.b16 %v2113
        %v2158 = vunpack.c.h.b16 %v2113
        %v2159 = vunpack.c.l.b16 %v2114
        %v2160 = vunpack.c.h.b16 %v2114
        %v2161 = vunpack.c.l.b16 %v2115
        %v2162 = vunpack.c.h.b16 %v2115
        %v2163 = vunpack.c.l.b16 %v2116
        %v2164 = vunpack.c.h.b16 %v2116
        %v2165 = vpack.c.b16 %v2135, %v2133
        %v2166 = vpack.c.b16 %v2136, %v2134
        %v2167 = vpack.c.b16 %v2139, %v2137
        %v2168 = vpack.c.b16 %v2140, %v2138
        %v2169 = vpack.c.b16 %v2143, %v2141
        %v2170 = vpack.c.b16 %v2144, %v2142
        %v2171 = vpack.c.b16 %v2147, %v2145
        %v2172 = vpack.c.b16 %v2148, %v2146
        %v2173 = vpack.c.b16 %v2151, %v2149
        %v2174 = vpack.c.b16 %v2152, %v2150
        %v2175 = vpack.c.b16 %v2155, %v2153
        %v2176 = vpack.c.b16 %v2156, %v2154
        %v2177 = vpack.c.b16 %v2159, %v2157
        %v2178 = vpack.c.b16 %v2160, %v2158
        %v2179 = vpack.c.b16 %v2163, %v2161
        %v2180 = vpack.c.b16 %v2164, %v2162
        %2197 = vmatprep.subr.bf16.mxu0 %v2166
        %2198 = vmatpush1.bf16.msra.mxu0 %v2165
        %2199 = vmatprep.subr.bf16.mxu0 %v2168
        %2200 = vmatpush1.bf16.msra.mxu0 %v2167
        %2201 = vmatprep.subr.bf16.mxu0 %v2170
        %2202 = vmatpush1.bf16.msra.mxu0 %v2169
        %2203 = vmatprep.subr.bf16.mxu0 %v2172
        %2204 = vmatpush1.bf16.msra.mxu0 %v2171
        %2205 = vmatprep.subr.bf16.mxu0 %v2174
        %2206 = vmatpush1.bf16.msra.mxu0 %v2173
        %2207 = vmatprep.subr.bf16.mxu0 %v2176
        %2208 = vmatpush1.bf16.msra.mxu0 %v2175
        %2209 = vmatprep.subr.bf16.mxu0 %v2178
        %2210 = vmatpush1.bf16.msra.mxu0 %v2177
        %2211 = vmatprep.subr.bf16.mxu0 %v2180
        %2212 = vmatpush1.bf16.msra.mxu0 %v2179
        %2213 = vmatprep.subr.bf16.mxu0 0
        %2214 = vmatpush1.bf16.msra.mxu0 0
        %2215 = vmatprep.subr.bf16.mxu0 0
        %2216 = vmatpush1.bf16.msra.mxu0 0
        %2217 = vmatprep.subr.bf16.mxu0 0
        %2218 = vmatpush1.bf16.msra.mxu0 0
        %2219 = vmatprep.subr.bf16.mxu0 0
        %2220 = vmatpush1.bf16.msra.mxu0 0
        %2221 = vmatprep.subr.bf16.mxu0 0
        %2222 = vmatpush1.bf16.msra.mxu0 0
        %2223 = vmatprep.subr.bf16.mxu0 0
        %2224 = vmatpush1.bf16.msra.mxu0 0
        %2225 = vmatprep.subr.bf16.mxu0 0
        %2226 = vmatpush1.bf16.msra.mxu0 0
        %2227 = vmatprep.subr.bf16.mxu0 0
        %2228 = vmatpush1.bf16.msra.mxu0 0
        %2229 = vmatprep.mubr.bf16.mxu0 0
        %2230 = vmatmul.mubr.bf16.gmra.mrb[0].mxu0 %v2093
        %v2231 = vpop.f32.mrb[0].mxu0
        %v2232 = vadd.f32 0.0, %v2231
        %v2233 = vpop.f32.mrb[0].mxu0
        %v2234 = vadd.f32 0.0, %v2233
        %v2235 = vpop.f32.mrb[0].mxu0
        %v2236 = vadd.f32 0.0, %v2235
        %v2237 = vpop.f32.mrb[0].mxu0
        %v2238 = vadd.f32 0.0, %v2237
        %2239 = vmatprep.mubr.bf16.mxu0 0
        %2240 = vmatmul.mubr.bf16.gmra.mrb[0].mxu0 %v2094
        %v2241 = vpop.f32.mrb[0].mxu0
        %v2242 = vadd.f32 0.0, %v2241
        %v2243 = vpop.f32.mrb[0].mxu0
        %v2244 = vadd.f32 0.0, %v2243
        %v2245 = vpop.f32.mrb[0].mxu0
        %v2246 = vadd.f32 0.0, %v2245
        %v2247 = vpop.f32.mrb[0].mxu0
        %v2248 = vadd.f32 0.0, %v2247
        %2249 = vmatprep.mubr.bf16.mxu0 0
        %2250 = vmatmul.mubr.bf16.gmra.mrb[0].mxu0 %v2095
        %v2251 = vpop.f32.mrb[0].mxu0
        %v2252 = vadd.f32 0.0, %v2251
        %v2253 = vpop.f32.mrb[0].mxu0
        %v2254 = vadd.f32 0.0, %v2253
        %v2255 = vpop.f32.mrb[0].mxu0
        %v2256 = vadd.f32 0.0, %v2255
        %v2257 = vpop.f32.mrb[0].mxu0
        %v2258 = vadd.f32 0.0, %v2257
        %2259 = vmatprep.mubr.bf16.mxu0 0
        %2260 = vmatmul.mubr.bf16.gmra.mrb[0].mxu0 %v2096
        %v2261 = vpop.f32.mrb[0].mxu0
        %v2262 = vadd.f32 0.0, %v2261
        %v2263 = vpop.f32.mrb[0].mxu0
        %v2264 = vadd.f32 0.0, %v2263
        %v2265 = vpop.f32.mrb[0].mxu0
        %v2266 = vadd.f32 0.0, %v2265
        %v2267 = vpop.f32.mrb[0].mxu0
        %v2268 = vadd.f32 0.0, %v2267
        %2269 = vmatprep.mubr.bf16.mxu0 0
        %2270 = vmatmul.mubr.bf16.gmra.mrb[0].mxu0 %v2097
        %v2271 = vpop.f32.mrb[0].mxu0
        %v2272 = vadd.f32 0.0, %v2271
        %v2273 = vpop.f32.mrb[0].mxu0
        %v2274 = vadd.f32 0.0, %v2273
        %v2275 = vpop.f32.mrb[0].mxu0
        %v2276 = vadd.f32 0.0, %v2275
        %v2277 = vpop.f32.mrb[0].mxu0
        %v2278 = vadd.f32 0.0, %v2277
        %2279 = vmatprep.mubr.bf16.mxu0 0
        %2280 = vmatmul.mubr.bf16.gmra.mrb[0].mxu0 %v2098
        %v2281 = vpop.f32.mrb[0].mxu0
        %v2282 = vadd.f32 0.0, %v2281
        %v2283 = vpop.f32.mrb[0].mxu0
        %v2284 = vadd.f32 0.0, %v2283
        %v2285 = vpop.f32.mrb[0].mxu0
        %v2286 = vadd.f32 0.0, %v2285
        %v2287 = vpop.f32.mrb[0].mxu0
        %v2288 = vadd.f32 0.0, %v2287
        %2289 = vmatprep.mubr.bf16.mxu0 0
        %2290 = vmatmul.mubr.bf16.gmra.mrb[0].mxu0 %v2099
        %v2291 = vpop.f32.mrb[0].mxu0
        %v2292 = vadd.f32 0.0, %v2291
        %v2293 = vpop.f32.mrb[0].mxu0
        %v2294 = vadd.f32 0.0, %v2293
        %v2295 = vpop.f32.mrb[0].mxu0
        %v2296 = vadd.f32 0.0, %v2295
        %v2297 = vpop.f32.mrb[0].mxu0
        %v2298 = vadd.f32 0.0, %v2297
        %2299 = vmatprep.mubr.bf16.mxu0 0
        %2300 = vmatmul.mubr.bf16.gmra.mrb[0].mxu0 %v2100
        %v2301 = vpop.f32.mrb[0].mxu0
        %v2302 = vadd.f32 0.0, %v2301
        %v2303 = vpop.f32.mrb[0].mxu0
        %v2304 = vadd.f32 0.0, %v2303
        %v2305 = vpop.f32.mrb[0].mxu0
        %v2306 = vadd.f32 0.0, %v2305
        %v2307 = vpop.f32.mrb[0].mxu0
        %v2308 = vadd.f32 0.0, %v2307
        %2309 = vdwg.mxu0
        %v2310 = vpack.c.bf16 %v2236, %v2232
        %v2311 = vpack.c.bf16 %v2246, %v2242
        %v2312 = vpack.c.bf16 %v2256, %v2252
        %v2313 = vpack.c.bf16 %v2266, %v2262
        %v2314 = vpack.c.bf16 %v2276, %v2272
        %v2315 = vpack.c.bf16 %v2286, %v2282
        %v2316 = vpack.c.bf16 %v2296, %v2292
        %v2317 = vpack.c.bf16 %v2306, %v2302
        %2318 = vst [vmem:[#allocation7] sm:$0xff] %v2310
        %2319 = vst [vmem:[#allocation7 + $0x8] sm:$0xff] %v2311
        %2320 = vst [vmem:[#allocation7 + $0x10] sm:$0xff] %v2312
        %2321 = vst [vmem:[#allocation7 + $0x18] sm:$0xff] %v2313
        %2322 = vst [vmem:[#allocation7 + $0x20] sm:$0xff] %v2314
        %2323 = vst [vmem:[#allocation7 + $0x28] sm:$0xff] %v2315
        %2324 = vst [vmem:[#allocation7 + $0x30] sm:$0xff] %v2316
        %2325 = vst [vmem:[#allocation7 + $0x38] sm:$0xff] %v2317
        %v2326 = vpack.c.bf16 %v2238, %v2234
        %v2327 = vpack.c.bf16 %v2248, %v2244
        %v2328 = vpack.c.bf16 %v2258, %v2254
        %v2329 = vpack.c.bf16 %v2268, %v2264
        %v2330 = vpack.c.bf16 %v2278, %v2274
        %v2331 = vpack.c.bf16 %v2288, %v2284
        %v2332 = vpack.c.bf16 %v2298, %v2294
        %v2333 = vpack.c.bf16 %v2308, %v2304
        %2334 = vst [vmem:[#allocation8] sm:$0xff] %v2326
        %2335 = vst [vmem:[#allocation8 + $0x8] sm:$0xff] %v2327
        %2336 = vst [vmem:[#allocation8 + $0x10] sm:$0xff] %v2328
        %2337 = vst [vmem:[#allocation8 + $0x18] sm:$0xff] %v2329
        %2338 = vst [vmem:[#allocation8 + $0x20] sm:$0xff] %v2330
        %2339 = vst [vmem:[#allocation8 + $0x28] sm:$0xff] %v2331
        %2340 = vst [vmem:[#allocation8 + $0x30] sm:$0xff] %v2332
        %2341 = vst [vmem:[#allocation8 + $0x38] sm:$0xff] %v2333
        %2342 = vst [vmem:[#allocation6] sm:$0xff] 0.0
        %2343 = vst [vmem:[#allocation6 + $0x8] sm:$0xff] 0.0
        %2344 = vst [vmem:[#allocation6 + $0x10] sm:$0xff] 0.0
        %2345 = vst [vmem:[#allocation6 + $0x18] sm:$0xff] 0.0
        %2346 = vst [vmem:[#allocation6 + $0x20] sm:$0xff] 0.0
        %2347 = vst [vmem:[#allocation6 + $0x28] sm:$0xff] 0.0
        %2348 = vst [vmem:[#allocation6 + $0x30] sm:$0xff] 0.0
        %2349 = vst [vmem:[#allocation6 + $0x38] sm:$0xff] 0.0
        %2350 = vst [vmem:[#allocation6 + $0x40] sm:$0xff] 0.0
        %2351 = vst [vmem:[#allocation6 + $0x48] sm:$0xff] 0.0
        %2352 = vst [vmem:[#allocation6 + $0x50] sm:$0xff] 0.0
        %2353 = vst [vmem:[#allocation6 + $0x58] sm:$0xff] 0.0
        %2354 = vst [vmem:[#allocation6 + $0x60] sm:$0xff] 0.0
        %2355 = vst [vmem:[#allocation6 + $0x68] sm:$0xff] 0.0
        %2356 = vst [vmem:[#allocation6 + $0x70] sm:$0xff] 0.0
        %2357 = vst [vmem:[#allocation6 + $0x78] sm:$0xff] 0.0
        %v2358 = vld [vmem:[%s1107] sm:$0x1f]
        %v2359 = vld [vmem:[#allocation18] sm:$0x1f]
        // Predicated region
        $region253: #{incompr_ns_forward.1} parent=111 // pred_check
          %p2360 = pneg %p1113
        $region254: #{incompr_ns_forward.1} parent=111 // pred_check_branch
          %2362 = sbr.rel (%p2360) target = $region256
        $region255: #{incompr_ns_forward.1} parent=111 // pred_region
          %v2363 = vld [vmem:[%s1] sm:$0xf]
          %v2364 = vld [vmem:[%s1 + $0x4] sm:$0xf]
          %v2365 = vld [vmem:[%s1 + $0x8] sm:$0xf]
          %v2366 = vld [vmem:[%s1 + $0xc] sm:$0xf]
          %v2367 = vld [vmem:[%s1 + $0x10] sm:$0xf]
          %v2368 = vld [vmem:[%s1 + $0x14] sm:$0xf]
          %v2369 = vld [vmem:[%s1 + $0x18] sm:$0xf]
          %v2370 = vld [vmem:[%s1 + $0x1c] sm:$0xf]
          %v2371 = vld [vmem:[%s1 + $0x20] sm:$0xf]
          %v2372 = vld [vmem:[%s1 + $0x24] sm:$0xf]
          %v2373 = vld [vmem:[%s1 + $0x28] sm:$0xf]
          %v2374 = vld [vmem:[%s1 + $0x2c] sm:$0xf]
          %v2375 = vld [vmem:[%s1 + $0x30] sm:$0xf]
          %v2376 = vld [vmem:[%s1 + $0x34] sm:$0xf]
          %v2377 = vld [vmem:[%s1 + $0x38] sm:$0xf]
          %v2378 = vld [vmem:[%s1 + $0x3c] sm:$0xf]
          %v2379 = vld [vmem:[#allocation14] sm:$0xf]
          %v2380 = vld [vmem:[#allocation14 + $0x4] sm:$0xf]
          %v2381 = vld [vmem:[#allocation14 + $0x8] sm:$0xf]
          %v2382 = vld [vmem:[#allocation14 + $0xc] sm:$0xf]
          %v2383 = vld [vmem:[#allocation14 + $0x10] sm:$0xf]
          %v2384 = vld [vmem:[#allocation14 + $0x14] sm:$0xf]
          %v2385 = vld [vmem:[#allocation14 + $0x18] sm:$0xf]
          %v2386 = vld [vmem:[#allocation14 + $0x1c] sm:$0xf]
          %v2387 = vld [vmem:[#allocation14 + $0x20] sm:$0xf]
          %v2388 = vld [vmem:[#allocation14 + $0x24] sm:$0xf]
          %v2389 = vld [vmem:[#allocation14 + $0x28] sm:$0xf]
          %v2390 = vld [vmem:[#allocation14 + $0x2c] sm:$0xf]
          %v2391 = vld [vmem:[#allocation14 + $0x30] sm:$0xf]
          %v2392 = vld [vmem:[#allocation14 + $0x34] sm:$0xf]
          %v2393 = vld [vmem:[#allocation14 + $0x38] sm:$0xf]
          %v2394 = vld [vmem:[#allocation14 + $0x3c] sm:$0xf]
          %v2395 = vld [vmem:[#allocation15] sm:$0xf]
          %v2396 = vld [vmem:[#allocation15 + $0x4] sm:$0xf]
          %v2397 = vld [vmem:[#allocation15 + $0x8] sm:$0xf]
          %v2398 = vld [vmem:[#allocation15 + $0xc] sm:$0xf]
          %v2399 = vld [vmem:[#allocation15 + $0x10] sm:$0xf]
          %v2400 = vld [vmem:[#allocation15 + $0x14] sm:$0xf]
          %v2401 = vld [vmem:[#allocation15 + $0x18] sm:$0xf]
          %v2402 = vld [vmem:[#allocation15 + $0x1c] sm:$0xf]
          %v2403 = vld [vmem:[#allocation15 + $0x20] sm:$0xf]
          %v2404 = vld [vmem:[#allocation15 + $0x24] sm:$0xf]
          %v2405 = vld [vmem:[#allocation15 + $0x28] sm:$0xf]
          %v2406 = vld [vmem:[#allocation15 + $0x2c] sm:$0xf]
          %v2407 = vld [vmem:[#allocation15 + $0x30] sm:$0xf]
          %v2408 = vld [vmem:[#allocation15 + $0x34] sm:$0xf]
          %v2409 = vld [vmem:[#allocation15 + $0x38] sm:$0xf]
          %v2410 = vld [vmem:[#allocation15 + $0x3c] sm:$0xf]
          %v2411 = vld [vmem:[#allocation17] sm:$0xf]
          %v2412 = vld [vmem:[#allocation17 + $0x4] sm:$0xf]
          %v2413 = vld [vmem:[#allocation17 + $0x8] sm:$0xf]
          %v2414 = vld [vmem:[#allocation17 + $0xc] sm:$0xf]
          %v2415 = vld [vmem:[#allocation17 + $0x10] sm:$0xf]
          %v2416 = vld [vmem:[#allocation17 + $0x14] sm:$0xf]
          %v2417 = vld [vmem:[#allocation17 + $0x18] sm:$0xf]
          %v2418 = vld [vmem:[#allocation17 + $0x1c] sm:$0xf]
          %v2419 = vld [vmem:[#allocation17 + $0x20] sm:$0xf]
          %v2420 = vld [vmem:[#allocation17 + $0x24] sm:$0xf]
          %v2421 = vld [vmem:[#allocation17 + $0x28] sm:$0xf]
          %v2422 = vld [vmem:[#allocation17 + $0x2c] sm:$0xf]
          %v2423 = vld [vmem:[#allocation17 + $0x30] sm:$0xf]
          %v2424 = vld [vmem:[#allocation17 + $0x34] sm:$0xf]
          %v2425 = vld [vmem:[#allocation17 + $0x38] sm:$0xf]
          %v2426 = vld [vmem:[#allocation17 + $0x3c] sm:$0xf]
          %v2427 = vlaneseq
          %v2428 = vshrl.u32 %v2427, 7
          %v2429 = vsub.s32 0, %v2428
          %v2430 = vrot.slane %v2359, %v2429
          %v2447 = vunpack.c.l.b16 %v2363
          %v2448 = vunpack.c.l.b16 %v2364
          %v2449 = vunpack.c.l.b16 %v2365
          %v2450 = vunpack.c.l.b16 %v2366
          %v2451 = vunpack.c.l.b16 %v2367
          %v2452 = vunpack.c.l.b16 %v2368
          %v2453 = vunpack.c.l.b16 %v2369
          %v2454 = vunpack.c.l.b16 %v2370
          %v2455 = vunpack.c.l.b16 %v2371
          %v2456 = vunpack.c.l.b16 %v2372
          %v2457 = vunpack.c.l.b16 %v2373
          %v2458 = vunpack.c.l.b16 %v2374
          %v2459 = vunpack.c.l.b16 %v2375
          %v2460 = vunpack.c.l.b16 %v2376
          %v2461 = vunpack.c.l.b16 %v2377
          %v2462 = vunpack.c.l.b16 %v2378
          %v2463 = vpack.c.b16 %v2448, %v2447
          %v2464 = vpack.c.b16 %v2450, %v2449
          %v2465 = vpack.c.b16 %v2452, %v2451
          %v2466 = vpack.c.b16 %v2454, %v2453
          %v2467 = vpack.c.b16 %v2456, %v2455
          %v2468 = vpack.c.b16 %v2458, %v2457
          %v2469 = vpack.c.b16 %v2460, %v2459
          %v2470 = vpack.c.b16 %v2462, %v2461
          %v2495 = vunpack.c.l.b16 %v2379
          %v2496 = vunpack.c.l.b16 %v2380
          %v2497 = vunpack.c.l.b16 %v2381
          %v2498 = vunpack.c.l.b16 %v2382
          %v2499 = vunpack.c.l.b16 %v2383
          %v2500 = vunpack.c.l.b16 %v2384
          %v2501 = vunpack.c.l.b16 %v2385
          %v2502 = vunpack.c.l.b16 %v2386
          %v2503 = vunpack.c.l.b16 %v2387
          %v2504 = vunpack.c.l.b16 %v2388
          %v2505 = vunpack.c.l.b16 %v2389
          %v2506 = vunpack.c.l.b16 %v2390
          %v2507 = vunpack.c.l.b16 %v2391
          %v2508 = vunpack.c.l.b16 %v2392
          %v2509 = vunpack.c.l.b16 %v2393
          %v2510 = vunpack.c.l.b16 %v2394
          %v2511 = vpack.c.b16 %v2496, %v2495
          %v2512 = vpack.c.b16 %v2498, %v2497
          %v2513 = vpack.c.b16 %v2500, %v2499
          %v2514 = vpack.c.b16 %v2502, %v2501
          %v2515 = vpack.c.b16 %v2504, %v2503
          %v2516 = vpack.c.b16 %v2506, %v2505
          %v2517 = vpack.c.b16 %v2508, %v2507
          %v2518 = vpack.c.b16 %v2510, %v2509
          %2527 = vmatprep.subr.bf16.mxu0 0
          %2528 = vmatpush1.bf16.msra.mxu0 %v2511
          %2529 = vmatprep.subr.bf16.mxu0 0
          %2530 = vmatpush1.bf16.msra.mxu0 %v2512
          %2531 = vmatprep.subr.bf16.mxu0 0
          %2532 = vmatpush1.bf16.msra.mxu0 %v2513
          %2533 = vmatprep.subr.bf16.mxu0 0
          %2534 = vmatpush1.bf16.msra.mxu0 %v2514
          %2535 = vmatprep.subr.bf16.mxu0 0
          %2536 = vmatpush1.bf16.msra.mxu0 %v2515
          %2537 = vmatprep.subr.bf16.mxu0 0
          %2538 = vmatpush1.bf16.msra.mxu0 %v2516
          %2539 = vmatprep.subr.bf16.mxu0 0
          %2540 = vmatpush1.bf16.msra.mxu0 %v2517
          %2541 = vmatprep.subr.bf16.mxu0 0
          %2542 = vmatpush1.bf16.msra.mxu0 %v2518
          %2543 = vmatprep.subr.bf16.mxu0 0
          %2544 = vmatpush1.bf16.msra.mxu0 0
          %2545 = vmatprep.subr.bf16.mxu0 0
          %2546 = vmatpush1.bf16.msra.mxu0 0
          %2547 = vmatprep.subr.bf16.mxu0 0
          %2548 = vmatpush1.bf16.msra.mxu0 0
          %2549 = vmatprep.subr.bf16.mxu0 0
          %2550 = vmatpush1.bf16.msra.mxu0 0
          %2551 = vmatprep.subr.bf16.mxu0 0
          %2552 = vmatpush1.bf16.msra.mxu0 0
          %2553 = vmatprep.subr.bf16.mxu0 0
          %2554 = vmatpush1.bf16.msra.mxu0 0
          %2555 = vmatprep.subr.bf16.mxu0 0
          %2556 = vmatpush1.bf16.msra.mxu0 0
          %2557 = vmatprep.subr.bf16.mxu0 0
          %2558 = vmatpush1.bf16.msra.mxu0 0
          %2559 = vmatprep.mubr.bf16.mxu0 0
          %2560 = vmatmul.mubr.bf16.gmra.mrb[0].mxu0 %v2463
          %v2561 = vpop.f32.mrb[0].mxu0
          %v2562 = vadd.f32 %v2430, %v2561
          %v2563 = vpop.f32.mrb[0].mxu0
          %v2564 = vpop.f32.mrb[0].mxu0
          %v2565 = vadd.f32 %v2430, %v2564
          %v2566 = vpop.f32.mrb[0].mxu0
          %2567 = vmatprep.mubr.bf16.mxu0 0
          %2568 = vmatmul.mubr.bf16.gmra.mrb[0].mxu0 %v2464
          %v2569 = vpop.f32.mrb[0].mxu0
          %v2570 = vadd.f32 %v2430, %v2569
          %v2571 = vpop.f32.mrb[0].mxu0
          %v2572 = vpop.f32.mrb[0].mxu0
          %v2573 = vadd.f32 %v2430, %v2572
          %v2574 = vpop.f32.mrb[0].mxu0
          %2575 = vmatprep.mubr.bf16.mxu0 0
          %2576 = vmatmul.mubr.bf16.gmra.mrb[0].mxu0 %v2465
          %v2577 = vpop.f32.mrb[0].mxu0
          %v2578 = vadd.f32 %v2430, %v2577
          %v2579 = vpop.f32.mrb[0].mxu0
          %v2580 = vpop.f32.mrb[0].mxu0
          %v2581 = vadd.f32 %v2430, %v2580
          %v2582 = vpop.f32.mrb[0].mxu0
          %2583 = vmatprep.mubr.bf16.mxu0 0
          %2584 = vmatmul.mubr.bf16.gmra.mrb[0].mxu0 %v2466
          %v2585 = vpop.f32.mrb[0].mxu0
          %v2586 = vadd.f32 %v2430, %v2585
          %v2587 = vpop.f32.mrb[0].mxu0
          %v2588 = vpop.f32.mrb[0].mxu0
          %v2589 = vadd.f32 %v2430, %v2588
          %v2590 = vpop.f32.mrb[0].mxu0
          %2591 = vmatprep.mubr.bf16.mxu0 0
          %2592 = vmatmul.mubr.bf16.gmra.mrb[0].mxu0 %v2467
          %v2593 = vpop.f32.mrb[0].mxu0
          %v2594 = vadd.f32 %v2430, %v2593
          %v2595 = vpop.f32.mrb[0].mxu0
          %v2596 = vpop.f32.mrb[0].mxu0
          %v2597 = vadd.f32 %v2430, %v2596
          %v2598 = vpop.f32.mrb[0].mxu0
          %2599 = vmatprep.mubr.bf16.mxu0 0
          %2600 = vmatmul.mubr.bf16.gmra.mrb[0].mxu0 %v2468
          %v2601 = vpop.f32.mrb[0].mxu0
          %v2602 = vadd.f32 %v2430, %v2601
          %v2603 = vpop.f32.mrb[0].mxu0
          %v2604 = vpop.f32.mrb[0].mxu0
          %v2605 = vadd.f32 %v2430, %v2604
          %v2606 = vpop.f32.mrb[0].mxu0
          %2607 = vmatprep.mubr.bf16.mxu0 0
          %2608 = vmatmul.mubr.bf16.gmra.mrb[0].mxu0 %v2469
          %v2609 = vpop.f32.mrb[0].mxu0
          %v2610 = vadd.f32 %v2430, %v2609
          %v2611 = vpop.f32.mrb[0].mxu0
          %v2612 = vpop.f32.mrb[0].mxu0
          %v2613 = vadd.f32 %v2430, %v2612
          %v2614 = vpop.f32.mrb[0].mxu0
          %2615 = vmatprep.mubr.bf16.mxu0 0
          %2616 = vmatmul.mubr.bf16.gmra.mrb[0].mxu0 %v2470
          %v2617 = vpop.f32.mrb[0].mxu0
          %v2618 = vadd.f32 %v2430, %v2617
          %v2619 = vpop.f32.mrb[0].mxu0
          %v2620 = vpop.f32.mrb[0].mxu0
          %v2621 = vadd.f32 %v2430, %v2620
          %v2622 = vpop.f32.mrb[0].mxu0
          %2623 = vdwg.mxu0
          %v2624 = vmax.f32 %v2562, 0.0
          %v2625 = vmax.f32 %v2565, 0.0
          %v2626 = vmax.f32 %v2570, 0.0
          %v2627 = vmax.f32 %v2573, 0.0
          %v2628 = vmax.f32 %v2578, 0.0
          %v2629 = vmax.f32 %v2581, 0.0
          %v2630 = vmax.f32 %v2586, 0.0
          %v2631 = vmax.f32 %v2589, 0.0
          %v2632 = vmax.f32 %v2594, 0.0
          %v2633 = vmax.f32 %v2597, 0.0
          %v2634 = vmax.f32 %v2602, 0.0
          %v2635 = vmax.f32 %v2605, 0.0
          %v2636 = vmax.f32 %v2610, 0.0
          %v2637 = vmax.f32 %v2613, 0.0
          %v2638 = vmax.f32 %v2618, 0.0
          %v2639 = vmax.f32 %v2621, 0.0
          %v2640 = vpack.c.bf16 %v2625, %v2624
          %v2641 = vpack.c.bf16 %v2627, %v2626
          %v2642 = vpack.c.bf16 %v2629, %v2628
          %v2643 = vpack.c.bf16 %v2631, %v2630
          %v2644 = vpack.c.bf16 %v2633, %v2632
          %v2645 = vpack.c.bf16 %v2635, %v2634
          %v2646 = vpack.c.bf16 %v2637, %v2636
          %v2647 = vpack.c.bf16 %v2639, %v2638
          %v2648 = vlaneseq
          %v2649 = vshrl.u32 %v2648, 7
          %v2650 = vsub.s32 1, %v2649
          %v2651 = vrot.slane %v2359, %v2650
          %v2668 = vunpack.c.l.b16 %v2395
          %v2669 = vunpack.c.l.b16 %v2396
          %v2670 = vunpack.c.l.b16 %v2397
          %v2671 = vunpack.c.l.b16 %v2398
          %v2672 = vunpack.c.l.b16 %v2399
          %v2673 = vunpack.c.l.b16 %v2400
          %v2674 = vunpack.c.l.b16 %v2401
          %v2675 = vunpack.c.l.b16 %v2402
          %v2676 = vunpack.c.l.b16 %v2403
          %v2677 = vunpack.c.l.b16 %v2404
          %v2678 = vunpack.c.l.b16 %v2405
          %v2679 = vunpack.c.l.b16 %v2406
          %v2680 = vunpack.c.l.b16 %v2407
          %v2681 = vunpack.c.l.b16 %v2408
          %v2682 = vunpack.c.l.b16 %v2409
          %v2683 = vunpack.c.l.b16 %v2410
          %v2684 = vpack.c.b16 %v2669, %v2668
          %v2685 = vpack.c.b16 %v2671, %v2670
          %v2686 = vpack.c.b16 %v2673, %v2672
          %v2687 = vpack.c.b16 %v2675, %v2674
          %v2688 = vpack.c.b16 %v2677, %v2676
          %v2689 = vpack.c.b16 %v2679, %v2678
          %v2690 = vpack.c.b16 %v2681, %v2680
          %v2691 = vpack.c.b16 %v2683, %v2682
          %2700 = vmatprep.subr.bf16.mxu0 0
          %2701 = vmatpush1.bf16.msra.mxu0 %v2684
          %2702 = vmatprep.subr.bf16.mxu0 0
          %2703 = vmatpush1.bf16.msra.mxu0 %v2685
          %2704 = vmatprep.subr.bf16.mxu0 0
          %2705 = vmatpush1.bf16.msra.mxu0 %v2686
          %2706 = vmatprep.subr.bf16.mxu0 0
          %2707 = vmatpush1.bf16.msra.mxu0 %v2687
          %2708 = vmatprep.subr.bf16.mxu0 0
          %2709 = vmatpush1.bf16.msra.mxu0 %v2688
          %2710 = vmatprep.subr.bf16.mxu0 0
          %2711 = vmatpush1.bf16.msra.mxu0 %v2689
          %2712 = vmatprep.subr.bf16.mxu0 0
          %2713 = vmatpush1.bf16.msra.mxu0 %v2690
          %2714 = vmatprep.subr.bf16.mxu0 0
          %2715 = vmatpush1.bf16.msra.mxu0 %v2691
          %2716 = vmatprep.subr.bf16.mxu0 0
          %2717 = vmatpush1.bf16.msra.mxu0 0
          %2718 = vmatprep.subr.bf16.mxu0 0
          %2719 = vmatpush1.bf16.msra.mxu0 0
          %2720 = vmatprep.subr.bf16.mxu0 0
          %2721 = vmatpush1.bf16.msra.mxu0 0
          %2722 = vmatprep.subr.bf16.mxu0 0
          %2723 = vmatpush1.bf16.msra.mxu0 0
          %2724 = vmatprep.subr.bf16.mxu0 0
          %2725 = vmatpush1.bf16.msra.mxu0 0
          %2726 = vmatprep.subr.bf16.mxu0 0
          %2727 = vmatpush1.bf16.msra.mxu0 0
          %2728 = vmatprep.subr.bf16.mxu0 0
          %2729 = vmatpush1.bf16.msra.mxu0 0
          %2730 = vmatprep.subr.bf16.mxu0 0
          %2731 = vmatpush1.bf16.msra.mxu0 0
          %2732 = vmatprep.mubr.bf16.mxu0 0
          %2733 = vmatmul.mubr.bf16.gmra.mrb[0].mxu0 %v2640
          %v2734 = vpop.f32.mrb[0].mxu0
          %v2735 = vadd.f32 %v2651, %v2734
          %v2736 = vpop.f32.mrb[0].mxu0
          %v2737 = vpop.f32.mrb[0].mxu0
          %v2738 = vadd.f32 %v2651, %v2737
          %v2739 = vpop.f32.mrb[0].mxu0
          %2740 = vmatprep.mubr.bf16.mxu0 0
          %2741 = vmatmul.mubr.bf16.gmra.mrb[0].mxu0 %v2641
          %v2742 = vpop.f32.mrb[0].mxu0
          %v2743 = vadd.f32 %v2651, %v2742
          %v2744 = vpop.f32.mrb[0].mxu0
          %v2745 = vpop.f32.mrb[0].mxu0
          %v2746 = vadd.f32 %v2651, %v2745
          %v2747 = vpop.f32.mrb[0].mxu0
          %2748 = vmatprep.mubr.bf16.mxu0 0
          %2749 = vmatmul.mubr.bf16.gmra.mrb[0].mxu0 %v2642
          %v2750 = vpop.f32.mrb[0].mxu0
          %v2751 = vadd.f32 %v2651, %v2750
          %v2752 = vpop.f32.mrb[0].mxu0
          %v2753 = vpop.f32.mrb[0].mxu0
          %v2754 = vadd.f32 %v2651, %v2753
          %v2755 = vpop.f32.mrb[0].mxu0
          %2756 = vmatprep.mubr.bf16.mxu0 0
          %2757 = vmatmul.mubr.bf16.gmra.mrb[0].mxu0 %v2643
          %v2758 = vpop.f32.mrb[0].mxu0
          %v2759 = vadd.f32 %v2651, %v2758
          %v2760 = vpop.f32.mrb[0].mxu0
          %v2761 = vpop.f32.mrb[0].mxu0
          %v2762 = vadd.f32 %v2651, %v2761
          %v2763 = vpop.f32.mrb[0].mxu0
          %2764 = vmatprep.mubr.bf16.mxu0 0
          %2765 = vmatmul.mubr.bf16.gmra.mrb[0].mxu0 %v2644
          %v2766 = vpop.f32.mrb[0].mxu0
          %v2767 = vadd.f32 %v2651, %v2766
          %v2768 = vpop.f32.mrb[0].mxu0
          %v2769 = vpop.f32.mrb[0].mxu0
          %v2770 = vadd.f32 %v2651, %v2769
          %v2771 = vpop.f32.mrb[0].mxu0
          %2772 = vmatprep.mubr.bf16.mxu0 0
          %2773 = vmatmul.mubr.bf16.gmra.mrb[0].mxu0 %v2645
          %v2774 = vpop.f32.mrb[0].mxu0
          %v2775 = vadd.f32 %v2651, %v2774
          %v2776 = vpop.f32.mrb[0].mxu0
          %v2777 = vpop.f32.mrb[0].mxu0
          %v2778 = vadd.f32 %v2651, %v2777
          %v2779 = vpop.f32.mrb[0].mxu0
          %2780 = vmatprep.mubr.bf16.mxu0 0
          %2781 = vmatmul.mubr.bf16.gmra.mrb[0].mxu0 %v2646
          %v2782 = vpop.f32.mrb[0].mxu0
          %v2783 = vadd.f32 %v2651, %v2782
          %v2784 = vpop.f32.mrb[0].mxu0
          %v2785 = vpop.f32.mrb[0].mxu0
          %v2786 = vadd.f32 %v2651, %v2785
          %v2787 = vpop.f32.mrb[0].mxu0
          %2788 = vmatprep.mubr.bf16.mxu0 0
          %2789 = vmatmul.mubr.bf16.gmra.mrb[0].mxu0 %v2647
          %v2790 = vpop.f32.mrb[0].mxu0
          %v2791 = vadd.f32 %v2651, %v2790
          %v2792 = vpop.f32.mrb[0].mxu0
          %v2793 = vpop.f32.mrb[0].mxu0
          %v2794 = vadd.f32 %v2651, %v2793
          %v2795 = vpop.f32.mrb[0].mxu0
          %2796 = vdwg.mxu0
          %v2797 = vmax.f32 %v2735, 0.0
          %v2798 = vmax.f32 %v2738, 0.0
          %v2799 = vmax.f32 %v2743, 0.0
          %v2800 = vmax.f32 %v2746, 0.0
          %v2801 = vmax.f32 %v2751, 0.0
          %v2802 = vmax.f32 %v2754, 0.0
          %v2803 = vmax.f32 %v2759, 0.0
          %v2804 = vmax.f32 %v2762, 0.0
          %v2805 = vmax.f32 %v2767, 0.0
          %v2806 = vmax.f32 %v2770, 0.0
          %v2807 = vmax.f32 %v2775, 0.0
          %v2808 = vmax.f32 %v2778, 0.0
          %v2809 = vmax.f32 %v2783, 0.0
          %v2810 = vmax.f32 %v2786, 0.0
          %v2811 = vmax.f32 %v2791, 0.0
          %v2812 = vmax.f32 %v2794, 0.0
          %v2813 = vpack.c.bf16 %v2798, %v2797
          %v2814 = vpack.c.bf16 %v2800, %v2799
          %v2815 = vpack.c.bf16 %v2802, %v2801
          %v2816 = vpack.c.bf16 %v2804, %v2803
          %v2817 = vpack.c.bf16 %v2806, %v2805
          %v2818 = vpack.c.bf16 %v2808, %v2807
          %v2819 = vpack.c.bf16 %v2810, %v2809
          %v2820 = vpack.c.bf16 %v2812, %v2811
          %v2821 = vlaneseq
          %v2822 = vshrl.u32 %v2821, 7
          %v2823 = vsub.s32 2, %v2822
          %v2824 = vrot.slane %v2359, %v2823
          %v2841 = vunpack.c.l.b16 %v2411
          %v2842 = vunpack.c.l.b16 %v2412
          %v2843 = vunpack.c.l.b16 %v2413
          %v2844 = vunpack.c.l.b16 %v2414
          %v2845 = vunpack.c.l.b16 %v2415
          %v2846 = vunpack.c.l.b16 %v2416
          %v2847 = vunpack.c.l.b16 %v2417
          %v2848 = vunpack.c.l.b16 %v2418
          %v2849 = vunpack.c.l.b16 %v2419
          %v2850 = vunpack.c.l.b16 %v2420
          %v2851 = vunpack.c.l.b16 %v2421
          %v2852 = vunpack.c.l.b16 %v2422
          %v2853 = vunpack.c.l.b16 %v2423
          %v2854 = vunpack.c.l.b16 %v2424
          %v2855 = vunpack.c.l.b16 %v2425
          %v2856 = vunpack.c.l.b16 %v2426
          %v2857 = vpack.c.b16 %v2842, %v2841
          %v2858 = vpack.c.b16 %v2844, %v2843
          %v2859 = vpack.c.b16 %v2846, %v2845
          %v2860 = vpack.c.b16 %v2848, %v2847
          %v2861 = vpack.c.b16 %v2850, %v2849
          %v2862 = vpack.c.b16 %v2852, %v2851
          %v2863 = vpack.c.b16 %v2854, %v2853
          %v2864 = vpack.c.b16 %v2856, %v2855
          %2873 = vmatprep.subr.bf16.mxu0 0
          %2874 = vmatpush1.bf16.msra.mxu0 %v2857
          %2875 = vmatprep.subr.bf16.mxu0 0
          %2876 = vmatpush1.bf16.msra.mxu0 %v2858
          %2877 = vmatprep.subr.bf16.mxu0 0
          %2878 = vmatpush1.bf16.msra.mxu0 %v2859
          %2879 = vmatprep.subr.bf16.mxu0 0
          %2880 = vmatpush1.bf16.msra.mxu0 %v2860
          %2881 = vmatprep.subr.bf16.mxu0 0
          %2882 = vmatpush1.bf16.msra.mxu0 %v2861
          %2883 = vmatprep.subr.bf16.mxu0 0
          %2884 = vmatpush1.bf16.msra.mxu0 %v2862
          %2885 = vmatprep.subr.bf16.mxu0 0
          %2886 = vmatpush1.bf16.msra.mxu0 %v2863
          %2887 = vmatprep.subr.bf16.mxu0 0
          %2888 = vmatpush1.bf16.msra.mxu0 %v2864
          %2889 = vmatprep.subr.bf16.mxu0 0
          %2890 = vmatpush1.bf16.msra.mxu0 0
          %2891 = vmatprep.subr.bf16.mxu0 0
          %2892 = vmatpush1.bf16.msra.mxu0 0
          %2893 = vmatprep.subr.bf16.mxu0 0
          %2894 = vmatpush1.bf16.msra.mxu0 0
          %2895 = vmatprep.subr.bf16.mxu0 0
          %2896 = vmatpush1.bf16.msra.mxu0 0
          %2897 = vmatprep.subr.bf16.mxu0 0
          %2898 = vmatpush1.bf16.msra.mxu0 0
          %2899 = vmatprep.subr.bf16.mxu0 0
          %2900 = vmatpush1.bf16.msra.mxu0 0
          %2901 = vmatprep.subr.bf16.mxu0 0
          %2902 = vmatpush1.bf16.msra.mxu0 0
          %2903 = vmatprep.subr.bf16.mxu0 0
          %2904 = vmatpush1.bf16.msra.mxu0 0
          %2905 = vmatprep.mubr.bf16.mxu0 0
          %2906 = vmatmul.mubr.bf16.gmra.mrb[0].mxu0 %v2813
          %v2907 = vpop.f32.mrb[0].mxu0
          %v2908 = vadd.f32 %v2824, %v2907
          %v2909 = vpop.f32.mrb[0].mxu0
          %v2910 = vpop.f32.mrb[0].mxu0
          %v2911 = vadd.f32 %v2824, %v2910
          %v2912 = vpop.f32.mrb[0].mxu0
          %2913 = vmatprep.mubr.bf16.mxu0 0
          %2914 = vmatmul.mubr.bf16.gmra.mrb[0].mxu0 %v2814
          %v2915 = vpop.f32.mrb[0].mxu0
          %v2916 = vadd.f32 %v2824, %v2915
          %v2917 = vpop.f32.mrb[0].mxu0
          %v2918 = vpop.f32.mrb[0].mxu0
          %v2919 = vadd.f32 %v2824, %v2918
          %v2920 = vpop.f32.mrb[0].mxu0
          %2921 = vmatprep.mubr.bf16.mxu0 0
          %2922 = vmatmul.mubr.bf16.gmra.mrb[0].mxu0 %v2815
          %v2923 = vpop.f32.mrb[0].mxu0
          %v2924 = vadd.f32 %v2824, %v2923
          %v2925 = vpop.f32.mrb[0].mxu0
          %v2926 = vpop.f32.mrb[0].mxu0
          %v2927 = vadd.f32 %v2824, %v2926
          %v2928 = vpop.f32.mrb[0].mxu0
          %2929 = vmatprep.mubr.bf16.mxu0 0
          %2930 = vmatmul.mubr.bf16.gmra.mrb[0].mxu0 %v2816
          %v2931 = vpop.f32.mrb[0].mxu0
          %v2932 = vadd.f32 %v2824, %v2931
          %v2933 = vpop.f32.mrb[0].mxu0
          %v2934 = vpop.f32.mrb[0].mxu0
          %v2935 = vadd.f32 %v2824, %v2934
          %v2936 = vpop.f32.mrb[0].mxu0
          %2937 = vmatprep.mubr.bf16.mxu0 0
          %2938 = vmatmul.mubr.bf16.gmra.mrb[0].mxu0 %v2817
          %v2939 = vpop.f32.mrb[0].mxu0
          %v2940 = vadd.f32 %v2824, %v2939
          %v2941 = vpop.f32.mrb[0].mxu0
          %v2942 = vpop.f32.mrb[0].mxu0
          %v2943 = vadd.f32 %v2824, %v2942
          %v2944 = vpop.f32.mrb[0].mxu0
          %2945 = vmatprep.mubr.bf16.mxu0 0
          %2946 = vmatmul.mubr.bf16.gmra.mrb[0].mxu0 %v2818
          %v2947 = vpop.f32.mrb[0].mxu0
          %v2948 = vadd.f32 %v2824, %v2947
          %v2949 = vpop.f32.mrb[0].mxu0
          %v2950 = vpop.f32.mrb[0].mxu0
          %v2951 = vadd.f32 %v2824, %v2950
          %v2952 = vpop.f32.mrb[0].mxu0
          %2953 = vmatprep.mubr.bf16.mxu0 0
          %2954 = vmatmul.mubr.bf16.gmra.mrb[0].mxu0 %v2819
          %v2955 = vpop.f32.mrb[0].mxu0
          %v2956 = vadd.f32 %v2824, %v2955
          %v2957 = vpop.f32.mrb[0].mxu0
          %v2958 = vpop.f32.mrb[0].mxu0
          %v2959 = vadd.f32 %v2824, %v2958
          %v2960 = vpop.f32.mrb[0].mxu0
          %2961 = vmatprep.mubr.bf16.mxu0 0
          %2962 = vmatmul.mubr.bf16.gmra.mrb[0].mxu0 %v2820
          %v2963 = vpop.f32.mrb[0].mxu0
          %v2964 = vadd.f32 %v2824, %v2963
          %v2965 = vpop.f32.mrb[0].mxu0
          %v2966 = vpop.f32.mrb[0].mxu0
          %v2967 = vadd.f32 %v2824, %v2966
          %v2968 = vpop.f32.mrb[0].mxu0
          %2969 = vdwg.mxu0
          %2970 = vadd.xlane.f32.xlu0 %v2908
          %v2971 = vpop.xlane.xlu0 %2970
          %2972 = vadd.xlane.f32.xlu0 %v2911
          %v2973 = vpop.xlane.xlu0 %2972
          %2974 = vadd.xlane.f32.xlu0 %v2916
          %v2975 = vpop.xlane.xlu0 %2974
          %2976 = vadd.xlane.f32.xlu0 %v2919
          %v2977 = vpop.xlane.xlu0 %2976
          %2978 = vadd.xlane.f32.xlu0 %v2924
          %v2979 = vpop.xlane.xlu0 %2978
          %2980 = vadd.xlane.f32.xlu0 %v2927
          %v2981 = vpop.xlane.xlu0 %2980
          %2982 = vadd.xlane.f32.xlu0 %v2932
          %v2983 = vpop.xlane.xlu0 %2982
          %2984 = vadd.xlane.f32.xlu0 %v2935
          %v2985 = vpop.xlane.xlu0 %2984
          %2986 = vadd.xlane.f32.xlu0 %v2940
          %v2987 = vpop.xlane.xlu0 %2986
          %2988 = vadd.xlane.f32.xlu0 %v2943
          %v2989 = vpop.xlane.xlu0 %2988
          %2990 = vadd.xlane.f32.xlu0 %v2948
          %v2991 = vpop.xlane.xlu0 %2990
          %2992 = vadd.xlane.f32.xlu0 %v2951
          %v2993 = vpop.xlane.xlu0 %2992
          %2994 = vadd.xlane.f32.xlu0 %v2956
          %v2995 = vpop.xlane.xlu0 %2994
          %2996 = vadd.xlane.f32.xlu0 %v2959
          %v2997 = vpop.xlane.xlu0 %2996
          %2998 = vadd.xlane.f32.xlu0 %v2964
          %v2999 = vpop.xlane.xlu0 %2998
          %3000 = vadd.xlane.f32.xlu0 %v2967
          %v3001 = vpop.xlane.xlu0 %3000
          %v3002 = vrcp.pop 128.0
          %v3003 = vmul.f32 %v2971, %v3002
          %v3004 = vmul.f32 %v2973, %v3002
          %v3005 = vmul.f32 %v2975, %v3002
          %v3006 = vmul.f32 %v2977, %v3002
          %v3007 = vmul.f32 %v2979, %v3002
          %v3008 = vmul.f32 %v2981, %v3002
          %v3009 = vmul.f32 %v2983, %v3002
          %v3010 = vmul.f32 %v2985, %v3002
          %v3011 = vmul.f32 %v2987, %v3002
          %v3012 = vmul.f32 %v2989, %v3002
          %v3013 = vmul.f32 %v2991, %v3002
          %v3014 = vmul.f32 %v2993, %v3002
          %v3015 = vmul.f32 %v2995, %v3002
          %v3016 = vmul.f32 %v2997, %v3002
          %v3017 = vmul.f32 %v2999, %v3002
          %v3018 = vmul.f32 %v3001, %v3002
          %v3019 = vsub.f32 %v2908, %v3003
          %v3020 = vsub.f32 %v2911, %v3004
          %v3021 = vsub.f32 %v2916, %v3005
          %v3022 = vsub.f32 %v2919, %v3006
          %v3023 = vsub.f32 %v2924, %v3007
          %v3024 = vsub.f32 %v2927, %v3008
          %v3025 = vsub.f32 %v2932, %v3009
          %v3026 = vsub.f32 %v2935, %v3010
          %v3027 = vsub.f32 %v2940, %v3011
          %v3028 = vsub.f32 %v2943, %v3012
          %v3029 = vsub.f32 %v2948, %v3013
          %v3030 = vsub.f32 %v2951, %v3014
          %v3031 = vsub.f32 %v2956, %v3015
          %v3032 = vsub.f32 %v2959, %v3016
          %v3033 = vsub.f32 %v2964, %v3017
          %v3034 = vsub.f32 %v2967, %v3018
          %v3035 = vmul.f32 %v3019, %v3019
          %v3036 = vmul.f32 %v3020, %v3020
          %v3037 = vmul.f32 %v3021, %v3021
          %v3038 = vmul.f32 %v3022, %v3022
          %v3039 = vmul.f32 %v3023, %v3023
          %v3040 = vmul.f32 %v3024, %v3024
          %v3041 = vmul.f32 %v3025, %v3025
          %v3042 = vmul.f32 %v3026, %v3026
          %v3043 = vmul.f32 %v3027, %v3027
          %v3044 = vmul.f32 %v3028, %v3028
          %v3045 = vmul.f32 %v3029, %v3029
          %v3046 = vmul.f32 %v3030, %v3030
          %v3047 = vmul.f32 %v3031, %v3031
          %v3048 = vmul.f32 %v3032, %v3032
          %v3049 = vmul.f32 %v3033, %v3033
          %v3050 = vmul.f32 %v3034, %v3034
          %3051 = vadd.xlane.f32.xlu0 %v3035
          %v3052 = vpop.xlane.xlu0 %3051
          %3053 = vadd.xlane.f32.xlu0 %v3036
          %v3054 = vpop.xlane.xlu0 %3053
          %3055 = vadd.xlane.f32.xlu0 %v3037
          %v3056 = vpop.xlane.xlu0 %3055
          %3057 = vadd.xlane.f32.xlu0 %v3038
          %v3058 = vpop.xlane.xlu0 %3057
          %3059 = vadd.xlane.f32.xlu0 %v3039
          %v3060 = vpop.xlane.xlu0 %3059
          %3061 = vadd.xlane.f32.xlu0 %v3040
          %v3062 = vpop.xlane.xlu0 %3061
          %3063 = vadd.xlane.f32.xlu0 %v3041
          %v3064 = vpop.xlane.xlu0 %3063
          %3065 = vadd.xlane.f32.xlu0 %v3042
          %v3066 = vpop.xlane.xlu0 %3065
          %3067 = vadd.xlane.f32.xlu0 %v3043
          %v3068 = vpop.xlane.xlu0 %3067
          %3069 = vadd.xlane.f32.xlu0 %v3044
          %v3070 = vpop.xlane.xlu0 %3069
          %3071 = vadd.xlane.f32.xlu0 %v3045
          %v3072 = vpop.xlane.xlu0 %3071
          %3073 = vadd.xlane.f32.xlu0 %v3046
          %v3074 = vpop.xlane.xlu0 %3073
          %3075 = vadd.xlane.f32.xlu0 %v3047
          %v3076 = vpop.xlane.xlu0 %3075
          %3077 = vadd.xlane.f32.xlu0 %v3048
          %v3078 = vpop.xlane.xlu0 %3077
          %3079 = vadd.xlane.f32.xlu0 %v3049
          %v3080 = vpop.xlane.xlu0 %3079
          %3081 = vadd.xlane.f32.xlu0 %v3050
          %v3082 = vpop.xlane.xlu0 %3081
          %v3083 = vmul.f32 %v3052, %v3002
          %v3084 = vmul.f32 %v3054, %v3002
          %v3085 = vmul.f32 %v3056, %v3002
          %v3086 = vmul.f32 %v3058, %v3002
          %v3087 = vmul.f32 %v3060, %v3002
          %v3088 = vmul.f32 %v3062, %v3002
          %v3089 = vmul.f32 %v3064, %v3002
          %v3090 = vmul.f32 %v3066, %v3002
          %v3091 = vmul.f32 %v3068, %v3002
          %v3092 = vmul.f32 %v3070, %v3002
          %v3093 = vmul.f32 %v3072, %v3002
          %v3094 = vmul.f32 %v3074, %v3002
          %v3095 = vmul.f32 %v3076, %v3002
          %v3096 = vmul.f32 %v3078, %v3002
          %v3097 = vmul.f32 %v3080, %v3002
          %v3098 = vmul.f32 %v3082, %v3002
          %v3099 = vadd.f32 %v3083, 1e-05
          %v3100 = vadd.f32 %v3084, 1e-05
          %v3101 = vadd.f32 %v3085, 1e-05
          %v3102 = vadd.f32 %v3086, 1e-05
          %v3103 = vadd.f32 %v3087, 1e-05
          %v3104 = vadd.f32 %v3088, 1e-05
          %v3105 = vadd.f32 %v3089, 1e-05
          %v3106 = vadd.f32 %v3090, 1e-05
          %v3107 = vadd.f32 %v3091, 1e-05
          %v3108 = vadd.f32 %v3092, 1e-05
          %v3109 = vadd.f32 %v3093, 1e-05
          %v3110 = vadd.f32 %v3094, 1e-05
          %v3111 = vadd.f32 %v3095, 1e-05
          %v3112 = vadd.f32 %v3096, 1e-05
          %v3113 = vadd.f32 %v3097, 1e-05
          %v3114 = vadd.f32 %v3098, 1e-05
          %v3115 = vrsqrt.pop %v3099
          %v3116 = vrsqrt.pop %v3100
          %v3117 = vrsqrt.pop %v3101
          %v3118 = vrsqrt.pop %v3102
          %v3119 = vrsqrt.pop %v3103
          %v3120 = vrsqrt.pop %v3104
          %v3121 = vrsqrt.pop %v3105
          %v3122 = vrsqrt.pop %v3106
          %v3123 = vrsqrt.pop %v3107
          %v3124 = vrsqrt.pop %v3108
          %v3125 = vrsqrt.pop %v3109
          %v3126 = vrsqrt.pop %v3110
          %v3127 = vrsqrt.pop %v3111
          %v3128 = vrsqrt.pop %v3112
          %v3129 = vrsqrt.pop %v3113
          %v3130 = vrsqrt.pop %v3114
          %v3131 = vmul.f32 %v3019, %v3115
          %v3132 = vmul.f32 %v3020, %v3116
          %v3133 = vmul.f32 %v3021, %v3117
          %v3134 = vmul.f32 %v3022, %v3118
          %v3135 = vmul.f32 %v3023, %v3119
          %v3136 = vmul.f32 %v3024, %v3120
          %v3137 = vmul.f32 %v3025, %v3121
          %v3138 = vmul.f32 %v3026, %v3122
          %v3139 = vmul.f32 %v3027, %v3123
          %v3140 = vmul.f32 %v3028, %v3124
          %v3141 = vmul.f32 %v3029, %v3125
          %v3142 = vmul.f32 %v3030, %v3126
          %v3143 = vmul.f32 %v3031, %v3127
          %v3144 = vmul.f32 %v3032, %v3128
          %v3145 = vmul.f32 %v3033, %v3129
          %v3146 = vmul.f32 %v3034, %v3130
          %v3147 = vlaneseq
          %v3148 = vshrl.u32 %v3147, 7
          %v3149 = vsub.s32 3, %v3148
          %v3150 = vrot.slane %v2359, %v3149
          %v3151 = vmul.f32 %v3131, %v3150
          %v3152 = vmul.f32 %v3132, %v3150
          %v3153 = vmul.f32 %v3133, %v3150
          %v3154 = vmul.f32 %v3134, %v3150
          %v3155 = vmul.f32 %v3135, %v3150
          %v3156 = vmul.f32 %v3136, %v3150
          %v3157 = vmul.f32 %v3137, %v3150
          %v3158 = vmul.f32 %v3138, %v3150
          %v3159 = vmul.f32 %v3139, %v3150
          %v3160 = vmul.f32 %v3140, %v3150
          %v3161 = vmul.f32 %v3141, %v3150
          %v3162 = vmul.f32 %v3142, %v3150
          %v3163 = vmul.f32 %v3143, %v3150
          %v3164 = vmul.f32 %v3144, %v3150
          %v3165 = vmul.f32 %v3145, %v3150
          %v3166 = vmul.f32 %v3146, %v3150
          %v3167 = vlaneseq
          %v3168 = vshrl.u32 %v3167, 7
          %v3169 = vsub.s32 4, %v3168
          %v3170 = vrot.slane %v2359, %v3169
          %v3171 = vadd.f32 %v3151, %v3170
          %v3172 = vadd.f32 %v3152, %v3170
          %v3173 = vadd.f32 %v3153, %v3170
          %v3174 = vadd.f32 %v3154, %v3170
          %v3175 = vadd.f32 %v3155, %v3170
          %v3176 = vadd.f32 %v3156, %v3170
          %v3177 = vadd.f32 %v3157, %v3170
          %v3178 = vadd.f32 %v3158, %v3170
          %v3179 = vadd.f32 %v3159, %v3170
          %v3180 = vadd.f32 %v3160, %v3170
          %v3181 = vadd.f32 %v3161, %v3170
          %v3182 = vadd.f32 %v3162, %v3170
          %v3183 = vadd.f32 %v3163, %v3170
          %v3184 = vadd.f32 %v3164, %v3170
          %v3185 = vadd.f32 %v3165, %v3170
          %v3186 = vadd.f32 %v3166, %v3170
          %3187 = vst [vmem:[#allocation5] sm:$0xff] %v3171
          %3188 = vst [vmem:[#allocation5 + $0x8] sm:$0xff] %v3172
          %3189 = vst [vmem:[#allocation5 + $0x10] sm:$0xff] %v3173
          %3190 = vst [vmem:[#allocation5 + $0x18] sm:$0xff] %v3174
          %3191 = vst [vmem:[#allocation5 + $0x20] sm:$0xff] %v3175
          %3192 = vst [vmem:[#allocation5 + $0x28] sm:$0xff] %v3176
          %3193 = vst [vmem:[#allocation5 + $0x30] sm:$0xff] %v3177
          %3194 = vst [vmem:[#allocation5 + $0x38] sm:$0xff] %v3178
          %3195 = vst [vmem:[#allocation5 + $0x40] sm:$0xff] %v3179
          %3196 = vst [vmem:[#allocation5 + $0x48] sm:$0xff] %v3180
          %3197 = vst [vmem:[#allocation5 + $0x50] sm:$0xff] %v3181
          %3198 = vst [vmem:[#allocation5 + $0x58] sm:$0xff] %v3182
          %3199 = vst [vmem:[#allocation5 + $0x60] sm:$0xff] %v3183
          %3200 = vst [vmem:[#allocation5 + $0x68] sm:$0xff] %v3184
          %3201 = vst [vmem:[#allocation5 + $0x70] sm:$0xff] %v3185
          %3202 = vst [vmem:[#allocation5 + $0x78] sm:$0xff] %v3186
        $region256: #{incompr_ns_forward.1} parent=111 // pred_fallthru
          _
        %v3203 = vld [vmem:[#allocation5] sm:$0xff]
        %v3204 = vld [vmem:[#allocation5 + $0x8] sm:$0xff]
        %v3205 = vld [vmem:[#allocation5 + $0x10] sm:$0xff]
        %v3206 = vld [vmem:[#allocation5 + $0x18] sm:$0xff]
        %v3207 = vld [vmem:[#allocation5 + $0x20] sm:$0xff]
        %v3208 = vld [vmem:[#allocation5 + $0x28] sm:$0xff]
        %v3209 = vld [vmem:[#allocation5 + $0x30] sm:$0xff]
        %v3210 = vld [vmem:[#allocation5 + $0x38] sm:$0xff]
        %v3211 = vld [vmem:[#allocation5 + $0x40] sm:$0xff]
        %v3212 = vld [vmem:[#allocation5 + $0x48] sm:$0xff]
        %v3213 = vld [vmem:[#allocation5 + $0x50] sm:$0xff]
        %v3214 = vld [vmem:[#allocation5 + $0x58] sm:$0xff]
        %v3215 = vld [vmem:[#allocation5 + $0x60] sm:$0xff]
        %v3216 = vld [vmem:[#allocation5 + $0x68] sm:$0xff]
        %v3217 = vld [vmem:[#allocation5 + $0x70] sm:$0xff]
        %v3218 = vld [vmem:[#allocation5 + $0x78] sm:$0xff]
        %v3219 = vld [vmem:[#allocation2] sm:$0xff]
        %v3220 = vld [vmem:[#allocation2 + $0x8] sm:$0xff]
        %v3221 = vld [vmem:[#allocation2 + $0x10] sm:$0xff]
        %v3222 = vld [vmem:[#allocation2 + $0x18] sm:$0xff]
        %v3223 = vld [vmem:[#allocation2 + $0x20] sm:$0xff]
        %v3224 = vld [vmem:[#allocation2 + $0x28] sm:$0xff]
        %v3225 = vld [vmem:[#allocation2 + $0x30] sm:$0xff]
        %v3226 = vld [vmem:[#allocation2 + $0x38] sm:$0xff]
        %v3227 = vld [vmem:[#allocation3] sm:$0xff]
        %v3228 = vld [vmem:[#allocation3 + $0x8] sm:$0xff]
        %v3229 = vld [vmem:[#allocation3 + $0x10] sm:$0xff]
        %v3230 = vld [vmem:[#allocation3 + $0x18] sm:$0xff]
        %v3231 = vld [vmem:[#allocation3 + $0x20] sm:$0xff]
        %v3232 = vld [vmem:[#allocation3 + $0x28] sm:$0xff]
        %v3233 = vld [vmem:[#allocation3 + $0x30] sm:$0xff]
        %v3234 = vld [vmem:[#allocation3 + $0x38] sm:$0xff]
        %v3235 = vld [vmem:[#allocation7] sm:$0xff]
        %v3236 = vld [vmem:[#allocation7 + $0x8] sm:$0xff]
        %v3237 = vld [vmem:[#allocation7 + $0x10] sm:$0xff]
        %v3238 = vld [vmem:[#allocation7 + $0x18] sm:$0xff]
        %v3239 = vld [vmem:[#allocation7 + $0x20] sm:$0xff]
        %v3240 = vld [vmem:[#allocation7 + $0x28] sm:$0xff]
        %v3241 = vld [vmem:[#allocation7 + $0x30] sm:$0xff]
        %v3242 = vld [vmem:[#allocation7 + $0x38] sm:$0xff]
        %v3243 = vld [vmem:[#allocation8] sm:$0xff]
        %v3244 = vld [vmem:[#allocation8 + $0x8] sm:$0xff]
        %v3245 = vld [vmem:[#allocation8 + $0x10] sm:$0xff]
        %v3246 = vld [vmem:[#allocation8 + $0x18] sm:$0xff]
        %v3247 = vld [vmem:[#allocation8 + $0x20] sm:$0xff]
        %v3248 = vld [vmem:[#allocation8 + $0x28] sm:$0xff]
        %v3249 = vld [vmem:[#allocation8 + $0x30] sm:$0xff]
        %v3250 = vld [vmem:[#allocation8 + $0x38] sm:$0xff]
        %3251 = vmatprep.subr.bf16.mxu0 0
        %3252 = vmatpush1.bf16.msra.mxu0 %v3243
        %3253 = vmatprep.subr.bf16.mxu0 0
        %3254 = vmatpush1.bf16.msra.mxu0 %v3244
        %3255 = vmatprep.subr.bf16.mxu0 0
        %3256 = vmatpush1.bf16.msra.mxu0 %v3245
        %3257 = vmatprep.subr.bf16.mxu0 0
        %3258 = vmatpush1.bf16.msra.mxu0 %v3246
        %3259 = vmatprep.subr.bf16.mxu0 0
        %3260 = vmatpush1.bf16.msra.mxu0 %v3247
        %3261 = vmatprep.subr.bf16.mxu0 0
        %3262 = vmatpush1.bf16.msra.mxu0 %v3248
        %3263 = vmatprep.subr.bf16.mxu0 0
        %3264 = vmatpush1.bf16.msra.mxu0 %v3249
        %3265 = vmatprep.subr.bf16.mxu0 0
        %3266 = vmatpush1.bf16.msra.mxu0 %v3250
        %3267 = vmatprep.subr.bf16.mxu0 0
        %3268 = vmatpush1.bf16.msra.mxu0 0
        %3269 = vmatprep.subr.bf16.mxu0 0
        %3270 = vmatpush1.bf16.msra.mxu0 0
        %3271 = vmatprep.subr.bf16.mxu0 0
        %3272 = vmatpush1.bf16.msra.mxu0 0
        %3273 = vmatprep.subr.bf16.mxu0 0
        %3274 = vmatpush1.bf16.msra.mxu0 0
        %3275 = vmatprep.subr.bf16.mxu0 0
        %3276 = vmatpush1.bf16.msra.mxu0 0
        %3277 = vmatprep.subr.bf16.mxu0 0
        %3278 = vmatpush1.bf16.msra.mxu0 0
        %3279 = vmatprep.subr.bf16.mxu0 0
        %3280 = vmatpush1.bf16.msra.mxu0 0
        %3281 = vmatprep.subr.bf16.mxu0 0
        %3282 = vmatpush1.bf16.msra.mxu0 0
        %3283 = vmatprep.mubr.bf16.mxu0 0
        %3284 = vmatmul.mubr.bf16.gmra.mrb[0].mxu0 %v3227
        %v3285 = vpop.f32.mrb[0].mxu0
        %v3286 = vadd.f32 0.0, %v3285
        %v3287 = vpop.f32.mrb[0].mxu0
        %v3288 = vpop.f32.mrb[0].mxu0
        %v3289 = vadd.f32 0.0, %v3288
        %v3290 = vpop.f32.mrb[0].mxu0
        %3291 = vmatprep.mubr.bf16.mxu0 0
        %3292 = vmatmul.mubr.bf16.gmra.mrb[0].mxu0 %v3228
        %v3293 = vpop.f32.mrb[0].mxu0
        %v3294 = vadd.f32 0.0, %v3293
        %v3295 = vpop.f32.mrb[0].mxu0
        %v3296 = vpop.f32.mrb[0].mxu0
        %v3297 = vadd.f32 0.0, %v3296
        %v3298 = vpop.f32.mrb[0].mxu0
        %3299 = vmatprep.mubr.bf16.mxu0 0
        %3300 = vmatmul.mubr.bf16.gmra.mrb[0].mxu0 %v3229
        %v3301 = vpop.f32.mrb[0].mxu0
        %v3302 = vadd.f32 0.0, %v3301
        %v3303 = vpop.f32.mrb[0].mxu0
        %v3304 = vpop.f32.mrb[0].mxu0
        %v3305 = vadd.f32 0.0, %v3304
        %v3306 = vpop.f32.mrb[0].mxu0
        %3307 = vmatprep.mubr.bf16.mxu0 0
        %3308 = vmatmul.mubr.bf16.gmra.mrb[0].mxu0 %v3230
        %v3309 = vpop.f32.mrb[0].mxu0
        %v3310 = vadd.f32 0.0, %v3309
        %v3311 = vpop.f32.mrb[0].mxu0
        %v3312 = vpop.f32.mrb[0].mxu0
        %v3313 = vadd.f32 0.0, %v3312
        %v3314 = vpop.f32.mrb[0].mxu0
        %3315 = vmatprep.mubr.bf16.mxu0 0
        %3316 = vmatmul.mubr.bf16.gmra.mrb[0].mxu0 %v3231
        %v3317 = vpop.f32.mrb[0].mxu0
        %v3318 = vadd.f32 0.0, %v3317
        %v3319 = vpop.f32.mrb[0].mxu0
        %v3320 = vpop.f32.mrb[0].mxu0
        %v3321 = vadd.f32 0.0, %v3320
        %v3322 = vpop.f32.mrb[0].mxu0
        %3323 = vmatprep.mubr.bf16.mxu0 0
        %3324 = vmatmul.mubr.bf16.gmra.mrb[0].mxu0 %v3232
        %v3325 = vpop.f32.mrb[0].mxu0
        %v3326 = vadd.f32 0.0, %v3325
        %v3327 = vpop.f32.mrb[0].mxu0
        %v3328 = vpop.f32.mrb[0].mxu0
        %v3329 = vadd.f32 0.0, %v3328
        %v3330 = vpop.f32.mrb[0].mxu0
        %3331 = vmatprep.mubr.bf16.mxu0 0
        %3332 = vmatmul.mubr.bf16.gmra.mrb[0].mxu0 %v3233
        %v3333 = vpop.f32.mrb[0].mxu0
        %v3334 = vadd.f32 0.0, %v3333
        %v3335 = vpop.f32.mrb[0].mxu0
        %v3336 = vpop.f32.mrb[0].mxu0
        %v3337 = vadd.f32 0.0, %v3336
        %v3338 = vpop.f32.mrb[0].mxu0
        %3339 = vmatprep.mubr.bf16.mxu0 0
        %3340 = vmatmul.mubr.bf16.gmra.mrb[0].mxu0 %v3234
        %v3341 = vpop.f32.mrb[0].mxu0
        %v3342 = vadd.f32 0.0, %v3341
        %v3343 = vpop.f32.mrb[0].mxu0
        %v3344 = vpop.f32.mrb[0].mxu0
        %v3345 = vadd.f32 0.0, %v3344
        %v3346 = vpop.f32.mrb[0].mxu0
        %3347 = vdwg.mxu0
        %3348 = vmatprep.subr.bf16.mxu0 0
        %3349 = vmatpush1.bf16.msra.mxu0 %v3235
        %3350 = vmatprep.subr.bf16.mxu0 0
        %3351 = vmatpush1.bf16.msra.mxu0 %v3236
        %3352 = vmatprep.subr.bf16.mxu0 0
        %3353 = vmatpush1.bf16.msra.mxu0 %v3237
        %3354 = vmatprep.subr.bf16.mxu0 0
        %3355 = vmatpush1.bf16.msra.mxu0 %v3238
        %3356 = vmatprep.subr.bf16.mxu0 0
        %3357 = vmatpush1.bf16.msra.mxu0 %v3239
        %3358 = vmatprep.subr.bf16.mxu0 0
        %3359 = vmatpush1.bf16.msra.mxu0 %v3240
        %3360 = vmatprep.subr.bf16.mxu0 0
        %3361 = vmatpush1.bf16.msra.mxu0 %v3241
        %3362 = vmatprep.subr.bf16.mxu0 0
        %3363 = vmatpush1.bf16.msra.mxu0 %v3242
        %3364 = vmatprep.subr.bf16.mxu0 0
        %3365 = vmatpush1.bf16.msra.mxu0 0
        %3366 = vmatprep.subr.bf16.mxu0 0
        %3367 = vmatpush1.bf16.msra.mxu0 0
        %3368 = vmatprep.subr.bf16.mxu0 0
        %3369 = vmatpush1.bf16.msra.mxu0 0
        %3370 = vmatprep.subr.bf16.mxu0 0
        %3371 = vmatpush1.bf16.msra.mxu0 0
        %3372 = vmatprep.subr.bf16.mxu0 0
        %3373 = vmatpush1.bf16.msra.mxu0 0
        %3374 = vmatprep.subr.bf16.mxu0 0
        %3375 = vmatpush1.bf16.msra.mxu0 0
        %3376 = vmatprep.subr.bf16.mxu0 0
        %3377 = vmatpush1.bf16.msra.mxu0 0
        %3378 = vmatprep.subr.bf16.mxu0 0
        %3379 = vmatpush1.bf16.msra.mxu0 0
        %3380 = vmatprep.mubr.bf16.mxu0 0
        %3381 = vmatmul.mubr.bf16.gmra.mrb[0].mxu0 %v3219
        %v3382 = vpop.f32.mrb[0].mxu0
        %v3383 = vadd.f32 %v3286, %v3382
        %v3384 = vpop.f32.mrb[0].mxu0
        %v3385 = vpop.f32.mrb[0].mxu0
        %v3386 = vadd.f32 %v3289, %v3385
        %v3387 = vpop.f32.mrb[0].mxu0
        %3388 = vmatprep.mubr.bf16.mxu0 0
        %3389 = vmatmul.mubr.bf16.gmra.mrb[0].mxu0 %v3220
        %v3390 = vpop.f32.mrb[0].mxu0
        %v3391 = vadd.f32 %v3294, %v3390
        %v3392 = vpop.f32.mrb[0].mxu0
        %v3393 = vpop.f32.mrb[0].mxu0
        %v3394 = vadd.f32 %v3297, %v3393
        %v3395 = vpop.f32.mrb[0].mxu0
        %3396 = vmatprep.mubr.bf16.mxu0 0
        %3397 = vmatmul.mubr.bf16.gmra.mrb[0].mxu0 %v3221
        %v3398 = vpop.f32.mrb[0].mxu0
        %v3399 = vadd.f32 %v3302, %v3398
        %v3400 = vpop.f32.mrb[0].mxu0
        %v3401 = vpop.f32.mrb[0].mxu0
        %v3402 = vadd.f32 %v3305, %v3401
        %v3403 = vpop.f32.mrb[0].mxu0
        %3404 = vmatprep.mubr.bf16.mxu0 0
        %3405 = vmatmul.mubr.bf16.gmra.mrb[0].mxu0 %v3222
        %v3406 = vpop.f32.mrb[0].mxu0
        %v3407 = vadd.f32 %v3310, %v3406
        %v3408 = vpop.f32.mrb[0].mxu0
        %v3409 = vpop.f32.mrb[0].mxu0
        %v3410 = vadd.f32 %v3313, %v3409
        %v3411 = vpop.f32.mrb[0].mxu0
        %3412 = vmatprep.mubr.bf16.mxu0 0
        %3413 = vmatmul.mubr.bf16.gmra.mrb[0].mxu0 %v3223
        %v3414 = vpop.f32.mrb[0].mxu0
        %v3415 = vadd.f32 %v3318, %v3414
        %v3416 = vpop.f32.mrb[0].mxu0
        %v3417 = vpop.f32.mrb[0].mxu0
        %v3418 = vadd.f32 %v3321, %v3417
        %v3419 = vpop.f32.mrb[0].mxu0
        %3420 = vmatprep.mubr.bf16.mxu0 0
        %3421 = vmatmul.mubr.bf16.gmra.mrb[0].mxu0 %v3224
        %v3422 = vpop.f32.mrb[0].mxu0
        %v3423 = vadd.f32 %v3326, %v3422
        %v3424 = vpop.f32.mrb[0].mxu0
        %v3425 = vpop.f32.mrb[0].mxu0
        %v3426 = vadd.f32 %v3329, %v3425
        %v3427 = vpop.f32.mrb[0].mxu0
        %3428 = vmatprep.mubr.bf16.mxu0 0
        %3429 = vmatmul.mubr.bf16.gmra.mrb[0].mxu0 %v3225
        %v3430 = vpop.f32.mrb[0].mxu0
        %v3431 = vadd.f32 %v3334, %v3430
        %v3432 = vpop.f32.mrb[0].mxu0
        %v3433 = vpop.f32.mrb[0].mxu0
        %v3434 = vadd.f32 %v3337, %v3433
        %v3435 = vpop.f32.mrb[0].mxu0
        %3436 = vmatprep.mubr.bf16.mxu0 0
        %3437 = vmatmul.mubr.bf16.gmra.mrb[0].mxu0 %v3226
        %v3438 = vpop.f32.mrb[0].mxu0
        %v3439 = vadd.f32 %v3342, %v3438
        %v3440 = vpop.f32.mrb[0].mxu0
        %v3441 = vpop.f32.mrb[0].mxu0
        %v3442 = vadd.f32 %v3345, %v3441
        %v3443 = vpop.f32.mrb[0].mxu0
        %3444 = vdwg.mxu0
        %v3445 = vpack.c.bf16 %v3204, %v3203
        %v3446 = vpack.c.bf16 %v3206, %v3205
        %v3447 = vpack.c.bf16 %v3208, %v3207
        %v3448 = vpack.c.bf16 %v3210, %v3209
        %v3449 = vpack.c.bf16 %v3212, %v3211
        %v3450 = vpack.c.bf16 %v3214, %v3213
        %v3451 = vpack.c.bf16 %v3216, %v3215
        %v3452 = vpack.c.bf16 %v3218, %v3217
        %v3453 = vld [vmem:[%s938] sm:$0xf]
        %v3454 = vld [vmem:[%s938 + $0x4] sm:$0xf]
        %v3455 = vld [vmem:[%s938 + $0x8] sm:$0xf]
        %v3456 = vld [vmem:[%s938 + $0xc] sm:$0xf]
        %v3457 = vld [vmem:[%s938 + $0x10] sm:$0xf]
        %v3458 = vld [vmem:[%s938 + $0x14] sm:$0xf]
        %v3459 = vld [vmem:[%s938 + $0x18] sm:$0xf]
        %v3460 = vld [vmem:[%s938 + $0x1c] sm:$0xf]
        %v3461 = vld [vmem:[%s938 + $0x20] sm:$0xf]
        %v3462 = vld [vmem:[%s938 + $0x24] sm:$0xf]
        %v3463 = vld [vmem:[%s938 + $0x28] sm:$0xf]
        %v3464 = vld [vmem:[%s938 + $0x2c] sm:$0xf]
        %v3465 = vld [vmem:[%s938 + $0x30] sm:$0xf]
        %v3466 = vld [vmem:[%s938 + $0x34] sm:$0xf]
        %v3467 = vld [vmem:[%s938 + $0x38] sm:$0xf]
        %v3468 = vld [vmem:[%s938 + $0x3c] sm:$0xf]
        %v3485 = vunpack.c.l.b16 %v3453
        %v3486 = vunpack.c.l.b16 %v3454
        %v3487 = vunpack.c.l.b16 %v3455
        %v3488 = vunpack.c.l.b16 %v3456
        %v3489 = vunpack.c.l.b16 %v3457
        %v3490 = vunpack.c.l.b16 %v3458
        %v3491 = vunpack.c.l.b16 %v3459
        %v3492 = vunpack.c.l.b16 %v3460
        %v3493 = vunpack.c.l.b16 %v3461
        %v3494 = vunpack.c.l.b16 %v3462
        %v3495 = vunpack.c.l.b16 %v3463
        %v3496 = vunpack.c.l.b16 %v3464
        %v3497 = vunpack.c.l.b16 %v3465
        %v3498 = vunpack.c.l.b16 %v3466
        %v3499 = vunpack.c.l.b16 %v3467
        %v3500 = vunpack.c.l.b16 %v3468
        %v3501 = vpack.c.b16 %v3486, %v3485
        %v3502 = vpack.c.b16 %v3488, %v3487
        %v3503 = vpack.c.b16 %v3490, %v3489
        %v3504 = vpack.c.b16 %v3492, %v3491
        %v3505 = vpack.c.b16 %v3494, %v3493
        %v3506 = vpack.c.b16 %v3496, %v3495
        %v3507 = vpack.c.b16 %v3498, %v3497
        %v3508 = vpack.c.b16 %v3500, %v3499
        %3517 = vmatprep.subr.bf16.mxu0 0
        %3518 = vmatpush1.bf16.msra.mxu0 %v3501
        %3519 = vmatprep.subr.bf16.mxu0 0
        %3520 = vmatpush1.bf16.msra.mxu0 %v3502
        %3521 = vmatprep.subr.bf16.mxu0 0
        %3522 = vmatpush1.bf16.msra.mxu0 %v3503
        %3523 = vmatprep.subr.bf16.mxu0 0
        %3524 = vmatpush1.bf16.msra.mxu0 %v3504
        %3525 = vmatprep.subr.bf16.mxu0 0
        %3526 = vmatpush1.bf16.msra.mxu0 %v3505
        %3527 = vmatprep.subr.bf16.mxu0 0
        %3528 = vmatpush1.bf16.msra.mxu0 %v3506
        %3529 = vmatprep.subr.bf16.mxu0 0
        %3530 = vmatpush1.bf16.msra.mxu0 %v3507
        %3531 = vmatprep.subr.bf16.mxu0 0
        %3532 = vmatpush1.bf16.msra.mxu0 %v3508
        %3533 = vmatprep.subr.bf16.mxu0 0
        %3534 = vmatpush1.bf16.msra.mxu0 0
        %3535 = vmatprep.subr.bf16.mxu0 0
        %3536 = vmatpush1.bf16.msra.mxu0 0
        %3537 = vmatprep.subr.bf16.mxu0 0
        %3538 = vmatpush1.bf16.msra.mxu0 0
        %3539 = vmatprep.subr.bf16.mxu0 0
        %3540 = vmatpush1.bf16.msra.mxu0 0
        %3541 = vmatprep.subr.bf16.mxu0 0
        %3542 = vmatpush1.bf16.msra.mxu0 0
        %3543 = vmatprep.subr.bf16.mxu0 0
        %3544 = vmatpush1.bf16.msra.mxu0 0
        %3545 = vmatprep.subr.bf16.mxu0 0
        %3546 = vmatpush1.bf16.msra.mxu0 0
        %3547 = vmatprep.subr.bf16.mxu0 0
        %3548 = vmatpush1.bf16.msra.mxu0 0
        %3549 = vmatprep.mubr.bf16.mxu0 0
        %3550 = vmatmul.mubr.bf16.gmra.mrb[0].mxu0 %v3445
        %v3551 = vpop.f32.mrb[0].mxu0
        %v3552 = vadd.f32 %v3383, %v3551
        %v3553 = vpop.f32.mrb[0].mxu0
        %v3554 = vpop.f32.mrb[0].mxu0
        %v3555 = vadd.f32 %v3386, %v3554
        %v3556 = vpop.f32.mrb[0].mxu0
        %3557 = vmatprep.mubr.bf16.mxu0 0
        %3558 = vmatmul.mubr.bf16.gmra.mrb[0].mxu0 %v3446
        %v3559 = vpop.f32.mrb[0].mxu0
        %v3560 = vadd.f32 %v3391, %v3559
        %v3561 = vpop.f32.mrb[0].mxu0
        %v3562 = vpop.f32.mrb[0].mxu0
        %v3563 = vadd.f32 %v3394, %v3562
        %v3564 = vpop.f32.mrb[0].mxu0
        %3565 = vmatprep.mubr.bf16.mxu0 0
        %3566 = vmatmul.mubr.bf16.gmra.mrb[0].mxu0 %v3447
        %v3567 = vpop.f32.mrb[0].mxu0
        %v3568 = vadd.f32 %v3399, %v3567
        %v3569 = vpop.f32.mrb[0].mxu0
        %v3570 = vpop.f32.mrb[0].mxu0
        %v3571 = vadd.f32 %v3402, %v3570
        %v3572 = vpop.f32.mrb[0].mxu0
        %3573 = vmatprep.mubr.bf16.mxu0 0
        %3574 = vmatmul.mubr.bf16.gmra.mrb[0].mxu0 %v3448
        %v3575 = vpop.f32.mrb[0].mxu0
        %v3576 = vadd.f32 %v3407, %v3575
        %v3577 = vpop.f32.mrb[0].mxu0
        %v3578 = vpop.f32.mrb[0].mxu0
        %v3579 = vadd.f32 %v3410, %v3578
        %v3580 = vpop.f32.mrb[0].mxu0
        %3581 = vmatprep.mubr.bf16.mxu0 0
        %3582 = vmatmul.mubr.bf16.gmra.mrb[0].mxu0 %v3449
        %v3583 = vpop.f32.mrb[0].mxu0
        %v3584 = vadd.f32 %v3415, %v3583
        %v3585 = vpop.f32.mrb[0].mxu0
        %v3586 = vpop.f32.mrb[0].mxu0
        %v3587 = vadd.f32 %v3418, %v3586
        %v3588 = vpop.f32.mrb[0].mxu0
        %3589 = vmatprep.mubr.bf16.mxu0 0
        %3590 = vmatmul.mubr.bf16.gmra.mrb[0].mxu0 %v3450
        %v3591 = vpop.f32.mrb[0].mxu0
        %v3592 = vadd.f32 %v3423, %v3591
        %v3593 = vpop.f32.mrb[0].mxu0
        %v3594 = vpop.f32.mrb[0].mxu0
        %v3595 = vadd.f32 %v3426, %v3594
        %v3596 = vpop.f32.mrb[0].mxu0
        %3597 = vmatprep.mubr.bf16.mxu0 0
        %3598 = vmatmul.mubr.bf16.gmra.mrb[0].mxu0 %v3451
        %v3599 = vpop.f32.mrb[0].mxu0
        %v3600 = vadd.f32 %v3431, %v3599
        %v3601 = vpop.f32.mrb[0].mxu0
        %v3602 = vpop.f32.mrb[0].mxu0
        %v3603 = vadd.f32 %v3434, %v3602
        %v3604 = vpop.f32.mrb[0].mxu0
        %3605 = vmatprep.mubr.bf16.mxu0 0
        %3606 = vmatmul.mubr.bf16.gmra.mrb[0].mxu0 %v3452
        %v3607 = vpop.f32.mrb[0].mxu0
        %v3608 = vadd.f32 %v3439, %v3607
        %v3609 = vpop.f32.mrb[0].mxu0
        %v3610 = vpop.f32.mrb[0].mxu0
        %v3611 = vadd.f32 %v3442, %v3610
        %v3612 = vpop.f32.mrb[0].mxu0
        %3613 = vdwg.mxu0
        %v3614 = vlaneseq
        %v3615 = vshrl.u32 %v3614, 7
        %v3616 = vsub.s32 0, %v3615
        %v3617 = vrot.slane %v2358, %v3616
        %v3618 = vadd.f32 %v3552, %v3617
        %v3619 = vadd.f32 %v3555, %v3617
        %v3620 = vadd.f32 %v3560, %v3617
        %v3621 = vadd.f32 %v3563, %v3617
        %v3622 = vadd.f32 %v3568, %v3617
        %v3623 = vadd.f32 %v3571, %v3617
        %v3624 = vadd.f32 %v3576, %v3617
        %v3625 = vadd.f32 %v3579, %v3617
        %v3626 = vadd.f32 %v3584, %v3617
        %v3627 = vadd.f32 %v3587, %v3617
        %v3628 = vadd.f32 %v3592, %v3617
        %v3629 = vadd.f32 %v3595, %v3617
        %v3630 = vadd.f32 %v3600, %v3617
        %v3631 = vadd.f32 %v3603, %v3617
        %v3632 = vadd.f32 %v3608, %v3617
        %v3633 = vadd.f32 %v3611, %v3617
        %v3634 = vmax.f32 %v3618, 0.0
        %v3635 = vmax.f32 %v3619, 0.0
        %v3636 = vmax.f32 %v3620, 0.0
        %v3637 = vmax.f32 %v3621, 0.0
        %v3638 = vmax.f32 %v3622, 0.0
        %v3639 = vmax.f32 %v3623, 0.0
        %v3640 = vmax.f32 %v3624, 0.0
        %v3641 = vmax.f32 %v3625, 0.0
        %v3642 = vmax.f32 %v3626, 0.0
        %v3643 = vmax.f32 %v3627, 0.0
        %v3644 = vmax.f32 %v3628, 0.0
        %v3645 = vmax.f32 %v3629, 0.0
        %v3646 = vmax.f32 %v3630, 0.0
        %v3647 = vmax.f32 %v3631, 0.0
        %v3648 = vmax.f32 %v3632, 0.0
        %v3649 = vmax.f32 %v3633, 0.0
        %v3650 = vpack.c.bf16 %v3635, %v3634
        %v3651 = vpack.c.bf16 %v3637, %v3636
        %v3652 = vpack.c.bf16 %v3639, %v3638
        %v3653 = vpack.c.bf16 %v3641, %v3640
        %v3654 = vpack.c.bf16 %v3643, %v3642
        %v3655 = vpack.c.bf16 %v3645, %v3644
        %v3656 = vpack.c.bf16 %v3647, %v3646
        %v3657 = vpack.c.bf16 %v3649, %v3648
        %v3658 = vld [vmem:[%s956] sm:$0xf]
        %v3659 = vld [vmem:[%s956 + $0x4] sm:$0xf]
        %v3660 = vld [vmem:[%s956 + $0x8] sm:$0xf]
        %v3661 = vld [vmem:[%s956 + $0xc] sm:$0xf]
        %v3662 = vld [vmem:[%s956 + $0x10] sm:$0xf]
        %v3663 = vld [vmem:[%s956 + $0x14] sm:$0xf]
        %v3664 = vld [vmem:[%s956 + $0x18] sm:$0xf]
        %v3665 = vld [vmem:[%s956 + $0x1c] sm:$0xf]
        %v3666 = vld [vmem:[%s956 + $0x20] sm:$0xf]
        %v3667 = vld [vmem:[%s956 + $0x24] sm:$0xf]
        %v3668 = vld [vmem:[%s956 + $0x28] sm:$0xf]
        %v3669 = vld [vmem:[%s956 + $0x2c] sm:$0xf]
        %v3670 = vld [vmem:[%s956 + $0x30] sm:$0xf]
        %v3671 = vld [vmem:[%s956 + $0x34] sm:$0xf]
        %v3672 = vld [vmem:[%s956 + $0x38] sm:$0xf]
        %v3673 = vld [vmem:[%s956 + $0x3c] sm:$0xf]
        %v3674 = vlaneseq
        %v3675 = vshrl.u32 %v3674, 7
        %v3676 = vsub.s32 1, %v3675
        %v3677 = vrot.slane %v2358, %v3676
        %v3694 = vunpack.c.l.b16 %v3658
        %v3695 = vunpack.c.l.b16 %v3659
        %v3696 = vunpack.c.l.b16 %v3660
        %v3697 = vunpack.c.l.b16 %v3661
        %v3698 = vunpack.c.l.b16 %v3662
        %v3699 = vunpack.c.l.b16 %v3663
        %v3700 = vunpack.c.l.b16 %v3664
        %v3701 = vunpack.c.l.b16 %v3665
        %v3702 = vunpack.c.l.b16 %v3666
        %v3703 = vunpack.c.l.b16 %v3667
        %v3704 = vunpack.c.l.b16 %v3668
        %v3705 = vunpack.c.l.b16 %v3669
        %v3706 = vunpack.c.l.b16 %v3670
        %v3707 = vunpack.c.l.b16 %v3671
        %v3708 = vunpack.c.l.b16 %v3672
        %v3709 = vunpack.c.l.b16 %v3673
        %v3710 = vpack.c.b16 %v3695, %v3694
        %v3711 = vpack.c.b16 %v3697, %v3696
        %v3712 = vpack.c.b16 %v3699, %v3698
        %v3713 = vpack.c.b16 %v3701, %v3700
        %v3714 = vpack.c.b16 %v3703, %v3702
        %v3715 = vpack.c.b16 %v3705, %v3704
        %v3716 = vpack.c.b16 %v3707, %v3706
        %v3717 = vpack.c.b16 %v3709, %v3708
        %3726 = vmatprep.subr.bf16.mxu0 0
        %3727 = vmatpush1.bf16.msra.mxu0 %v3710
        %3728 = vmatprep.subr.bf16.mxu0 0
        %3729 = vmatpush1.bf16.msra.mxu0 %v3711
        %3730 = vmatprep.subr.bf16.mxu0 0
        %3731 = vmatpush1.bf16.msra.mxu0 %v3712
        %3732 = vmatprep.subr.bf16.mxu0 0
        %3733 = vmatpush1.bf16.msra.mxu0 %v3713
        %3734 = vmatprep.subr.bf16.mxu0 0
        %3735 = vmatpush1.bf16.msra.mxu0 %v3714
        %3736 = vmatprep.subr.bf16.mxu0 0
        %3737 = vmatpush1.bf16.msra.mxu0 %v3715
        %3738 = vmatprep.subr.bf16.mxu0 0
        %3739 = vmatpush1.bf16.msra.mxu0 %v3716
        %3740 = vmatprep.subr.bf16.mxu0 0
        %3741 = vmatpush1.bf16.msra.mxu0 %v3717
        %3742 = vmatprep.subr.bf16.mxu0 0
        %3743 = vmatpush1.bf16.msra.mxu0 0
        %3744 = vmatprep.subr.bf16.mxu0 0
        %3745 = vmatpush1.bf16.msra.mxu0 0
        %3746 = vmatprep.subr.bf16.mxu0 0
        %3747 = vmatpush1.bf16.msra.mxu0 0
        %3748 = vmatprep.subr.bf16.mxu0 0
        %3749 = vmatpush1.bf16.msra.mxu0 0
        %3750 = vmatprep.subr.bf16.mxu0 0
        %3751 = vmatpush1.bf16.msra.mxu0 0
        %3752 = vmatprep.subr.bf16.mxu0 0
        %3753 = vmatpush1.bf16.msra.mxu0 0
        %3754 = vmatprep.subr.bf16.mxu0 0
        %3755 = vmatpush1.bf16.msra.mxu0 0
        %3756 = vmatprep.subr.bf16.mxu0 0
        %3757 = vmatpush1.bf16.msra.mxu0 0
        %3758 = vmatprep.mubr.bf16.mxu0 0
        %3759 = vmatmul.mubr.bf16.gmra.mrb[0].mxu0 %v3650
        %v3760 = vpop.f32.mrb[0].mxu0
        %v3761 = vadd.f32 %v3677, %v3760
        %v3762 = vpop.f32.mrb[0].mxu0
        %v3763 = vpop.f32.mrb[0].mxu0
        %v3764 = vadd.f32 %v3677, %v3763
        %v3765 = vpop.f32.mrb[0].mxu0
        %3766 = vmatprep.mubr.bf16.mxu0 0
        %3767 = vmatmul.mubr.bf16.gmra.mrb[0].mxu0 %v3651
        %v3768 = vpop.f32.mrb[0].mxu0
        %v3769 = vadd.f32 %v3677, %v3768
        %v3770 = vpop.f32.mrb[0].mxu0
        %v3771 = vpop.f32.mrb[0].mxu0
        %v3772 = vadd.f32 %v3677, %v3771
        %v3773 = vpop.f32.mrb[0].mxu0
        %3774 = vmatprep.mubr.bf16.mxu0 0
        %3775 = vmatmul.mubr.bf16.gmra.mrb[0].mxu0 %v3652
        %v3776 = vpop.f32.mrb[0].mxu0
        %v3777 = vadd.f32 %v3677, %v3776
        %v3778 = vpop.f32.mrb[0].mxu0
        %v3779 = vpop.f32.mrb[0].mxu0
        %v3780 = vadd.f32 %v3677, %v3779
        %v3781 = vpop.f32.mrb[0].mxu0
        %3782 = vmatprep.mubr.bf16.mxu0 0
        %3783 = vmatmul.mubr.bf16.gmra.mrb[0].mxu0 %v3653
        %v3784 = vpop.f32.mrb[0].mxu0
        %v3785 = vadd.f32 %v3677, %v3784
        %v3786 = vpop.f32.mrb[0].mxu0
        %v3787 = vpop.f32.mrb[0].mxu0
        %v3788 = vadd.f32 %v3677, %v3787
        %v3789 = vpop.f32.mrb[0].mxu0
        %3790 = vmatprep.mubr.bf16.mxu0 0
        %3791 = vmatmul.mubr.bf16.gmra.mrb[0].mxu0 %v3654
        %v3792 = vpop.f32.mrb[0].mxu0
        %v3793 = vadd.f32 %v3677, %v3792
        %v3794 = vpop.f32.mrb[0].mxu0
        %v3795 = vpop.f32.mrb[0].mxu0
        %v3796 = vadd.f32 %v3677, %v3795
        %v3797 = vpop.f32.mrb[0].mxu0
        %3798 = vmatprep.mubr.bf16.mxu0 0
        %3799 = vmatmul.mubr.bf16.gmra.mrb[0].mxu0 %v3655
        %v3800 = vpop.f32.mrb[0].mxu0
        %v3801 = vadd.f32 %v3677, %v3800
        %v3802 = vpop.f32.mrb[0].mxu0
        %v3803 = vpop.f32.mrb[0].mxu0
        %v3804 = vadd.f32 %v3677, %v3803
        %v3805 = vpop.f32.mrb[0].mxu0
        %3806 = vmatprep.mubr.bf16.mxu0 0
        %3807 = vmatmul.mubr.bf16.gmra.mrb[0].mxu0 %v3656
        %v3808 = vpop.f32.mrb[0].mxu0
        %v3809 = vadd.f32 %v3677, %v3808
        %v3810 = vpop.f32.mrb[0].mxu0
        %v3811 = vpop.f32.mrb[0].mxu0
        %v3812 = vadd.f32 %v3677, %v3811
        %v3813 = vpop.f32.mrb[0].mxu0
        %3814 = vmatprep.mubr.bf16.mxu0 0
        %3815 = vmatmul.mubr.bf16.gmra.mrb[0].mxu0 %v3657
        %v3816 = vpop.f32.mrb[0].mxu0
        %v3817 = vadd.f32 %v3677, %v3816
        %v3818 = vpop.f32.mrb[0].mxu0
        %v3819 = vpop.f32.mrb[0].mxu0
        %v3820 = vadd.f32 %v3677, %v3819
        %v3821 = vpop.f32.mrb[0].mxu0
        %3822 = vdwg.mxu0
        %v3823 = vmax.f32 %v3761, 0.0
        %v3824 = vmax.f32 %v3764, 0.0
        %v3825 = vmax.f32 %v3769, 0.0
        %v3826 = vmax.f32 %v3772, 0.0
        %v3827 = vmax.f32 %v3777, 0.0
        %v3828 = vmax.f32 %v3780, 0.0
        %v3829 = vmax.f32 %v3785, 0.0
        %v3830 = vmax.f32 %v3788, 0.0
        %v3831 = vmax.f32 %v3793, 0.0
        %v3832 = vmax.f32 %v3796, 0.0
        %v3833 = vmax.f32 %v3801, 0.0
        %v3834 = vmax.f32 %v3804, 0.0
        %v3835 = vmax.f32 %v3809, 0.0
        %v3836 = vmax.f32 %v3812, 0.0
        %v3837 = vmax.f32 %v3817, 0.0
        %v3838 = vmax.f32 %v3820, 0.0
        %v3839 = vpack.c.bf16 %v3824, %v3823
        %v3840 = vpack.c.bf16 %v3826, %v3825
        %v3841 = vpack.c.bf16 %v3828, %v3827
        %v3842 = vpack.c.bf16 %v3830, %v3829
        %v3843 = vpack.c.bf16 %v3832, %v3831
        %v3844 = vpack.c.bf16 %v3834, %v3833
        %v3845 = vpack.c.bf16 %v3836, %v3835
        %v3846 = vpack.c.bf16 %v3838, %v3837
        %v3847 = vld [vmem:[%s965] sm:$0xf]
        %v3848 = vld [vmem:[%s965 + $0x4] sm:$0xf]
        %v3849 = vld [vmem:[%s965 + $0x8] sm:$0xf]
        %v3850 = vld [vmem:[%s965 + $0xc] sm:$0xf]
        %v3851 = vld [vmem:[%s965 + $0x10] sm:$0xf]
        %v3852 = vld [vmem:[%s965 + $0x14] sm:$0xf]
        %v3853 = vld [vmem:[%s965 + $0x18] sm:$0xf]
        %v3854 = vld [vmem:[%s965 + $0x1c] sm:$0xf]
        %v3855 = vld [vmem:[%s965 + $0x20] sm:$0xf]
        %v3856 = vld [vmem:[%s965 + $0x24] sm:$0xf]
        %v3857 = vld [vmem:[%s965 + $0x28] sm:$0xf]
        %v3858 = vld [vmem:[%s965 + $0x2c] sm:$0xf]
        %v3859 = vld [vmem:[%s965 + $0x30] sm:$0xf]
        %v3860 = vld [vmem:[%s965 + $0x34] sm:$0xf]
        %v3861 = vld [vmem:[%s965 + $0x38] sm:$0xf]
        %v3862 = vld [vmem:[%s965 + $0x3c] sm:$0xf]
        %v3863 = vlaneseq
        %v3864 = vshrl.u32 %v3863, 7
        %v3865 = vsub.s32 2, %v3864
        %v3866 = vrot.slane %v2358, %v3865
        %v3883 = vunpack.c.l.b16 %v3847
        %v3884 = vunpack.c.l.b16 %v3848
        %v3885 = vunpack.c.l.b16 %v3849
        %v3886 = vunpack.c.l.b16 %v3850
        %v3887 = vunpack.c.l.b16 %v3851
        %v3888 = vunpack.c.l.b16 %v3852
        %v3889 = vunpack.c.l.b16 %v3853
        %v3890 = vunpack.c.l.b16 %v3854
        %v3891 = vunpack.c.l.b16 %v3855
        %v3892 = vunpack.c.l.b16 %v3856
        %v3893 = vunpack.c.l.b16 %v3857
        %v3894 = vunpack.c.l.b16 %v3858
        %v3895 = vunpack.c.l.b16 %v3859
        %v3896 = vunpack.c.l.b16 %v3860
        %v3897 = vunpack.c.l.b16 %v3861
        %v3898 = vunpack.c.l.b16 %v3862
        %v3899 = vpack.c.b16 %v3884, %v3883
        %v3900 = vpack.c.b16 %v3886, %v3885
        %v3901 = vpack.c.b16 %v3888, %v3887
        %v3902 = vpack.c.b16 %v3890, %v3889
        %v3903 = vpack.c.b16 %v3892, %v3891
        %v3904 = vpack.c.b16 %v3894, %v3893
        %v3905 = vpack.c.b16 %v3896, %v3895
        %v3906 = vpack.c.b16 %v3898, %v3897
        %3915 = vmatprep.subr.bf16.mxu0 0
        %3916 = vmatpush1.bf16.msra.mxu0 %v3899
        %3917 = vmatprep.subr.bf16.mxu0 0
        %3918 = vmatpush1.bf16.msra.mxu0 %v3900
        %3919 = vmatprep.subr.bf16.mxu0 0
        %3920 = vmatpush1.bf16.msra.mxu0 %v3901
        %3921 = vmatprep.subr.bf16.mxu0 0
        %3922 = vmatpush1.bf16.msra.mxu0 %v3902
        %3923 = vmatprep.subr.bf16.mxu0 0
        %3924 = vmatpush1.bf16.msra.mxu0 %v3903
        %3925 = vmatprep.subr.bf16.mxu0 0
        %3926 = vmatpush1.bf16.msra.mxu0 %v3904
        %3927 = vmatprep.subr.bf16.mxu0 0
        %3928 = vmatpush1.bf16.msra.mxu0 %v3905
        %3929 = vmatprep.subr.bf16.mxu0 0
        %3930 = vmatpush1.bf16.msra.mxu0 %v3906
        %3931 = vmatprep.subr.bf16.mxu0 0
        %3932 = vmatpush1.bf16.msra.mxu0 0
        %3933 = vmatprep.subr.bf16.mxu0 0
        %3934 = vmatpush1.bf16.msra.mxu0 0
        %3935 = vmatprep.subr.bf16.mxu0 0
        %3936 = vmatpush1.bf16.msra.mxu0 0
        %3937 = vmatprep.subr.bf16.mxu0 0
        %3938 = vmatpush1.bf16.msra.mxu0 0
        %3939 = vmatprep.subr.bf16.mxu0 0
        %3940 = vmatpush1.bf16.msra.mxu0 0
        %3941 = vmatprep.subr.bf16.mxu0 0
        %3942 = vmatpush1.bf16.msra.mxu0 0
        %3943 = vmatprep.subr.bf16.mxu0 0
        %3944 = vmatpush1.bf16.msra.mxu0 0
        %3945 = vmatprep.subr.bf16.mxu0 0
        %3946 = vmatpush1.bf16.msra.mxu0 0
        %3947 = vmatprep.mubr.bf16.mxu0 0
        %3948 = vmatmul.mubr.bf16.gmra.mrb[0].mxu0 %v3839
        %v3949 = vpop.f32.mrb[0].mxu0
        %v3950 = vadd.f32 %v3866, %v3949
        %v3951 = vpop.f32.mrb[0].mxu0
        %v3952 = vpop.f32.mrb[0].mxu0
        %v3953 = vadd.f32 %v3866, %v3952
        %v3954 = vpop.f32.mrb[0].mxu0
        %3955 = vmatprep.mubr.bf16.mxu0 0
        %3956 = vmatmul.mubr.bf16.gmra.mrb[0].mxu0 %v3840
        %v3957 = vpop.f32.mrb[0].mxu0
        %v3958 = vadd.f32 %v3866, %v3957
        %v3959 = vpop.f32.mrb[0].mxu0
        %v3960 = vpop.f32.mrb[0].mxu0
        %v3961 = vadd.f32 %v3866, %v3960
        %v3962 = vpop.f32.mrb[0].mxu0
        %3963 = vmatprep.mubr.bf16.mxu0 0
        %3964 = vmatmul.mubr.bf16.gmra.mrb[0].mxu0 %v3841
        %v3965 = vpop.f32.mrb[0].mxu0
        %v3966 = vadd.f32 %v3866, %v3965
        %v3967 = vpop.f32.mrb[0].mxu0
        %v3968 = vpop.f32.mrb[0].mxu0
        %v3969 = vadd.f32 %v3866, %v3968
        %v3970 = vpop.f32.mrb[0].mxu0
        %3971 = vmatprep.mubr.bf16.mxu0 0
        %3972 = vmatmul.mubr.bf16.gmra.mrb[0].mxu0 %v3842
        %v3973 = vpop.f32.mrb[0].mxu0
        %v3974 = vadd.f32 %v3866, %v3973
        %v3975 = vpop.f32.mrb[0].mxu0
        %v3976 = vpop.f32.mrb[0].mxu0
        %v3977 = vadd.f32 %v3866, %v3976
        %v3978 = vpop.f32.mrb[0].mxu0
        %3979 = vmatprep.mubr.bf16.mxu0 0
        %3980 = vmatmul.mubr.bf16.gmra.mrb[0].mxu0 %v3843
        %v3981 = vpop.f32.mrb[0].mxu0
        %v3982 = vadd.f32 %v3866, %v3981
        %v3983 = vpop.f32.mrb[0].mxu0
        %v3984 = vpop.f32.mrb[0].mxu0
        %v3985 = vadd.f32 %v3866, %v3984
        %v3986 = vpop.f32.mrb[0].mxu0
        %3987 = vmatprep.mubr.bf16.mxu0 0
        %3988 = vmatmul.mubr.bf16.gmra.mrb[0].mxu0 %v3844
        %v3989 = vpop.f32.mrb[0].mxu0
        %v3990 = vadd.f32 %v3866, %v3989
        %v3991 = vpop.f32.mrb[0].mxu0
        %v3992 = vpop.f32.mrb[0].mxu0
        %v3993 = vadd.f32 %v3866, %v3992
        %v3994 = vpop.f32.mrb[0].mxu0
        %3995 = vmatprep.mubr.bf16.mxu0 0
        %3996 = vmatmul.mubr.bf16.gmra.mrb[0].mxu0 %v3845
        %v3997 = vpop.f32.mrb[0].mxu0
        %v3998 = vadd.f32 %v3866, %v3997
        %v3999 = vpop.f32.mrb[0].mxu0
        %v4000 = vpop.f32.mrb[0].mxu0
        %v4001 = vadd.f32 %v3866, %v4000
        %v4002 = vpop.f32.mrb[0].mxu0
        %4003 = vmatprep.mubr.bf16.mxu0 0
        %4004 = vmatmul.mubr.bf16.gmra.mrb[0].mxu0 %v3846
        %v4005 = vpop.f32.mrb[0].mxu0
        %v4006 = vadd.f32 %v3866, %v4005
        %v4007 = vpop.f32.mrb[0].mxu0
        %v4008 = vpop.f32.mrb[0].mxu0
        %v4009 = vadd.f32 %v3866, %v4008
        %v4010 = vpop.f32.mrb[0].mxu0
        %4011 = vdwg.mxu0
        %4012 = vadd.xlane.f32.xlu0 %v3950
        %v4013 = vpop.xlane.xlu0 %4012
        %4014 = vadd.xlane.f32.xlu0 %v3953
        %v4015 = vpop.xlane.xlu0 %4014
        %4016 = vadd.xlane.f32.xlu0 %v3958
        %v4017 = vpop.xlane.xlu0 %4016
        %4018 = vadd.xlane.f32.xlu0 %v3961
        %v4019 = vpop.xlane.xlu0 %4018
        %4020 = vadd.xlane.f32.xlu0 %v3966
        %v4021 = vpop.xlane.xlu0 %4020
        %4022 = vadd.xlane.f32.xlu0 %v3969
        %v4023 = vpop.xlane.xlu0 %4022
        %4024 = vadd.xlane.f32.xlu0 %v3974
        %v4025 = vpop.xlane.xlu0 %4024
        %4026 = vadd.xlane.f32.xlu0 %v3977
        %v4027 = vpop.xlane.xlu0 %4026
        %4028 = vadd.xlane.f32.xlu0 %v3982
        %v4029 = vpop.xlane.xlu0 %4028
        %4030 = vadd.xlane.f32.xlu0 %v3985
        %v4031 = vpop.xlane.xlu0 %4030
        %4032 = vadd.xlane.f32.xlu0 %v3990
        %v4033 = vpop.xlane.xlu0 %4032
        %4034 = vadd.xlane.f32.xlu0 %v3993
        %v4035 = vpop.xlane.xlu0 %4034
        %4036 = vadd.xlane.f32.xlu0 %v3998
        %v4037 = vpop.xlane.xlu0 %4036
        %4038 = vadd.xlane.f32.xlu0 %v4001
        %v4039 = vpop.xlane.xlu0 %4038
        %4040 = vadd.xlane.f32.xlu0 %v4006
        %v4041 = vpop.xlane.xlu0 %4040
        %4042 = vadd.xlane.f32.xlu0 %v4009
        %v4043 = vpop.xlane.xlu0 %4042
        %v4044 = vrcp.pop 128.0
        %v4045 = vmul.f32 %v4013, %v4044
        %v4046 = vmul.f32 %v4015, %v4044
        %v4047 = vmul.f32 %v4017, %v4044
        %v4048 = vmul.f32 %v4019, %v4044
        %v4049 = vmul.f32 %v4021, %v4044
        %v4050 = vmul.f32 %v4023, %v4044
        %v4051 = vmul.f32 %v4025, %v4044
        %v4052 = vmul.f32 %v4027, %v4044
        %v4053 = vmul.f32 %v4029, %v4044
        %v4054 = vmul.f32 %v4031, %v4044
        %v4055 = vmul.f32 %v4033, %v4044
        %v4056 = vmul.f32 %v4035, %v4044
        %v4057 = vmul.f32 %v4037, %v4044
        %v4058 = vmul.f32 %v4039, %v4044
        %v4059 = vmul.f32 %v4041, %v4044
        %v4060 = vmul.f32 %v4043, %v4044
        %v4061 = vsub.f32 %v3950, %v4045
        %v4062 = vsub.f32 %v3953, %v4046
        %v4063 = vsub.f32 %v3958, %v4047
        %v4064 = vsub.f32 %v3961, %v4048
        %v4065 = vsub.f32 %v3966, %v4049
        %v4066 = vsub.f32 %v3969, %v4050
        %v4067 = vsub.f32 %v3974, %v4051
        %v4068 = vsub.f32 %v3977, %v4052
        %v4069 = vsub.f32 %v3982, %v4053
        %v4070 = vsub.f32 %v3985, %v4054
        %v4071 = vsub.f32 %v3990, %v4055
        %v4072 = vsub.f32 %v3993, %v4056
        %v4073 = vsub.f32 %v3998, %v4057
        %v4074 = vsub.f32 %v4001, %v4058
        %v4075 = vsub.f32 %v4006, %v4059
        %v4076 = vsub.f32 %v4009, %v4060
        %v4077 = vmul.f32 %v4061, %v4061
        %v4078 = vmul.f32 %v4062, %v4062
        %v4079 = vmul.f32 %v4063, %v4063
        %v4080 = vmul.f32 %v4064, %v4064
        %v4081 = vmul.f32 %v4065, %v4065
        %v4082 = vmul.f32 %v4066, %v4066
        %v4083 = vmul.f32 %v4067, %v4067
        %v4084 = vmul.f32 %v4068, %v4068
        %v4085 = vmul.f32 %v4069, %v4069
        %v4086 = vmul.f32 %v4070, %v4070
        %v4087 = vmul.f32 %v4071, %v4071
        %v4088 = vmul.f32 %v4072, %v4072
        %v4089 = vmul.f32 %v4073, %v4073
        %v4090 = vmul.f32 %v4074, %v4074
        %v4091 = vmul.f32 %v4075, %v4075
        %v4092 = vmul.f32 %v4076, %v4076
        %4093 = vadd.xlane.f32.xlu0 %v4077
        %v4094 = vpop.xlane.xlu0 %4093
        %4095 = vadd.xlane.f32.xlu0 %v4078
        %v4096 = vpop.xlane.xlu0 %4095
        %4097 = vadd.xlane.f32.xlu0 %v4079
        %v4098 = vpop.xlane.xlu0 %4097
        %4099 = vadd.xlane.f32.xlu0 %v4080
        %v4100 = vpop.xlane.xlu0 %4099
        %4101 = vadd.xlane.f32.xlu0 %v4081
        %v4102 = vpop.xlane.xlu0 %4101
        %4103 = vadd.xlane.f32.xlu0 %v4082
        %v4104 = vpop.xlane.xlu0 %4103
        %4105 = vadd.xlane.f32.xlu0 %v4083
        %v4106 = vpop.xlane.xlu0 %4105
        %4107 = vadd.xlane.f32.xlu0 %v4084
        %v4108 = vpop.xlane.xlu0 %4107
        %4109 = vadd.xlane.f32.xlu0 %v4085
        %v4110 = vpop.xlane.xlu0 %4109
        %4111 = vadd.xlane.f32.xlu0 %v4086
        %v4112 = vpop.xlane.xlu0 %4111
        %4113 = vadd.xlane.f32.xlu0 %v4087
        %v4114 = vpop.xlane.xlu0 %4113
        %4115 = vadd.xlane.f32.xlu0 %v4088
        %v4116 = vpop.xlane.xlu0 %4115
        %4117 = vadd.xlane.f32.xlu0 %v4089
        %v4118 = vpop.xlane.xlu0 %4117
        %4119 = vadd.xlane.f32.xlu0 %v4090
        %v4120 = vpop.xlane.xlu0 %4119
        %4121 = vadd.xlane.f32.xlu0 %v4091
        %v4122 = vpop.xlane.xlu0 %4121
        %4123 = vadd.xlane.f32.xlu0 %v4092
        %v4124 = vpop.xlane.xlu0 %4123
        %v4125 = vmul.f32 %v4094, %v4044
        %v4126 = vmul.f32 %v4096, %v4044
        %v4127 = vmul.f32 %v4098, %v4044
        %v4128 = vmul.f32 %v4100, %v4044
        %v4129 = vmul.f32 %v4102, %v4044
        %v4130 = vmul.f32 %v4104, %v4044
        %v4131 = vmul.f32 %v4106, %v4044
        %v4132 = vmul.f32 %v4108, %v4044
        %v4133 = vmul.f32 %v4110, %v4044
        %v4134 = vmul.f32 %v4112, %v4044
        %v4135 = vmul.f32 %v4114, %v4044
        %v4136 = vmul.f32 %v4116, %v4044
        %v4137 = vmul.f32 %v4118, %v4044
        %v4138 = vmul.f32 %v4120, %v4044
        %v4139 = vmul.f32 %v4122, %v4044
        %v4140 = vmul.f32 %v4124, %v4044
        %v4141 = vadd.f32 %v4125, 1e-05
        %v4142 = vadd.f32 %v4126, 1e-05
        %v4143 = vadd.f32 %v4127, 1e-05
        %v4144 = vadd.f32 %v4128, 1e-05
        %v4145 = vadd.f32 %v4129, 1e-05
        %v4146 = vadd.f32 %v4130, 1e-05
        %v4147 = vadd.f32 %v4131, 1e-05
        %v4148 = vadd.f32 %v4132, 1e-05
        %v4149 = vadd.f32 %v4133, 1e-05
        %v4150 = vadd.f32 %v4134, 1e-05
        %v4151 = vadd.f32 %v4135, 1e-05
        %v4152 = vadd.f32 %v4136, 1e-05
        %v4153 = vadd.f32 %v4137, 1e-05
        %v4154 = vadd.f32 %v4138, 1e-05
        %v4155 = vadd.f32 %v4139, 1e-05
        %v4156 = vadd.f32 %v4140, 1e-05
        %v4157 = vrsqrt.pop %v4141
        %v4158 = vrsqrt.pop %v4142
        %v4159 = vrsqrt.pop %v4143
        %v4160 = vrsqrt.pop %v4144
        %v4161 = vrsqrt.pop %v4145
        %v4162 = vrsqrt.pop %v4146
        %v4163 = vrsqrt.pop %v4147
        %v4164 = vrsqrt.pop %v4148
        %v4165 = vrsqrt.pop %v4149
        %v4166 = vrsqrt.pop %v4150
        %v4167 = vrsqrt.pop %v4151
        %v4168 = vrsqrt.pop %v4152
        %v4169 = vrsqrt.pop %v4153
        %v4170 = vrsqrt.pop %v4154
        %v4171 = vrsqrt.pop %v4155
        %v4172 = vrsqrt.pop %v4156
        %v4173 = vmul.f32 %v4061, %v4157
        %v4174 = vmul.f32 %v4062, %v4158
        %v4175 = vmul.f32 %v4063, %v4159
        %v4176 = vmul.f32 %v4064, %v4160
        %v4177 = vmul.f32 %v4065, %v4161
        %v4178 = vmul.f32 %v4066, %v4162
        %v4179 = vmul.f32 %v4067, %v4163
        %v4180 = vmul.f32 %v4068, %v4164
        %v4181 = vmul.f32 %v4069, %v4165
        %v4182 = vmul.f32 %v4070, %v4166
        %v4183 = vmul.f32 %v4071, %v4167
        %v4184 = vmul.f32 %v4072, %v4168
        %v4185 = vmul.f32 %v4073, %v4169
        %v4186 = vmul.f32 %v4074, %v4170
        %v4187 = vmul.f32 %v4075, %v4171
        %v4188 = vmul.f32 %v4076, %v4172
        %v4189 = vlaneseq
        %v4190 = vshrl.u32 %v4189, 7
        %v4191 = vsub.s32 3, %v4190
        %v4192 = vrot.slane %v2358, %v4191
        %v4193 = vmul.f32 %v4173, %v4192
        %v4194 = vmul.f32 %v4174, %v4192
        %v4195 = vmul.f32 %v4175, %v4192
        %v4196 = vmul.f32 %v4176, %v4192
        %v4197 = vmul.f32 %v4177, %v4192
        %v4198 = vmul.f32 %v4178, %v4192
        %v4199 = vmul.f32 %v4179, %v4192
        %v4200 = vmul.f32 %v4180, %v4192
        %v4201 = vmul.f32 %v4181, %v4192
        %v4202 = vmul.f32 %v4182, %v4192
        %v4203 = vmul.f32 %v4183, %v4192
        %v4204 = vmul.f32 %v4184, %v4192
        %v4205 = vmul.f32 %v4185, %v4192
        %v4206 = vmul.f32 %v4186, %v4192
        %v4207 = vmul.f32 %v4187, %v4192
        %v4208 = vmul.f32 %v4188, %v4192
        %v4209 = vlaneseq
        %v4210 = vshrl.u32 %v4209, 7
        %v4211 = vsub.s32 4, %v4210
        %v4212 = vrot.slane %v2358, %v4211
        %v4213 = vadd.f32 %v4193, %v4212
        %v4214 = vadd.f32 %v4194, %v4212
        %v4215 = vadd.f32 %v4195, %v4212
        %v4216 = vadd.f32 %v4196, %v4212
        %v4217 = vadd.f32 %v4197, %v4212
        %v4218 = vadd.f32 %v4198, %v4212
        %v4219 = vadd.f32 %v4199, %v4212
        %v4220 = vadd.f32 %v4200, %v4212
        %v4221 = vadd.f32 %v4201, %v4212
        %v4222 = vadd.f32 %v4202, %v4212
        %v4223 = vadd.f32 %v4203, %v4212
        %v4224 = vadd.f32 %v4204, %v4212
        %v4225 = vadd.f32 %v4205, %v4212
        %v4226 = vadd.f32 %v4206, %v4212
        %v4227 = vadd.f32 %v4207, %v4212
        %v4228 = vadd.f32 %v4208, %v4212
        %v4229 = vadd.f32 %v3203, %v4213
        %v4230 = vadd.f32 %v3204, %v4214
        %v4231 = vadd.f32 %v3205, %v4215
        %v4232 = vadd.f32 %v3206, %v4216
        %v4233 = vadd.f32 %v3207, %v4217
        %v4234 = vadd.f32 %v3208, %v4218
        %v4235 = vadd.f32 %v3209, %v4219
        %v4236 = vadd.f32 %v3210, %v4220
        %v4237 = vadd.f32 %v3211, %v4221
        %v4238 = vadd.f32 %v3212, %v4222
        %v4239 = vadd.f32 %v3213, %v4223
        %v4240 = vadd.f32 %v3214, %v4224
        %v4241 = vadd.f32 %v3215, %v4225
        %v4242 = vadd.f32 %v3216, %v4226
        %v4243 = vadd.f32 %v3217, %v4227
        %v4244 = vadd.f32 %v3218, %v4228
        %4245 = vst [vmem:[#allocation5] sm:$0xff] %v4229
        %4246 = vst [vmem:[#allocation5 + $0x8] sm:$0xff] %v4230
        %4247 = vst [vmem:[#allocation5 + $0x10] sm:$0xff] %v4231
        %4248 = vst [vmem:[#allocation5 + $0x18] sm:$0xff] %v4232
        %4249 = vst [vmem:[#allocation5 + $0x20] sm:$0xff] %v4233
        %4250 = vst [vmem:[#allocation5 + $0x28] sm:$0xff] %v4234
        %4251 = vst [vmem:[#allocation5 + $0x30] sm:$0xff] %v4235
        %4252 = vst [vmem:[#allocation5 + $0x38] sm:$0xff] %v4236
        %4253 = vst [vmem:[#allocation5 + $0x40] sm:$0xff] %v4237
        %4254 = vst [vmem:[#allocation5 + $0x48] sm:$0xff] %v4238
        %4255 = vst [vmem:[#allocation5 + $0x50] sm:$0xff] %v4239
        %4256 = vst [vmem:[#allocation5 + $0x58] sm:$0xff] %v4240
        %4257 = vst [vmem:[#allocation5 + $0x60] sm:$0xff] %v4241
        %4258 = vst [vmem:[#allocation5 + $0x68] sm:$0xff] %v4242
        %4259 = vst [vmem:[#allocation5 + $0x70] sm:$0xff] %v4243
        %4260 = vst [vmem:[#allocation5 + $0x78] sm:$0xff] %v4244
        %v4261 = vld [vmem:[#allocation6] sm:$0xff]
        %v4262 = vld [vmem:[#allocation6 + $0x8] sm:$0xff]
        %v4263 = vld [vmem:[#allocation6 + $0x10] sm:$0xff]
        %v4264 = vld [vmem:[#allocation6 + $0x18] sm:$0xff]
        %v4265 = vld [vmem:[#allocation6 + $0x20] sm:$0xff]
        %v4266 = vld [vmem:[#allocation6 + $0x28] sm:$0xff]
        %v4267 = vld [vmem:[#allocation6 + $0x30] sm:$0xff]
        %v4268 = vld [vmem:[#allocation6 + $0x38] sm:$0xff]
        %v4269 = vld [vmem:[#allocation6 + $0x40] sm:$0xff]
        %v4270 = vld [vmem:[#allocation6 + $0x48] sm:$0xff]
        %v4271 = vld [vmem:[#allocation6 + $0x50] sm:$0xff]
        %v4272 = vld [vmem:[#allocation6 + $0x58] sm:$0xff]
        %v4273 = vld [vmem:[#allocation6 + $0x60] sm:$0xff]
        %v4274 = vld [vmem:[#allocation6 + $0x68] sm:$0xff]
        %v4275 = vld [vmem:[#allocation6 + $0x70] sm:$0xff]
        %v4276 = vld [vmem:[#allocation6 + $0x78] sm:$0xff]
        %v4277 = vpack.c.bf16 %v4230, %v4229
        %v4278 = vpack.c.bf16 %v4232, %v4231
        %v4279 = vpack.c.bf16 %v4234, %v4233
        %v4280 = vpack.c.bf16 %v4236, %v4235
        %v4281 = vpack.c.bf16 %v4238, %v4237
        %v4282 = vpack.c.bf16 %v4240, %v4239
        %v4283 = vpack.c.bf16 %v4242, %v4241
        %v4284 = vpack.c.bf16 %v4244, %v4243
        %4285 = vxpose.xlu0.c.b16.start [1/8] %v3227, 128
        %4286 = vxpose.xlu0.c.b16.cont [2/8] %v3228, 128
        %4287 = vxpose.xlu0.c.b16.cont [3/8] %v3229, 128
        %4288 = vxpose.xlu0.c.b16.cont [4/8] %v3230, 128
        %4289 = vxpose.xlu0.c.b16.cont [5/8] %v3231, 128
        %4290 = vxpose.xlu0.c.b16.cont [6/8] %v3232, 128
        %4291 = vxpose.xlu0.c.b16.cont [7/8] %v3233, 128
        %4292 = vxpose.xlu0.c.b16.end [8/8] %v3234, 128
        %v4293 = vpop.trf.xlu0
        %v4294 = vpop.trf.xlu0
        %v4295 = vpop.trf.xlu0
        %v4296 = vpop.trf.xlu0
        %v4297 = vpop.trf.xlu0
        %v4298 = vpop.trf.xlu0
        %v4299 = vpop.trf.xlu0
        %v4300 = vpop.trf.xlu0
        %4301 = vmatprep.subr.bf16.mxu0 0
        %4302 = vmatpush1.bf16.msra.mxu0 %v4277
        %4303 = vmatprep.subr.bf16.mxu0 0
        %4304 = vmatpush1.bf16.msra.mxu0 %v4278
        %4305 = vmatprep.subr.bf16.mxu0 0
        %4306 = vmatpush1.bf16.msra.mxu0 %v4279
        %4307 = vmatprep.subr.bf16.mxu0 0
        %4308 = vmatpush1.bf16.msra.mxu0 %v4280
        %4309 = vmatprep.subr.bf16.mxu0 0
        %4310 = vmatpush1.bf16.msra.mxu0 %v4281
        %4311 = vmatprep.subr.bf16.mxu0 0
        %4312 = vmatpush1.bf16.msra.mxu0 %v4282
        %4313 = vmatprep.subr.bf16.mxu0 0
        %4314 = vmatpush1.bf16.msra.mxu0 %v4283
        %4315 = vmatprep.subr.bf16.mxu0 0
        %4316 = vmatpush1.bf16.msra.mxu0 %v4284
        %4317 = vmatprep.subr.bf16.mxu0 0
        %4318 = vmatpush1.bf16.msra.mxu0 0
        %4319 = vmatprep.subr.bf16.mxu0 0
        %4320 = vmatpush1.bf16.msra.mxu0 0
        %4321 = vmatprep.subr.bf16.mxu0 0
        %4322 = vmatpush1.bf16.msra.mxu0 0
        %4323 = vmatprep.subr.bf16.mxu0 0
        %4324 = vmatpush1.bf16.msra.mxu0 0
        %4325 = vmatprep.subr.bf16.mxu0 0
        %4326 = vmatpush1.bf16.msra.mxu0 0
        %4327 = vmatprep.subr.bf16.mxu0 0
        %4328 = vmatpush1.bf16.msra.mxu0 0
        %4329 = vmatprep.subr.bf16.mxu0 0
        %4330 = vmatpush1.bf16.msra.mxu0 0
        %4331 = vmatprep.subr.bf16.mxu0 0
        %4332 = vmatpush1.bf16.msra.mxu0 0
        %4333 = vmatprep.mubr.bf16.mxu0 0
        %4334 = vmatmul.mubr.bf16.gmra.mrb[0].mxu0 %v4293
        %v4335 = vpop.f32.mrb[0].mxu0
        %v4336 = vadd.f32 0.0, %v4335
        %v4337 = vpop.f32.mrb[0].mxu0
        %v4338 = vpop.f32.mrb[0].mxu0
        %v4339 = vadd.f32 0.0, %v4338
        %v4340 = vpop.f32.mrb[0].mxu0
        %4341 = vmatprep.mubr.bf16.mxu0 0
        %4342 = vmatmul.mubr.bf16.gmra.mrb[0].mxu0 %v4294
        %v4343 = vpop.f32.mrb[0].mxu0
        %v4344 = vadd.f32 0.0, %v4343
        %v4345 = vpop.f32.mrb[0].mxu0
        %v4346 = vpop.f32.mrb[0].mxu0
        %v4347 = vadd.f32 0.0, %v4346
        %v4348 = vpop.f32.mrb[0].mxu0
        %4349 = vmatprep.mubr.bf16.mxu0 0
        %4350 = vmatmul.mubr.bf16.gmra.mrb[0].mxu0 %v4295
        %v4351 = vpop.f32.mrb[0].mxu0
        %v4352 = vadd.f32 0.0, %v4351
        %v4353 = vpop.f32.mrb[0].mxu0
        %v4354 = vpop.f32.mrb[0].mxu0
        %v4355 = vadd.f32 0.0, %v4354
        %v4356 = vpop.f32.mrb[0].mxu0
        %4357 = vmatprep.mubr.bf16.mxu0 0
        %4358 = vmatmul.mubr.bf16.gmra.mrb[0].mxu0 %v4296
        %v4359 = vpop.f32.mrb[0].mxu0
        %v4360 = vadd.f32 0.0, %v4359
        %v4361 = vpop.f32.mrb[0].mxu0
        %v4362 = vpop.f32.mrb[0].mxu0
        %v4363 = vadd.f32 0.0, %v4362
        %v4364 = vpop.f32.mrb[0].mxu0
        %4365 = vmatprep.mubr.bf16.mxu0 0
        %4366 = vmatmul.mubr.bf16.gmra.mrb[0].mxu0 %v4297
        %v4367 = vpop.f32.mrb[0].mxu0
        %v4368 = vadd.f32 0.0, %v4367
        %v4369 = vpop.f32.mrb[0].mxu0
        %v4370 = vpop.f32.mrb[0].mxu0
        %v4371 = vadd.f32 0.0, %v4370
        %v4372 = vpop.f32.mrb[0].mxu0
        %4373 = vmatprep.mubr.bf16.mxu0 0
        %4374 = vmatmul.mubr.bf16.gmra.mrb[0].mxu0 %v4298
        %v4375 = vpop.f32.mrb[0].mxu0
        %v4376 = vadd.f32 0.0, %v4375
        %v4377 = vpop.f32.mrb[0].mxu0
        %v4378 = vpop.f32.mrb[0].mxu0
        %v4379 = vadd.f32 0.0, %v4378
        %v4380 = vpop.f32.mrb[0].mxu0
        %4381 = vmatprep.mubr.bf16.mxu0 0
        %4382 = vmatmul.mubr.bf16.gmra.mrb[0].mxu0 %v4299
        %v4383 = vpop.f32.mrb[0].mxu0
        %v4384 = vadd.f32 0.0, %v4383
        %v4385 = vpop.f32.mrb[0].mxu0
        %v4386 = vpop.f32.mrb[0].mxu0
        %v4387 = vadd.f32 0.0, %v4386
        %v4388 = vpop.f32.mrb[0].mxu0
        %4389 = vmatprep.mubr.bf16.mxu0 0
        %4390 = vmatmul.mubr.bf16.gmra.mrb[0].mxu0 %v4300
        %v4391 = vpop.f32.mrb[0].mxu0
        %v4392 = vadd.f32 0.0, %v4391
        %v4393 = vpop.f32.mrb[0].mxu0
        %v4394 = vpop.f32.mrb[0].mxu0
        %v4395 = vadd.f32 0.0, %v4394
        %v4396 = vpop.f32.mrb[0].mxu0
        %4397 = vdwg.mxu0
        %v4398 = vadd.f32 %v4261, %v4336
        %v4399 = vadd.f32 %v4262, %v4339
        %v4400 = vadd.f32 %v4263, %v4344
        %v4401 = vadd.f32 %v4264, %v4347
        %v4402 = vadd.f32 %v4265, %v4352
        %v4403 = vadd.f32 %v4266, %v4355
        %v4404 = vadd.f32 %v4267, %v4360
        %v4405 = vadd.f32 %v4268, %v4363
        %v4406 = vadd.f32 %v4269, %v4368
        %v4407 = vadd.f32 %v4270, %v4371
        %v4408 = vadd.f32 %v4271, %v4376
        %v4409 = vadd.f32 %v4272, %v4379
        %v4410 = vadd.f32 %v4273, %v4384
        %v4411 = vadd.f32 %v4274, %v4387
        %v4412 = vadd.f32 %v4275, %v4392
        %v4413 = vadd.f32 %v4276, %v4395
        %4414 = vst [vmem:[#allocation6] sm:$0xff] %v4398
        %4415 = vst [vmem:[#allocation6 + $0x8] sm:$0xff] %v4399
        %4416 = vst [vmem:[#allocation6 + $0x10] sm:$0xff] %v4400
        %4417 = vst [vmem:[#allocation6 + $0x18] sm:$0xff] %v4401
        %4418 = vst [vmem:[#allocation6 + $0x20] sm:$0xff] %v4402
        %4419 = vst [vmem:[#allocation6 + $0x28] sm:$0xff] %v4403
        %4420 = vst [vmem:[#allocation6 + $0x30] sm:$0xff] %v4404
        %4421 = vst [vmem:[#allocation6 + $0x38] sm:$0xff] %v4405
        %4422 = vst [vmem:[#allocation6 + $0x40] sm:$0xff] %v4406
        %4423 = vst [vmem:[#allocation6 + $0x48] sm:$0xff] %v4407
        %4424 = vst [vmem:[#allocation6 + $0x50] sm:$0xff] %v4408
        %4425 = vst [vmem:[#allocation6 + $0x58] sm:$0xff] %v4409
        %4426 = vst [vmem:[#allocation6 + $0x60] sm:$0xff] %v4410
        %4427 = vst [vmem:[#allocation6 + $0x68] sm:$0xff] %v4411
        %4428 = vst [vmem:[#allocation6 + $0x70] sm:$0xff] %v4412
        %4429 = vst [vmem:[#allocation6 + $0x78] sm:$0xff] %v4413
        %v4430 = vld [vmem:[%s1111] sm:$0x1f]
        %v4431 = vld [vmem:[#allocation6] sm:$0xff]
        %v4432 = vld [vmem:[#allocation6 + $0x8] sm:$0xff]
        %v4433 = vld [vmem:[#allocation6 + $0x10] sm:$0xff]
        %v4434 = vld [vmem:[#allocation6 + $0x18] sm:$0xff]
        %v4435 = vld [vmem:[#allocation6 + $0x20] sm:$0xff]
        %v4436 = vld [vmem:[#allocation6 + $0x28] sm:$0xff]
        %v4437 = vld [vmem:[#allocation6 + $0x30] sm:$0xff]
        %v4438 = vld [vmem:[#allocation6 + $0x38] sm:$0xff]
        %v4439 = vld [vmem:[#allocation6 + $0x40] sm:$0xff]
        %v4440 = vld [vmem:[#allocation6 + $0x48] sm:$0xff]
        %v4441 = vld [vmem:[#allocation6 + $0x50] sm:$0xff]
        %v4442 = vld [vmem:[#allocation6 + $0x58] sm:$0xff]
        %v4443 = vld [vmem:[#allocation6 + $0x60] sm:$0xff]
        %v4444 = vld [vmem:[#allocation6 + $0x68] sm:$0xff]
        %v4445 = vld [vmem:[#allocation6 + $0x70] sm:$0xff]
        %v4446 = vld [vmem:[#allocation6 + $0x78] sm:$0xff]
        %v4447 = vpack.c.bf16 %v4432, %v4431
        %v4448 = vpack.c.bf16 %v4434, %v4433
        %v4449 = vpack.c.bf16 %v4436, %v4435
        %v4450 = vpack.c.bf16 %v4438, %v4437
        %v4451 = vpack.c.bf16 %v4440, %v4439
        %v4452 = vpack.c.bf16 %v4442, %v4441
        %v4453 = vpack.c.bf16 %v4444, %v4443
        %v4454 = vpack.c.bf16 %v4446, %v4445
        %v4455 = vld [vmem:[%s974] sm:$0xf]
        %v4456 = vld [vmem:[%s974 + $0x4] sm:$0xf]
        %v4457 = vld [vmem:[%s974 + $0x8] sm:$0xf]
        %v4458 = vld [vmem:[%s974 + $0xc] sm:$0xf]
        %v4459 = vld [vmem:[%s974 + $0x10] sm:$0xf]
        %v4460 = vld [vmem:[%s974 + $0x14] sm:$0xf]
        %v4461 = vld [vmem:[%s974 + $0x18] sm:$0xf]
        %v4462 = vld [vmem:[%s974 + $0x1c] sm:$0xf]
        %v4463 = vld [vmem:[%s974 + $0x20] sm:$0xf]
        %v4464 = vld [vmem:[%s974 + $0x24] sm:$0xf]
        %v4465 = vld [vmem:[%s974 + $0x28] sm:$0xf]
        %v4466 = vld [vmem:[%s974 + $0x2c] sm:$0xf]
        %v4467 = vld [vmem:[%s974 + $0x30] sm:$0xf]
        %v4468 = vld [vmem:[%s974 + $0x34] sm:$0xf]
        %v4469 = vld [vmem:[%s974 + $0x38] sm:$0xf]
        %v4470 = vld [vmem:[%s974 + $0x3c] sm:$0xf]
        %v4471 = vld [vmem:[%s974 + $0x40] sm:$0xf]
        %v4472 = vld [vmem:[%s974 + $0x44] sm:$0xf]
        %v4473 = vld [vmem:[%s974 + $0x48] sm:$0xf]
        %v4474 = vld [vmem:[%s974 + $0x4c] sm:$0xf]
        %v4475 = vld [vmem:[%s974 + $0x50] sm:$0xf]
        %v4476 = vld [vmem:[%s974 + $0x54] sm:$0xf]
        %v4477 = vld [vmem:[%s974 + $0x58] sm:$0xf]
        %v4478 = vld [vmem:[%s974 + $0x5c] sm:$0xf]
        %v4479 = vld [vmem:[%s974 + $0x60] sm:$0xf]
        %v4480 = vld [vmem:[%s974 + $0x64] sm:$0xf]
        %v4481 = vld [vmem:[%s974 + $0x68] sm:$0xf]
        %v4482 = vld [vmem:[%s974 + $0x6c] sm:$0xf]
        %v4483 = vld [vmem:[%s974 + $0x70] sm:$0xf]
        %v4484 = vld [vmem:[%s974 + $0x74] sm:$0xf]
        %v4485 = vld [vmem:[%s974 + $0x78] sm:$0xf]
        %v4486 = vld [vmem:[%s974 + $0x7c] sm:$0xf]
        %v4487 = vld [vmem:[%s983] sm:$0xf]
        %v4488 = vld [vmem:[%s983 + $0x4] sm:$0xf]
        %v4489 = vld [vmem:[%s983 + $0x8] sm:$0xf]
        %v4490 = vld [vmem:[%s983 + $0xc] sm:$0xf]
        %v4491 = vld [vmem:[%s983 + $0x10] sm:$0xf]
        %v4492 = vld [vmem:[%s983 + $0x14] sm:$0xf]
        %v4493 = vld [vmem:[%s983 + $0x18] sm:$0xf]
        %v4494 = vld [vmem:[%s983 + $0x1c] sm:$0xf]
        %v4495 = vld [vmem:[%s983 + $0x20] sm:$0xf]
        %v4496 = vld [vmem:[%s983 + $0x24] sm:$0xf]
        %v4497 = vld [vmem:[%s983 + $0x28] sm:$0xf]
        %v4498 = vld [vmem:[%s983 + $0x2c] sm:$0xf]
        %v4499 = vld [vmem:[%s983 + $0x30] sm:$0xf]
        %v4500 = vld [vmem:[%s983 + $0x34] sm:$0xf]
        %v4501 = vld [vmem:[%s983 + $0x38] sm:$0xf]
        %v4502 = vld [vmem:[%s983 + $0x3c] sm:$0xf]
        %v4503 = vld [vmem:[%s992] sm:$0xf]
        %v4504 = vld [vmem:[%s992 + $0x4] sm:$0xf]
        %v4505 = vld [vmem:[%s992 + $0x8] sm:$0xf]
        %v4506 = vld [vmem:[%s992 + $0xc] sm:$0xf]
        %v4507 = vld [vmem:[%s992 + $0x10] sm:$0xf]
        %v4508 = vld [vmem:[%s992 + $0x14] sm:$0xf]
        %v4509 = vld [vmem:[%s992 + $0x18] sm:$0xf]
        %v4510 = vld [vmem:[%s992 + $0x1c] sm:$0xf]
        %v4511 = vld [vmem:[%s992 + $0x20] sm:$0xf]
        %v4512 = vld [vmem:[%s992 + $0x24] sm:$0xf]
        %v4513 = vld [vmem:[%s992 + $0x28] sm:$0xf]
        %v4514 = vld [vmem:[%s992 + $0x2c] sm:$0xf]
        %v4515 = vld [vmem:[%s992 + $0x30] sm:$0xf]
        %v4516 = vld [vmem:[%s992 + $0x34] sm:$0xf]
        %v4517 = vld [vmem:[%s992 + $0x38] sm:$0xf]
        %v4518 = vld [vmem:[%s992 + $0x3c] sm:$0xf]
        %v4519 = vlaneseq
        %v4520 = vshrl.u32 %v4519, 7
        %v4521 = vsub.s32 0, %v4520
        %v4522 = vrot.slane %v4430, %v4521
        %v4555 = vunpack.c.l.b16 %v4455
        %v4556 = vunpack.c.l.b16 %v4456
        %v4557 = vunpack.c.l.b16 %v4457
        %v4558 = vunpack.c.l.b16 %v4458
        %v4559 = vunpack.c.l.b16 %v4459
        %v4560 = vunpack.c.l.b16 %v4460
        %v4561 = vunpack.c.l.b16 %v4461
        %v4562 = vunpack.c.l.b16 %v4462
        %v4563 = vunpack.c.l.b16 %v4463
        %v4564 = vunpack.c.l.b16 %v4464
        %v4565 = vunpack.c.l.b16 %v4465
        %v4566 = vunpack.c.l.b16 %v4466
        %v4567 = vunpack.c.l.b16 %v4467
        %v4568 = vunpack.c.l.b16 %v4468
        %v4569 = vunpack.c.l.b16 %v4469
        %v4570 = vunpack.c.l.b16 %v4470
        %v4571 = vunpack.c.l.b16 %v4471
        %v4572 = vunpack.c.l.b16 %v4472
        %v4573 = vunpack.c.l.b16 %v4473
        %v4574 = vunpack.c.l.b16 %v4474
        %v4575 = vunpack.c.l.b16 %v4475
        %v4576 = vunpack.c.l.b16 %v4476
        %v4577 = vunpack.c.l.b16 %v4477
        %v4578 = vunpack.c.l.b16 %v4478
        %v4579 = vunpack.c.l.b16 %v4479
        %v4580 = vunpack.c.l.b16 %v4480
        %v4581 = vunpack.c.l.b16 %v4481
        %v4582 = vunpack.c.l.b16 %v4482
        %v4583 = vunpack.c.l.b16 %v4483
        %v4584 = vunpack.c.l.b16 %v4484
        %v4585 = vunpack.c.l.b16 %v4485
        %v4586 = vunpack.c.l.b16 %v4486
        %v4587 = vpack.c.b16 %v4556, %v4555
        %v4588 = vpack.c.b16 %v4558, %v4557
        %v4589 = vpack.c.b16 %v4560, %v4559
        %v4590 = vpack.c.b16 %v4562, %v4561
        %v4591 = vpack.c.b16 %v4564, %v4563
        %v4592 = vpack.c.b16 %v4566, %v4565
        %v4593 = vpack.c.b16 %v4568, %v4567
        %v4594 = vpack.c.b16 %v4570, %v4569
        %v4595 = vpack.c.b16 %v4572, %v4571
        %v4596 = vpack.c.b16 %v4574, %v4573
        %v4597 = vpack.c.b16 %v4576, %v4575
        %v4598 = vpack.c.b16 %v4578, %v4577
        %v4599 = vpack.c.b16 %v4580, %v4579
        %v4600 = vpack.c.b16 %v4582, %v4581
        %v4601 = vpack.c.b16 %v4584, %v4583
        %v4602 = vpack.c.b16 %v4586, %v4585
        %4619 = vmatprep.subr.bf16.mxu0 0
        %4620 = vmatpush1.bf16.msra.mxu0 %v4587
        %4621 = vmatprep.subr.bf16.mxu0 0
        %4622 = vmatpush1.bf16.msra.mxu0 %v4588
        %4623 = vmatprep.subr.bf16.mxu0 0
        %4624 = vmatpush1.bf16.msra.mxu0 %v4589
        %4625 = vmatprep.subr.bf16.mxu0 0
        %4626 = vmatpush1.bf16.msra.mxu0 %v4590
        %4627 = vmatprep.subr.bf16.mxu0 0
        %4628 = vmatpush1.bf16.msra.mxu0 %v4591
        %4629 = vmatprep.subr.bf16.mxu0 0
        %4630 = vmatpush1.bf16.msra.mxu0 %v4592
        %4631 = vmatprep.subr.bf16.mxu0 0
        %4632 = vmatpush1.bf16.msra.mxu0 %v4593
        %4633 = vmatprep.subr.bf16.mxu0 0
        %4634 = vmatpush1.bf16.msra.mxu0 %v4594
        %4635 = vmatprep.subr.bf16.mxu0 0
        %4636 = vmatpush1.bf16.msra.mxu0 %v4595
        %4637 = vmatprep.subr.bf16.mxu0 0
        %4638 = vmatpush1.bf16.msra.mxu0 %v4596
        %4639 = vmatprep.subr.bf16.mxu0 0
        %4640 = vmatpush1.bf16.msra.mxu0 %v4597
        %4641 = vmatprep.subr.bf16.mxu0 0
        %4642 = vmatpush1.bf16.msra.mxu0 %v4598
        %4643 = vmatprep.subr.bf16.mxu0 0
        %4644 = vmatpush1.bf16.msra.mxu0 %v4599
        %4645 = vmatprep.subr.bf16.mxu0 0
        %4646 = vmatpush1.bf16.msra.mxu0 %v4600
        %4647 = vmatprep.subr.bf16.mxu0 0
        %4648 = vmatpush1.bf16.msra.mxu0 %v4601
        %4649 = vmatprep.subr.bf16.mxu0 0
        %4650 = vmatpush1.bf16.msra.mxu0 %v4602
        %4651 = vmatprep.mubr.bf16.mxu0 %v4447
        %4652 = vmatmul.mubr.bf16.gmra.mrb[0].mxu0 %v2093
        %v4653 = vpop.f32.mrb[0].mxu0
        %v4654 = vadd.f32 %v4522, %v4653
        %v4655 = vpop.f32.mrb[0].mxu0
        %v4656 = vpop.f32.mrb[0].mxu0
        %v4657 = vadd.f32 %v4522, %v4656
        %v4658 = vpop.f32.mrb[0].mxu0
        %4659 = vmatprep.mubr.bf16.mxu0 %v4448
        %4660 = vmatmul.mubr.bf16.gmra.mrb[0].mxu0 %v2094
        %v4661 = vpop.f32.mrb[0].mxu0
        %v4662 = vadd.f32 %v4522, %v4661
        %v4663 = vpop.f32.mrb[0].mxu0
        %v4664 = vpop.f32.mrb[0].mxu0
        %v4665 = vadd.f32 %v4522, %v4664
        %v4666 = vpop.f32.mrb[0].mxu0
        %4667 = vmatprep.mubr.bf16.mxu0 %v4449
        %4668 = vmatmul.mubr.bf16.gmra.mrb[0].mxu0 %v2095
        %v4669 = vpop.f32.mrb[0].mxu0
        %v4670 = vadd.f32 %v4522, %v4669
        %v4671 = vpop.f32.mrb[0].mxu0
        %v4672 = vpop.f32.mrb[0].mxu0
        %v4673 = vadd.f32 %v4522, %v4672
        %v4674 = vpop.f32.mrb[0].mxu0
        %4675 = vmatprep.mubr.bf16.mxu0 %v4450
        %4676 = vmatmul.mubr.bf16.gmra.mrb[0].mxu0 %v2096
        %v4677 = vpop.f32.mrb[0].mxu0
        %v4678 = vadd.f32 %v4522, %v4677
        %v4679 = vpop.f32.mrb[0].mxu0
        %v4680 = vpop.f32.mrb[0].mxu0
        %v4681 = vadd.f32 %v4522, %v4680
        %v4682 = vpop.f32.mrb[0].mxu0
        %4683 = vmatprep.mubr.bf16.mxu0 %v4451
        %4684 = vmatmul.mubr.bf16.gmra.mrb[0].mxu0 %v2097
        %v4685 = vpop.f32.mrb[0].mxu0
        %v4686 = vadd.f32 %v4522, %v4685
        %v4687 = vpop.f32.mrb[0].mxu0
        %v4688 = vpop.f32.mrb[0].mxu0
        %v4689 = vadd.f32 %v4522, %v4688
        %v4690 = vpop.f32.mrb[0].mxu0
        %4691 = vmatprep.mubr.bf16.mxu0 %v4452
        %4692 = vmatmul.mubr.bf16.gmra.mrb[0].mxu0 %v2098
        %v4693 = vpop.f32.mrb[0].mxu0
        %v4694 = vadd.f32 %v4522, %v4693
        %v4695 = vpop.f32.mrb[0].mxu0
        %v4696 = vpop.f32.mrb[0].mxu0
        %v4697 = vadd.f32 %v4522, %v4696
        %v4698 = vpop.f32.mrb[0].mxu0
        %4699 = vmatprep.mubr.bf16.mxu0 %v4453
        %4700 = vmatmul.mubr.bf16.gmra.mrb[0].mxu0 %v2099
        %v4701 = vpop.f32.mrb[0].mxu0
        %v4702 = vadd.f32 %v4522, %v4701
        %v4703 = vpop.f32.mrb[0].mxu0
        %v4704 = vpop.f32.mrb[0].mxu0
        %v4705 = vadd.f32 %v4522, %v4704
        %v4706 = vpop.f32.mrb[0].mxu0
        %4707 = vmatprep.mubr.bf16.mxu0 %v4454
        %4708 = vmatmul.mubr.bf16.gmra.mrb[0].mxu0 %v2100
        %v4709 = vpop.f32.mrb[0].mxu0
        %v4710 = vadd.f32 %v4522, %v4709
        %v4711 = vpop.f32.mrb[0].mxu0
        %v4712 = vpop.f32.mrb[0].mxu0
        %v4713 = vadd.f32 %v4522, %v4712
        %v4714 = vpop.f32.mrb[0].mxu0
        %4715 = vdwg.mxu0
        %v4716 = vmax.f32 %v4654, 0.0
        %v4717 = vmax.f32 %v4657, 0.0
        %v4718 = vmax.f32 %v4662, 0.0
        %v4719 = vmax.f32 %v4665, 0.0
        %v4720 = vmax.f32 %v4670, 0.0
        %v4721 = vmax.f32 %v4673, 0.0
        %v4722 = vmax.f32 %v4678, 0.0
        %v4723 = vmax.f32 %v4681, 0.0
        %v4724 = vmax.f32 %v4686, 0.0
        %v4725 = vmax.f32 %v4689, 0.0
        %v4726 = vmax.f32 %v4694, 0.0
        %v4727 = vmax.f32 %v4697, 0.0
        %v4728 = vmax.f32 %v4702, 0.0
        %v4729 = vmax.f32 %v4705, 0.0
        %v4730 = vmax.f32 %v4710, 0.0
        %v4731 = vmax.f32 %v4713, 0.0
        %v4732 = vpack.c.bf16 %v4717, %v4716
        %v4733 = vpack.c.bf16 %v4719, %v4718
        %v4734 = vpack.c.bf16 %v4721, %v4720
        %v4735 = vpack.c.bf16 %v4723, %v4722
        %v4736 = vpack.c.bf16 %v4725, %v4724
        %v4737 = vpack.c.bf16 %v4727, %v4726
        %v4738 = vpack.c.bf16 %v4729, %v4728
        %v4739 = vpack.c.bf16 %v4731, %v4730
        %v4740 = vlaneseq
        %v4741 = vshrl.u32 %v4740, 7
        %v4742 = vsub.s32 1, %v4741
        %v4743 = vrot.slane %v4430, %v4742
        %v4760 = vunpack.c.l.b16 %v4487
        %v4761 = vunpack.c.l.b16 %v4488
        %v4762 = vunpack.c.l.b16 %v4489
        %v4763 = vunpack.c.l.b16 %v4490
        %v4764 = vunpack.c.l.b16 %v4491
        %v4765 = vunpack.c.l.b16 %v4492
        %v4766 = vunpack.c.l.b16 %v4493
        %v4767 = vunpack.c.l.b16 %v4494
        %v4768 = vunpack.c.l.b16 %v4495
        %v4769 = vunpack.c.l.b16 %v4496
        %v4770 = vunpack.c.l.b16 %v4497
        %v4771 = vunpack.c.l.b16 %v4498
        %v4772 = vunpack.c.l.b16 %v4499
        %v4773 = vunpack.c.l.b16 %v4500
        %v4774 = vunpack.c.l.b16 %v4501
        %v4775 = vunpack.c.l.b16 %v4502
        %v4776 = vpack.c.b16 %v4761, %v4760
        %v4777 = vpack.c.b16 %v4763, %v4762
        %v4778 = vpack.c.b16 %v4765, %v4764
        %v4779 = vpack.c.b16 %v4767, %v4766
        %v4780 = vpack.c.b16 %v4769, %v4768
        %v4781 = vpack.c.b16 %v4771, %v4770
        %v4782 = vpack.c.b16 %v4773, %v4772
        %v4783 = vpack.c.b16 %v4775, %v4774
        %4792 = vmatprep.subr.bf16.mxu0 0
        %4793 = vmatpush1.bf16.msra.mxu0 %v4776
        %4794 = vmatprep.subr.bf16.mxu0 0
        %4795 = vmatpush1.bf16.msra.mxu0 %v4777
        %4796 = vmatprep.subr.bf16.mxu0 0
        %4797 = vmatpush1.bf16.msra.mxu0 %v4778
        %4798 = vmatprep.subr.bf16.mxu0 0
        %4799 = vmatpush1.bf16.msra.mxu0 %v4779
        %4800 = vmatprep.subr.bf16.mxu0 0
        %4801 = vmatpush1.bf16.msra.mxu0 %v4780
        %4802 = vmatprep.subr.bf16.mxu0 0
        %4803 = vmatpush1.bf16.msra.mxu0 %v4781
        %4804 = vmatprep.subr.bf16.mxu0 0
        %4805 = vmatpush1.bf16.msra.mxu0 %v4782
        %4806 = vmatprep.subr.bf16.mxu0 0
        %4807 = vmatpush1.bf16.msra.mxu0 %v4783
        %4808 = vmatprep.subr.bf16.mxu0 0
        %4809 = vmatpush1.bf16.msra.mxu0 0
        %4810 = vmatprep.subr.bf16.mxu0 0
        %4811 = vmatpush1.bf16.msra.mxu0 0
        %4812 = vmatprep.subr.bf16.mxu0 0
        %4813 = vmatpush1.bf16.msra.mxu0 0
        %4814 = vmatprep.subr.bf16.mxu0 0
        %4815 = vmatpush1.bf16.msra.mxu0 0
        %4816 = vmatprep.subr.bf16.mxu0 0
        %4817 = vmatpush1.bf16.msra.mxu0 0
        %4818 = vmatprep.subr.bf16.mxu0 0
        %4819 = vmatpush1.bf16.msra.mxu0 0
        %4820 = vmatprep.subr.bf16.mxu0 0
        %4821 = vmatpush1.bf16.msra.mxu0 0
        %4822 = vmatprep.subr.bf16.mxu0 0
        %4823 = vmatpush1.bf16.msra.mxu0 0
        %4824 = vmatprep.mubr.bf16.mxu0 0
        %4825 = vmatmul.mubr.bf16.gmra.mrb[0].mxu0 %v4732
        %v4826 = vpop.f32.mrb[0].mxu0
        %v4827 = vadd.f32 %v4743, %v4826
        %v4828 = vpop.f32.mrb[0].mxu0
        %v4829 = vpop.f32.mrb[0].mxu0
        %v4830 = vadd.f32 %v4743, %v4829
        %v4831 = vpop.f32.mrb[0].mxu0
        %4832 = vmatprep.mubr.bf16.mxu0 0
        %4833 = vmatmul.mubr.bf16.gmra.mrb[0].mxu0 %v4733
        %v4834 = vpop.f32.mrb[0].mxu0
        %v4835 = vadd.f32 %v4743, %v4834
        %v4836 = vpop.f32.mrb[0].mxu0
        %v4837 = vpop.f32.mrb[0].mxu0
        %v4838 = vadd.f32 %v4743, %v4837
        %v4839 = vpop.f32.mrb[0].mxu0
        %4840 = vmatprep.mubr.bf16.mxu0 0
        %4841 = vmatmul.mubr.bf16.gmra.mrb[0].mxu0 %v4734
        %v4842 = vpop.f32.mrb[0].mxu0
        %v4843 = vadd.f32 %v4743, %v4842
        %v4844 = vpop.f32.mrb[0].mxu0
        %v4845 = vpop.f32.mrb[0].mxu0
        %v4846 = vadd.f32 %v4743, %v4845
        %v4847 = vpop.f32.mrb[0].mxu0
        %4848 = vmatprep.mubr.bf16.mxu0 0
        %4849 = vmatmul.mubr.bf16.gmra.mrb[0].mxu0 %v4735
        %v4850 = vpop.f32.mrb[0].mxu0
        %v4851 = vadd.f32 %v4743, %v4850
        %v4852 = vpop.f32.mrb[0].mxu0
        %v4853 = vpop.f32.mrb[0].mxu0
        %v4854 = vadd.f32 %v4743, %v4853
        %v4855 = vpop.f32.mrb[0].mxu0
        %4856 = vmatprep.mubr.bf16.mxu0 0
        %4857 = vmatmul.mubr.bf16.gmra.mrb[0].mxu0 %v4736
        %v4858 = vpop.f32.mrb[0].mxu0
        %v4859 = vadd.f32 %v4743, %v4858
        %v4860 = vpop.f32.mrb[0].mxu0
        %v4861 = vpop.f32.mrb[0].mxu0
        %v4862 = vadd.f32 %v4743, %v4861
        %v4863 = vpop.f32.mrb[0].mxu0
        %4864 = vmatprep.mubr.bf16.mxu0 0
        %4865 = vmatmul.mubr.bf16.gmra.mrb[0].mxu0 %v4737
        %v4866 = vpop.f32.mrb[0].mxu0
        %v4867 = vadd.f32 %v4743, %v4866
        %v4868 = vpop.f32.mrb[0].mxu0
        %v4869 = vpop.f32.mrb[0].mxu0
        %v4870 = vadd.f32 %v4743, %v4869
        %v4871 = vpop.f32.mrb[0].mxu0
        %4872 = vmatprep.mubr.bf16.mxu0 0
        %4873 = vmatmul.mubr.bf16.gmra.mrb[0].mxu0 %v4738
        %v4874 = vpop.f32.mrb[0].mxu0
        %v4875 = vadd.f32 %v4743, %v4874
        %v4876 = vpop.f32.mrb[0].mxu0
        %v4877 = vpop.f32.mrb[0].mxu0
        %v4878 = vadd.f32 %v4743, %v4877
        %v4879 = vpop.f32.mrb[0].mxu0
        %4880 = vmatprep.mubr.bf16.mxu0 0
        %4881 = vmatmul.mubr.bf16.gmra.mrb[0].mxu0 %v4739
        %v4882 = vpop.f32.mrb[0].mxu0
        %v4883 = vadd.f32 %v4743, %v4882
        %v4884 = vpop.f32.mrb[0].mxu0
        %v4885 = vpop.f32.mrb[0].mxu0
        %v4886 = vadd.f32 %v4743, %v4885
        %v4887 = vpop.f32.mrb[0].mxu0
        %4888 = vdwg.mxu0
        %v4889 = vmax.f32 %v4827, 0.0
        %v4890 = vmax.f32 %v4830, 0.0
        %v4891 = vmax.f32 %v4835, 0.0
        %v4892 = vmax.f32 %v4838, 0.0
        %v4893 = vmax.f32 %v4843, 0.0
        %v4894 = vmax.f32 %v4846, 0.0
        %v4895 = vmax.f32 %v4851, 0.0
        %v4896 = vmax.f32 %v4854, 0.0
        %v4897 = vmax.f32 %v4859, 0.0
        %v4898 = vmax.f32 %v4862, 0.0
        %v4899 = vmax.f32 %v4867, 0.0
        %v4900 = vmax.f32 %v4870, 0.0
        %v4901 = vmax.f32 %v4875, 0.0
        %v4902 = vmax.f32 %v4878, 0.0
        %v4903 = vmax.f32 %v4883, 0.0
        %v4904 = vmax.f32 %v4886, 0.0
        %v4905 = vpack.c.bf16 %v4890, %v4889
        %v4906 = vpack.c.bf16 %v4892, %v4891
        %v4907 = vpack.c.bf16 %v4894, %v4893
        %v4908 = vpack.c.bf16 %v4896, %v4895
        %v4909 = vpack.c.bf16 %v4898, %v4897
        %v4910 = vpack.c.bf16 %v4900, %v4899
        %v4911 = vpack.c.bf16 %v4902, %v4901
        %v4912 = vpack.c.bf16 %v4904, %v4903
        %v4913 = vlaneseq
        %v4914 = vshrl.u32 %v4913, 7
        %v4915 = vsub.s32 2, %v4914
        %v4916 = vrot.slane %v4430, %v4915
        %v4933 = vunpack.c.l.b16 %v4503
        %v4934 = vunpack.c.l.b16 %v4504
        %v4935 = vunpack.c.l.b16 %v4505
        %v4936 = vunpack.c.l.b16 %v4506
        %v4937 = vunpack.c.l.b16 %v4507
        %v4938 = vunpack.c.l.b16 %v4508
        %v4939 = vunpack.c.l.b16 %v4509
        %v4940 = vunpack.c.l.b16 %v4510
        %v4941 = vunpack.c.l.b16 %v4511
        %v4942 = vunpack.c.l.b16 %v4512
        %v4943 = vunpack.c.l.b16 %v4513
        %v4944 = vunpack.c.l.b16 %v4514
        %v4945 = vunpack.c.l.b16 %v4515
        %v4946 = vunpack.c.l.b16 %v4516
        %v4947 = vunpack.c.l.b16 %v4517
        %v4948 = vunpack.c.l.b16 %v4518
        %v4949 = vpack.c.b16 %v4934, %v4933
        %v4950 = vpack.c.b16 %v4936, %v4935
        %v4951 = vpack.c.b16 %v4938, %v4937
        %v4952 = vpack.c.b16 %v4940, %v4939
        %v4953 = vpack.c.b16 %v4942, %v4941
        %v4954 = vpack.c.b16 %v4944, %v4943
        %v4955 = vpack.c.b16 %v4946, %v4945
        %v4956 = vpack.c.b16 %v4948, %v4947
        %4965 = vmatprep.subr.bf16.mxu0 0
        %4966 = vmatpush1.bf16.msra.mxu0 %v4949
        %4967 = vmatprep.subr.bf16.mxu0 0
        %4968 = vmatpush1.bf16.msra.mxu0 %v4950
        %4969 = vmatprep.subr.bf16.mxu0 0
        %4970 = vmatpush1.bf16.msra.mxu0 %v4951
        %4971 = vmatprep.subr.bf16.mxu0 0
        %4972 = vmatpush1.bf16.msra.mxu0 %v4952
        %4973 = vmatprep.subr.bf16.mxu0 0
        %4974 = vmatpush1.bf16.msra.mxu0 %v4953
        %4975 = vmatprep.subr.bf16.mxu0 0
        %4976 = vmatpush1.bf16.msra.mxu0 %v4954
        %4977 = vmatprep.subr.bf16.mxu0 0
        %4978 = vmatpush1.bf16.msra.mxu0 %v4955
        %4979 = vmatprep.subr.bf16.mxu0 0
        %4980 = vmatpush1.bf16.msra.mxu0 %v4956
        %4981 = vmatprep.subr.bf16.mxu0 0
        %4982 = vmatpush1.bf16.msra.mxu0 0
        %4983 = vmatprep.subr.bf16.mxu0 0
        %4984 = vmatpush1.bf16.msra.mxu0 0
        %4985 = vmatprep.subr.bf16.mxu0 0
        %4986 = vmatpush1.bf16.msra.mxu0 0
        %4987 = vmatprep.subr.bf16.mxu0 0
        %4988 = vmatpush1.bf16.msra.mxu0 0
        %4989 = vmatprep.subr.bf16.mxu0 0
        %4990 = vmatpush1.bf16.msra.mxu0 0
        %4991 = vmatprep.subr.bf16.mxu0 0
        %4992 = vmatpush1.bf16.msra.mxu0 0
        %4993 = vmatprep.subr.bf16.mxu0 0
        %4994 = vmatpush1.bf16.msra.mxu0 0
        %4995 = vmatprep.subr.bf16.mxu0 0
        %4996 = vmatpush1.bf16.msra.mxu0 0
        %4997 = vmatprep.mubr.bf16.mxu0 0
        %4998 = vmatmul.mubr.bf16.gmra.mrb[0].mxu0 %v4905
        %v4999 = vpop.f32.mrb[0].mxu0
        %v5000 = vadd.f32 %v4916, %v4999
        %v5001 = vpop.f32.mrb[0].mxu0
        %v5002 = vpop.f32.mrb[0].mxu0
        %v5003 = vadd.f32 %v4916, %v5002
        %v5004 = vpop.f32.mrb[0].mxu0
        %5005 = vmatprep.mubr.bf16.mxu0 0
        %5006 = vmatmul.mubr.bf16.gmra.mrb[0].mxu0 %v4906
        %v5007 = vpop.f32.mrb[0].mxu0
        %v5008 = vadd.f32 %v4916, %v5007
        %v5009 = vpop.f32.mrb[0].mxu0
        %v5010 = vpop.f32.mrb[0].mxu0
        %v5011 = vadd.f32 %v4916, %v5010
        %v5012 = vpop.f32.mrb[0].mxu0
        %5013 = vmatprep.mubr.bf16.mxu0 0
        %5014 = vmatmul.mubr.bf16.gmra.mrb[0].mxu0 %v4907
        %v5015 = vpop.f32.mrb[0].mxu0
        %v5016 = vadd.f32 %v4916, %v5015
        %v5017 = vpop.f32.mrb[0].mxu0
        %v5018 = vpop.f32.mrb[0].mxu0
        %v5019 = vadd.f32 %v4916, %v5018
        %v5020 = vpop.f32.mrb[0].mxu0
        %5021 = vmatprep.mubr.bf16.mxu0 0
        %5022 = vmatmul.mubr.bf16.gmra.mrb[0].mxu0 %v4908
        %v5023 = vpop.f32.mrb[0].mxu0
        %v5024 = vadd.f32 %v4916, %v5023
        %v5025 = vpop.f32.mrb[0].mxu0
        %v5026 = vpop.f32.mrb[0].mxu0
        %v5027 = vadd.f32 %v4916, %v5026
        %v5028 = vpop.f32.mrb[0].mxu0
        %5029 = vmatprep.mubr.bf16.mxu0 0
        %5030 = vmatmul.mubr.bf16.gmra.mrb[0].mxu0 %v4909
        %v5031 = vpop.f32.mrb[0].mxu0
        %v5032 = vadd.f32 %v4916, %v5031
        %v5033 = vpop.f32.mrb[0].mxu0
        %v5034 = vpop.f32.mrb[0].mxu0
        %v5035 = vadd.f32 %v4916, %v5034
        %v5036 = vpop.f32.mrb[0].mxu0
        %5037 = vmatprep.mubr.bf16.mxu0 0
        %5038 = vmatmul.mubr.bf16.gmra.mrb[0].mxu0 %v4910
        %v5039 = vpop.f32.mrb[0].mxu0
        %v5040 = vadd.f32 %v4916, %v5039
        %v5041 = vpop.f32.mrb[0].mxu0
        %v5042 = vpop.f32.mrb[0].mxu0
        %v5043 = vadd.f32 %v4916, %v5042
        %v5044 = vpop.f32.mrb[0].mxu0
        %5045 = vmatprep.mubr.bf16.mxu0 0
        %5046 = vmatmul.mubr.bf16.gmra.mrb[0].mxu0 %v4911
        %v5047 = vpop.f32.mrb[0].mxu0
        %v5048 = vadd.f32 %v4916, %v5047
        %v5049 = vpop.f32.mrb[0].mxu0
        %v5050 = vpop.f32.mrb[0].mxu0
        %v5051 = vadd.f32 %v4916, %v5050
        %v5052 = vpop.f32.mrb[0].mxu0
        %5053 = vmatprep.mubr.bf16.mxu0 0
        %5054 = vmatmul.mubr.bf16.gmra.mrb[0].mxu0 %v4912
        %v5055 = vpop.f32.mrb[0].mxu0
        %v5056 = vadd.f32 %v4916, %v5055
        %v5057 = vpop.f32.mrb[0].mxu0
        %v5058 = vpop.f32.mrb[0].mxu0
        %v5059 = vadd.f32 %v4916, %v5058
        %v5060 = vpop.f32.mrb[0].mxu0
        %5061 = vdwg.mxu0
        %5062 = vadd.xlane.f32.xlu0 %v5000
        %v5063 = vpop.xlane.xlu0 %5062
        %5064 = vadd.xlane.f32.xlu0 %v5003
        %v5065 = vpop.xlane.xlu0 %5064
        %5066 = vadd.xlane.f32.xlu0 %v5008
        %v5067 = vpop.xlane.xlu0 %5066
        %5068 = vadd.xlane.f32.xlu0 %v5011
        %v5069 = vpop.xlane.xlu0 %5068
        %5070 = vadd.xlane.f32.xlu0 %v5016
        %v5071 = vpop.xlane.xlu0 %5070
        %5072 = vadd.xlane.f32.xlu0 %v5019
        %v5073 = vpop.xlane.xlu0 %5072
        %5074 = vadd.xlane.f32.xlu0 %v5024
        %v5075 = vpop.xlane.xlu0 %5074
        %5076 = vadd.xlane.f32.xlu0 %v5027
        %v5077 = vpop.xlane.xlu0 %5076
        %5078 = vadd.xlane.f32.xlu0 %v5032
        %v5079 = vpop.xlane.xlu0 %5078
        %5080 = vadd.xlane.f32.xlu0 %v5035
        %v5081 = vpop.xlane.xlu0 %5080
        %5082 = vadd.xlane.f32.xlu0 %v5040
        %v5083 = vpop.xlane.xlu0 %5082
        %5084 = vadd.xlane.f32.xlu0 %v5043
        %v5085 = vpop.xlane.xlu0 %5084
        %5086 = vadd.xlane.f32.xlu0 %v5048
        %v5087 = vpop.xlane.xlu0 %5086
        %5088 = vadd.xlane.f32.xlu0 %v5051
        %v5089 = vpop.xlane.xlu0 %5088
        %5090 = vadd.xlane.f32.xlu0 %v5056
        %v5091 = vpop.xlane.xlu0 %5090
        %5092 = vadd.xlane.f32.xlu0 %v5059
        %v5093 = vpop.xlane.xlu0 %5092
        %v5094 = vmul.f32 %v5063, %v4044
        %v5095 = vmul.f32 %v5065, %v4044
        %v5096 = vmul.f32 %v5067, %v4044
        %v5097 = vmul.f32 %v5069, %v4044
        %v5098 = vmul.f32 %v5071, %v4044
        %v5099 = vmul.f32 %v5073, %v4044
        %v5100 = vmul.f32 %v5075, %v4044
        %v5101 = vmul.f32 %v5077, %v4044
        %v5102 = vmul.f32 %v5079, %v4044
        %v5103 = vmul.f32 %v5081, %v4044
        %v5104 = vmul.f32 %v5083, %v4044
        %v5105 = vmul.f32 %v5085, %v4044
        %v5106 = vmul.f32 %v5087, %v4044
        %v5107 = vmul.f32 %v5089, %v4044
        %v5108 = vmul.f32 %v5091, %v4044
        %v5109 = vmul.f32 %v5093, %v4044
        %v5110 = vsub.f32 %v5000, %v5094
        %v5111 = vsub.f32 %v5003, %v5095
        %v5112 = vsub.f32 %v5008, %v5096
        %v5113 = vsub.f32 %v5011, %v5097
        %v5114 = vsub.f32 %v5016, %v5098
        %v5115 = vsub.f32 %v5019, %v5099
        %v5116 = vsub.f32 %v5024, %v5100
        %v5117 = vsub.f32 %v5027, %v5101
        %v5118 = vsub.f32 %v5032, %v5102
        %v5119 = vsub.f32 %v5035, %v5103
        %v5120 = vsub.f32 %v5040, %v5104
        %v5121 = vsub.f32 %v5043, %v5105
        %v5122 = vsub.f32 %v5048, %v5106
        %v5123 = vsub.f32 %v5051, %v5107
        %v5124 = vsub.f32 %v5056, %v5108
        %v5125 = vsub.f32 %v5059, %v5109
        %v5126 = vmul.f32 %v5110, %v5110
        %v5127 = vmul.f32 %v5111, %v5111
        %v5128 = vmul.f32 %v5112, %v5112
        %v5129 = vmul.f32 %v5113, %v5113
        %v5130 = vmul.f32 %v5114, %v5114
        %v5131 = vmul.f32 %v5115, %v5115
        %v5132 = vmul.f32 %v5116, %v5116
        %v5133 = vmul.f32 %v5117, %v5117
        %v5134 = vmul.f32 %v5118, %v5118
        %v5135 = vmul.f32 %v5119, %v5119
        %v5136 = vmul.f32 %v5120, %v5120
        %v5137 = vmul.f32 %v5121, %v5121
        %v5138 = vmul.f32 %v5122, %v5122
        %v5139 = vmul.f32 %v5123, %v5123
        %v5140 = vmul.f32 %v5124, %v5124
        %v5141 = vmul.f32 %v5125, %v5125
        %5142 = vadd.xlane.f32.xlu0 %v5126
        %v5143 = vpop.xlane.xlu0 %5142
        %5144 = vadd.xlane.f32.xlu0 %v5127
        %v5145 = vpop.xlane.xlu0 %5144
        %5146 = vadd.xlane.f32.xlu0 %v5128
        %v5147 = vpop.xlane.xlu0 %5146
        %5148 = vadd.xlane.f32.xlu0 %v5129
        %v5149 = vpop.xlane.xlu0 %5148
        %5150 = vadd.xlane.f32.xlu0 %v5130
        %v5151 = vpop.xlane.xlu0 %5150
        %5152 = vadd.xlane.f32.xlu0 %v5131
        %v5153 = vpop.xlane.xlu0 %5152
        %5154 = vadd.xlane.f32.xlu0 %v5132
        %v5155 = vpop.xlane.xlu0 %5154
        %5156 = vadd.xlane.f32.xlu0 %v5133
        %v5157 = vpop.xlane.xlu0 %5156
        %5158 = vadd.xlane.f32.xlu0 %v5134
        %v5159 = vpop.xlane.xlu0 %5158
        %5160 = vadd.xlane.f32.xlu0 %v5135
        %v5161 = vpop.xlane.xlu0 %5160
        %5162 = vadd.xlane.f32.xlu0 %v5136
        %v5163 = vpop.xlane.xlu0 %5162
        %5164 = vadd.xlane.f32.xlu0 %v5137
        %v5165 = vpop.xlane.xlu0 %5164
        %5166 = vadd.xlane.f32.xlu0 %v5138
        %v5167 = vpop.xlane.xlu0 %5166
        %5168 = vadd.xlane.f32.xlu0 %v5139
        %v5169 = vpop.xlane.xlu0 %5168
        %5170 = vadd.xlane.f32.xlu0 %v5140
        %v5171 = vpop.xlane.xlu0 %5170
        %5172 = vadd.xlane.f32.xlu0 %v5141
        %v5173 = vpop.xlane.xlu0 %5172
        %v5174 = vmul.f32 %v5143, %v4044
        %v5175 = vmul.f32 %v5145, %v4044
        %v5176 = vmul.f32 %v5147, %v4044
        %v5177 = vmul.f32 %v5149, %v4044
        %v5178 = vmul.f32 %v5151, %v4044
        %v5179 = vmul.f32 %v5153, %v4044
        %v5180 = vmul.f32 %v5155, %v4044
        %v5181 = vmul.f32 %v5157, %v4044
        %v5182 = vmul.f32 %v5159, %v4044
        %v5183 = vmul.f32 %v5161, %v4044
        %v5184 = vmul.f32 %v5163, %v4044
        %v5185 = vmul.f32 %v5165, %v4044
        %v5186 = vmul.f32 %v5167, %v4044
        %v5187 = vmul.f32 %v5169, %v4044
        %v5188 = vmul.f32 %v5171, %v4044
        %v5189 = vmul.f32 %v5173, %v4044
        %v5190 = vadd.f32 %v5174, 1e-05
        %v5191 = vadd.f32 %v5175, 1e-05
        %v5192 = vadd.f32 %v5176, 1e-05
        %v5193 = vadd.f32 %v5177, 1e-05
        %v5194 = vadd.f32 %v5178, 1e-05
        %v5195 = vadd.f32 %v5179, 1e-05
        %v5196 = vadd.f32 %v5180, 1e-05
        %v5197 = vadd.f32 %v5181, 1e-05
        %v5198 = vadd.f32 %v5182, 1e-05
        %v5199 = vadd.f32 %v5183, 1e-05
        %v5200 = vadd.f32 %v5184, 1e-05
        %v5201 = vadd.f32 %v5185, 1e-05
        %v5202 = vadd.f32 %v5186, 1e-05
        %v5203 = vadd.f32 %v5187, 1e-05
        %v5204 = vadd.f32 %v5188, 1e-05
        %v5205 = vadd.f32 %v5189, 1e-05
        %v5206 = vrsqrt.pop %v5190
        %v5207 = vrsqrt.pop %v5191
        %v5208 = vrsqrt.pop %v5192
        %v5209 = vrsqrt.pop %v5193
        %v5210 = vrsqrt.pop %v5194
        %v5211 = vrsqrt.pop %v5195
        %v5212 = vrsqrt.pop %v5196
        %v5213 = vrsqrt.pop %v5197
        %v5214 = vrsqrt.pop %v5198
        %v5215 = vrsqrt.pop %v5199
        %v5216 = vrsqrt.pop %v5200
        %v5217 = vrsqrt.pop %v5201
        %v5218 = vrsqrt.pop %v5202
        %v5219 = vrsqrt.pop %v5203
        %v5220 = vrsqrt.pop %v5204
        %v5221 = vrsqrt.pop %v5205
        %v5222 = vmul.f32 %v5110, %v5206
        %v5223 = vmul.f32 %v5111, %v5207
        %v5224 = vmul.f32 %v5112, %v5208
        %v5225 = vmul.f32 %v5113, %v5209
        %v5226 = vmul.f32 %v5114, %v5210
        %v5227 = vmul.f32 %v5115, %v5211
        %v5228 = vmul.f32 %v5116, %v5212
        %v5229 = vmul.f32 %v5117, %v5213
        %v5230 = vmul.f32 %v5118, %v5214
        %v5231 = vmul.f32 %v5119, %v5215
        %v5232 = vmul.f32 %v5120, %v5216
        %v5233 = vmul.f32 %v5121, %v5217
        %v5234 = vmul.f32 %v5122, %v5218
        %v5235 = vmul.f32 %v5123, %v5219
        %v5236 = vmul.f32 %v5124, %v5220
        %v5237 = vmul.f32 %v5125, %v5221
        %v5238 = vlaneseq
        %v5239 = vshrl.u32 %v5238, 7
        %v5240 = vsub.s32 3, %v5239
        %v5241 = vrot.slane %v4430, %v5240
        %v5242 = vmul.f32 %v5222, %v5241
        %v5243 = vmul.f32 %v5223, %v5241
        %v5244 = vmul.f32 %v5224, %v5241
        %v5245 = vmul.f32 %v5225, %v5241
        %v5246 = vmul.f32 %v5226, %v5241
        %v5247 = vmul.f32 %v5227, %v5241
        %v5248 = vmul.f32 %v5228, %v5241
        %v5249 = vmul.f32 %v5229, %v5241
        %v5250 = vmul.f32 %v5230, %v5241
        %v5251 = vmul.f32 %v5231, %v5241
        %v5252 = vmul.f32 %v5232, %v5241
        %v5253 = vmul.f32 %v5233, %v5241
        %v5254 = vmul.f32 %v5234, %v5241
        %v5255 = vmul.f32 %v5235, %v5241
        %v5256 = vmul.f32 %v5236, %v5241
        %v5257 = vmul.f32 %v5237, %v5241
        %v5258 = vlaneseq
        %v5259 = vshrl.u32 %v5258, 7
        %v5260 = vsub.s32 4, %v5259
        %v5261 = vrot.slane %v4430, %v5260
        %v5262 = vadd.f32 %v5242, %v5261
        %v5263 = vadd.f32 %v5243, %v5261
        %v5264 = vadd.f32 %v5244, %v5261
        %v5265 = vadd.f32 %v5245, %v5261
        %v5266 = vadd.f32 %v5246, %v5261
        %v5267 = vadd.f32 %v5247, %v5261
        %v5268 = vadd.f32 %v5248, %v5261
        %v5269 = vadd.f32 %v5249, %v5261
        %v5270 = vadd.f32 %v5250, %v5261
        %v5271 = vadd.f32 %v5251, %v5261
        %v5272 = vadd.f32 %v5252, %v5261
        %v5273 = vadd.f32 %v5253, %v5261
        %v5274 = vadd.f32 %v5254, %v5261
        %v5275 = vadd.f32 %v5255, %v5261
        %v5276 = vadd.f32 %v5256, %v5261
        %v5277 = vadd.f32 %v5257, %v5261
        %v5278 = vadd.f32 %v2077, %v5262
        %v5279 = vadd.f32 %v2078, %v5263
        %v5280 = vadd.f32 %v2079, %v5264
        %v5281 = vadd.f32 %v2080, %v5265
        %v5282 = vadd.f32 %v2081, %v5266
        %v5283 = vadd.f32 %v2082, %v5267
        %v5284 = vadd.f32 %v2083, %v5268
        %v5285 = vadd.f32 %v2084, %v5269
        %v5286 = vadd.f32 %v2085, %v5270
        %v5287 = vadd.f32 %v2086, %v5271
        %v5288 = vadd.f32 %v2087, %v5272
        %v5289 = vadd.f32 %v2088, %v5273
        %v5290 = vadd.f32 %v2089, %v5274
        %v5291 = vadd.f32 %v2090, %v5275
        %v5292 = vadd.f32 %v2091, %v5276
        %v5293 = vadd.f32 %v2092, %v5277
        %5294 = vst [vmem:[#allocation4] sm:$0xff] %v5278
        %5295 = vst [vmem:[#allocation4 + $0x8] sm:$0xff] %v5279
        %5296 = vst [vmem:[#allocation4 + $0x10] sm:$0xff] %v5280
        %5297 = vst [vmem:[#allocation4 + $0x18] sm:$0xff] %v5281
        %5298 = vst [vmem:[#allocation4 + $0x20] sm:$0xff] %v5282
        %5299 = vst [vmem:[#allocation4 + $0x28] sm:$0xff] %v5283
        %5300 = vst [vmem:[#allocation4 + $0x30] sm:$0xff] %v5284
        %5301 = vst [vmem:[#allocation4 + $0x38] sm:$0xff] %v5285
        %5302 = vst [vmem:[#allocation4 + $0x40] sm:$0xff] %v5286
        %5303 = vst [vmem:[#allocation4 + $0x48] sm:$0xff] %v5287
        %5304 = vst [vmem:[#allocation4 + $0x50] sm:$0xff] %v5288
        %5305 = vst [vmem:[#allocation4 + $0x58] sm:$0xff] %v5289
        %5306 = vst [vmem:[#allocation4 + $0x60] sm:$0xff] %v5290
        %5307 = vst [vmem:[#allocation4 + $0x68] sm:$0xff] %v5291
        %5308 = vst [vmem:[#allocation4 + $0x70] sm:$0xff] %v5292
        %5309 = vst [vmem:[#allocation4 + $0x78] sm:$0xff] %v5293
        %p5310 = scmp.eq.s32.totalorder %s41, 14
        // Predicated region
        $region257: #{incompr_ns_forward.1} parent=111 // pred_check
          %p5311 = pneg %p5310
        $region258: #{incompr_ns_forward.1} parent=111 // pred_check_branch
          %5313 = sbr.rel (%p5311) target = $region260
        $region259: #{incompr_ns_forward.1} parent=111 // pred_region
          %v5314 = vld [vmem:[#allocation4] sm:$0xff]
          %v5315 = vld [vmem:[#allocation4 + $0x8] sm:$0xff]
          %v5316 = vld [vmem:[#allocation4 + $0x10] sm:$0xff]
          %v5317 = vld [vmem:[#allocation4 + $0x18] sm:$0xff]
          %v5318 = vld [vmem:[#allocation4 + $0x20] sm:$0xff]
          %v5319 = vld [vmem:[#allocation4 + $0x28] sm:$0xff]
          %v5320 = vld [vmem:[#allocation4 + $0x30] sm:$0xff]
          %v5321 = vld [vmem:[#allocation4 + $0x38] sm:$0xff]
          %v5322 = vld [vmem:[#allocation4 + $0x40] sm:$0xff]
          %v5323 = vld [vmem:[#allocation4 + $0x48] sm:$0xff]
          %v5324 = vld [vmem:[#allocation4 + $0x50] sm:$0xff]
          %v5325 = vld [vmem:[#allocation4 + $0x58] sm:$0xff]
          %v5326 = vld [vmem:[#allocation4 + $0x60] sm:$0xff]
          %v5327 = vld [vmem:[#allocation4 + $0x68] sm:$0xff]
          %v5328 = vld [vmem:[#allocation4 + $0x70] sm:$0xff]
          %v5329 = vld [vmem:[#allocation4 + $0x78] sm:$0xff]
          %v5330 = vpack.c.bf16 %v5315, %v5314
          %v5331 = vpack.c.bf16 %v5317, %v5316
          %v5332 = vpack.c.bf16 %v5319, %v5318
          %v5333 = vpack.c.bf16 %v5321, %v5320
          %v5334 = vpack.c.bf16 %v5323, %v5322
          %v5335 = vpack.c.bf16 %v5325, %v5324
          %v5336 = vpack.c.bf16 %v5327, %v5326
          %v5337 = vpack.c.bf16 %v5329, %v5328
          %v5338 = vld [vmem:[#allocation27] sm:$0xf]
          %v5339 = vld [vmem:[#allocation27 + $0x4] sm:$0xf]
          %v5340 = vld [vmem:[#allocation27 + $0x8] sm:$0xf]
          %v5341 = vld [vmem:[#allocation27 + $0xc] sm:$0xf]
          %v5342 = vld [vmem:[#allocation27 + $0x10] sm:$0xf]
          %v5343 = vld [vmem:[#allocation27 + $0x14] sm:$0xf]
          %v5344 = vld [vmem:[#allocation27 + $0x18] sm:$0xf]
          %v5345 = vld [vmem:[#allocation27 + $0x1c] sm:$0xf]
          %v5346 = vld [vmem:[#allocation27 + $0x20] sm:$0xf]
          %v5347 = vld [vmem:[#allocation27 + $0x24] sm:$0xf]
          %v5348 = vld [vmem:[#allocation27 + $0x28] sm:$0xf]
          %v5349 = vld [vmem:[#allocation27 + $0x2c] sm:$0xf]
          %v5350 = vld [vmem:[#allocation27 + $0x30] sm:$0xf]
          %v5351 = vld [vmem:[#allocation27 + $0x34] sm:$0xf]
          %v5352 = vld [vmem:[#allocation27 + $0x38] sm:$0xf]
          %v5353 = vld [vmem:[#allocation27 + $0x3c] sm:$0xf]
          %v5354 = vld [vmem:[#allocation28] sm:$0xf]
          %v5355 = vld [vmem:[#allocation28 + $0x4] sm:$0xf]
          %v5356 = vld [vmem:[#allocation28 + $0x8] sm:$0xf]
          %v5357 = vld [vmem:[#allocation28 + $0xc] sm:$0xf]
          %v5358 = vld [vmem:[#allocation28 + $0x10] sm:$0xf]
          %v5359 = vld [vmem:[#allocation28 + $0x14] sm:$0xf]
          %v5360 = vld [vmem:[#allocation28 + $0x18] sm:$0xf]
          %v5361 = vld [vmem:[#allocation28 + $0x1c] sm:$0xf]
          %v5362 = vld [vmem:[#allocation28 + $0x20] sm:$0xf]
          %v5363 = vld [vmem:[#allocation28 + $0x24] sm:$0xf]
          %v5364 = vld [vmem:[#allocation28 + $0x28] sm:$0xf]
          %v5365 = vld [vmem:[#allocation28 + $0x2c] sm:$0xf]
          %v5366 = vld [vmem:[#allocation28 + $0x30] sm:$0xf]
          %v5367 = vld [vmem:[#allocation28 + $0x34] sm:$0xf]
          %v5368 = vld [vmem:[#allocation28 + $0x38] sm:$0xf]
          %v5369 = vld [vmem:[#allocation28 + $0x3c] sm:$0xf]
          %v5370 = vld [vmem:[#allocation29] sm:$0xf]
          %v5371 = vld [vmem:[#allocation29 + $0x4] sm:$0xf]
          %v5372 = vld [vmem:[#allocation29 + $0x8] sm:$0xf]
          %v5373 = vld [vmem:[#allocation29 + $0xc] sm:$0xf]
          %v5374 = vld [vmem:[#allocation29 + $0x10] sm:$0xf]
          %v5375 = vld [vmem:[#allocation29 + $0x14] sm:$0xf]
          %v5376 = vld [vmem:[#allocation29 + $0x18] sm:$0xf]
          %v5377 = vld [vmem:[#allocation29 + $0x1c] sm:$0xf]
          %v5378 = vld [vmem:[#allocation29 + $0x20] sm:$0xf]
          %v5379 = vld [vmem:[#allocation29 + $0x24] sm:$0xf]
          %v5380 = vld [vmem:[#allocation29 + $0x28] sm:$0xf]
          %v5381 = vld [vmem:[#allocation29 + $0x2c] sm:$0xf]
          %v5382 = vld [vmem:[#allocation29 + $0x30] sm:$0xf]
          %v5383 = vld [vmem:[#allocation29 + $0x34] sm:$0xf]
          %v5384 = vld [vmem:[#allocation29 + $0x38] sm:$0xf]
          %v5385 = vld [vmem:[#allocation29 + $0x3c] sm:$0xf]
          %v5386 = vld [vmem:[#allocation30] sm:$0x7]
          %v5387 = vlaneseq
          %v5388 = vshrl.u32 %v5387, 7
          %v5389 = vsub.s32 0, %v5388
          %v5390 = vrot.slane %v5386, %v5389
          %v5407 = vunpack.c.l.b16 %v5338
          %v5408 = vunpack.c.l.b16 %v5339
          %v5409 = vunpack.c.l.b16 %v5340
          %v5410 = vunpack.c.l.b16 %v5341
          %v5411 = vunpack.c.l.b16 %v5342
          %v5412 = vunpack.c.l.b16 %v5343
          %v5413 = vunpack.c.l.b16 %v5344
          %v5414 = vunpack.c.l.b16 %v5345
          %v5415 = vunpack.c.l.b16 %v5346
          %v5416 = vunpack.c.l.b16 %v5347
          %v5417 = vunpack.c.l.b16 %v5348
          %v5418 = vunpack.c.l.b16 %v5349
          %v5419 = vunpack.c.l.b16 %v5350
          %v5420 = vunpack.c.l.b16 %v5351
          %v5421 = vunpack.c.l.b16 %v5352
          %v5422 = vunpack.c.l.b16 %v5353
          %v5423 = vpack.c.b16 %v5408, %v5407
          %v5424 = vpack.c.b16 %v5410, %v5409
          %v5425 = vpack.c.b16 %v5412, %v5411
          %v5426 = vpack.c.b16 %v5414, %v5413
          %v5427 = vpack.c.b16 %v5416, %v5415
          %v5428 = vpack.c.b16 %v5418, %v5417
          %v5429 = vpack.c.b16 %v5420, %v5419
          %v5430 = vpack.c.b16 %v5422, %v5421
          %5439 = vmatprep.subr.bf16.mxu0 0
          %5440 = vmatpush1.bf16.msra.mxu0 %v5423
          %5441 = vmatprep.subr.bf16.mxu0 0
          %5442 = vmatpush1.bf16.msra.mxu0 %v5424
          %5443 = vmatprep.subr.bf16.mxu0 0
          %5444 = vmatpush1.bf16.msra.mxu0 %v5425
          %5445 = vmatprep.subr.bf16.mxu0 0
          %5446 = vmatpush1.bf16.msra.mxu0 %v5426
          %5447 = vmatprep.subr.bf16.mxu0 0
          %5448 = vmatpush1.bf16.msra.mxu0 %v5427
          %5449 = vmatprep.subr.bf16.mxu0 0
          %5450 = vmatpush1.bf16.msra.mxu0 %v5428
          %5451 = vmatprep.subr.bf16.mxu0 0
          %5452 = vmatpush1.bf16.msra.mxu0 %v5429
          %5453 = vmatprep.subr.bf16.mxu0 0
          %5454 = vmatpush1.bf16.msra.mxu0 %v5430
          %5455 = vmatprep.subr.bf16.mxu0 0
          %5456 = vmatpush1.bf16.msra.mxu0 0
          %5457 = vmatprep.subr.bf16.mxu0 0
          %5458 = vmatpush1.bf16.msra.mxu0 0
          %5459 = vmatprep.subr.bf16.mxu0 0
          %5460 = vmatpush1.bf16.msra.mxu0 0
          %5461 = vmatprep.subr.bf16.mxu0 0
          %5462 = vmatpush1.bf16.msra.mxu0 0
          %5463 = vmatprep.subr.bf16.mxu0 0
          %5464 = vmatpush1.bf16.msra.mxu0 0
          %5465 = vmatprep.subr.bf16.mxu0 0
          %5466 = vmatpush1.bf16.msra.mxu0 0
          %5467 = vmatprep.subr.bf16.mxu0 0
          %5468 = vmatpush1.bf16.msra.mxu0 0
          %5469 = vmatprep.subr.bf16.mxu0 0
          %5470 = vmatpush1.bf16.msra.mxu0 0
          %5471 = vmatprep.mubr.bf16.mxu0 0
          %5472 = vmatmul.mubr.bf16.gmra.mrb[0].mxu0 %v5330
          %v5473 = vpop.f32.mrb[0].mxu0
          %v5474 = vadd.f32 %v5390, %v5473
          %v5475 = vpop.f32.mrb[0].mxu0
          %v5476 = vpop.f32.mrb[0].mxu0
          %v5477 = vadd.f32 %v5390, %v5476
          %v5478 = vpop.f32.mrb[0].mxu0
          %5479 = vmatprep.mubr.bf16.mxu0 0
          %5480 = vmatmul.mubr.bf16.gmra.mrb[0].mxu0 %v5331
          %v5481 = vpop.f32.mrb[0].mxu0
          %v5482 = vadd.f32 %v5390, %v5481
          %v5483 = vpop.f32.mrb[0].mxu0
          %v5484 = vpop.f32.mrb[0].mxu0
          %v5485 = vadd.f32 %v5390, %v5484
          %v5486 = vpop.f32.mrb[0].mxu0
          %5487 = vmatprep.mubr.bf16.mxu0 0
          %5488 = vmatmul.mubr.bf16.gmra.mrb[0].mxu0 %v5332
          %v5489 = vpop.f32.mrb[0].mxu0
          %v5490 = vadd.f32 %v5390, %v5489
          %v5491 = vpop.f32.mrb[0].mxu0
          %v5492 = vpop.f32.mrb[0].mxu0
          %v5493 = vadd.f32 %v5390, %v5492
          %v5494 = vpop.f32.mrb[0].mxu0
          %5495 = vmatprep.mubr.bf16.mxu0 0
          %5496 = vmatmul.mubr.bf16.gmra.mrb[0].mxu0 %v5333
          %v5497 = vpop.f32.mrb[0].mxu0
          %v5498 = vadd.f32 %v5390, %v5497
          %v5499 = vpop.f32.mrb[0].mxu0
          %v5500 = vpop.f32.mrb[0].mxu0
          %v5501 = vadd.f32 %v5390, %v5500
          %v5502 = vpop.f32.mrb[0].mxu0
          %5503 = vmatprep.mubr.bf16.mxu0 0
          %5504 = vmatmul.mubr.bf16.gmra.mrb[0].mxu0 %v5334
          %v5505 = vpop.f32.mrb[0].mxu0
          %v5506 = vadd.f32 %v5390, %v5505
          %v5507 = vpop.f32.mrb[0].mxu0
          %v5508 = vpop.f32.mrb[0].mxu0
          %v5509 = vadd.f32 %v5390, %v5508
          %v5510 = vpop.f32.mrb[0].mxu0
          %5511 = vmatprep.mubr.bf16.mxu0 0
          %5512 = vmatmul.mubr.bf16.gmra.mrb[0].mxu0 %v5335
          %v5513 = vpop.f32.mrb[0].mxu0
          %v5514 = vadd.f32 %v5390, %v5513
          %v5515 = vpop.f32.mrb[0].mxu0
          %v5516 = vpop.f32.mrb[0].mxu0
          %v5517 = vadd.f32 %v5390, %v5516
          %v5518 = vpop.f32.mrb[0].mxu0
          %5519 = vmatprep.mubr.bf16.mxu0 0
          %5520 = vmatmul.mubr.bf16.gmra.mrb[0].mxu0 %v5336
          %v5521 = vpop.f32.mrb[0].mxu0
          %v5522 = vadd.f32 %v5390, %v5521
          %v5523 = vpop.f32.mrb[0].mxu0
          %v5524 = vpop.f32.mrb[0].mxu0
          %v5525 = vadd.f32 %v5390, %v5524
          %v5526 = vpop.f32.mrb[0].mxu0
          %5527 = vmatprep.mubr.bf16.mxu0 0
          %5528 = vmatmul.mubr.bf16.gmra.mrb[0].mxu0 %v5337
          %v5529 = vpop.f32.mrb[0].mxu0
          %v5530 = vadd.f32 %v5390, %v5529
          %v5531 = vpop.f32.mrb[0].mxu0
          %v5532 = vpop.f32.mrb[0].mxu0
          %v5533 = vadd.f32 %v5390, %v5532
          %v5534 = vpop.f32.mrb[0].mxu0
          %5535 = vdwg.mxu0
          %v5536 = vmax.f32 %v5474, 0.0
          %v5537 = vmax.f32 %v5477, 0.0
          %v5538 = vmax.f32 %v5482, 0.0
          %v5539 = vmax.f32 %v5485, 0.0
          %v5540 = vmax.f32 %v5490, 0.0
          %v5541 = vmax.f32 %v5493, 0.0
          %v5542 = vmax.f32 %v5498, 0.0
          %v5543 = vmax.f32 %v5501, 0.0
          %v5544 = vmax.f32 %v5506, 0.0
          %v5545 = vmax.f32 %v5509, 0.0
          %v5546 = vmax.f32 %v5514, 0.0
          %v5547 = vmax.f32 %v5517, 0.0
          %v5548 = vmax.f32 %v5522, 0.0
          %v5549 = vmax.f32 %v5525, 0.0
          %v5550 = vmax.f32 %v5530, 0.0
          %v5551 = vmax.f32 %v5533, 0.0
          %v5552 = vpack.c.bf16 %v5537, %v5536
          %v5553 = vpack.c.bf16 %v5539, %v5538
          %v5554 = vpack.c.bf16 %v5541, %v5540
          %v5555 = vpack.c.bf16 %v5543, %v5542
          %v5556 = vpack.c.bf16 %v5545, %v5544
          %v5557 = vpack.c.bf16 %v5547, %v5546
          %v5558 = vpack.c.bf16 %v5549, %v5548
          %v5559 = vpack.c.bf16 %v5551, %v5550
          %v5560 = vlaneseq
          %v5561 = vshrl.u32 %v5560, 7
          %v5562 = vsub.s32 1, %v5561
          %v5563 = vrot.slane %v5386, %v5562
          %v5580 = vunpack.c.l.b16 %v5354
          %v5581 = vunpack.c.l.b16 %v5355
          %v5582 = vunpack.c.l.b16 %v5356
          %v5583 = vunpack.c.l.b16 %v5357
          %v5584 = vunpack.c.l.b16 %v5358
          %v5585 = vunpack.c.l.b16 %v5359
          %v5586 = vunpack.c.l.b16 %v5360
          %v5587 = vunpack.c.l.b16 %v5361
          %v5588 = vunpack.c.l.b16 %v5362
          %v5589 = vunpack.c.l.b16 %v5363
          %v5590 = vunpack.c.l.b16 %v5364
          %v5591 = vunpack.c.l.b16 %v5365
          %v5592 = vunpack.c.l.b16 %v5366
          %v5593 = vunpack.c.l.b16 %v5367
          %v5594 = vunpack.c.l.b16 %v5368
          %v5595 = vunpack.c.l.b16 %v5369
          %v5596 = vpack.c.b16 %v5581, %v5580
          %v5597 = vpack.c.b16 %v5583, %v5582
          %v5598 = vpack.c.b16 %v5585, %v5584
          %v5599 = vpack.c.b16 %v5587, %v5586
          %v5600 = vpack.c.b16 %v5589, %v5588
          %v5601 = vpack.c.b16 %v5591, %v5590
          %v5602 = vpack.c.b16 %v5593, %v5592
          %v5603 = vpack.c.b16 %v5595, %v5594
          %5612 = vmatprep.subr.bf16.mxu0 0
          %5613 = vmatpush1.bf16.msra.mxu0 %v5596
          %5614 = vmatprep.subr.bf16.mxu0 0
          %5615 = vmatpush1.bf16.msra.mxu0 %v5597
          %5616 = vmatprep.subr.bf16.mxu0 0
          %5617 = vmatpush1.bf16.msra.mxu0 %v5598
          %5618 = vmatprep.subr.bf16.mxu0 0
          %5619 = vmatpush1.bf16.msra.mxu0 %v5599
          %5620 = vmatprep.subr.bf16.mxu0 0
          %5621 = vmatpush1.bf16.msra.mxu0 %v5600
          %5622 = vmatprep.subr.bf16.mxu0 0
          %5623 = vmatpush1.bf16.msra.mxu0 %v5601
          %5624 = vmatprep.subr.bf16.mxu0 0
          %5625 = vmatpush1.bf16.msra.mxu0 %v5602
          %5626 = vmatprep.subr.bf16.mxu0 0
          %5627 = vmatpush1.bf16.msra.mxu0 %v5603
          %5628 = vmatprep.subr.bf16.mxu0 0
          %5629 = vmatpush1.bf16.msra.mxu0 0
          %5630 = vmatprep.subr.bf16.mxu0 0
          %5631 = vmatpush1.bf16.msra.mxu0 0
          %5632 = vmatprep.subr.bf16.mxu0 0
          %5633 = vmatpush1.bf16.msra.mxu0 0
          %5634 = vmatprep.subr.bf16.mxu0 0
          %5635 = vmatpush1.bf16.msra.mxu0 0
          %5636 = vmatprep.subr.bf16.mxu0 0
          %5637 = vmatpush1.bf16.msra.mxu0 0
          %5638 = vmatprep.subr.bf16.mxu0 0
          %5639 = vmatpush1.bf16.msra.mxu0 0
          %5640 = vmatprep.subr.bf16.mxu0 0
          %5641 = vmatpush1.bf16.msra.mxu0 0
          %5642 = vmatprep.subr.bf16.mxu0 0
          %5643 = vmatpush1.bf16.msra.mxu0 0
          %5644 = vmatprep.mubr.bf16.mxu0 0
          %5645 = vmatmul.mubr.bf16.gmra.mrb[0].mxu0 %v5552
          %v5646 = vpop.f32.mrb[0].mxu0
          %v5647 = vadd.f32 %v5563, %v5646
          %v5648 = vpop.f32.mrb[0].mxu0
          %v5649 = vpop.f32.mrb[0].mxu0
          %v5650 = vadd.f32 %v5563, %v5649
          %v5651 = vpop.f32.mrb[0].mxu0
          %5652 = vmatprep.mubr.bf16.mxu0 0
          %5653 = vmatmul.mubr.bf16.gmra.mrb[0].mxu0 %v5553
          %v5654 = vpop.f32.mrb[0].mxu0
          %v5655 = vadd.f32 %v5563, %v5654
          %v5656 = vpop.f32.mrb[0].mxu0
          %v5657 = vpop.f32.mrb[0].mxu0
          %v5658 = vadd.f32 %v5563, %v5657
          %v5659 = vpop.f32.mrb[0].mxu0
          %5660 = vmatprep.mubr.bf16.mxu0 0
          %5661 = vmatmul.mubr.bf16.gmra.mrb[0].mxu0 %v5554
          %v5662 = vpop.f32.mrb[0].mxu0
          %v5663 = vadd.f32 %v5563, %v5662
          %v5664 = vpop.f32.mrb[0].mxu0
          %v5665 = vpop.f32.mrb[0].mxu0
          %v5666 = vadd.f32 %v5563, %v5665
          %v5667 = vpop.f32.mrb[0].mxu0
          %5668 = vmatprep.mubr.bf16.mxu0 0
          %5669 = vmatmul.mubr.bf16.gmra.mrb[0].mxu0 %v5555
          %v5670 = vpop.f32.mrb[0].mxu0
          %v5671 = vadd.f32 %v5563, %v5670
          %v5672 = vpop.f32.mrb[0].mxu0
          %v5673 = vpop.f32.mrb[0].mxu0
          %v5674 = vadd.f32 %v5563, %v5673
          %v5675 = vpop.f32.mrb[0].mxu0
          %5676 = vmatprep.mubr.bf16.mxu0 0
          %5677 = vmatmul.mubr.bf16.gmra.mrb[0].mxu0 %v5556
          %v5678 = vpop.f32.mrb[0].mxu0
          %v5679 = vadd.f32 %v5563, %v5678
          %v5680 = vpop.f32.mrb[0].mxu0
          %v5681 = vpop.f32.mrb[0].mxu0
          %v5682 = vadd.f32 %v5563, %v5681
          %v5683 = vpop.f32.mrb[0].mxu0
          %5684 = vmatprep.mubr.bf16.mxu0 0
          %5685 = vmatmul.mubr.bf16.gmra.mrb[0].mxu0 %v5557
          %v5686 = vpop.f32.mrb[0].mxu0
          %v5687 = vadd.f32 %v5563, %v5686
          %v5688 = vpop.f32.mrb[0].mxu0
          %v5689 = vpop.f32.mrb[0].mxu0
          %v5690 = vadd.f32 %v5563, %v5689
          %v5691 = vpop.f32.mrb[0].mxu0
          %5692 = vmatprep.mubr.bf16.mxu0 0
          %5693 = vmatmul.mubr.bf16.gmra.mrb[0].mxu0 %v5558
          %v5694 = vpop.f32.mrb[0].mxu0
          %v5695 = vadd.f32 %v5563, %v5694
          %v5696 = vpop.f32.mrb[0].mxu0
          %v5697 = vpop.f32.mrb[0].mxu0
          %v5698 = vadd.f32 %v5563, %v5697
          %v5699 = vpop.f32.mrb[0].mxu0
          %5700 = vmatprep.mubr.bf16.mxu0 0
          %5701 = vmatmul.mubr.bf16.gmra.mrb[0].mxu0 %v5559
          %v5702 = vpop.f32.mrb[0].mxu0
          %v5703 = vadd.f32 %v5563, %v5702
          %v5704 = vpop.f32.mrb[0].mxu0
          %v5705 = vpop.f32.mrb[0].mxu0
          %v5706 = vadd.f32 %v5563, %v5705
          %v5707 = vpop.f32.mrb[0].mxu0
          %5708 = vdwg.mxu0
          %v5709 = vmax.f32 %v5647, 0.0
          %v5710 = vmax.f32 %v5650, 0.0
          %v5711 = vmax.f32 %v5655, 0.0
          %v5712 = vmax.f32 %v5658, 0.0
          %v5713 = vmax.f32 %v5663, 0.0
          %v5714 = vmax.f32 %v5666, 0.0
          %v5715 = vmax.f32 %v5671, 0.0
          %v5716 = vmax.f32 %v5674, 0.0
          %v5717 = vmax.f32 %v5679, 0.0
          %v5718 = vmax.f32 %v5682, 0.0
          %v5719 = vmax.f32 %v5687, 0.0
          %v5720 = vmax.f32 %v5690, 0.0
          %v5721 = vmax.f32 %v5695, 0.0
          %v5722 = vmax.f32 %v5698, 0.0
          %v5723 = vmax.f32 %v5703, 0.0
          %v5724 = vmax.f32 %v5706, 0.0
          %v5725 = vpack.c.bf16 %v5710, %v5709
          %v5726 = vpack.c.bf16 %v5712, %v5711
          %v5727 = vpack.c.bf16 %v5714, %v5713
          %v5728 = vpack.c.bf16 %v5716, %v5715
          %v5729 = vpack.c.bf16 %v5718, %v5717
          %v5730 = vpack.c.bf16 %v5720, %v5719
          %v5731 = vpack.c.bf16 %v5722, %v5721
          %v5732 = vpack.c.bf16 %v5724, %v5723
          %v5733 = vlaneseq
          %v5734 = vshrl.u32 %v5733, 7
          %v5735 = vsub.s32 2, %v5734
          %v5736 = vrot.slane %v5386, %v5735
          %v5753 = vunpack.c.l.b16 %v5370
          %v5754 = vunpack.c.l.b16 %v5371
          %v5755 = vunpack.c.l.b16 %v5372
          %v5756 = vunpack.c.l.b16 %v5373
          %v5757 = vunpack.c.l.b16 %v5374
          %v5758 = vunpack.c.l.b16 %v5375
          %v5759 = vunpack.c.l.b16 %v5376
          %v5760 = vunpack.c.l.b16 %v5377
          %v5761 = vunpack.c.l.b16 %v5378
          %v5762 = vunpack.c.l.b16 %v5379
          %v5763 = vunpack.c.l.b16 %v5380
          %v5764 = vunpack.c.l.b16 %v5381
          %v5765 = vunpack.c.l.b16 %v5382
          %v5766 = vunpack.c.l.b16 %v5383
          %v5767 = vunpack.c.l.b16 %v5384
          %v5768 = vunpack.c.l.b16 %v5385
          %v5769 = vpack.c.b16 %v5754, %v5753
          %v5770 = vpack.c.b16 %v5756, %v5755
          %v5771 = vpack.c.b16 %v5758, %v5757
          %v5772 = vpack.c.b16 %v5760, %v5759
          %v5773 = vpack.c.b16 %v5762, %v5761
          %v5774 = vpack.c.b16 %v5764, %v5763
          %v5775 = vpack.c.b16 %v5766, %v5765
          %v5776 = vpack.c.b16 %v5768, %v5767
          %5785 = vmatprep.subr.bf16.mxu0 0
          %5786 = vmatpush1.bf16.msra.mxu0 %v5769
          %5787 = vmatprep.subr.bf16.mxu0 0
          %5788 = vmatpush1.bf16.msra.mxu0 %v5770
          %5789 = vmatprep.subr.bf16.mxu0 0
          %5790 = vmatpush1.bf16.msra.mxu0 %v5771
          %5791 = vmatprep.subr.bf16.mxu0 0
          %5792 = vmatpush1.bf16.msra.mxu0 %v5772
          %5793 = vmatprep.subr.bf16.mxu0 0
          %5794 = vmatpush1.bf16.msra.mxu0 %v5773
          %5795 = vmatprep.subr.bf16.mxu0 0
          %5796 = vmatpush1.bf16.msra.mxu0 %v5774
          %5797 = vmatprep.subr.bf16.mxu0 0
          %5798 = vmatpush1.bf16.msra.mxu0 %v5775
          %5799 = vmatprep.subr.bf16.mxu0 0
          %5800 = vmatpush1.bf16.msra.mxu0 %v5776
          %5801 = vmatprep.subr.bf16.mxu0 0
          %5802 = vmatpush1.bf16.msra.mxu0 0
          %5803 = vmatprep.subr.bf16.mxu0 0
          %5804 = vmatpush1.bf16.msra.mxu0 0
          %5805 = vmatprep.subr.bf16.mxu0 0
          %5806 = vmatpush1.bf16.msra.mxu0 0
          %5807 = vmatprep.subr.bf16.mxu0 0
          %5808 = vmatpush1.bf16.msra.mxu0 0
          %5809 = vmatprep.subr.bf16.mxu0 0
          %5810 = vmatpush1.bf16.msra.mxu0 0
          %5811 = vmatprep.subr.bf16.mxu0 0
          %5812 = vmatpush1.bf16.msra.mxu0 0
          %5813 = vmatprep.subr.bf16.mxu0 0
          %5814 = vmatpush1.bf16.msra.mxu0 0
          %5815 = vmatprep.subr.bf16.mxu0 0
          %5816 = vmatpush1.bf16.msra.mxu0 0
          %5817 = vmatprep.mubr.bf16.mxu0 0
          %5818 = vmatmul.mubr.bf16.gmra.mrb[0].mxu0 %v5725
          %v5819 = vpop.f32.mrb[0].mxu0
          %v5820 = vadd.f32 %v5736, %v5819
          %v5821 = vpop.f32.mrb[0].mxu0
          %v5822 = vpop.f32.mrb[0].mxu0
          %v5823 = vadd.f32 %v5736, %v5822
          %v5824 = vpop.f32.mrb[0].mxu0
          %5825 = vmatprep.mubr.bf16.mxu0 0
          %5826 = vmatmul.mubr.bf16.gmra.mrb[0].mxu0 %v5726
          %v5827 = vpop.f32.mrb[0].mxu0
          %v5828 = vadd.f32 %v5736, %v5827
          %v5829 = vpop.f32.mrb[0].mxu0
          %v5830 = vpop.f32.mrb[0].mxu0
          %v5831 = vadd.f32 %v5736, %v5830
          %v5832 = vpop.f32.mrb[0].mxu0
          %5833 = vmatprep.mubr.bf16.mxu0 0
          %5834 = vmatmul.mubr.bf16.gmra.mrb[0].mxu0 %v5727
          %v5835 = vpop.f32.mrb[0].mxu0
          %v5836 = vadd.f32 %v5736, %v5835
          %v5837 = vpop.f32.mrb[0].mxu0
          %v5838 = vpop.f32.mrb[0].mxu0
          %v5839 = vadd.f32 %v5736, %v5838
          %v5840 = vpop.f32.mrb[0].mxu0
          %5841 = vmatprep.mubr.bf16.mxu0 0
          %5842 = vmatmul.mubr.bf16.gmra.mrb[0].mxu0 %v5728
          %v5843 = vpop.f32.mrb[0].mxu0
          %v5844 = vadd.f32 %v5736, %v5843
          %v5845 = vpop.f32.mrb[0].mxu0
          %v5846 = vpop.f32.mrb[0].mxu0
          %v5847 = vadd.f32 %v5736, %v5846
          %v5848 = vpop.f32.mrb[0].mxu0
          %5849 = vmatprep.mubr.bf16.mxu0 0
          %5850 = vmatmul.mubr.bf16.gmra.mrb[0].mxu0 %v5729
          %v5851 = vpop.f32.mrb[0].mxu0
          %v5852 = vadd.f32 %v5736, %v5851
          %v5853 = vpop.f32.mrb[0].mxu0
          %v5854 = vpop.f32.mrb[0].mxu0
          %v5855 = vadd.f32 %v5736, %v5854
          %v5856 = vpop.f32.mrb[0].mxu0
          %5857 = vmatprep.mubr.bf16.mxu0 0
          %5858 = vmatmul.mubr.bf16.gmra.mrb[0].mxu0 %v5730
          %v5859 = vpop.f32.mrb[0].mxu0
          %v5860 = vadd.f32 %v5736, %v5859
          %v5861 = vpop.f32.mrb[0].mxu0
          %v5862 = vpop.f32.mrb[0].mxu0
          %v5863 = vadd.f32 %v5736, %v5862
          %v5864 = vpop.f32.mrb[0].mxu0
          %5865 = vmatprep.mubr.bf16.mxu0 0
          %5866 = vmatmul.mubr.bf16.gmra.mrb[0].mxu0 %v5731
          %v5867 = vpop.f32.mrb[0].mxu0
          %v5868 = vadd.f32 %v5736, %v5867
          %v5869 = vpop.f32.mrb[0].mxu0
          %v5870 = vpop.f32.mrb[0].mxu0
          %v5871 = vadd.f32 %v5736, %v5870
          %v5872 = vpop.f32.mrb[0].mxu0
          %5873 = vmatprep.mubr.bf16.mxu0 0
          %5874 = vmatmul.mubr.bf16.gmra.mrb[0].mxu0 %v5732
          %v5875 = vpop.f32.mrb[0].mxu0
          %v5876 = vadd.f32 %v5736, %v5875
          %v5877 = vpop.f32.mrb[0].mxu0
          %v5878 = vpop.f32.mrb[0].mxu0
          %v5879 = vadd.f32 %v5736, %v5878
          %v5880 = vpop.f32.mrb[0].mxu0
          %5881 = vdwg.mxu0
          %5882 = vst [vmem:[%s25] sm:$0xff] %v5820
          %5883 = vst [vmem:[%s25 + $0x8] sm:$0xff] %v5823
          %5884 = vst [vmem:[%s25 + $0x10] sm:$0xff] %v5828
          %5885 = vst [vmem:[%s25 + $0x18] sm:$0xff] %v5831
          %5886 = vst [vmem:[%s25 + $0x20] sm:$0xff] %v5836
          %5887 = vst [vmem:[%s25 + $0x28] sm:$0xff] %v5839
          %5888 = vst [vmem:[%s25 + $0x30] sm:$0xff] %v5844
          %5889 = vst [vmem:[%s25 + $0x38] sm:$0xff] %v5847
          %5890 = vst [vmem:[%s25 + $0x40] sm:$0xff] %v5852
          %5891 = vst [vmem:[%s25 + $0x48] sm:$0xff] %v5855
          %5892 = vst [vmem:[%s25 + $0x50] sm:$0xff] %v5860
          %5893 = vst [vmem:[%s25 + $0x58] sm:$0xff] %v5863
          %5894 = vst [vmem:[%s25 + $0x60] sm:$0xff] %v5868
          %5895 = vst [vmem:[%s25 + $0x68] sm:$0xff] %v5871
          %5896 = vst [vmem:[%s25 + $0x70] sm:$0xff] %v5876
          %5897 = vst [vmem:[%s25 + $0x78] sm:$0xff] %v5879
        $region260: #{incompr_ns_forward.1} parent=111 // pred_fallthru
          _
        // Predicated region
        $region261: #{incompr_ns_forward.1} parent=111 // pred_check
          %p5898 = pneg %p582
        $region262: #{incompr_ns_forward.1} parent=111 // pred_check_branch
          %5900 = sbr.rel (%p5898) target = $region264
        $region263: #{incompr_ns_forward.1} parent=111 // pred_region
          _
        $region264: #{incompr_ns_forward.1} parent=111 // pred_fallthru
          _
        // Predicated region
        $region265: #{incompr_ns_forward.1} parent=111 // pred_check
          %p5901 = pneg %p582
        $region266: #{incompr_ns_forward.1} parent=111 // pred_check_branch
          %5903 = sbr.rel (%p5901) target = $region268
        $region267: #{incompr_ns_forward.1} parent=111 // pred_region
          _
        $region268: #{incompr_ns_forward.1} parent=111 // pred_fallthru
          _
      $region112: #{incompr_ns_forward.1} parent=5 // pred_fallthru
        _
      %p5904 = scmp.le.s32.totalorder 2, %s36
      // Predicated region
      $region269: #{incompr_ns_forward.1} parent=5 // pred_check
        %p5905 = pneg %p5904
      $region270: #{incompr_ns_forward.1} parent=5 // pred_check_branch
        %5907 = sbr.rel (%p5905) target = $region272
      $region271: #{incompr_ns_forward.1} parent=5 // pred_region
        %s5908 = ssub.s32 %s36, 2
      $region272: #{incompr_ns_forward.1} parent=5 // pred_fallthru
        _
    $region6: #{incompr_ns_forward.1} parent=1 // loop_footer
      %s40 = sadd.s32 1, %s36
    $region7: #{incompr_ns_forward.1} parent=1 // loop_footer_branch
      %35 = sbr.rel target = $region3
    $region8: #{incompr_ns_forward.1} parent=1 // loop_exit
      _
    %5909 = vsyncpa [#allocation11], 1
    %s5910 = scalar_lea.sflag [#allocation11], 1
    %5911 = vsyncpa %s5910, 1
    %5912 = vsyncpa [#allocation13], 1
    %5913 = vsyncpa [#allocation16], 1
    %5914 = vsyncpa [#allocation19], 1
    %5915 = vsyncpa [#allocation31], 1
  %5916 = vsyncmov [#allocation9]
  %s5917 = vpop.sfrf %5916
  %p5918 = scmp.eq.s32.totalorder %s5917, 0
  %p5919 = pneg %p5918
  %5921 = shalt.err (%p5919)
  %s5922 = scalar_lea.sflag [#allocation9], 1
  %5923 = vsyncmov %s5922
  %s5924 = vpop.sfrf %5923
  %p5925 = scmp.eq.s32.totalorder %s5924, 0
  %p5926 = pneg %p5925
  %5928 = shalt.err (%p5926)

</llo_original>
